<compile_context>
chip_gen: v6e
topology: v6e:2x2x1
jax: 0.10.0
libtpu: 0.0.40
codegen_flags: <defaults>
</compile_context>

<pallas_src>
import functools

import jax
import jax.numpy as jnp
import numpy as np
from jax.experimental import pallas as pl
from jax.experimental.pallas import tpu as pltpu

EPS = 1e-5
LANE = 128


def _round_up(x, m):
    return (x + m - 1) // m * m


# ------------------------------ fused kernel --------------------------------

def _basic_block_kernel(x_ref, w1_ref, w2_ref, g1_ref, b1_ref, g2_ref, b2_ref,
                        o_ref, xp_ref, *, N, H, W, Cp):
    """Fused conv3x3 -> BN -> ReLU -> grouped conv3x3 -> BN -> +res -> ReLU.

    x_ref : (N, H, W, Cp) f32, channels zero-padded to Cp (lane-dense).
    w*_ref: (9*Cp, Cp) bf16 im2col weight matrices (grouped conv pre-expanded
            to block-diagonal; zero rows/cols in padded channels).
    g/b   : (1, Cp) f32 BN scale/shift (zero in padded channels).
    o_ref : (N, H, W, Cp) f32 output.
    xp_ref: (N, H+2, W+2, Cp) f32 VMEM scratch holding the spatial halo.
    """
    M = N * H * W
    inv_m = 1.0 / M  # compile-time reciprocal (M = 512 here, exact in f32)

    # Zero the halo scratch once; both convs only rewrite the interior,
    # so the 1-pixel zero halo persists.
    xp_ref[...] = jnp.zeros((N, H + 2, W + 2, Cp), jnp.float32)

    def conv3x3(act_nhwc, w_ref):
        # Spatial halo entirely in VMEM (no HBM round-trip of a padded copy).
        xp_ref[:, 1:H + 1, 1:W + 1, :] = act_nhwc
        xp = xp_ref[...]
        # im2col: one lane-aligned concat of the 9 taps -> a single big MXU
        # matmul with K = 9*Cp instead of 9 tiny-K matmuls.
        taps = [xp[:, kh:kh + H, kw:kw + W, :]
                for kh in range(3) for kw in range(3)]
        patches = jnp.concatenate(taps, axis=-1).reshape(M, 9 * Cp)
        return jnp.dot(patches.astype(jnp.bfloat16), w_ref[...],
                       preferred_element_type=jnp.float32)          # (M, Cp) f32

    def bn(y, g_ref, b_ref):
        # Training-mode BatchNorm2d: batch stats, biased variance, f32 math.
        # Reduction over the sublane (M) axis keeps the result lane-resident.
        mean = jnp.sum(y, axis=0, keepdims=True) * inv_m
        d = y - mean
        var = jnp.sum(d * d, axis=0, keepdims=True) * inv_m
        return d * jax.lax.rsqrt(var + EPS) * g_ref[...] + b_ref[...]

    x = x_ref[...]                                                   # (N,H,W,Cp) f32

    y = conv3x3(x, w1_ref)                                           # conv1
    y = jnp.maximum(bn(y, g1_ref, b1_ref), 0.0)                      # bn1 + relu

    z = conv3x3(y.reshape(N, H, W, Cp), w2_ref)                      # grouped conv2
    z = bn(z, g2_ref, b2_ref)                                        # bn2
    z = z + x.reshape(M, Cp)                                         # identity residual
    o_ref[...] = jnp.maximum(z, 0.0).reshape(N, H, W, Cp)            # relu


# ---------------------- one-time parameter preprocessing ---------------------

def _im2col_weight(w_oihw, groups, cin, cout, cp):
    """PyTorch (Cout, Cin/groups, 3, 3) -> (9*Cp, Cp) bf16 im2col matrix.

    Grouped convs become a block-diagonal dense matrix (exact).  Row index is
    kh*3*Cp + kw*Cp + cin, matching the in-kernel tap concatenation order.
    """
    w = jnp.transpose(jnp.asarray(w_oihw, jnp.float32), (2, 3, 1, 0))  # (3,3,Cin/g,Cout)
    cin_g, cout_g = cin // groups, cout // groups
    dense = jnp.zeros((3, 3, cp, cp), jnp.float32)
    for g in range(groups):
        dense = dense.at[:, :, g * cin_g:(g + 1) * cin_g,
                         g * cout_g:(g + 1) * cout_g].set(
            w[:, :, :, g * cout_g:(g + 1) * cout_g])
    return dense.reshape(9 * cp, cp).astype(jnp.bfloat16)


def _pad_vec(v, cp):
    v = jnp.asarray(v, jnp.float32)
    return jnp.zeros((1, cp), jnp.float32).at[0, :v.shape[0]].set(v)


def prepare_params(params, *, inplanes, planes, num_group):
    """Hoisted, call-once preprocessing of all weights / BN scales."""
    C = planes * 2
    assert inplanes == C, "identity residual requires inplanes == planes*2"
    Cp = _round_up(C, LANE)
    return dict(
        C=C, Cp=Cp,
        w1=_im2col_weight(params["w1"], 1, inplanes, C, Cp),
        w2=_im2col_weight(params["w2"], num_group, C, C, Cp),
        g1=_pad_vec(params["g1"], Cp), b1=_pad_vec(params["b1"], Cp),
        g2=_pad_vec(params["g2"], Cp), b2=_pad_vec(params["b2"], Cp),
    )


# ------------------------------ forward wrapper ------------------------------

def basic_block_forward(x_nchw, prep, *, stride=1):
    assert stride == 1, "stride>1 / downsample path not supported"
    C, Cp = prep["C"], prep["Cp"]
    N, Cin, H, W = x_nchw.shape
    assert Cin == C

    x = jnp.transpose(x_nchw, (0, 2, 3, 1)).astype(jnp.float32)     # NCHW -> NHWC
    x = jnp.pad(x, ((0, 0), (0, 0), (0, 0), (0, Cp - Cin)))          # lane-dense channels

    kern = functools.partial(_basic_block_kernel, N=N, H=H, W=W, Cp=Cp)
    vmem_specs = [pl.BlockSpec(memory_space=pltpu.MemorySpace.VMEM)
                  for _ in range(7)]
    out = pl.pallas_call(
        kern,
        out_shape=jax.ShapeDtypeStruct((N, H, W, Cp), jnp.float32),
        in_specs=vmem_specs,
        out_specs=pl.BlockSpec(memory_space=pltpu.MemorySpace.VMEM),
        scratch_shapes=[pltpu.VMEM((N, H + 2, W + 2, Cp), jnp.float32)],
        compiler_params=pltpu.CompilerParams(vmem_limit_bytes=32 * 1024 * 1024),
    )(x, prep["w1"], prep["w2"], prep["g1"], prep["b1"], prep["g2"], prep["b2"])

    out = out[..., :C]                                               # drop channel pad
    return jnp.transpose(out, (0, 3, 1, 2))                          # NHWC -> NCHW


# --------------------------- pure-JAX reference ------------------------------

def _ref_forward(x_nchw, params, num_group):
    """Reference. Conv inputs cast to bf16 (f32 accumulation) to mirror the
    kernel's MXU precision; BN / residual math in f32."""
    x = jnp.transpose(x_nchw, (0, 2, 3, 1)).astype(jnp.float32)

    def conv(a, w, groups):
        w_hwio = jnp.transpose(jnp.asarray(w, jnp.float32), (2, 3, 1, 0))
        return jax.lax.conv_general_dilated(
            a.astype(jnp.bfloat16), w_hwio.astype(jnp.bfloat16),
            (1, 1), ((1, 1), (1, 1)),
            dimension_numbers=("NHWC", "HWIO", "NHWC"),
            feature_group_count=groups,
            preferred_element_type=jnp.float32)

    def bn(a, g, b):
        m = jnp.mean(a, axis=(0, 1, 2), keepdims=True)
        v = jnp.mean((a - m) ** 2, axis=(0, 1, 2), keepdims=True)
        return ((a - m) * jax.lax.rsqrt(v + EPS) * g.reshape(1, 1, 1, -1)
                + b.reshape(1, 1, 1, -1))

    out = jax.nn.relu(bn(conv(x, params["w1"], 1), params["g1"], params["b1"]))
    out = bn(conv(out, params["w2"], num_group), params["g2"], params["b2"])
    out = jax.nn.relu(out + x)
    return jnp.transpose(out, (0, 3, 1, 2))


# ----------------------------------- main ------------------------------------

if __name__ == "__main__":
    key = jax.random.PRNGKey(0)
    kx, k1, k2, k3, k4, k5, k6 = jax.random.split(key, 7)

    # Small shapes consistent with BasicBlock(inplanes=8, planes=4, num_group=4)
    N, inplanes, planes, H, W = 2, 8, 4, 16, 16
    num_group = 4
    C = planes * 2  # == inplanes so the identity residual is shape-compatible

    x = jax.random.normal(kx, (N, inplanes, H, W), jnp.float32)
    params = dict(
        w1=0.1 * jax.random.normal(k1, (C, inplanes, 3, 3), jnp.float32),
        g1=1.0 + 0.1 * jax.random.normal(k2, (C,), jnp.float32),
        b1=0.1 * jax.random.normal(k3, (C,), jnp.float32),
        w2=0.1 * jax.random.normal(k4, (C, C // num_group, 3, 3), jnp.float32),
        g2=1.0 + 0.1 * jax.random.normal(k5, (C,), jnp.float32),
        b2=0.1 * jax.random.normal(k6, (C,), jnp.float32),
    )

    prep = prepare_params(params, inplanes=inplanes, planes=planes,
                          num_group=num_group)
    out = basic_block_forward(x, prep, stride=1)
    out = jax.block_until_ready(out)

    ref = _ref_forward(x, params, num_group)
    assert out.shape == (N, C, H, W), out.shape
    np.testing.assert_allclose(np.asarray(out), np.asarray(ref),
                               rtol=2e-3, atol=2e-3)
    print("KERNEL_OK")
</pallas_src>

<mosaic_0001>
module attributes {stable_mosaic.version = 11 : i64} {
  func.func @_basic_block_kernel(%arg0: memref<2x16x16x128xf32, #tpu.memory_space<vmem>>, %arg1: memref<1152x128xbf16, #tpu.memory_space<vmem>>, %arg2: memref<1152x128xbf16, #tpu.memory_space<vmem>>, %arg3: memref<1x128xf32, #tpu.memory_space<vmem>>, %arg4: memref<1x128xf32, #tpu.memory_space<vmem>>, %arg5: memref<1x128xf32, #tpu.memory_space<vmem>>, %arg6: memref<1x128xf32, #tpu.memory_space<vmem>>, %arg7: memref<2x16x16x128xf32, #tpu.memory_space<vmem>>, %arg8: memref<2x18x18x128xf32, #tpu.memory_space<vmem>>) attributes {dimension_semantics = [], scalar_prefetch = 0 : i64, scratch_operands = 1 : i64, tpu.core_type = #tpu.core_type<tc>} {
    %cst = arith.constant 0.000000e+00 : f32
    %0 = vector.broadcast %cst : f32 to vector<2x18x18x128xf32>
    %c0 = arith.constant 0 : index
    %c0_0 = arith.constant 0 : index
    %c0_1 = arith.constant 0 : index
    %c0_2 = arith.constant 0 : index
    %1 = vector.load %arg8[%c0, %c0_0, %c0_1, %c0_2] : memref<2x18x18x128xf32, #tpu.memory_space<vmem>>, vector<2x18x18x128xf32>
    tpu.vector_store %arg8[%c0, %c0_0, %c0_1, %c0_2], %0 {strides = array<i32>} : memref<2x18x18x128xf32, #tpu.memory_space<vmem>>, vector<2x18x18x128xf32>,
    %c0_3 = arith.constant 0 : index
    %c0_4 = arith.constant 0 : index
    %c0_5 = arith.constant 0 : index
    %c0_6 = arith.constant 0 : index
    %2 = vector.load %arg0[%c0_3, %c0_4, %c0_5, %c0_6] : memref<2x16x16x128xf32, #tpu.memory_space<vmem>>, vector<2x16x16x128xf32>
    %c0_7 = arith.constant 0 : index
    %c1 = arith.constant 1 : index
    %c1_8 = arith.constant 1 : index
    %c0_9 = arith.constant 0 : index
    %3 = vector.load %arg8[%c0_7, %c1, %c1_8, %c0_9] : memref<2x18x18x128xf32, #tpu.memory_space<vmem>>, vector<2x16x16x128xf32>
    tpu.vector_store %arg8[%c0_7, %c1, %c1_8, %c0_9], %2 {strides = array<i32>} : memref<2x18x18x128xf32, #tpu.memory_space<vmem>>, vector<2x16x16x128xf32>,
    %c0_10 = arith.constant 0 : index
    %c0_11 = arith.constant 0 : index
    %c0_12 = arith.constant 0 : index
    %c0_13 = arith.constant 0 : index
    %4 = vector.load %arg8[%c0_10, %c0_11, %c0_12, %c0_13] : memref<2x18x18x128xf32, #tpu.memory_space<vmem>>, vector<2x18x18x128xf32>
    %5 = vector.extract_strided_slice %4 {offsets = [0, 0, 0, 0], sizes = [2, 16, 16, 128], strides = [1, 1, 1, 1]} : vector<2x18x18x128xf32> to vector<2x16x16x128xf32>
    %6 = vector.extract_strided_slice %4 {offsets = [0, 0, 1, 0], sizes = [2, 16, 16, 128], strides = [1, 1, 1, 1]} : vector<2x18x18x128xf32> to vector<2x16x16x128xf32>
    %7 = vector.extract_strided_slice %4 {offsets = [0, 0, 2, 0], sizes = [2, 16, 16, 128], strides = [1, 1, 1, 1]} : vector<2x18x18x128xf32> to vector<2x16x16x128xf32>
    %8 = vector.extract_strided_slice %4 {offsets = [0, 1, 0, 0], sizes = [2, 16, 16, 128], strides = [1, 1, 1, 1]} : vector<2x18x18x128xf32> to vector<2x16x16x128xf32>
    %9 = vector.extract_strided_slice %4 {offsets = [0, 1, 1, 0], sizes = [2, 16, 16, 128], strides = [1, 1, 1, 1]} : vector<2x18x18x128xf32> to vector<2x16x16x128xf32>
    %10 = vector.extract_strided_slice %4 {offsets = [0, 1, 2, 0], sizes = [2, 16, 16, 128], strides = [1, 1, 1, 1]} : vector<2x18x18x128xf32> to vector<2x16x16x128xf32>
    %11 = vector.extract_strided_slice %4 {offsets = [0, 2, 0, 0], sizes = [2, 16, 16, 128], strides = [1, 1, 1, 1]} : vector<2x18x18x128xf32> to vector<2x16x16x128xf32>
    %12 = vector.extract_strided_slice %4 {offsets = [0, 2, 1, 0], sizes = [2, 16, 16, 128], strides = [1, 1, 1, 1]} : vector<2x18x18x128xf32> to vector<2x16x16x128xf32>
    %13 = vector.extract_strided_slice %4 {offsets = [0, 2, 2, 0], sizes = [2, 16, 16, 128], strides = [1, 1, 1, 1]} : vector<2x18x18x128xf32> to vector<2x16x16x128xf32>
    %14 = tpu.concatenate %5, %6, %7, %8, %9, %10, %11, %12, %13 in 3 : vector<2x16x16x128xf32>, vector<2x16x16x128xf32>, vector<2x16x16x128xf32>, vector<2x16x16x128xf32>, vector<2x16x16x128xf32>, vector<2x16x16x128xf32>, vector<2x16x16x128xf32>, vector<2x16x16x128xf32>, vector<2x16x16x128xf32> -> vector<2x16x16x1152xf32>
    %15 = vector.shape_cast %14 : vector<2x16x16x1152xf32> to vector<512x1152xf32>
    %16 = arith.truncf %15 : vector<512x1152xf32> to vector<512x1152xbf16>
    %c0_14 = arith.constant 0 : index
    %c0_15 = arith.constant 0 : index
    %17 = vector.load %arg1[%c0_14, %c0_15] : memref<1152x128xbf16, #tpu.memory_space<vmem>>, vector<1152x128xbf16>
    %cst_16 = arith.constant dense<0.000000e+00> : vector<512x128xf32>
    %18 = tpu.matmul %16, %17, %cst_16 {dimension_numbers = #tpu.dot_dimension_numbers<[1], [0], [0], [1], [0, 0, 1, 1], [], []>} : vector<512x1152xbf16>, vector<1152x128xbf16>, vector<512x128xf32> -> vector<512x128xf32>
    %cst_17 = arith.constant dense<0.000000e+00> : vector<128xf32>
    %19 = vector.multi_reduction <add>, %18, %cst_17 [0] : vector<512x128xf32> to vector<128xf32>
    %20 = vector.shape_cast %19 : vector<128xf32> to vector<1x128xf32>
    %cst_18 = arith.constant 0.001953125 : f32
    %21 = vector.broadcast %cst_18 : f32 to vector<1x128xf32>
    %22 = arith.mulf %20, %21 : vector<1x128xf32>
    %23 = vector.broadcast %22 : vector<1x128xf32> to vector<512x128xf32>
    %24 = arith.subf %18, %23 : vector<512x128xf32>
    %25 = arith.mulf %24, %24 : vector<512x128xf32>
    %cst_19 = arith.constant dense<0.000000e+00> : vector<128xf32>
    %26 = vector.multi_reduction <add>, %25, %cst_19 [0] : vector<512x128xf32> to vector<128xf32>
    %27 = vector.shape_cast %26 : vector<128xf32> to vector<1x128xf32>
    %cst_20 = arith.constant 0.001953125 : f32
    %28 = vector.broadcast %cst_20 : f32 to vector<1x128xf32>
    %29 = arith.mulf %27, %28 : vector<1x128xf32>
    %cst_21 = arith.constant 9.99999974E-6 : f32
    %30 = vector.broadcast %cst_21 : f32 to vector<1x128xf32>
    %31 = arith.addf %29, %30 : vector<1x128xf32>
    %32 = math.rsqrt %31 : vector<1x128xf32>
    %33 = vector.broadcast %32 : vector<1x128xf32> to vector<512x128xf32>
    %34 = arith.mulf %24, %33 : vector<512x128xf32>
    %c0_22 = arith.constant 0 : index
    %c0_23 = arith.constant 0 : index
    %35 = vector.load %arg3[%c0_22, %c0_23] : memref<1x128xf32, #tpu.memory_space<vmem>>, vector<1x128xf32>
    %36 = vector.broadcast %35 : vector<1x128xf32> to vector<512x128xf32>
    %37 = arith.mulf %34, %36 : vector<512x128xf32>
    %c0_24 = arith.constant 0 : index
    %c0_25 = arith.constant 0 : index
    %38 = vector.load %arg4[%c0_24, %c0_25] : memref<1x128xf32, #tpu.memory_space<vmem>>, vector<1x128xf32>
    %39 = vector.broadcast %38 : vector<1x128xf32> to vector<512x128xf32>
    %40 = arith.addf %37, %39 : vector<512x128xf32>
    %cst_26 = arith.constant 0.000000e+00 : f32
    %41 = vector.broadcast %cst_26 : f32 to vector<512x128xf32>
    %42 = arith.maximumf %40, %41 : vector<512x128xf32>
    %43 = vector.shape_cast %42 : vector<512x128xf32> to vector<2x16x16x128xf32>
    %c0_27 = arith.constant 0 : index
    %c1_28 = arith.constant 1 : index
    %c1_29 = arith.constant 1 : index
    %c0_30 = arith.constant 0 : index
    %44 = vector.load %arg8[%c0_27, %c1_28, %c1_29, %c0_30] : memref<2x18x18x128xf32, #tpu.memory_space<vmem>>, vector<2x16x16x128xf32>
    tpu.vector_store %arg8[%c0_27, %c1_28, %c1_29, %c0_30], %43 {strides = array<i32>} : memref<2x18x18x128xf32, #tpu.memory_space<vmem>>, vector<2x16x16x128xf32>,
    %c0_31 = arith.constant 0 : index
    %c0_32 = arith.constant 0 : index
    %c0_33 = arith.constant 0 : index
    %c0_34 = arith.constant 0 : index
    %45 = vector.load %arg8[%c0_31, %c0_32, %c0_33, %c0_34] : memref<2x18x18x128xf32, #tpu.memory_space<vmem>>, vector<2x18x18x128xf32>
    %46 = vector.extract_strided_slice %45 {offsets = [0, 0, 0, 0], sizes = [2, 16, 16, 128], strides = [1, 1, 1, 1]} : vector<2x18x18x128xf32> to vector<2x16x16x128xf32>
    %47 = vector.extract_strided_slice %45 {offsets = [0, 0, 1, 0], sizes = [2, 16, 16, 128], strides = [1, 1, 1, 1]} : vector<2x18x18x128xf32> to vector<2x16x16x128xf32>
    %48 = vector.extract_strided_slice %45 {offsets = [0, 0, 2, 0], sizes = [2, 16, 16, 128], strides = [1, 1, 1, 1]} : vector<2x18x18x128xf32> to vector<2x16x16x128xf32>
    %49 = vector.extract_strided_slice %45 {offsets = [0, 1, 0, 0], sizes = [2, 16, 16, 128], strides = [1, 1, 1, 1]} : vector<2x18x18x128xf32> to vector<2x16x16x128xf32>
    %50 = vector.extract_strided_slice %45 {offsets = [0, 1, 1, 0], sizes = [2, 16, 16, 128], strides = [1, 1, 1, 1]} : vector<2x18x18x128xf32> to vector<2x16x16x128xf32>
    %51 = vector.extract_strided_slice %45 {offsets = [0, 1, 2, 0], sizes = [2, 16, 16, 128], strides = [1, 1, 1, 1]} : vector<2x18x18x128xf32> to vector<2x16x16x128xf32>
    %52 = vector.extract_strided_slice %45 {offsets = [0, 2, 0, 0], sizes = [2, 16, 16, 128], strides = [1, 1, 1, 1]} : vector<2x18x18x128xf32> to vector<2x16x16x128xf32>
    %53 = vector.extract_strided_slice %45 {offsets = [0, 2, 1, 0], sizes = [2, 16, 16, 128], strides = [1, 1, 1, 1]} : vector<2x18x18x128xf32> to vector<2x16x16x128xf32>
    %54 = vector.extract_strided_slice %45 {offsets = [0, 2, 2, 0], sizes = [2, 16, 16, 128], strides = [1, 1, 1, 1]} : vector<2x18x18x128xf32> to vector<2x16x16x128xf32>
    %55 = tpu.concatenate %46, %47, %48, %49, %50, %51, %52, %53, %54 in 3 : vector<2x16x16x128xf32>, vector<2x16x16x128xf32>, vector<2x16x16x128xf32>, vector<2x16x16x128xf32>, vector<2x16x16x128xf32>, vector<2x16x16x128xf32>, vector<2x16x16x128xf32>, vector<2x16x16x128xf32>, vector<2x16x16x128xf32> -> vector<2x16x16x1152xf32>
    %56 = vector.shape_cast %55 : vector<2x16x16x1152xf32> to vector<512x1152xf32>
    %57 = arith.truncf %56 : vector<512x1152xf32> to vector<512x1152xbf16>
    %c0_35 = arith.constant 0 : index
    %c0_36 = arith.constant 0 : index
    %58 = vector.load %arg2[%c0_35, %c0_36] : memref<1152x128xbf16, #tpu.memory_space<vmem>>, vector<1152x128xbf16>
    %cst_37 = arith.constant dense<0.000000e+00> : vector<512x128xf32>
    %59 = tpu.matmul %57, %58, %cst_37 {dimension_numbers = #tpu.dot_dimension_numbers<[1], [0], [0], [1], [0, 0, 1, 1], [], []>} : vector<512x1152xbf16>, vector<1152x128xbf16>, vector<512x128xf32> -> vector<512x128xf32>
    %cst_38 = arith.constant dense<0.000000e+00> : vector<128xf32>
    %60 = vector.multi_reduction <add>, %59, %cst_38 [0] : vector<512x128xf32> to vector<128xf32>
    %61 = vector.shape_cast %60 : vector<128xf32> to vector<1x128xf32>
    %cst_39 = arith.constant 0.001953125 : f32
    %62 = vector.broadcast %cst_39 : f32 to vector<1x128xf32>
    %63 = arith.mulf %61, %62 : vector<1x128xf32>
    %64 = vector.broadcast %63 : vector<1x128xf32> to vector<512x128xf32>
    %65 = arith.subf %59, %64 : vector<512x128xf32>
    %66 = arith.mulf %65, %65 : vector<512x128xf32>
    %cst_40 = arith.constant dense<0.000000e+00> : vector<128xf32>
    %67 = vector.multi_reduction <add>, %66, %cst_40 [0] : vector<512x128xf32> to vector<128xf32>
    %68 = vector.shape_cast %67 : vector<128xf32> to vector<1x128xf32>
    %cst_41 = arith.constant 0.001953125 : f32
    %69 = vector.broadcast %cst_41 : f32 to vector<1x128xf32>
    %70 = arith.mulf %68, %69 : vector<1x128xf32>
    %cst_42 = arith.constant 9.99999974E-6 : f32
    %71 = vector.broadcast %cst_42 : f32 to vector<1x128xf32>
    %72 = arith.addf %70, %71 : vector<1x128xf32>
    %73 = math.rsqrt %72 : vector<1x128xf32>
    %74 = vector.broadcast %73 : vector<1x128xf32> to vector<512x128xf32>
    %75 = arith.mulf %65, %74 : vector<512x128xf32>
    %c0_43 = arith.constant 0 : index
    %c0_44 = arith.constant 0 : index
    %76 = vector.load %arg5[%c0_43, %c0_44] : memref<1x128xf32, #tpu.memory_space<vmem>>, vector<1x128xf32>
    %77 = vector.broadcast %76 : vector<1x128xf32> to vector<512x128xf32>
    %78 = arith.mulf %75, %77 : vector<512x128xf32>
    %c0_45 = arith.constant 0 : index
    %c0_46 = arith.constant 0 : index
    %79 = vector.load %arg6[%c0_45, %c0_46] : memref<1x128xf32, #tpu.memory_space<vmem>>, vector<1x128xf32>
    %80 = vector.broadcast %79 : vector<1x128xf32> to vector<512x128xf32>
    %81 = arith.addf %78, %80 : vector<512x128xf32>
    %82 = vector.shape_cast %2 : vector<2x16x16x128xf32> to vector<512x128xf32>
    %83 = arith.addf %81, %82 : vector<512x128xf32>
    %cst_47 = arith.constant 0.000000e+00 : f32
    %84 = vector.broadcast %cst_47 : f32 to vector<512x128xf32>
    %85 = arith.maximumf %83, %84 : vector<512x128xf32>
    %86 = vector.shape_cast %85 : vector<512x128xf32> to vector<2x16x16x128xf32>
    %c0_48 = arith.constant 0 : index
    %c0_49 = arith.constant 0 : index
    %c0_50 = arith.constant 0 : index
    %c0_51 = arith.constant 0 : index
    %87 = vector.load %arg7[%c0_48, %c0_49, %c0_50, %c0_51] : memref<2x16x16x128xf32, #tpu.memory_space<vmem>>, vector<2x16x16x128xf32>
    tpu.vector_store %arg7[%c0_48, %c0_49, %c0_50, %c0_51], %86 {strides = array<i32>} : memref<2x16x16x128xf32, #tpu.memory_space<vmem>>, vector<2x16x16x128xf32>,
    return
  }
}

</mosaic_0001>

<llo_original>
// kernel: tpu_custom_call.1
$region0: #{tpu_custom_call.1}
  #allocation0 [shape = 'u32[]', space=smem, size = 0x4, offset = 0x4, fixed_abs, tag = 'smem constant byte address 0x4 - core index']
  #allocation1 [shape = 'u32[144,128]{1,0:T(1,128)}', space=vmem, size = 0x12000, scoped, tag = 'internal scratch']
  #allocation2 [shape = 'f32[2,18,18,128]{3,2,1,0:T(8,128)}', space=vmem, size = 0x6c000, scoped, tag = 'scratch operand']
  %s0 = inlined_call_operand.hbm [shape: f32[2,16,16,128], index: 0, kind: input, shape index: {}]
  %s1 = inlined_call_operand.hbm [shape: bf16[1152,128], index: 1, kind: input, shape index: {}]
  %s2 = inlined_call_operand.hbm [shape: bf16[1152,128], index: 2, kind: input, shape index: {}]
  %s3 = inlined_call_operand.vmem [shape: f32[1,128], index: 3, kind: input, shape index: {}]
  %s4 = inlined_call_operand.vmem [shape: f32[1,128], index: 4, kind: input, shape index: {}]
  %s5 = inlined_call_operand.vmem [shape: f32[1,128], index: 5, kind: input, shape index: {}]
  %s6 = inlined_call_operand.vmem [shape: f32[1,128], index: 6, kind: input, shape index: {}]
  %s7 = inlined_call_operand.hbm [shape: f32[2,16,16,128], index: 7, kind: output, shape index: {}]
  %s8 = sld [smem:[#allocation0]]
  $region50: #{tpu_custom_call.1} parent=0
    _
  %s10 = ssub.s32 1, %s8
  %s11 = scalar_select 0, %s10, %s8
  $region1: #{tpu_custom_call.1} parent=0
    #allocation3 [shape = 'u8[262144]{0}', space=vmem, size = 0x40000, scoped, tag = 'input window, operand 0, single buffered']
    #allocation4 [shape = 's32[1]{0}', space=sflag, size = 0x4, scoped, tag = 'scoped memory for tpu_custom_call.1']
    #allocation5 [shape = 's32[1]{0}', space=sflag, size = 0x4, scoped, tag = 'scoped memory for tpu_custom_call.1']
    #allocation6 [shape = 'u8[294912]{0}', space=vmem, size = 0x48000, scoped, tag = 'input window, operand 1, single buffered']
    #allocation7 [shape = 's32[1]{0}', space=sflag, size = 0x4, scoped, tag = 'scoped memory for tpu_custom_call.1']
    #allocation8 [shape = 'u8[294912]{0}', space=vmem, size = 0x48000, scoped, tag = 'input window, operand 2, single buffered']
    #allocation9 [shape = 'u8[262144]{0}', space=vmem, size = 0x40000, scoped, tag = 'output window, operand 0, single buffered']
    %12 = vsyncpa [#allocation4], 0
    %13 = vsyncpa [#allocation7], 0
    %14 = vsyncpa [#allocation5], 0
    // Predicated region
    $region2: #{tpu_custom_call.1} parent=1 // pred_check
      _
    $region3: #{tpu_custom_call.1} parent=1 // pred_check_branch
      %16 = sbr.rel (0) target = $region5
    $region4: #{tpu_custom_call.1} parent=1 // pred_region
      %s18 = ssub.s32 8192, 8192
      %19 = vsyncadd [#allocation4], %s18
      %s20 = sshll.u32 [#allocation3], 4
      %s21 = int_to_ptr.vmem [resolvable:$true] %s20
      %26 = dma.hbm_to_vmem [thread:$0]  %s0, 8192, %s21, [#allocation4], 128, 128, 8
    $region5: #{tpu_custom_call.1} parent=1 // pred_fallthru
      _
    // Predicated region
    $region6: #{tpu_custom_call.1} parent=1 // pred_check
      _
    $region7: #{tpu_custom_call.1} parent=1 // pred_check_branch
      %28 = sbr.rel (0) target = $region9
    $region8: #{tpu_custom_call.1} parent=1 // pred_region
      %s30 = ssub.s32 9216, 9216
      %31 = vsyncadd [#allocation7], %s30
      %s32 = sshll.u32 [#allocation6], 4
      %s33 = int_to_ptr.vmem [resolvable:$true] %s32
      %38 = dma.hbm_to_vmem [thread:$0]  %s1, 9216, %s33, [#allocation7], 64, 64, 4
    $region9: #{tpu_custom_call.1} parent=1 // pred_fallthru
      _
    // Predicated region
    $region10: #{tpu_custom_call.1} parent=1 // pred_check
      _
    $region11: #{tpu_custom_call.1} parent=1 // pred_check_branch
      %40 = sbr.rel (0) target = $region13
    $region12: #{tpu_custom_call.1} parent=1 // pred_region
      %s42 = ssub.s32 9216, 9216
      %43 = vsyncadd [#allocation7], %s42
      %s44 = sshll.u32 [#allocation8], 4
      %s45 = int_to_ptr.vmem [resolvable:$true] %s44
      %50 = dma.hbm_to_vmem [thread:$0]  %s2, 9216, %s45, [#allocation7], 64, 64, 4
    $region13: #{tpu_custom_call.1} parent=1 // pred_fallthru
      _
    // Predicated region
    $region14: #{tpu_custom_call.1} parent=1 // pred_check
      _
    $region15: #{tpu_custom_call.1} parent=1 // pred_check_branch
      %52 = sbr.rel (0) target = $region17
    $region16: #{tpu_custom_call.1} parent=1 // pred_region
      _
    $region17: #{tpu_custom_call.1} parent=1 // pred_fallthru
      _
    // Predicated region
    $region18: #{tpu_custom_call.1} parent=1 // pred_check
      _
    $region19: #{tpu_custom_call.1} parent=1 // pred_check_branch
      %54 = sbr.rel (0) target = $region21
    $region20: #{tpu_custom_call.1} parent=1 // pred_region
      _
    $region21: #{tpu_custom_call.1} parent=1 // pred_fallthru
      _
    // Predicated region
    $region22: #{tpu_custom_call.1} parent=1 // pred_check
      _
    $region23: #{tpu_custom_call.1} parent=1 // pred_check_branch
      %56 = sbr.rel (0) target = $region25
    $region24: #{tpu_custom_call.1} parent=1 // pred_region
      _
    $region25: #{tpu_custom_call.1} parent=1 // pred_fallthru
      _
    // Predicated region
    $region26: #{tpu_custom_call.1} parent=1 // pred_check
      _
    $region27: #{tpu_custom_call.1} parent=1 // pred_check_branch
      %58 = sbr.rel (0) target = $region29
    $region28: #{tpu_custom_call.1} parent=1 // pred_region
      _
    $region29: #{tpu_custom_call.1} parent=1 // pred_fallthru
      _
    // Predicated region
    $region30: #{tpu_custom_call.1} parent=1 // pred_check
      _
    $region31: #{tpu_custom_call.1} parent=1 // pred_check_branch
      %60 = sbr.rel (0) target = $region33
    $region32: #{tpu_custom_call.1} parent=1 // pred_region
      %61 = dma.done [#allocation4], 8192
    $region33: #{tpu_custom_call.1} parent=1 // pred_fallthru
      _
    // Predicated region
    $region34: #{tpu_custom_call.1} parent=1 // pred_check
      _
    $region35: #{tpu_custom_call.1} parent=1 // pred_check_branch
      %63 = sbr.rel (0) target = $region37
    $region36: #{tpu_custom_call.1} parent=1 // pred_region
      %64 = dma.done [#allocation7], 9216
    $region37: #{tpu_custom_call.1} parent=1 // pred_fallthru
      _
    // Predicated region
    $region38: #{tpu_custom_call.1} parent=1 // pred_check
      _
    $region39: #{tpu_custom_call.1} parent=1 // pred_check_branch
      %66 = sbr.rel (0) target = $region41
    $region40: #{tpu_custom_call.1} parent=1 // pred_region
      %67 = dma.done [#allocation7], 9216
    $region41: #{tpu_custom_call.1} parent=1 // pred_fallthru
      _
    %69 = vst [vmem:[#allocation2] sm:$0xff] 0.0
    %70 = vst [vmem:[#allocation2 + $0x8] sm:$0xff] 0.0
    %71 = vst [vmem:[#allocation2 + $0x10] sm:$0x3] 0.0
    %72 = vst [vmem:[#allocation2 + $0x18] sm:$0xff] 0.0
    %73 = vst [vmem:[#allocation2 + $0x20] sm:$0xff] 0.0
    %74 = vst [vmem:[#allocation2 + $0x28] sm:$0x3] 0.0
    %75 = vst [vmem:[#allocation2 + $0x30] sm:$0xff] 0.0
    %76 = vst [vmem:[#allocation2 + $0x38] sm:$0xff] 0.0
    %77 = vst [vmem:[#allocation2 + $0x40] sm:$0x3] 0.0
    %78 = vst [vmem:[#allocation2 + $0x48] sm:$0xff] 0.0
    %79 = vst [vmem:[#allocation2 + $0x50] sm:$0xff] 0.0
    %80 = vst [vmem:[#allocation2 + $0x58] sm:$0x3] 0.0
    %81 = vst [vmem:[#allocation2 + $0x60] sm:$0xff] 0.0
    %82 = vst [vmem:[#allocation2 + $0x68] sm:$0xff] 0.0
    %83 = vst [vmem:[#allocation2 + $0x70] sm:$0x3] 0.0
    %84 = vst [vmem:[#allocation2 + $0x78] sm:$0xff] 0.0
    %85 = vst [vmem:[#allocation2 + $0x80] sm:$0xff] 0.0
    %86 = vst [vmem:[#allocation2 + $0x88] sm:$0x3] 0.0
    %87 = vst [vmem:[#allocation2 + $0x90] sm:$0xff] 0.0
    %88 = vst [vmem:[#allocation2 + $0x98] sm:$0xff] 0.0
    %89 = vst [vmem:[#allocation2 + $0xa0] sm:$0x3] 0.0
    %90 = vst [vmem:[#allocation2 + $0xa8] sm:$0xff] 0.0
    %91 = vst [vmem:[#allocation2 + $0xb0] sm:$0xff] 0.0
    %92 = vst [vmem:[#allocation2 + $0xb8] sm:$0x3] 0.0
    %93 = vst [vmem:[#allocation2 + $0xc0] sm:$0xff] 0.0
    %94 = vst [vmem:[#allocation2 + $0xc8] sm:$0xff] 0.0
    %95 = vst [vmem:[#allocation2 + $0xd0] sm:$0x3] 0.0
    %96 = vst [vmem:[#allocation2 + $0xd8] sm:$0xff] 0.0
    %97 = vst [vmem:[#allocation2 + $0xe0] sm:$0xff] 0.0
    %98 = vst [vmem:[#allocation2 + $0xe8] sm:$0x3] 0.0
    %99 = vst [vmem:[#allocation2 + $0xf0] sm:$0xff] 0.0
    %100 = vst [vmem:[#allocation2 + $0xf8] sm:$0xff] 0.0
    %101 = vst [vmem:[#allocation2 + $0x100] sm:$0x3] 0.0
    %102 = vst [vmem:[#allocation2 + $0x108] sm:$0xff] 0.0
    %103 = vst [vmem:[#allocation2 + $0x110] sm:$0xff] 0.0
    %104 = vst [vmem:[#allocation2 + $0x118] sm:$0x3] 0.0
    %105 = vst [vmem:[#allocation2 + $0x120] sm:$0xff] 0.0
    %106 = vst [vmem:[#allocation2 + $0x128] sm:$0xff] 0.0
    %107 = vst [vmem:[#allocation2 + $0x130] sm:$0x3] 0.0
    %108 = vst [vmem:[#allocation2 + $0x138] sm:$0xff] 0.0
    %109 = vst [vmem:[#allocation2 + $0x140] sm:$0xff] 0.0
    %110 = vst [vmem:[#allocation2 + $0x148] sm:$0x3] 0.0
    %111 = vst [vmem:[#allocation2 + $0x150] sm:$0xff] 0.0
    %112 = vst [vmem:[#allocation2 + $0x158] sm:$0xff] 0.0
    %113 = vst [vmem:[#allocation2 + $0x160] sm:$0x3] 0.0
    %114 = vst [vmem:[#allocation2 + $0x168] sm:$0xff] 0.0
    %115 = vst [vmem:[#allocation2 + $0x170] sm:$0xff] 0.0
    %116 = vst [vmem:[#allocation2 + $0x178] sm:$0x3] 0.0
    %117 = vst [vmem:[#allocation2 + $0x180] sm:$0xff] 0.0
    %118 = vst [vmem:[#allocation2 + $0x188] sm:$0xff] 0.0
    %119 = vst [vmem:[#allocation2 + $0x190] sm:$0x3] 0.0
    %120 = vst [vmem:[#allocation2 + $0x198] sm:$0xff] 0.0
    %121 = vst [vmem:[#allocation2 + $0x1a0] sm:$0xff] 0.0
    %122 = vst [vmem:[#allocation2 + $0x1a8] sm:$0x3] 0.0
    %123 = vst [vmem:[#allocation2 + $0x1b0] sm:$0xff] 0.0
    %124 = vst [vmem:[#allocation2 + $0x1b8] sm:$0xff] 0.0
    %125 = vst [vmem:[#allocation2 + $0x1c0] sm:$0x3] 0.0
    %126 = vst [vmem:[#allocation2 + $0x1c8] sm:$0xff] 0.0
    %127 = vst [vmem:[#allocation2 + $0x1d0] sm:$0xff] 0.0
    %128 = vst [vmem:[#allocation2 + $0x1d8] sm:$0x3] 0.0
    %129 = vst [vmem:[#allocation2 + $0x1e0] sm:$0xff] 0.0
    %130 = vst [vmem:[#allocation2 + $0x1e8] sm:$0xff] 0.0
    %131 = vst [vmem:[#allocation2 + $0x1f0] sm:$0x3] 0.0
    %132 = vst [vmem:[#allocation2 + $0x1f8] sm:$0xff] 0.0
    %133 = vst [vmem:[#allocation2 + $0x200] sm:$0xff] 0.0
    %134 = vst [vmem:[#allocation2 + $0x208] sm:$0x3] 0.0
    %135 = vst [vmem:[#allocation2 + $0x210] sm:$0xff] 0.0
    %136 = vst [vmem:[#allocation2 + $0x218] sm:$0xff] 0.0
    %137 = vst [vmem:[#allocation2 + $0x220] sm:$0x3] 0.0
    %138 = vst [vmem:[#allocation2 + $0x228] sm:$0xff] 0.0
    %139 = vst [vmem:[#allocation2 + $0x230] sm:$0xff] 0.0
    %140 = vst [vmem:[#allocation2 + $0x238] sm:$0x3] 0.0
    %141 = vst [vmem:[#allocation2 + $0x240] sm:$0xff] 0.0
    %142 = vst [vmem:[#allocation2 + $0x248] sm:$0xff] 0.0
    %143 = vst [vmem:[#allocation2 + $0x250] sm:$0x3] 0.0
    %144 = vst [vmem:[#allocation2 + $0x258] sm:$0xff] 0.0
    %145 = vst [vmem:[#allocation2 + $0x260] sm:$0xff] 0.0
    %146 = vst [vmem:[#allocation2 + $0x268] sm:$0x3] 0.0
    %147 = vst [vmem:[#allocation2 + $0x270] sm:$0xff] 0.0
    %148 = vst [vmem:[#allocation2 + $0x278] sm:$0xff] 0.0
    %149 = vst [vmem:[#allocation2 + $0x280] sm:$0x3] 0.0
    %150 = vst [vmem:[#allocation2 + $0x288] sm:$0xff] 0.0
    %151 = vst [vmem:[#allocation2 + $0x290] sm:$0xff] 0.0
    %152 = vst [vmem:[#allocation2 + $0x298] sm:$0x3] 0.0
    %153 = vst [vmem:[#allocation2 + $0x2a0] sm:$0xff] 0.0
    %154 = vst [vmem:[#allocation2 + $0x2a8] sm:$0xff] 0.0
    %155 = vst [vmem:[#allocation2 + $0x2b0] sm:$0x3] 0.0
    %156 = vst [vmem:[#allocation2 + $0x2b8] sm:$0xff] 0.0
    %157 = vst [vmem:[#allocation2 + $0x2c0] sm:$0xff] 0.0
    %158 = vst [vmem:[#allocation2 + $0x2c8] sm:$0x3] 0.0
    %159 = vst [vmem:[#allocation2 + $0x2d0] sm:$0xff] 0.0
    %160 = vst [vmem:[#allocation2 + $0x2d8] sm:$0xff] 0.0
    %161 = vst [vmem:[#allocation2 + $0x2e0] sm:$0x3] 0.0
    %162 = vst [vmem:[#allocation2 + $0x2e8] sm:$0xff] 0.0
    %163 = vst [vmem:[#allocation2 + $0x2f0] sm:$0xff] 0.0
    %164 = vst [vmem:[#allocation2 + $0x2f8] sm:$0x3] 0.0
    %165 = vst [vmem:[#allocation2 + $0x300] sm:$0xff] 0.0
    %166 = vst [vmem:[#allocation2 + $0x308] sm:$0xff] 0.0
    %167 = vst [vmem:[#allocation2 + $0x310] sm:$0x3] 0.0
    %168 = vst [vmem:[#allocation2 + $0x318] sm:$0xff] 0.0
    %169 = vst [vmem:[#allocation2 + $0x320] sm:$0xff] 0.0
    %170 = vst [vmem:[#allocation2 + $0x328] sm:$0x3] 0.0
    %171 = vst [vmem:[#allocation2 + $0x330] sm:$0xff] 0.0
    %172 = vst [vmem:[#allocation2 + $0x338] sm:$0xff] 0.0
    %173 = vst [vmem:[#allocation2 + $0x340] sm:$0x3] 0.0
    %174 = vst [vmem:[#allocation2 + $0x348] sm:$0xff] 0.0
    %175 = vst [vmem:[#allocation2 + $0x350] sm:$0xff] 0.0
    %176 = vst [vmem:[#allocation2 + $0x358] sm:$0x3] 0.0
    %v177 = vld [vmem:[#allocation3] sm:$0xff]
    %v178 = vld [vmem:[#allocation3 + $0x8] sm:$0xff]
    %v179 = vld [vmem:[#allocation3 + $0x10] sm:$0xff]
    %v180 = vld [vmem:[#allocation3 + $0x18] sm:$0xff]
    %v181 = vld [vmem:[#allocation3 + $0x20] sm:$0xff]
    %v182 = vld [vmem:[#allocation3 + $0x28] sm:$0xff]
    %v183 = vld [vmem:[#allocation3 + $0x30] sm:$0xff]
    %v184 = vld [vmem:[#allocation3 + $0x38] sm:$0xff]
    %v185 = vld [vmem:[#allocation3 + $0x40] sm:$0xff]
    %v186 = vld [vmem:[#allocation3 + $0x48] sm:$0xff]
    %v187 = vld [vmem:[#allocation3 + $0x50] sm:$0xff]
    %v188 = vld [vmem:[#allocation3 + $0x58] sm:$0xff]
    %v189 = vld [vmem:[#allocation3 + $0x60] sm:$0xff]
    %v190 = vld [vmem:[#allocation3 + $0x68] sm:$0xff]
    %v191 = vld [vmem:[#allocation3 + $0x70] sm:$0xff]
    %v192 = vld [vmem:[#allocation3 + $0x78] sm:$0xff]
    %v193 = vld [vmem:[#allocation3 + $0x80] sm:$0xff]
    %v194 = vld [vmem:[#allocation3 + $0x88] sm:$0xff]
    %v195 = vld [vmem:[#allocation3 + $0x90] sm:$0xff]
    %v196 = vld [vmem:[#allocation3 + $0x98] sm:$0xff]
    %v197 = vld [vmem:[#allocation3 + $0xa0] sm:$0xff]
    %v198 = vld [vmem:[#allocation3 + $0xa8] sm:$0xff]
    %v199 = vld [vmem:[#allocation3 + $0xb0] sm:$0xff]
    %v200 = vld [vmem:[#allocation3 + $0xb8] sm:$0xff]
    %v201 = vld [vmem:[#allocation3 + $0xc0] sm:$0xff]
    %v202 = vld [vmem:[#allocation3 + $0xc8] sm:$0xff]
    %v203 = vld [vmem:[#allocation3 + $0xd0] sm:$0xff]
    %v204 = vld [vmem:[#allocation3 + $0xd8] sm:$0xff]
    %v205 = vld [vmem:[#allocation3 + $0xe0] sm:$0xff]
    %v206 = vld [vmem:[#allocation3 + $0xe8] sm:$0xff]
    %v207 = vld [vmem:[#allocation3 + $0xf0] sm:$0xff]
    %v208 = vld [vmem:[#allocation3 + $0xf8] sm:$0xff]
    %v209 = vld [vmem:[#allocation3 + $0x100] sm:$0xff]
    %v210 = vld [vmem:[#allocation3 + $0x108] sm:$0xff]
    %v211 = vld [vmem:[#allocation3 + $0x110] sm:$0xff]
    %v212 = vld [vmem:[#allocation3 + $0x118] sm:$0xff]
    %v213 = vld [vmem:[#allocation3 + $0x120] sm:$0xff]
    %v214 = vld [vmem:[#allocation3 + $0x128] sm:$0xff]
    %v215 = vld [vmem:[#allocation3 + $0x130] sm:$0xff]
    %v216 = vld [vmem:[#allocation3 + $0x138] sm:$0xff]
    %v217 = vld [vmem:[#allocation3 + $0x140] sm:$0xff]
    %v218 = vld [vmem:[#allocation3 + $0x148] sm:$0xff]
    %v219 = vld [vmem:[#allocation3 + $0x150] sm:$0xff]
    %v220 = vld [vmem:[#allocation3 + $0x158] sm:$0xff]
    %v221 = vld [vmem:[#allocation3 + $0x160] sm:$0xff]
    %v222 = vld [vmem:[#allocation3 + $0x168] sm:$0xff]
    %v223 = vld [vmem:[#allocation3 + $0x170] sm:$0xff]
    %v224 = vld [vmem:[#allocation3 + $0x178] sm:$0xff]
    %v225 = vld [vmem:[#allocation3 + $0x180] sm:$0xff]
    %v226 = vld [vmem:[#allocation3 + $0x188] sm:$0xff]
    %v227 = vld [vmem:[#allocation3 + $0x190] sm:$0xff]
    %v228 = vld [vmem:[#allocation3 + $0x198] sm:$0xff]
    %v229 = vld [vmem:[#allocation3 + $0x1a0] sm:$0xff]
    %v230 = vld [vmem:[#allocation3 + $0x1a8] sm:$0xff]
    %v231 = vld [vmem:[#allocation3 + $0x1b0] sm:$0xff]
    %v232 = vld [vmem:[#allocation3 + $0x1b8] sm:$0xff]
    %v233 = vld [vmem:[#allocation3 + $0x1c0] sm:$0xff]
    %v234 = vld [vmem:[#allocation3 + $0x1c8] sm:$0xff]
    %v235 = vld [vmem:[#allocation3 + $0x1d0] sm:$0xff]
    %v236 = vld [vmem:[#allocation3 + $0x1d8] sm:$0xff]
    %v237 = vld [vmem:[#allocation3 + $0x1e0] sm:$0xff]
    %v238 = vld [vmem:[#allocation3 + $0x1e8] sm:$0xff]
    %v239 = vld [vmem:[#allocation3 + $0x1f0] sm:$0xff]
    %v240 = vld [vmem:[#allocation3 + $0x1f8] sm:$0xff]
    %s241 = scalar_lea.vmem [#allocation2], 24
    %242 = vst [vmem:[%s241 + $0x1] sm:$0xff] %v177
    %243 = vst [vmem:[%s241 + $0x9] sm:$0xff] %v178
    %244 = vst [vmem:[%s241 + $0x19] sm:$0xff] %v179
    %245 = vst [vmem:[%s241 + $0x21] sm:$0xff] %v180
    %246 = vst [vmem:[%s241 + $0x31] sm:$0xff] %v181
    %247 = vst [vmem:[%s241 + $0x39] sm:$0xff] %v182
    %248 = vst [vmem:[%s241 + $0x49] sm:$0xff] %v183
    %249 = vst [vmem:[%s241 + $0x51] sm:$0xff] %v184
    %250 = vst [vmem:[%s241 + $0x61] sm:$0xff] %v185
    %251 = vst [vmem:[%s241 + $0x69] sm:$0xff] %v186
    %252 = vst [vmem:[%s241 + $0x79] sm:$0xff] %v187
    %253 = vst [vmem:[%s241 + $0x81] sm:$0xff] %v188
    %254 = vst [vmem:[%s241 + $0x91] sm:$0xff] %v189
    %255 = vst [vmem:[%s241 + $0x99] sm:$0xff] %v190
    %256 = vst [vmem:[%s241 + $0xa9] sm:$0xff] %v191
    %257 = vst [vmem:[%s241 + $0xb1] sm:$0xff] %v192
    %258 = vst [vmem:[%s241 + $0xc1] sm:$0xff] %v193
    %259 = vst [vmem:[%s241 + $0xc9] sm:$0xff] %v194
    %260 = vst [vmem:[%s241 + $0xd9] sm:$0xff] %v195
    %261 = vst [vmem:[%s241 + $0xe1] sm:$0xff] %v196
    %262 = vst [vmem:[%s241 + $0xf1] sm:$0xff] %v197
    %263 = vst [vmem:[%s241 + $0xf9] sm:$0xff] %v198
    %264 = vst [vmem:[%s241 + $0x109] sm:$0xff] %v199
    %265 = vst [vmem:[%s241 + $0x111] sm:$0xff] %v200
    %266 = vst [vmem:[%s241 + $0x121] sm:$0xff] %v201
    %267 = vst [vmem:[%s241 + $0x129] sm:$0xff] %v202
    %268 = vst [vmem:[%s241 + $0x139] sm:$0xff] %v203
    %269 = vst [vmem:[%s241 + $0x141] sm:$0xff] %v204
    %270 = vst [vmem:[%s241 + $0x151] sm:$0xff] %v205
    %271 = vst [vmem:[%s241 + $0x159] sm:$0xff] %v206
    %272 = vst [vmem:[%s241 + $0x169] sm:$0xff] %v207
    %273 = vst [vmem:[%s241 + $0x171] sm:$0xff] %v208
    %274 = vst [vmem:[%s241 + $0x1b1] sm:$0xff] %v209
    %275 = vst [vmem:[%s241 + $0x1b9] sm:$0xff] %v210
    %276 = vst [vmem:[%s241 + $0x1c9] sm:$0xff] %v211
    %277 = vst [vmem:[%s241 + $0x1d1] sm:$0xff] %v212
    %278 = vst [vmem:[%s241 + $0x1e1] sm:$0xff] %v213
    %279 = vst [vmem:[%s241 + $0x1e9] sm:$0xff] %v214
    %280 = vst [vmem:[%s241 + $0x1f9] sm:$0xff] %v215
    %281 = vst [vmem:[%s241 + $0x201] sm:$0xff] %v216
    %282 = vst [vmem:[%s241 + $0x211] sm:$0xff] %v217
    %283 = vst [vmem:[%s241 + $0x219] sm:$0xff] %v218
    %284 = vst [vmem:[%s241 + $0x229] sm:$0xff] %v219
    %285 = vst [vmem:[%s241 + $0x231] sm:$0xff] %v220
    %286 = vst [vmem:[%s241 + $0x241] sm:$0xff] %v221
    %287 = vst [vmem:[%s241 + $0x249] sm:$0xff] %v222
    %288 = vst [vmem:[%s241 + $0x259] sm:$0xff] %v223
    %289 = vst [vmem:[%s241 + $0x261] sm:$0xff] %v224
    %290 = vst [vmem:[%s241 + $0x271] sm:$0xff] %v225
    %291 = vst [vmem:[%s241 + $0x279] sm:$0xff] %v226
    %292 = vst [vmem:[%s241 + $0x289] sm:$0xff] %v227
    %293 = vst [vmem:[%s241 + $0x291] sm:$0xff] %v228
    %294 = vst [vmem:[%s241 + $0x2a1] sm:$0xff] %v229
    %295 = vst [vmem:[%s241 + $0x2a9] sm:$0xff] %v230
    %296 = vst [vmem:[%s241 + $0x2b9] sm:$0xff] %v231
    %297 = vst [vmem:[%s241 + $0x2c1] sm:$0xff] %v232
    %298 = vst [vmem:[%s241 + $0x2d1] sm:$0xff] %v233
    %299 = vst [vmem:[%s241 + $0x2d9] sm:$0xff] %v234
    %300 = vst [vmem:[%s241 + $0x2e9] sm:$0xff] %v235
    %301 = vst [vmem:[%s241 + $0x2f1] sm:$0xff] %v236
    %302 = vst [vmem:[%s241 + $0x301] sm:$0xff] %v237
    %303 = vst [vmem:[%s241 + $0x309] sm:$0xff] %v238
    %304 = vst [vmem:[%s241 + $0x319] sm:$0xff] %v239
    %305 = vst [vmem:[%s241 + $0x321] sm:$0xff] %v240
    %v306 = vld [vmem:[#allocation2] sm:$0xff]
    %v307 = vld [vmem:[#allocation2 + $0x8] sm:$0xff]
    %v308 = vld [vmem:[#allocation2 + $0x10] sm:$0x3]
    %v309 = vld [vmem:[#allocation2 + $0x18] sm:$0xff]
    %v310 = vld [vmem:[#allocation2 + $0x20] sm:$0xff]
    %v311 = vld [vmem:[#allocation2 + $0x28] sm:$0x3]
    %v312 = vld [vmem:[#allocation2 + $0x30] sm:$0xff]
    %v313 = vld [vmem:[#allocation2 + $0x38] sm:$0xff]
    %v314 = vld [vmem:[#allocation2 + $0x40] sm:$0x3]
    %v315 = vld [vmem:[#allocation2 + $0x48] sm:$0xff]
    %v316 = vld [vmem:[#allocation2 + $0x50] sm:$0xff]
    %v317 = vld [vmem:[#allocation2 + $0x58] sm:$0x3]
    %v318 = vld [vmem:[#allocation2 + $0x60] sm:$0xff]
    %v319 = vld [vmem:[#allocation2 + $0x68] sm:$0xff]
    %v320 = vld [vmem:[#allocation2 + $0x70] sm:$0x3]
    %v321 = vld [vmem:[#allocation2 + $0x78] sm:$0xff]
    %v322 = vld [vmem:[#allocation2 + $0x80] sm:$0xff]
    %v323 = vld [vmem:[#allocation2 + $0x88] sm:$0x3]
    %v324 = vld [vmem:[#allocation2 + $0x90] sm:$0xff]
    %v325 = vld [vmem:[#allocation2 + $0x98] sm:$0xff]
    %v326 = vld [vmem:[#allocation2 + $0xa0] sm:$0x3]
    %v327 = vld [vmem:[#allocation2 + $0xa8] sm:$0xff]
    %v328 = vld [vmem:[#allocation2 + $0xb0] sm:$0xff]
    %v329 = vld [vmem:[#allocation2 + $0xb8] sm:$0x3]
    %v330 = vld [vmem:[#allocation2 + $0xc0] sm:$0xff]
    %v331 = vld [vmem:[#allocation2 + $0xc8] sm:$0xff]
    %v332 = vld [vmem:[#allocation2 + $0xd0] sm:$0x3]
    %v333 = vld [vmem:[#allocation2 + $0xd8] sm:$0xff]
    %v334 = vld [vmem:[#allocation2 + $0xe0] sm:$0xff]
    %v335 = vld [vmem:[#allocation2 + $0xe8] sm:$0x3]
    %v336 = vld [vmem:[#allocation2 + $0xf0] sm:$0xff]
    %v337 = vld [vmem:[#allocation2 + $0xf8] sm:$0xff]
    %v338 = vld [vmem:[#allocation2 + $0x100] sm:$0x3]
    %v339 = vld [vmem:[#allocation2 + $0x108] sm:$0xff]
    %v340 = vld [vmem:[#allocation2 + $0x110] sm:$0xff]
    %v341 = vld [vmem:[#allocation2 + $0x118] sm:$0x3]
    %v342 = vld [vmem:[#allocation2 + $0x120] sm:$0xff]
    %v343 = vld [vmem:[#allocation2 + $0x128] sm:$0xff]
    %v344 = vld [vmem:[#allocation2 + $0x130] sm:$0x3]
    %v345 = vld [vmem:[#allocation2 + $0x138] sm:$0xff]
    %v346 = vld [vmem:[#allocation2 + $0x140] sm:$0xff]
    %v347 = vld [vmem:[#allocation2 + $0x148] sm:$0x3]
    %v348 = vld [vmem:[#allocation2 + $0x150] sm:$0xff]
    %v349 = vld [vmem:[#allocation2 + $0x158] sm:$0xff]
    %v350 = vld [vmem:[#allocation2 + $0x160] sm:$0x3]
    %v351 = vld [vmem:[#allocation2 + $0x168] sm:$0xff]
    %v352 = vld [vmem:[#allocation2 + $0x170] sm:$0xff]
    %v353 = vld [vmem:[#allocation2 + $0x178] sm:$0x3]
    %v354 = vld [vmem:[#allocation2 + $0x180] sm:$0xff]
    %v355 = vld [vmem:[#allocation2 + $0x188] sm:$0xff]
    %v356 = vld [vmem:[#allocation2 + $0x190] sm:$0x3]
    %v357 = vld [vmem:[#allocation2 + $0x198] sm:$0xff]
    %v358 = vld [vmem:[#allocation2 + $0x1a0] sm:$0xff]
    %v359 = vld [vmem:[#allocation2 + $0x1a8] sm:$0x3]
    %v360 = vld [vmem:[#allocation2 + $0x1b0] sm:$0xff]
    %v361 = vld [vmem:[#allocation2 + $0x1b8] sm:$0xff]
    %v362 = vld [vmem:[#allocation2 + $0x1c0] sm:$0x3]
    %v363 = vld [vmem:[#allocation2 + $0x1c8] sm:$0xff]
    %v364 = vld [vmem:[#allocation2 + $0x1d0] sm:$0xff]
    %v365 = vld [vmem:[#allocation2 + $0x1d8] sm:$0x3]
    %v366 = vld [vmem:[#allocation2 + $0x1e0] sm:$0xff]
    %v367 = vld [vmem:[#allocation2 + $0x1e8] sm:$0xff]
    %v368 = vld [vmem:[#allocation2 + $0x1f0] sm:$0x3]
    %v369 = vld [vmem:[#allocation2 + $0x1f8] sm:$0xff]
    %v370 = vld [vmem:[#allocation2 + $0x200] sm:$0xff]
    %v371 = vld [vmem:[#allocation2 + $0x208] sm:$0x3]
    %v372 = vld [vmem:[#allocation2 + $0x210] sm:$0xff]
    %v373 = vld [vmem:[#allocation2 + $0x218] sm:$0xff]
    %v374 = vld [vmem:[#allocation2 + $0x220] sm:$0x3]
    %v375 = vld [vmem:[#allocation2 + $0x228] sm:$0xff]
    %v376 = vld [vmem:[#allocation2 + $0x230] sm:$0xff]
    %v377 = vld [vmem:[#allocation2 + $0x238] sm:$0x3]
    %v378 = vld [vmem:[#allocation2 + $0x240] sm:$0xff]
    %v379 = vld [vmem:[#allocation2 + $0x248] sm:$0xff]
    %v380 = vld [vmem:[#allocation2 + $0x250] sm:$0x3]
    %v381 = vld [vmem:[#allocation2 + $0x258] sm:$0xff]
    %v382 = vld [vmem:[#allocation2 + $0x260] sm:$0xff]
    %v383 = vld [vmem:[#allocation2 + $0x268] sm:$0x3]
    %v384 = vld [vmem:[#allocation2 + $0x270] sm:$0xff]
    %v385 = vld [vmem:[#allocation2 + $0x278] sm:$0xff]
    %v386 = vld [vmem:[#allocation2 + $0x280] sm:$0x3]
    %v387 = vld [vmem:[#allocation2 + $0x288] sm:$0xff]
    %v388 = vld [vmem:[#allocation2 + $0x290] sm:$0xff]
    %v389 = vld [vmem:[#allocation2 + $0x298] sm:$0x3]
    %v390 = vld [vmem:[#allocation2 + $0x2a0] sm:$0xff]
    %v391 = vld [vmem:[#allocation2 + $0x2a8] sm:$0xff]
    %v392 = vld [vmem:[#allocation2 + $0x2b0] sm:$0x3]
    %v393 = vld [vmem:[#allocation2 + $0x2b8] sm:$0xff]
    %v394 = vld [vmem:[#allocation2 + $0x2c0] sm:$0xff]
    %v395 = vld [vmem:[#allocation2 + $0x2c8] sm:$0x3]
    %v396 = vld [vmem:[#allocation2 + $0x2d0] sm:$0xff]
    %v397 = vld [vmem:[#allocation2 + $0x2d8] sm:$0xff]
    %v398 = vld [vmem:[#allocation2 + $0x2e0] sm:$0x3]
    %v399 = vld [vmem:[#allocation2 + $0x2e8] sm:$0xff]
    %v400 = vld [vmem:[#allocation2 + $0x2f0] sm:$0xff]
    %v401 = vld [vmem:[#allocation2 + $0x2f8] sm:$0x3]
    %v402 = vld [vmem:[#allocation2 + $0x300] sm:$0xff]
    %v403 = vld [vmem:[#allocation2 + $0x308] sm:$0xff]
    %v404 = vld [vmem:[#allocation2 + $0x310] sm:$0x3]
    %v405 = vld [vmem:[#allocation2 + $0x318] sm:$0xff]
    %v406 = vld [vmem:[#allocation2 + $0x320] sm:$0xff]
    %v407 = vld [vmem:[#allocation2 + $0x328] sm:$0x3]
    %v408 = vld [vmem:[#allocation2 + $0x330] sm:$0xff]
    %v409 = vld [vmem:[#allocation2 + $0x338] sm:$0xff]
    %v410 = vld [vmem:[#allocation2 + $0x340] sm:$0x3]
    %v411 = vld [vmem:[#allocation2 + $0x348] sm:$0xff]
    %v412 = vld [vmem:[#allocation2 + $0x350] sm:$0xff]
    %v413 = vld [vmem:[#allocation2 + $0x358] sm:$0x3]
    %vm510 = vcmask 1046528
    %v511 = vrot.slane %v306, 1
    %v512 = vrot.slane %v307, 1
    %v513 = vsel %vm510, %v511, %v512
    %v514 = vrot.slane %v308, 1
    %v515 = vsel %vm510, %v512, %v514
    %v516 = vrot.slane %v309, 1
    %v517 = vrot.slane %v310, 1
    %v518 = vsel %vm510, %v516, %v517
    %v519 = vrot.slane %v311, 1
    %v520 = vsel %vm510, %v517, %v519
    %v521 = vrot.slane %v312, 1
    %v522 = vrot.slane %v313, 1
    %v523 = vsel %vm510, %v521, %v522
    %v524 = vrot.slane %v314, 1
    %v525 = vsel %vm510, %v522, %v524
    %v526 = vrot.slane %v315, 1
    %v527 = vrot.slane %v316, 1
    %v528 = vsel %vm510, %v526, %v527
    %v529 = vrot.slane %v317, 1
    %v530 = vsel %vm510, %v527, %v529
    %v531 = vrot.slane %v318, 1
    %v532 = vrot.slane %v319, 1
    %v533 = vsel %vm510, %v531, %v532
    %v534 = vrot.slane %v320, 1
    %v535 = vsel %vm510, %v532, %v534
    %v536 = vrot.slane %v321, 1
    %v537 = vrot.slane %v322, 1
    %v538 = vsel %vm510, %v536, %v537
    %v539 = vrot.slane %v323, 1
    %v540 = vsel %vm510, %v537, %v539
    %v541 = vrot.slane %v324, 1
    %v542 = vrot.slane %v325, 1
    %v543 = vsel %vm510, %v541, %v542
    %v544 = vrot.slane %v326, 1
    %v545 = vsel %vm510, %v542, %v544
    %v546 = vrot.slane %v327, 1
    %v547 = vrot.slane %v328, 1
    %v548 = vsel %vm510, %v546, %v547
    %v549 = vrot.slane %v329, 1
    %v550 = vsel %vm510, %v547, %v549
    %v551 = vrot.slane %v330, 1
    %v552 = vrot.slane %v331, 1
    %v553 = vsel %vm510, %v551, %v552
    %v554 = vrot.slane %v332, 1
    %v555 = vsel %vm510, %v552, %v554
    %v556 = vrot.slane %v333, 1
    %v557 = vrot.slane %v334, 1
    %v558 = vsel %vm510, %v556, %v557
    %v559 = vrot.slane %v335, 1
    %v560 = vsel %vm510, %v557, %v559
    %v561 = vrot.slane %v336, 1
    %v562 = vrot.slane %v337, 1
    %v563 = vsel %vm510, %v561, %v562
    %v564 = vrot.slane %v338, 1
    %v565 = vsel %vm510, %v562, %v564
    %v566 = vrot.slane %v339, 1
    %v567 = vrot.slane %v340, 1
    %v568 = vsel %vm510, %v566, %v567
    %v569 = vrot.slane %v341, 1
    %v570 = vsel %vm510, %v567, %v569
    %v571 = vrot.slane %v342, 1
    %v572 = vrot.slane %v343, 1
    %v573 = vsel %vm510, %v571, %v572
    %v574 = vrot.slane %v344, 1
    %v575 = vsel %vm510, %v572, %v574
    %v576 = vrot.slane %v345, 1
    %v577 = vrot.slane %v346, 1
    %v578 = vsel %vm510, %v576, %v577
    %v579 = vrot.slane %v347, 1
    %v580 = vsel %vm510, %v577, %v579
    %v581 = vrot.slane %v348, 1
    %v582 = vrot.slane %v349, 1
    %v583 = vsel %vm510, %v581, %v582
    %v584 = vrot.slane %v350, 1
    %v585 = vsel %vm510, %v582, %v584
    %v586 = vrot.slane %v351, 1
    %v587 = vrot.slane %v352, 1
    %v588 = vsel %vm510, %v586, %v587
    %v589 = vrot.slane %v353, 1
    %v590 = vsel %vm510, %v587, %v589
    %v591 = vrot.slane %v360, 1
    %v592 = vrot.slane %v361, 1
    %v593 = vsel %vm510, %v591, %v592
    %v594 = vrot.slane %v362, 1
    %v595 = vsel %vm510, %v592, %v594
    %v596 = vrot.slane %v363, 1
    %v597 = vrot.slane %v364, 1
    %v598 = vsel %vm510, %v596, %v597
    %v599 = vrot.slane %v365, 1
    %v600 = vsel %vm510, %v597, %v599
    %v601 = vrot.slane %v366, 1
    %v602 = vrot.slane %v367, 1
    %v603 = vsel %vm510, %v601, %v602
    %v604 = vrot.slane %v368, 1
    %v605 = vsel %vm510, %v602, %v604
    %v606 = vrot.slane %v369, 1
    %v607 = vrot.slane %v370, 1
    %v608 = vsel %vm510, %v606, %v607
    %v609 = vrot.slane %v371, 1
    %v610 = vsel %vm510, %v607, %v609
    %v611 = vrot.slane %v372, 1
    %v612 = vrot.slane %v373, 1
    %v613 = vsel %vm510, %v611, %v612
    %v614 = vrot.slane %v374, 1
    %v615 = vsel %vm510, %v612, %v614
    %v616 = vrot.slane %v375, 1
    %v617 = vrot.slane %v376, 1
    %v618 = vsel %vm510, %v616, %v617
    %v619 = vrot.slane %v377, 1
    %v620 = vsel %vm510, %v617, %v619
    %v621 = vrot.slane %v378, 1
    %v622 = vrot.slane %v379, 1
    %v623 = vsel %vm510, %v621, %v622
    %v624 = vrot.slane %v380, 1
    %v625 = vsel %vm510, %v622, %v624
    %v626 = vrot.slane %v381, 1
    %v627 = vrot.slane %v382, 1
    %v628 = vsel %vm510, %v626, %v627
    %v629 = vrot.slane %v383, 1
    %v630 = vsel %vm510, %v627, %v629
    %v631 = vrot.slane %v384, 1
    %v632 = vrot.slane %v385, 1
    %v633 = vsel %vm510, %v631, %v632
    %v634 = vrot.slane %v386, 1
    %v635 = vsel %vm510, %v632, %v634
    %v636 = vrot.slane %v387, 1
    %v637 = vrot.slane %v388, 1
    %v638 = vsel %vm510, %v636, %v637
    %v639 = vrot.slane %v389, 1
    %v640 = vsel %vm510, %v637, %v639
    %v641 = vrot.slane %v390, 1
    %v642 = vrot.slane %v391, 1
    %v643 = vsel %vm510, %v641, %v642
    %v644 = vrot.slane %v392, 1
    %v645 = vsel %vm510, %v642, %v644
    %v646 = vrot.slane %v393, 1
    %v647 = vrot.slane %v394, 1
    %v648 = vsel %vm510, %v646, %v647
    %v649 = vrot.slane %v395, 1
    %v650 = vsel %vm510, %v647, %v649
    %v651 = vrot.slane %v396, 1
    %v652 = vrot.slane %v397, 1
    %v653 = vsel %vm510, %v651, %v652
    %v654 = vrot.slane %v398, 1
    %v655 = vsel %vm510, %v652, %v654
    %v656 = vrot.slane %v399, 1
    %v657 = vrot.slane %v400, 1
    %v658 = vsel %vm510, %v656, %v657
    %v659 = vrot.slane %v401, 1
    %v660 = vsel %vm510, %v657, %v659
    %v661 = vrot.slane %v402, 1
    %v662 = vrot.slane %v403, 1
    %v663 = vsel %vm510, %v661, %v662
    %v664 = vrot.slane %v404, 1
    %v665 = vsel %vm510, %v662, %v664
    %v666 = vrot.slane %v405, 1
    %v667 = vrot.slane %v406, 1
    %v668 = vsel %vm510, %v666, %v667
    %v669 = vrot.slane %v407, 1
    %v670 = vsel %vm510, %v667, %v669
    %vm735 = vcmask 1045504
    %v736 = vrot.slane %v306, 2
    %v737 = vrot.slane %v307, 2
    %v738 = vsel %vm735, %v736, %v737
    %v739 = vrot.slane %v308, 2
    %v740 = vsel %vm735, %v737, %v739
    %v741 = vrot.slane %v309, 2
    %v742 = vrot.slane %v310, 2
    %v743 = vsel %vm735, %v741, %v742
    %v744 = vrot.slane %v311, 2
    %v745 = vsel %vm735, %v742, %v744
    %v746 = vrot.slane %v312, 2
    %v747 = vrot.slane %v313, 2
    %v748 = vsel %vm735, %v746, %v747
    %v749 = vrot.slane %v314, 2
    %v750 = vsel %vm735, %v747, %v749
    %v751 = vrot.slane %v315, 2
    %v752 = vrot.slane %v316, 2
    %v753 = vsel %vm735, %v751, %v752
    %v754 = vrot.slane %v317, 2
    %v755 = vsel %vm735, %v752, %v754
    %v756 = vrot.slane %v318, 2
    %v757 = vrot.slane %v319, 2
    %v758 = vsel %vm735, %v756, %v757
    %v759 = vrot.slane %v320, 2
    %v760 = vsel %vm735, %v757, %v759
    %v761 = vrot.slane %v321, 2
    %v762 = vrot.slane %v322, 2
    %v763 = vsel %vm735, %v761, %v762
    %v764 = vrot.slane %v323, 2
    %v765 = vsel %vm735, %v762, %v764
    %v766 = vrot.slane %v324, 2
    %v767 = vrot.slane %v325, 2
    %v768 = vsel %vm735, %v766, %v767
    %v769 = vrot.slane %v326, 2
    %v770 = vsel %vm735, %v767, %v769
    %v771 = vrot.slane %v327, 2
    %v772 = vrot.slane %v328, 2
    %v773 = vsel %vm735, %v771, %v772
    %v774 = vrot.slane %v329, 2
    %v775 = vsel %vm735, %v772, %v774
    %v776 = vrot.slane %v330, 2
    %v777 = vrot.slane %v331, 2
    %v778 = vsel %vm735, %v776, %v777
    %v779 = vrot.slane %v332, 2
    %v780 = vsel %vm735, %v777, %v779
    %v781 = vrot.slane %v333, 2
    %v782 = vrot.slane %v334, 2
    %v783 = vsel %vm735, %v781, %v782
    %v784 = vrot.slane %v335, 2
    %v785 = vsel %vm735, %v782, %v784
    %v786 = vrot.slane %v336, 2
    %v787 = vrot.slane %v337, 2
    %v788 = vsel %vm735, %v786, %v787
    %v789 = vrot.slane %v338, 2
    %v790 = vsel %vm735, %v787, %v789
    %v791 = vrot.slane %v339, 2
    %v792 = vrot.slane %v340, 2
    %v793 = vsel %vm735, %v791, %v792
    %v794 = vrot.slane %v341, 2
    %v795 = vsel %vm735, %v792, %v794
    %v796 = vrot.slane %v342, 2
    %v797 = vrot.slane %v343, 2
    %v798 = vsel %vm735, %v796, %v797
    %v799 = vrot.slane %v344, 2
    %v800 = vsel %vm735, %v797, %v799
    %v801 = vrot.slane %v345, 2
    %v802 = vrot.slane %v346, 2
    %v803 = vsel %vm735, %v801, %v802
    %v804 = vrot.slane %v347, 2
    %v805 = vsel %vm735, %v802, %v804
    %v806 = vrot.slane %v348, 2
    %v807 = vrot.slane %v349, 2
    %v808 = vsel %vm735, %v806, %v807
    %v809 = vrot.slane %v350, 2
    %v810 = vsel %vm735, %v807, %v809
    %v811 = vrot.slane %v351, 2
    %v812 = vrot.slane %v352, 2
    %v813 = vsel %vm735, %v811, %v812
    %v814 = vrot.slane %v353, 2
    %v815 = vsel %vm735, %v812, %v814
    %v816 = vrot.slane %v360, 2
    %v817 = vrot.slane %v361, 2
    %v818 = vsel %vm735, %v816, %v817
    %v819 = vrot.slane %v362, 2
    %v820 = vsel %vm735, %v817, %v819
    %v821 = vrot.slane %v363, 2
    %v822 = vrot.slane %v364, 2
    %v823 = vsel %vm735, %v821, %v822
    %v824 = vrot.slane %v365, 2
    %v825 = vsel %vm735, %v822, %v824
    %v826 = vrot.slane %v366, 2
    %v827 = vrot.slane %v367, 2
    %v828 = vsel %vm735, %v826, %v827
    %v829 = vrot.slane %v368, 2
    %v830 = vsel %vm735, %v827, %v829
    %v831 = vrot.slane %v369, 2
    %v832 = vrot.slane %v370, 2
    %v833 = vsel %vm735, %v831, %v832
    %v834 = vrot.slane %v371, 2
    %v835 = vsel %vm735, %v832, %v834
    %v836 = vrot.slane %v372, 2
    %v837 = vrot.slane %v373, 2
    %v838 = vsel %vm735, %v836, %v837
    %v839 = vrot.slane %v374, 2
    %v840 = vsel %vm735, %v837, %v839
    %v841 = vrot.slane %v375, 2
    %v842 = vrot.slane %v376, 2
    %v843 = vsel %vm735, %v841, %v842
    %v844 = vrot.slane %v377, 2
    %v845 = vsel %vm735, %v842, %v844
    %v846 = vrot.slane %v378, 2
    %v847 = vrot.slane %v379, 2
    %v848 = vsel %vm735, %v846, %v847
    %v849 = vrot.slane %v380, 2
    %v850 = vsel %vm735, %v847, %v849
    %v851 = vrot.slane %v381, 2
    %v852 = vrot.slane %v382, 2
    %v853 = vsel %vm735, %v851, %v852
    %v854 = vrot.slane %v383, 2
    %v855 = vsel %vm735, %v852, %v854
    %v856 = vrot.slane %v384, 2
    %v857 = vrot.slane %v385, 2
    %v858 = vsel %vm735, %v856, %v857
    %v859 = vrot.slane %v386, 2
    %v860 = vsel %vm735, %v857, %v859
    %v861 = vrot.slane %v387, 2
    %v862 = vrot.slane %v388, 2
    %v863 = vsel %vm735, %v861, %v862
    %v864 = vrot.slane %v389, 2
    %v865 = vsel %vm735, %v862, %v864
    %v866 = vrot.slane %v390, 2
    %v867 = vrot.slane %v391, 2
    %v868 = vsel %vm735, %v866, %v867
    %v869 = vrot.slane %v392, 2
    %v870 = vsel %vm735, %v867, %v869
    %v871 = vrot.slane %v393, 2
    %v872 = vrot.slane %v394, 2
    %v873 = vsel %vm735, %v871, %v872
    %v874 = vrot.slane %v395, 2
    %v875 = vsel %vm735, %v872, %v874
    %v876 = vrot.slane %v396, 2
    %v877 = vrot.slane %v397, 2
    %v878 = vsel %vm735, %v876, %v877
    %v879 = vrot.slane %v398, 2
    %v880 = vsel %vm735, %v877, %v879
    %v881 = vrot.slane %v399, 2
    %v882 = vrot.slane %v400, 2
    %v883 = vsel %vm735, %v881, %v882
    %v884 = vrot.slane %v401, 2
    %v885 = vsel %vm735, %v882, %v884
    %v886 = vrot.slane %v402, 2
    %v887 = vrot.slane %v403, 2
    %v888 = vsel %vm735, %v886, %v887
    %v889 = vrot.slane %v404, 2
    %v890 = vsel %vm735, %v887, %v889
    %v891 = vrot.slane %v405, 2
    %v892 = vrot.slane %v406, 2
    %v893 = vsel %vm735, %v891, %v892
    %v894 = vrot.slane %v407, 2
    %v895 = vsel %vm735, %v892, %v894
    %v966 = vrot.slane %v354, 1
    %v967 = vrot.slane %v355, 1
    %v968 = vsel %vm510, %v966, %v967
    %v969 = vrot.slane %v356, 1
    %v970 = vsel %vm510, %v967, %v969
    %v971 = vrot.slane %v408, 1
    %v972 = vrot.slane %v409, 1
    %v973 = vsel %vm510, %v971, %v972
    %v974 = vrot.slane %v410, 1
    %v975 = vsel %vm510, %v972, %v974
    %v980 = vrot.slane %v354, 2
    %v981 = vrot.slane %v355, 2
    %v982 = vsel %vm735, %v980, %v981
    %v983 = vrot.slane %v356, 2
    %v984 = vsel %vm735, %v981, %v983
    %v985 = vrot.slane %v408, 2
    %v986 = vrot.slane %v409, 2
    %v987 = vsel %vm735, %v985, %v986
    %v988 = vrot.slane %v410, 2
    %v989 = vsel %vm735, %v986, %v988
    %v1000 = vrot.slane %v357, 1
    %v1001 = vrot.slane %v358, 1
    %v1002 = vsel %vm510, %v1000, %v1001
    %v1003 = vrot.slane %v359, 1
    %v1004 = vsel %vm510, %v1001, %v1003
    %v1005 = vrot.slane %v411, 1
    %v1006 = vrot.slane %v412, 1
    %v1007 = vsel %vm510, %v1005, %v1006
    %v1008 = vrot.slane %v413, 1
    %v1009 = vsel %vm510, %v1006, %v1008
    %v1014 = vrot.slane %v357, 2
    %v1015 = vrot.slane %v358, 2
    %v1016 = vsel %vm735, %v1014, %v1015
    %v1017 = vrot.slane %v359, 2
    %v1018 = vsel %vm735, %v1015, %v1017
    %v1019 = vrot.slane %v411, 2
    %v1020 = vrot.slane %v412, 2
    %v1021 = vsel %vm735, %v1019, %v1020
    %v1022 = vrot.slane %v413, 2
    %v1023 = vsel %vm735, %v1020, %v1022
    %v1028 = vpack.c.bf16 %v307, %v306
    %v1029 = vpack.c.bf16 %v515, %v513
    %v1030 = vpack.c.bf16 %v740, %v738
    %v1031 = vpack.c.bf16 %v310, %v309
    %v1032 = vpack.c.bf16 %v520, %v518
    %v1033 = vpack.c.bf16 %v745, %v743
    %v1034 = vpack.c.bf16 %v313, %v312
    %v1035 = vpack.c.bf16 %v525, %v523
    %v1036 = vpack.c.bf16 %v750, %v748
    %v1037 = vpack.c.bf16 %v316, %v315
    %v1038 = vpack.c.bf16 %v530, %v528
    %v1039 = vpack.c.bf16 %v755, %v753
    %v1040 = vpack.c.bf16 %v319, %v318
    %v1041 = vpack.c.bf16 %v535, %v533
    %v1042 = vpack.c.bf16 %v760, %v758
    %v1043 = vpack.c.bf16 %v322, %v321
    %v1044 = vpack.c.bf16 %v540, %v538
    %v1045 = vpack.c.bf16 %v765, %v763
    %v1046 = vpack.c.bf16 %v325, %v324
    %v1047 = vpack.c.bf16 %v545, %v543
    %v1048 = vpack.c.bf16 %v770, %v768
    %v1049 = vpack.c.bf16 %v328, %v327
    %v1050 = vpack.c.bf16 %v550, %v548
    %v1051 = vpack.c.bf16 %v775, %v773
    %v1052 = vpack.c.bf16 %v331, %v330
    %v1053 = vpack.c.bf16 %v555, %v553
    %v1054 = vpack.c.bf16 %v780, %v778
    %v1055 = vpack.c.bf16 %v334, %v333
    %v1056 = vpack.c.bf16 %v560, %v558
    %v1057 = vpack.c.bf16 %v785, %v783
    %v1058 = vpack.c.bf16 %v337, %v336
    %v1059 = vpack.c.bf16 %v565, %v563
    %v1060 = vpack.c.bf16 %v790, %v788
    %v1061 = vpack.c.bf16 %v340, %v339
    %v1062 = vpack.c.bf16 %v570, %v568
    %v1063 = vpack.c.bf16 %v795, %v793
    %v1064 = vpack.c.bf16 %v343, %v342
    %v1065 = vpack.c.bf16 %v575, %v573
    %v1066 = vpack.c.bf16 %v800, %v798
    %v1067 = vpack.c.bf16 %v346, %v345
    %v1068 = vpack.c.bf16 %v580, %v578
    %v1069 = vpack.c.bf16 %v805, %v803
    %v1070 = vpack.c.bf16 %v349, %v348
    %v1071 = vpack.c.bf16 %v585, %v583
    %v1072 = vpack.c.bf16 %v810, %v808
    %v1073 = vpack.c.bf16 %v352, %v351
    %v1074 = vpack.c.bf16 %v590, %v588
    %v1075 = vpack.c.bf16 %v815, %v813
    %v1076 = vpack.c.bf16 %v355, %v354
    %v1077 = vpack.c.bf16 %v970, %v968
    %v1078 = vpack.c.bf16 %v984, %v982
    %v1079 = vpack.c.bf16 %v358, %v357
    %v1080 = vpack.c.bf16 %v1004, %v1002
    %v1081 = vpack.c.bf16 %v1018, %v1016
    %v1082 = vpack.c.bf16 %v361, %v360
    %v1083 = vpack.c.bf16 %v595, %v593
    %v1084 = vpack.c.bf16 %v820, %v818
    %v1085 = vpack.c.bf16 %v364, %v363
    %v1086 = vpack.c.bf16 %v600, %v598
    %v1087 = vpack.c.bf16 %v825, %v823
    %v1088 = vpack.c.bf16 %v367, %v366
    %v1089 = vpack.c.bf16 %v605, %v603
    %v1090 = vpack.c.bf16 %v830, %v828
    %v1091 = vpack.c.bf16 %v370, %v369
    %v1092 = vpack.c.bf16 %v610, %v608
    %v1093 = vpack.c.bf16 %v835, %v833
    %v1094 = vpack.c.bf16 %v373, %v372
    %v1095 = vpack.c.bf16 %v615, %v613
    %v1096 = vpack.c.bf16 %v840, %v838
    %v1097 = vpack.c.bf16 %v376, %v375
    %v1098 = vpack.c.bf16 %v620, %v618
    %v1099 = vpack.c.bf16 %v845, %v843
    %v1100 = vpack.c.bf16 %v379, %v378
    %v1101 = vpack.c.bf16 %v625, %v623
    %v1102 = vpack.c.bf16 %v850, %v848
    %v1103 = vpack.c.bf16 %v382, %v381
    %v1104 = vpack.c.bf16 %v630, %v628
    %v1105 = vpack.c.bf16 %v855, %v853
    %v1106 = vpack.c.bf16 %v385, %v384
    %v1107 = vpack.c.bf16 %v635, %v633
    %v1108 = vpack.c.bf16 %v860, %v858
    %v1109 = vpack.c.bf16 %v388, %v387
    %v1110 = vpack.c.bf16 %v640, %v638
    %v1111 = vpack.c.bf16 %v865, %v863
    %v1112 = vpack.c.bf16 %v391, %v390
    %v1113 = vpack.c.bf16 %v645, %v643
    %v1114 = vpack.c.bf16 %v870, %v868
    %v1115 = vpack.c.bf16 %v394, %v393
    %v1116 = vpack.c.bf16 %v650, %v648
    %v1117 = vpack.c.bf16 %v875, %v873
    %v1118 = vpack.c.bf16 %v397, %v396
    %v1119 = vpack.c.bf16 %v655, %v653
    %v1120 = vpack.c.bf16 %v880, %v878
    %v1121 = vpack.c.bf16 %v400, %v399
    %v1122 = vpack.c.bf16 %v660, %v658
    %v1123 = vpack.c.bf16 %v885, %v883
    %v1124 = vpack.c.bf16 %v403, %v402
    %v1125 = vpack.c.bf16 %v665, %v663
    %v1126 = vpack.c.bf16 %v890, %v888
    %v1127 = vpack.c.bf16 %v406, %v405
    %v1128 = vpack.c.bf16 %v670, %v668
    %v1129 = vpack.c.bf16 %v895, %v893
    %v1130 = vpack.c.bf16 %v409, %v408
    %v1131 = vpack.c.bf16 %v975, %v973
    %v1132 = vpack.c.bf16 %v989, %v987
    %v1133 = vpack.c.bf16 %v412, %v411
    %v1134 = vpack.c.bf16 %v1009, %v1007
    %v1135 = vpack.c.bf16 %v1023, %v1021
    %v1136 = vld [vmem:[#allocation6] sm:$0xf]
    %v1137 = vld [vmem:[#allocation6 + $0x4] sm:$0xf]
    %v1138 = vld [vmem:[#allocation6 + $0x8] sm:$0xf]
    %v1139 = vld [vmem:[#allocation6 + $0xc] sm:$0xf]
    %v1140 = vld [vmem:[#allocation6 + $0x10] sm:$0xf]
    %v1141 = vld [vmem:[#allocation6 + $0x14] sm:$0xf]
    %v1142 = vld [vmem:[#allocation6 + $0x18] sm:$0xf]
    %v1143 = vld [vmem:[#allocation6 + $0x1c] sm:$0xf]
    %v1144 = vld [vmem:[#allocation6 + $0x20] sm:$0xf]
    %v1145 = vld [vmem:[#allocation6 + $0x24] sm:$0xf]
    %v1146 = vld [vmem:[#allocation6 + $0x28] sm:$0xf]
    %v1147 = vld [vmem:[#allocation6 + $0x2c] sm:$0xf]
    %v1148 = vld [vmem:[#allocation6 + $0x30] sm:$0xf]
    %v1149 = vld [vmem:[#allocation6 + $0x34] sm:$0xf]
    %v1150 = vld [vmem:[#allocation6 + $0x38] sm:$0xf]
    %v1151 = vld [vmem:[#allocation6 + $0x3c] sm:$0xf]
    %v1152 = vld [vmem:[#allocation6 + $0x40] sm:$0xf]
    %v1153 = vld [vmem:[#allocation6 + $0x44] sm:$0xf]
    %v1154 = vld [vmem:[#allocation6 + $0x48] sm:$0xf]
    %v1155 = vld [vmem:[#allocation6 + $0x4c] sm:$0xf]
    %v1156 = vld [vmem:[#allocation6 + $0x50] sm:$0xf]
    %v1157 = vld [vmem:[#allocation6 + $0x54] sm:$0xf]
    %v1158 = vld [vmem:[#allocation6 + $0x58] sm:$0xf]
    %v1159 = vld [vmem:[#allocation6 + $0x5c] sm:$0xf]
    %v1160 = vld [vmem:[#allocation6 + $0x60] sm:$0xf]
    %v1161 = vld [vmem:[#allocation6 + $0x64] sm:$0xf]
    %v1162 = vld [vmem:[#allocation6 + $0x68] sm:$0xf]
    %v1163 = vld [vmem:[#allocation6 + $0x6c] sm:$0xf]
    %v1164 = vld [vmem:[#allocation6 + $0x70] sm:$0xf]
    %v1165 = vld [vmem:[#allocation6 + $0x74] sm:$0xf]
    %v1166 = vld [vmem:[#allocation6 + $0x78] sm:$0xf]
    %v1167 = vld [vmem:[#allocation6 + $0x7c] sm:$0xf]
    %v1168 = vld [vmem:[#allocation6 + $0x80] sm:$0xf]
    %v1169 = vld [vmem:[#allocation6 + $0x84] sm:$0xf]
    %v1170 = vld [vmem:[#allocation6 + $0x88] sm:$0xf]
    %v1171 = vld [vmem:[#allocation6 + $0x8c] sm:$0xf]
    %v1172 = vld [vmem:[#allocation6 + $0x90] sm:$0xf]
    %v1173 = vld [vmem:[#allocation6 + $0x94] sm:$0xf]
    %v1174 = vld [vmem:[#allocation6 + $0x98] sm:$0xf]
    %v1175 = vld [vmem:[#allocation6 + $0x9c] sm:$0xf]
    %v1176 = vld [vmem:[#allocation6 + $0xa0] sm:$0xf]
    %v1177 = vld [vmem:[#allocation6 + $0xa4] sm:$0xf]
    %v1178 = vld [vmem:[#allocation6 + $0xa8] sm:$0xf]
    %v1179 = vld [vmem:[#allocation6 + $0xac] sm:$0xf]
    %v1180 = vld [vmem:[#allocation6 + $0xb0] sm:$0xf]
    %v1181 = vld [vmem:[#allocation6 + $0xb4] sm:$0xf]
    %v1182 = vld [vmem:[#allocation6 + $0xb8] sm:$0xf]
    %v1183 = vld [vmem:[#allocation6 + $0xbc] sm:$0xf]
    %v1184 = vld [vmem:[#allocation6 + $0xc0] sm:$0xf]
    %v1185 = vld [vmem:[#allocation6 + $0xc4] sm:$0xf]
    %v1186 = vld [vmem:[#allocation6 + $0xc8] sm:$0xf]
    %v1187 = vld [vmem:[#allocation6 + $0xcc] sm:$0xf]
    %v1188 = vld [vmem:[#allocation6 + $0xd0] sm:$0xf]
    %v1189 = vld [vmem:[#allocation6 + $0xd4] sm:$0xf]
    %v1190 = vld [vmem:[#allocation6 + $0xd8] sm:$0xf]
    %v1191 = vld [vmem:[#allocation6 + $0xdc] sm:$0xf]
    %v1192 = vld [vmem:[#allocation6 + $0xe0] sm:$0xf]
    %v1193 = vld [vmem:[#allocation6 + $0xe4] sm:$0xf]
    %v1194 = vld [vmem:[#allocation6 + $0xe8] sm:$0xf]
    %v1195 = vld [vmem:[#allocation6 + $0xec] sm:$0xf]
    %v1196 = vld [vmem:[#allocation6 + $0xf0] sm:$0xf]
    %v1197 = vld [vmem:[#allocation6 + $0xf4] sm:$0xf]
    %v1198 = vld [vmem:[#allocation6 + $0xf8] sm:$0xf]
    %v1199 = vld [vmem:[#allocation6 + $0xfc] sm:$0xf]
    %v1200 = vld [vmem:[#allocation6 + $0x100] sm:$0xf]
    %v1201 = vld [vmem:[#allocation6 + $0x104] sm:$0xf]
    %v1202 = vld [vmem:[#allocation6 + $0x108] sm:$0xf]
    %v1203 = vld [vmem:[#allocation6 + $0x10c] sm:$0xf]
    %v1204 = vld [vmem:[#allocation6 + $0x110] sm:$0xf]
    %v1205 = vld [vmem:[#allocation6 + $0x114] sm:$0xf]
    %v1206 = vld [vmem:[#allocation6 + $0x118] sm:$0xf]
    %v1207 = vld [vmem:[#allocation6 + $0x11c] sm:$0xf]
    %v1208 = vld [vmem:[#allocation6 + $0x120] sm:$0xf]
    %v1209 = vld [vmem:[#allocation6 + $0x124] sm:$0xf]
    %v1210 = vld [vmem:[#allocation6 + $0x128] sm:$0xf]
    %v1211 = vld [vmem:[#allocation6 + $0x12c] sm:$0xf]
    %v1212 = vld [vmem:[#allocation6 + $0x130] sm:$0xf]
    %v1213 = vld [vmem:[#allocation6 + $0x134] sm:$0xf]
    %v1214 = vld [vmem:[#allocation6 + $0x138] sm:$0xf]
    %v1215 = vld [vmem:[#allocation6 + $0x13c] sm:$0xf]
    %v1216 = vld [vmem:[#allocation6 + $0x140] sm:$0xf]
    %v1217 = vld [vmem:[#allocation6 + $0x144] sm:$0xf]
    %v1218 = vld [vmem:[#allocation6 + $0x148] sm:$0xf]
    %v1219 = vld [vmem:[#allocation6 + $0x14c] sm:$0xf]
    %v1220 = vld [vmem:[#allocation6 + $0x150] sm:$0xf]
    %v1221 = vld [vmem:[#allocation6 + $0x154] sm:$0xf]
    %v1222 = vld [vmem:[#allocation6 + $0x158] sm:$0xf]
    %v1223 = vld [vmem:[#allocation6 + $0x15c] sm:$0xf]
    %v1224 = vld [vmem:[#allocation6 + $0x160] sm:$0xf]
    %v1225 = vld [vmem:[#allocation6 + $0x164] sm:$0xf]
    %v1226 = vld [vmem:[#allocation6 + $0x168] sm:$0xf]
    %v1227 = vld [vmem:[#allocation6 + $0x16c] sm:$0xf]
    %v1228 = vld [vmem:[#allocation6 + $0x170] sm:$0xf]
    %v1229 = vld [vmem:[#allocation6 + $0x174] sm:$0xf]
    %v1230 = vld [vmem:[#allocation6 + $0x178] sm:$0xf]
    %v1231 = vld [vmem:[#allocation6 + $0x17c] sm:$0xf]
    %v1232 = vld [vmem:[#allocation6 + $0x180] sm:$0xf]
    %v1233 = vld [vmem:[#allocation6 + $0x184] sm:$0xf]
    %v1234 = vld [vmem:[#allocation6 + $0x188] sm:$0xf]
    %v1235 = vld [vmem:[#allocation6 + $0x18c] sm:$0xf]
    %v1236 = vld [vmem:[#allocation6 + $0x190] sm:$0xf]
    %v1237 = vld [vmem:[#allocation6 + $0x194] sm:$0xf]
    %v1238 = vld [vmem:[#allocation6 + $0x198] sm:$0xf]
    %v1239 = vld [vmem:[#allocation6 + $0x19c] sm:$0xf]
    %v1240 = vld [vmem:[#allocation6 + $0x1a0] sm:$0xf]
    %v1241 = vld [vmem:[#allocation6 + $0x1a4] sm:$0xf]
    %v1242 = vld [vmem:[#allocation6 + $0x1a8] sm:$0xf]
    %v1243 = vld [vmem:[#allocation6 + $0x1ac] sm:$0xf]
    %v1244 = vld [vmem:[#allocation6 + $0x1b0] sm:$0xf]
    %v1245 = vld [vmem:[#allocation6 + $0x1b4] sm:$0xf]
    %v1246 = vld [vmem:[#allocation6 + $0x1b8] sm:$0xf]
    %v1247 = vld [vmem:[#allocation6 + $0x1bc] sm:$0xf]
    %v1248 = vld [vmem:[#allocation6 + $0x1c0] sm:$0xf]
    %v1249 = vld [vmem:[#allocation6 + $0x1c4] sm:$0xf]
    %v1250 = vld [vmem:[#allocation6 + $0x1c8] sm:$0xf]
    %v1251 = vld [vmem:[#allocation6 + $0x1cc] sm:$0xf]
    %v1252 = vld [vmem:[#allocation6 + $0x1d0] sm:$0xf]
    %v1253 = vld [vmem:[#allocation6 + $0x1d4] sm:$0xf]
    %v1254 = vld [vmem:[#allocation6 + $0x1d8] sm:$0xf]
    %v1255 = vld [vmem:[#allocation6 + $0x1dc] sm:$0xf]
    %v1256 = vld [vmem:[#allocation6 + $0x1e0] sm:$0xf]
    %v1257 = vld [vmem:[#allocation6 + $0x1e4] sm:$0xf]
    %v1258 = vld [vmem:[#allocation6 + $0x1e8] sm:$0xf]
    %v1259 = vld [vmem:[#allocation6 + $0x1ec] sm:$0xf]
    %v1260 = vld [vmem:[#allocation6 + $0x1f0] sm:$0xf]
    %v1261 = vld [vmem:[#allocation6 + $0x1f4] sm:$0xf]
    %v1262 = vld [vmem:[#allocation6 + $0x1f8] sm:$0xf]
    %v1263 = vld [vmem:[#allocation6 + $0x1fc] sm:$0xf]
    %v1264 = vld [vmem:[#allocation6 + $0x200] sm:$0xf]
    %v1265 = vld [vmem:[#allocation6 + $0x204] sm:$0xf]
    %v1266 = vld [vmem:[#allocation6 + $0x208] sm:$0xf]
    %v1267 = vld [vmem:[#allocation6 + $0x20c] sm:$0xf]
    %v1268 = vld [vmem:[#allocation6 + $0x210] sm:$0xf]
    %v1269 = vld [vmem:[#allocation6 + $0x214] sm:$0xf]
    %v1270 = vld [vmem:[#allocation6 + $0x218] sm:$0xf]
    %v1271 = vld [vmem:[#allocation6 + $0x21c] sm:$0xf]
    %v1272 = vld [vmem:[#allocation6 + $0x220] sm:$0xf]
    %v1273 = vld [vmem:[#allocation6 + $0x224] sm:$0xf]
    %v1274 = vld [vmem:[#allocation6 + $0x228] sm:$0xf]
    %v1275 = vld [vmem:[#allocation6 + $0x22c] sm:$0xf]
    %v1276 = vld [vmem:[#allocation6 + $0x230] sm:$0xf]
    %v1277 = vld [vmem:[#allocation6 + $0x234] sm:$0xf]
    %v1278 = vld [vmem:[#allocation6 + $0x238] sm:$0xf]
    %v1279 = vld [vmem:[#allocation6 + $0x23c] sm:$0xf]
    %v1424 = vunpack.c.l.b16 %v1136
    %v1425 = vunpack.c.l.b16 %v1137
    %v1426 = vunpack.c.l.b16 %v1138
    %v1427 = vunpack.c.l.b16 %v1139
    %v1428 = vunpack.c.l.b16 %v1140
    %v1429 = vunpack.c.l.b16 %v1141
    %v1430 = vunpack.c.l.b16 %v1142
    %v1431 = vunpack.c.l.b16 %v1143
    %v1432 = vunpack.c.l.b16 %v1144
    %v1433 = vunpack.c.l.b16 %v1145
    %v1434 = vunpack.c.l.b16 %v1146
    %v1435 = vunpack.c.l.b16 %v1147
    %v1436 = vunpack.c.l.b16 %v1148
    %v1437 = vunpack.c.l.b16 %v1149
    %v1438 = vunpack.c.l.b16 %v1150
    %v1439 = vunpack.c.l.b16 %v1151
    %v1440 = vunpack.c.l.b16 %v1152
    %v1441 = vunpack.c.l.b16 %v1153
    %v1442 = vunpack.c.l.b16 %v1154
    %v1443 = vunpack.c.l.b16 %v1155
    %v1444 = vunpack.c.l.b16 %v1156
    %v1445 = vunpack.c.l.b16 %v1157
    %v1446 = vunpack.c.l.b16 %v1158
    %v1447 = vunpack.c.l.b16 %v1159
    %v1448 = vunpack.c.l.b16 %v1160
    %v1449 = vunpack.c.l.b16 %v1161
    %v1450 = vunpack.c.l.b16 %v1162
    %v1451 = vunpack.c.l.b16 %v1163
    %v1452 = vunpack.c.l.b16 %v1164
    %v1453 = vunpack.c.l.b16 %v1165
    %v1454 = vunpack.c.l.b16 %v1166
    %v1455 = vunpack.c.l.b16 %v1167
    %v1456 = vunpack.c.l.b16 %v1168
    %v1457 = vunpack.c.l.b16 %v1169
    %v1458 = vunpack.c.l.b16 %v1170
    %v1459 = vunpack.c.l.b16 %v1171
    %v1460 = vunpack.c.l.b16 %v1172
    %v1461 = vunpack.c.l.b16 %v1173
    %v1462 = vunpack.c.l.b16 %v1174
    %v1463 = vunpack.c.l.b16 %v1175
    %v1464 = vunpack.c.l.b16 %v1176
    %v1465 = vunpack.c.l.b16 %v1177
    %v1466 = vunpack.c.l.b16 %v1178
    %v1467 = vunpack.c.l.b16 %v1179
    %v1468 = vunpack.c.l.b16 %v1180
    %v1469 = vunpack.c.l.b16 %v1181
    %v1470 = vunpack.c.l.b16 %v1182
    %v1471 = vunpack.c.l.b16 %v1183
    %v1472 = vunpack.c.l.b16 %v1184
    %v1473 = vunpack.c.l.b16 %v1185
    %v1474 = vunpack.c.l.b16 %v1186
    %v1475 = vunpack.c.l.b16 %v1187
    %v1476 = vunpack.c.l.b16 %v1188
    %v1477 = vunpack.c.l.b16 %v1189
    %v1478 = vunpack.c.l.b16 %v1190
    %v1479 = vunpack.c.l.b16 %v1191
    %v1480 = vunpack.c.l.b16 %v1192
    %v1481 = vunpack.c.l.b16 %v1193
    %v1482 = vunpack.c.l.b16 %v1194
    %v1483 = vunpack.c.l.b16 %v1195
    %v1484 = vunpack.c.l.b16 %v1196
    %v1485 = vunpack.c.l.b16 %v1197
    %v1486 = vunpack.c.l.b16 %v1198
    %v1487 = vunpack.c.l.b16 %v1199
    %v1488 = vunpack.c.l.b16 %v1200
    %v1489 = vunpack.c.l.b16 %v1201
    %v1490 = vunpack.c.l.b16 %v1202
    %v1491 = vunpack.c.l.b16 %v1203
    %v1492 = vunpack.c.l.b16 %v1204
    %v1493 = vunpack.c.l.b16 %v1205
    %v1494 = vunpack.c.l.b16 %v1206
    %v1495 = vunpack.c.l.b16 %v1207
    %v1496 = vunpack.c.l.b16 %v1208
    %v1497 = vunpack.c.l.b16 %v1209
    %v1498 = vunpack.c.l.b16 %v1210
    %v1499 = vunpack.c.l.b16 %v1211
    %v1500 = vunpack.c.l.b16 %v1212
    %v1501 = vunpack.c.l.b16 %v1213
    %v1502 = vunpack.c.l.b16 %v1214
    %v1503 = vunpack.c.l.b16 %v1215
    %v1504 = vunpack.c.l.b16 %v1216
    %v1505 = vunpack.c.l.b16 %v1217
    %v1506 = vunpack.c.l.b16 %v1218
    %v1507 = vunpack.c.l.b16 %v1219
    %v1508 = vunpack.c.l.b16 %v1220
    %v1509 = vunpack.c.l.b16 %v1221
    %v1510 = vunpack.c.l.b16 %v1222
    %v1511 = vunpack.c.l.b16 %v1223
    %v1512 = vunpack.c.l.b16 %v1224
    %v1513 = vunpack.c.l.b16 %v1225
    %v1514 = vunpack.c.l.b16 %v1226
    %v1515 = vunpack.c.l.b16 %v1227
    %v1516 = vunpack.c.l.b16 %v1228
    %v1517 = vunpack.c.l.b16 %v1229
    %v1518 = vunpack.c.l.b16 %v1230
    %v1519 = vunpack.c.l.b16 %v1231
    %v1520 = vunpack.c.l.b16 %v1232
    %v1521 = vunpack.c.l.b16 %v1233
    %v1522 = vunpack.c.l.b16 %v1234
    %v1523 = vunpack.c.l.b16 %v1235
    %v1524 = vunpack.c.l.b16 %v1236
    %v1525 = vunpack.c.l.b16 %v1237
    %v1526 = vunpack.c.l.b16 %v1238
    %v1527 = vunpack.c.l.b16 %v1239
    %v1528 = vunpack.c.l.b16 %v1240
    %v1529 = vunpack.c.l.b16 %v1241
    %v1530 = vunpack.c.l.b16 %v1242
    %v1531 = vunpack.c.l.b16 %v1243
    %v1532 = vunpack.c.l.b16 %v1244
    %v1533 = vunpack.c.l.b16 %v1245
    %v1534 = vunpack.c.l.b16 %v1246
    %v1535 = vunpack.c.l.b16 %v1247
    %v1536 = vunpack.c.l.b16 %v1248
    %v1537 = vunpack.c.l.b16 %v1249
    %v1538 = vunpack.c.l.b16 %v1250
    %v1539 = vunpack.c.l.b16 %v1251
    %v1540 = vunpack.c.l.b16 %v1252
    %v1541 = vunpack.c.l.b16 %v1253
    %v1542 = vunpack.c.l.b16 %v1254
    %v1543 = vunpack.c.l.b16 %v1255
    %v1544 = vunpack.c.l.b16 %v1256
    %v1545 = vunpack.c.l.b16 %v1257
    %v1546 = vunpack.c.l.b16 %v1258
    %v1547 = vunpack.c.l.b16 %v1259
    %v1548 = vunpack.c.l.b16 %v1260
    %v1549 = vunpack.c.l.b16 %v1261
    %v1550 = vunpack.c.l.b16 %v1262
    %v1551 = vunpack.c.l.b16 %v1263
    %v1552 = vunpack.c.l.b16 %v1264
    %v1553 = vunpack.c.l.b16 %v1265
    %v1554 = vunpack.c.l.b16 %v1266
    %v1555 = vunpack.c.l.b16 %v1267
    %v1556 = vunpack.c.l.b16 %v1268
    %v1557 = vunpack.c.l.b16 %v1269
    %v1558 = vunpack.c.l.b16 %v1270
    %v1559 = vunpack.c.l.b16 %v1271
    %v1560 = vunpack.c.l.b16 %v1272
    %v1561 = vunpack.c.l.b16 %v1273
    %v1562 = vunpack.c.l.b16 %v1274
    %v1563 = vunpack.c.l.b16 %v1275
    %v1564 = vunpack.c.l.b16 %v1276
    %v1565 = vunpack.c.l.b16 %v1277
    %v1566 = vunpack.c.l.b16 %v1278
    %v1567 = vunpack.c.l.b16 %v1279
    %v1568 = vpack.c.b16 %v1425, %v1424
    %v1569 = vpack.c.b16 %v1427, %v1426
    %v1570 = vpack.c.b16 %v1429, %v1428
    %v1571 = vpack.c.b16 %v1431, %v1430
    %v1572 = vpack.c.b16 %v1433, %v1432
    %v1573 = vpack.c.b16 %v1435, %v1434
    %v1574 = vpack.c.b16 %v1437, %v1436
    %v1575 = vpack.c.b16 %v1439, %v1438
    %v1576 = vpack.c.b16 %v1441, %v1440
    %v1577 = vpack.c.b16 %v1443, %v1442
    %v1578 = vpack.c.b16 %v1445, %v1444
    %v1579 = vpack.c.b16 %v1447, %v1446
    %v1580 = vpack.c.b16 %v1449, %v1448
    %v1581 = vpack.c.b16 %v1451, %v1450
    %v1582 = vpack.c.b16 %v1453, %v1452
    %v1583 = vpack.c.b16 %v1455, %v1454
    %v1584 = vpack.c.b16 %v1457, %v1456
    %v1585 = vpack.c.b16 %v1459, %v1458
    %v1586 = vpack.c.b16 %v1461, %v1460
    %v1587 = vpack.c.b16 %v1463, %v1462
    %v1588 = vpack.c.b16 %v1465, %v1464
    %v1589 = vpack.c.b16 %v1467, %v1466
    %v1590 = vpack.c.b16 %v1469, %v1468
    %v1591 = vpack.c.b16 %v1471, %v1470
    %v1592 = vpack.c.b16 %v1473, %v1472
    %v1593 = vpack.c.b16 %v1475, %v1474
    %v1594 = vpack.c.b16 %v1477, %v1476
    %v1595 = vpack.c.b16 %v1479, %v1478
    %v1596 = vpack.c.b16 %v1481, %v1480
    %v1597 = vpack.c.b16 %v1483, %v1482
    %v1598 = vpack.c.b16 %v1485, %v1484
    %v1599 = vpack.c.b16 %v1487, %v1486
    %v1600 = vpack.c.b16 %v1489, %v1488
    %v1601 = vpack.c.b16 %v1491, %v1490
    %v1602 = vpack.c.b16 %v1493, %v1492
    %v1603 = vpack.c.b16 %v1495, %v1494
    %v1604 = vpack.c.b16 %v1497, %v1496
    %v1605 = vpack.c.b16 %v1499, %v1498
    %v1606 = vpack.c.b16 %v1501, %v1500
    %v1607 = vpack.c.b16 %v1503, %v1502
    %v1608 = vpack.c.b16 %v1505, %v1504
    %v1609 = vpack.c.b16 %v1507, %v1506
    %v1610 = vpack.c.b16 %v1509, %v1508
    %v1611 = vpack.c.b16 %v1511, %v1510
    %v1612 = vpack.c.b16 %v1513, %v1512
    %v1613 = vpack.c.b16 %v1515, %v1514
    %v1614 = vpack.c.b16 %v1517, %v1516
    %v1615 = vpack.c.b16 %v1519, %v1518
    %v1616 = vpack.c.b16 %v1521, %v1520
    %v1617 = vpack.c.b16 %v1523, %v1522
    %v1618 = vpack.c.b16 %v1525, %v1524
    %v1619 = vpack.c.b16 %v1527, %v1526
    %v1620 = vpack.c.b16 %v1529, %v1528
    %v1621 = vpack.c.b16 %v1531, %v1530
    %v1622 = vpack.c.b16 %v1533, %v1532
    %v1623 = vpack.c.b16 %v1535, %v1534
    %v1624 = vpack.c.b16 %v1537, %v1536
    %v1625 = vpack.c.b16 %v1539, %v1538
    %v1626 = vpack.c.b16 %v1541, %v1540
    %v1627 = vpack.c.b16 %v1543, %v1542
    %v1628 = vpack.c.b16 %v1545, %v1544
    %v1629 = vpack.c.b16 %v1547, %v1546
    %v1630 = vpack.c.b16 %v1549, %v1548
    %v1631 = vpack.c.b16 %v1551, %v1550
    %v1632 = vpack.c.b16 %v1553, %v1552
    %v1633 = vpack.c.b16 %v1555, %v1554
    %v1634 = vpack.c.b16 %v1557, %v1556
    %v1635 = vpack.c.b16 %v1559, %v1558
    %v1636 = vpack.c.b16 %v1561, %v1560
    %v1637 = vpack.c.b16 %v1563, %v1562
    %v1638 = vpack.c.b16 %v1565, %v1564
    %v1639 = vpack.c.b16 %v1567, %v1566
    %1712 = vmatprep.subr.bf16.mxu0 0
    %1713 = vmatpush1.bf16.msra.mxu0 %v1575
    %1714 = vmatprep.subr.bf16.mxu0 0
    %1715 = vmatpush1.bf16.msra.mxu0 %v1574
    %1716 = vmatprep.subr.bf16.mxu0 0
    %1717 = vmatpush1.bf16.msra.mxu0 %v1573
    %1718 = vmatprep.subr.bf16.mxu0 0
    %1719 = vmatpush1.bf16.msra.mxu0 %v1572
    %1720 = vmatprep.subr.bf16.mxu0 0
    %1721 = vmatpush1.bf16.msra.mxu0 %v1571
    %1722 = vmatprep.subr.bf16.mxu0 0
    %1723 = vmatpush1.bf16.msra.mxu0 %v1570
    %1724 = vmatprep.subr.bf16.mxu0 0
    %1725 = vmatpush1.bf16.msra.mxu0 %v1569
    %1726 = vmatprep.subr.bf16.mxu0 0
    %1727 = vmatpush1.bf16.msra.mxu0 %v1568
    %1728 = vmatprep.subr.bf16.mxu0 0
    %1729 = vmatpush2.bf16.msra.mxu0 %v1583
    %1730 = vmatprep.subr.bf16.mxu0 0
    %1731 = vmatpush2.bf16.msra.mxu0 %v1582
    %1732 = vmatprep.subr.bf16.mxu0 0
    %1733 = vmatpush2.bf16.msra.mxu0 %v1581
    %1734 = vmatprep.subr.bf16.mxu0 0
    %1735 = vmatpush2.bf16.msra.mxu0 %v1580
    %1736 = vmatprep.subr.bf16.mxu0 0
    %1737 = vmatpush2.bf16.msra.mxu0 %v1579
    %1738 = vmatprep.subr.bf16.mxu0 0
    %1739 = vmatpush2.bf16.msra.mxu0 %v1578
    %1740 = vmatprep.subr.bf16.mxu0 0
    %1741 = vmatpush2.bf16.msra.mxu0 %v1577
    %1742 = vmatprep.subr.bf16.mxu0 0
    %1743 = vmatpush2.bf16.msra.mxu0 %v1576
    %1744 = vmatprep.mubr.bf16.mxu0 %v1029
    %1745 = vmatmul.mubr.bf16.gmra.mxu0 %v1028
    %v1746 = vpop.f32.mrf.mxu0
    %v1747 = vadd.f32 0.0, %v1746
    %v1748 = vpop.f32.mrf.mxu0
    %v1749 = vpop.f32.mrf.mxu0
    %v1750 = vadd.f32 0.0, %v1749
    %v1751 = vpop.f32.mrf.mxu0
    %1752 = vmatprep.mubr.bf16.mxu0 %v1032
    %1753 = vmatmul.mubr.bf16.gmra.mxu0 %v1031
    %v1754 = vpop.f32.mrf.mxu0
    %v1755 = vadd.f32 0.0, %v1754
    %v1756 = vpop.f32.mrf.mxu0
    %v1757 = vpop.f32.mrf.mxu0
    %v1758 = vadd.f32 0.0, %v1757
    %v1759 = vpop.f32.mrf.mxu0
    %1760 = vmatprep.mubr.bf16.mxu0 %v1035
    %1761 = vmatmul.mubr.bf16.gmra.mxu0 %v1034
    %v1762 = vpop.f32.mrf.mxu0
    %v1763 = vadd.f32 0.0, %v1762
    %v1764 = vpop.f32.mrf.mxu0
    %v1765 = vpop.f32.mrf.mxu0
    %v1766 = vadd.f32 0.0, %v1765
    %v1767 = vpop.f32.mrf.mxu0
    %1768 = vmatprep.mubr.bf16.mxu0 %v1038
    %1769 = vmatmul.mubr.bf16.gmra.mxu0 %v1037
    %v1770 = vpop.f32.mrf.mxu0
    %v1771 = vadd.f32 0.0, %v1770
    %v1772 = vpop.f32.mrf.mxu0
    %v1773 = vpop.f32.mrf.mxu0
    %v1774 = vadd.f32 0.0, %v1773
    %v1775 = vpop.f32.mrf.mxu0
    %1776 = vmatprep.mubr.bf16.mxu0 %v1041
    %1777 = vmatmul.mubr.bf16.gmra.mxu0 %v1040
    %v1778 = vpop.f32.mrf.mxu0
    %v1779 = vadd.f32 0.0, %v1778
    %v1780 = vpop.f32.mrf.mxu0
    %v1781 = vpop.f32.mrf.mxu0
    %v1782 = vadd.f32 0.0, %v1781
    %v1783 = vpop.f32.mrf.mxu0
    %1784 = vmatprep.mubr.bf16.mxu0 %v1044
    %1785 = vmatmul.mubr.bf16.gmra.mxu0 %v1043
    %v1786 = vpop.f32.mrf.mxu0
    %v1787 = vadd.f32 0.0, %v1786
    %v1788 = vpop.f32.mrf.mxu0
    %v1789 = vpop.f32.mrf.mxu0
    %v1790 = vadd.f32 0.0, %v1789
    %v1791 = vpop.f32.mrf.mxu0
    %1792 = vmatprep.mubr.bf16.mxu0 %v1047
    %1793 = vmatmul.mubr.bf16.gmra.mxu0 %v1046
    %v1794 = vpop.f32.mrf.mxu0
    %v1795 = vadd.f32 0.0, %v1794
    %v1796 = vpop.f32.mrf.mxu0
    %v1797 = vpop.f32.mrf.mxu0
    %v1798 = vadd.f32 0.0, %v1797
    %v1799 = vpop.f32.mrf.mxu0
    %1800 = vmatprep.mubr.bf16.mxu0 %v1050
    %1801 = vmatmul.mubr.bf16.gmra.mxu0 %v1049
    %v1802 = vpop.f32.mrf.mxu0
    %v1803 = vadd.f32 0.0, %v1802
    %v1804 = vpop.f32.mrf.mxu0
    %v1805 = vpop.f32.mrf.mxu0
    %v1806 = vadd.f32 0.0, %v1805
    %v1807 = vpop.f32.mrf.mxu0
    %1808 = vmatprep.mubr.bf16.mxu0 %v1053
    %1809 = vmatmul.mubr.bf16.gmra.mxu0 %v1052
    %v1810 = vpop.f32.mrf.mxu0
    %v1811 = vadd.f32 0.0, %v1810
    %v1812 = vpop.f32.mrf.mxu0
    %v1813 = vpop.f32.mrf.mxu0
    %v1814 = vadd.f32 0.0, %v1813
    %v1815 = vpop.f32.mrf.mxu0
    %1816 = vmatprep.mubr.bf16.mxu0 %v1056
    %1817 = vmatmul.mubr.bf16.gmra.mxu0 %v1055
    %v1818 = vpop.f32.mrf.mxu0
    %v1819 = vadd.f32 0.0, %v1818
    %v1820 = vpop.f32.mrf.mxu0
    %v1821 = vpop.f32.mrf.mxu0
    %v1822 = vadd.f32 0.0, %v1821
    %v1823 = vpop.f32.mrf.mxu0
    %1824 = vmatprep.mubr.bf16.mxu0 %v1059
    %1825 = vmatmul.mubr.bf16.gmra.mxu0 %v1058
    %v1826 = vpop.f32.mrf.mxu0
    %v1827 = vadd.f32 0.0, %v1826
    %v1828 = vpop.f32.mrf.mxu0
    %v1829 = vpop.f32.mrf.mxu0
    %v1830 = vadd.f32 0.0, %v1829
    %v1831 = vpop.f32.mrf.mxu0
    %1832 = vmatprep.mubr.bf16.mxu0 %v1062
    %1833 = vmatmul.mubr.bf16.gmra.mxu0 %v1061
    %v1834 = vpop.f32.mrf.mxu0
    %v1835 = vadd.f32 0.0, %v1834
    %v1836 = vpop.f32.mrf.mxu0
    %v1837 = vpop.f32.mrf.mxu0
    %v1838 = vadd.f32 0.0, %v1837
    %v1839 = vpop.f32.mrf.mxu0
    %1840 = vmatprep.mubr.bf16.mxu0 %v1065
    %1841 = vmatmul.mubr.bf16.gmra.mxu0 %v1064
    %v1842 = vpop.f32.mrf.mxu0
    %v1843 = vadd.f32 0.0, %v1842
    %v1844 = vpop.f32.mrf.mxu0
    %v1845 = vpop.f32.mrf.mxu0
    %v1846 = vadd.f32 0.0, %v1845
    %v1847 = vpop.f32.mrf.mxu0
    %1848 = vmatprep.mubr.bf16.mxu0 %v1068
    %1849 = vmatmul.mubr.bf16.gmra.mxu0 %v1067
    %v1850 = vpop.f32.mrf.mxu0
    %v1851 = vadd.f32 0.0, %v1850
    %v1852 = vpop.f32.mrf.mxu0
    %v1853 = vpop.f32.mrf.mxu0
    %v1854 = vadd.f32 0.0, %v1853
    %v1855 = vpop.f32.mrf.mxu0
    %1856 = vmatprep.mubr.bf16.mxu0 %v1071
    %1857 = vmatmul.mubr.bf16.gmra.mxu0 %v1070
    %v1858 = vpop.f32.mrf.mxu0
    %v1859 = vadd.f32 0.0, %v1858
    %v1860 = vpop.f32.mrf.mxu0
    %v1861 = vpop.f32.mrf.mxu0
    %v1862 = vadd.f32 0.0, %v1861
    %v1863 = vpop.f32.mrf.mxu0
    %1864 = vmatprep.mubr.bf16.mxu0 %v1074
    %1865 = vmatmul.mubr.bf16.gmra.mxu0 %v1073
    %v1866 = vpop.f32.mrf.mxu0
    %v1867 = vadd.f32 0.0, %v1866
    %v1868 = vpop.f32.mrf.mxu0
    %v1869 = vpop.f32.mrf.mxu0
    %v1870 = vadd.f32 0.0, %v1869
    %v1871 = vpop.f32.mrf.mxu0
    %1872 = vmatprep.mubr.bf16.mxu0 %v1083
    %1873 = vmatmul.mubr.bf16.gmra.mxu0 %v1082
    %v1874 = vpop.f32.mrf.mxu0
    %v1875 = vadd.f32 0.0, %v1874
    %v1876 = vpop.f32.mrf.mxu0
    %v1877 = vpop.f32.mrf.mxu0
    %v1878 = vadd.f32 0.0, %v1877
    %v1879 = vpop.f32.mrf.mxu0
    %1880 = vmatprep.mubr.bf16.mxu0 %v1086
    %1881 = vmatmul.mubr.bf16.gmra.mxu0 %v1085
    %v1882 = vpop.f32.mrf.mxu0
    %v1883 = vadd.f32 0.0, %v1882
    %v1884 = vpop.f32.mrf.mxu0
    %v1885 = vpop.f32.mrf.mxu0
    %v1886 = vadd.f32 0.0, %v1885
    %v1887 = vpop.f32.mrf.mxu0
    %1888 = vmatprep.mubr.bf16.mxu0 %v1089
    %1889 = vmatmul.mubr.bf16.gmra.mxu0 %v1088
    %v1890 = vpop.f32.mrf.mxu0
    %v1891 = vadd.f32 0.0, %v1890
    %v1892 = vpop.f32.mrf.mxu0
    %v1893 = vpop.f32.mrf.mxu0
    %v1894 = vadd.f32 0.0, %v1893
    %v1895 = vpop.f32.mrf.mxu0
    %1896 = vmatprep.mubr.bf16.mxu0 %v1092
    %1897 = vmatmul.mubr.bf16.gmra.mxu0 %v1091
    %v1898 = vpop.f32.mrf.mxu0
    %v1899 = vadd.f32 0.0, %v1898
    %v1900 = vpop.f32.mrf.mxu0
    %v1901 = vpop.f32.mrf.mxu0
    %v1902 = vadd.f32 0.0, %v1901
    %v1903 = vpop.f32.mrf.mxu0
    %1904 = vmatprep.mubr.bf16.mxu0 %v1095
    %1905 = vmatmul.mubr.bf16.gmra.mxu0 %v1094
    %v1906 = vpop.f32.mrf.mxu0
    %v1907 = vadd.f32 0.0, %v1906
    %v1908 = vpop.f32.mrf.mxu0
    %v1909 = vpop.f32.mrf.mxu0
    %v1910 = vadd.f32 0.0, %v1909
    %v1911 = vpop.f32.mrf.mxu0
    %1912 = vmatprep.mubr.bf16.mxu0 %v1098
    %1913 = vmatmul.mubr.bf16.gmra.mxu0 %v1097
    %v1914 = vpop.f32.mrf.mxu0
    %v1915 = vadd.f32 0.0, %v1914
    %v1916 = vpop.f32.mrf.mxu0
    %v1917 = vpop.f32.mrf.mxu0
    %v1918 = vadd.f32 0.0, %v1917
    %v1919 = vpop.f32.mrf.mxu0
    %1920 = vmatprep.mubr.bf16.mxu0 %v1101
    %1921 = vmatmul.mubr.bf16.gmra.mxu0 %v1100
    %v1922 = vpop.f32.mrf.mxu0
    %v1923 = vadd.f32 0.0, %v1922
    %v1924 = vpop.f32.mrf.mxu0
    %v1925 = vpop.f32.mrf.mxu0
    %v1926 = vadd.f32 0.0, %v1925
    %v1927 = vpop.f32.mrf.mxu0
    %1928 = vmatprep.mubr.bf16.mxu0 %v1104
    %1929 = vmatmul.mubr.bf16.gmra.mxu0 %v1103
    %v1930 = vpop.f32.mrf.mxu0
    %v1931 = vadd.f32 0.0, %v1930
    %v1932 = vpop.f32.mrf.mxu0
    %v1933 = vpop.f32.mrf.mxu0
    %v1934 = vadd.f32 0.0, %v1933
    %v1935 = vpop.f32.mrf.mxu0
    %1936 = vmatprep.mubr.bf16.mxu0 %v1107
    %1937 = vmatmul.mubr.bf16.gmra.mxu0 %v1106
    %v1938 = vpop.f32.mrf.mxu0
    %v1939 = vadd.f32 0.0, %v1938
    %v1940 = vpop.f32.mrf.mxu0
    %v1941 = vpop.f32.mrf.mxu0
    %v1942 = vadd.f32 0.0, %v1941
    %v1943 = vpop.f32.mrf.mxu0
    %1944 = vmatprep.mubr.bf16.mxu0 %v1110
    %1945 = vmatmul.mubr.bf16.gmra.mxu0 %v1109
    %v1946 = vpop.f32.mrf.mxu0
    %v1947 = vadd.f32 0.0, %v1946
    %v1948 = vpop.f32.mrf.mxu0
    %v1949 = vpop.f32.mrf.mxu0
    %v1950 = vadd.f32 0.0, %v1949
    %v1951 = vpop.f32.mrf.mxu0
    %1952 = vmatprep.mubr.bf16.mxu0 %v1113
    %1953 = vmatmul.mubr.bf16.gmra.mxu0 %v1112
    %v1954 = vpop.f32.mrf.mxu0
    %v1955 = vadd.f32 0.0, %v1954
    %v1956 = vpop.f32.mrf.mxu0
    %v1957 = vpop.f32.mrf.mxu0
    %v1958 = vadd.f32 0.0, %v1957
    %v1959 = vpop.f32.mrf.mxu0
    %1960 = vmatprep.mubr.bf16.mxu0 %v1116
    %1961 = vmatmul.mubr.bf16.gmra.mxu0 %v1115
    %v1962 = vpop.f32.mrf.mxu0
    %v1963 = vadd.f32 0.0, %v1962
    %v1964 = vpop.f32.mrf.mxu0
    %v1965 = vpop.f32.mrf.mxu0
    %v1966 = vadd.f32 0.0, %v1965
    %v1967 = vpop.f32.mrf.mxu0
    %1968 = vmatprep.mubr.bf16.mxu0 %v1119
    %1969 = vmatmul.mubr.bf16.gmra.mxu0 %v1118
    %v1970 = vpop.f32.mrf.mxu0
    %v1971 = vadd.f32 0.0, %v1970
    %v1972 = vpop.f32.mrf.mxu0
    %v1973 = vpop.f32.mrf.mxu0
    %v1974 = vadd.f32 0.0, %v1973
    %v1975 = vpop.f32.mrf.mxu0
    %1976 = vmatprep.mubr.bf16.mxu0 %v1122
    %1977 = vmatmul.mubr.bf16.gmra.mxu0 %v1121
    %v1978 = vpop.f32.mrf.mxu0
    %v1979 = vadd.f32 0.0, %v1978
    %v1980 = vpop.f32.mrf.mxu0
    %v1981 = vpop.f32.mrf.mxu0
    %v1982 = vadd.f32 0.0, %v1981
    %v1983 = vpop.f32.mrf.mxu0
    %1984 = vmatprep.mubr.bf16.mxu0 %v1125
    %1985 = vmatmul.mubr.bf16.gmra.mxu0 %v1124
    %v1986 = vpop.f32.mrf.mxu0
    %v1987 = vadd.f32 0.0, %v1986
    %v1988 = vpop.f32.mrf.mxu0
    %v1989 = vpop.f32.mrf.mxu0
    %v1990 = vadd.f32 0.0, %v1989
    %v1991 = vpop.f32.mrf.mxu0
    %1992 = vmatprep.mubr.bf16.mxu0 %v1128
    %1993 = vmatmul.mubr.bf16.gmra.mxu0 %v1127
    %v1994 = vpop.f32.mrf.mxu0
    %v1995 = vadd.f32 0.0, %v1994
    %v1996 = vpop.f32.mrf.mxu0
    %v1997 = vpop.f32.mrf.mxu0
    %v1998 = vadd.f32 0.0, %v1997
    %v1999 = vpop.f32.mrf.mxu0
    %2000 = vdwg.mxu0
    %2001 = vmatprep.subr.bf16.mxu0 0
    %2002 = vmatpush1.bf16.msra.mxu0 %v1591
    %2003 = vmatprep.subr.bf16.mxu0 0
    %2004 = vmatpush1.bf16.msra.mxu0 %v1590
    %2005 = vmatprep.subr.bf16.mxu0 0
    %2006 = vmatpush1.bf16.msra.mxu0 %v1589
    %2007 = vmatprep.subr.bf16.mxu0 0
    %2008 = vmatpush1.bf16.msra.mxu0 %v1588
    %2009 = vmatprep.subr.bf16.mxu0 0
    %2010 = vmatpush1.bf16.msra.mxu0 %v1587
    %2011 = vmatprep.subr.bf16.mxu0 0
    %2012 = vmatpush1.bf16.msra.mxu0 %v1586
    %2013 = vmatprep.subr.bf16.mxu0 0
    %2014 = vmatpush1.bf16.msra.mxu0 %v1585
    %2015 = vmatprep.subr.bf16.mxu0 0
    %2016 = vmatpush1.bf16.msra.mxu0 %v1584
    %2017 = vmatprep.subr.bf16.mxu0 0
    %2018 = vmatpush2.bf16.msra.mxu0 %v1599
    %2019 = vmatprep.subr.bf16.mxu0 0
    %2020 = vmatpush2.bf16.msra.mxu0 %v1598
    %2021 = vmatprep.subr.bf16.mxu0 0
    %2022 = vmatpush2.bf16.msra.mxu0 %v1597
    %2023 = vmatprep.subr.bf16.mxu0 0
    %2024 = vmatpush2.bf16.msra.mxu0 %v1596
    %2025 = vmatprep.subr.bf16.mxu0 0
    %2026 = vmatpush2.bf16.msra.mxu0 %v1595
    %2027 = vmatprep.subr.bf16.mxu0 0
    %2028 = vmatpush2.bf16.msra.mxu0 %v1594
    %2029 = vmatprep.subr.bf16.mxu0 0
    %2030 = vmatpush2.bf16.msra.mxu0 %v1593
    %2031 = vmatprep.subr.bf16.mxu0 0
    %2032 = vmatpush2.bf16.msra.mxu0 %v1592
    %2033 = vmatprep.mubr.bf16.mxu0 %v1031
    %2034 = vmatmul.mubr.bf16.gmra.mxu0 %v1030
    %v2035 = vpop.f32.mrf.mxu0
    %v2036 = vadd.f32 %v1747, %v2035
    %v2037 = vpop.f32.mrf.mxu0
    %v2038 = vpop.f32.mrf.mxu0
    %v2039 = vadd.f32 %v1750, %v2038
    %v2040 = vpop.f32.mrf.mxu0
    %2041 = vmatprep.mubr.bf16.mxu0 %v1034
    %2042 = vmatmul.mubr.bf16.gmra.mxu0 %v1033
    %v2043 = vpop.f32.mrf.mxu0
    %v2044 = vadd.f32 %v1755, %v2043
    %v2045 = vpop.f32.mrf.mxu0
    %v2046 = vpop.f32.mrf.mxu0
    %v2047 = vadd.f32 %v1758, %v2046
    %v2048 = vpop.f32.mrf.mxu0
    %2049 = vmatprep.mubr.bf16.mxu0 %v1037
    %2050 = vmatmul.mubr.bf16.gmra.mxu0 %v1036
    %v2051 = vpop.f32.mrf.mxu0
    %v2052 = vadd.f32 %v1763, %v2051
    %v2053 = vpop.f32.mrf.mxu0
    %v2054 = vpop.f32.mrf.mxu0
    %v2055 = vadd.f32 %v1766, %v2054
    %v2056 = vpop.f32.mrf.mxu0
    %2057 = vmatprep.mubr.bf16.mxu0 %v1040
    %2058 = vmatmul.mubr.bf16.gmra.mxu0 %v1039
    %v2059 = vpop.f32.mrf.mxu0
    %v2060 = vadd.f32 %v1771, %v2059
    %v2061 = vpop.f32.mrf.mxu0
    %v2062 = vpop.f32.mrf.mxu0
    %v2063 = vadd.f32 %v1774, %v2062
    %v2064 = vpop.f32.mrf.mxu0
    %2065 = vmatprep.mubr.bf16.mxu0 %v1043
    %2066 = vmatmul.mubr.bf16.gmra.mxu0 %v1042
    %v2067 = vpop.f32.mrf.mxu0
    %v2068 = vadd.f32 %v1779, %v2067
    %v2069 = vpop.f32.mrf.mxu0
    %v2070 = vpop.f32.mrf.mxu0
    %v2071 = vadd.f32 %v1782, %v2070
    %v2072 = vpop.f32.mrf.mxu0
    %2073 = vmatprep.mubr.bf16.mxu0 %v1046
    %2074 = vmatmul.mubr.bf16.gmra.mxu0 %v1045
    %v2075 = vpop.f32.mrf.mxu0
    %v2076 = vadd.f32 %v1787, %v2075
    %v2077 = vpop.f32.mrf.mxu0
    %v2078 = vpop.f32.mrf.mxu0
    %v2079 = vadd.f32 %v1790, %v2078
    %v2080 = vpop.f32.mrf.mxu0
    %2081 = vmatprep.mubr.bf16.mxu0 %v1049
    %2082 = vmatmul.mubr.bf16.gmra.mxu0 %v1048
    %v2083 = vpop.f32.mrf.mxu0
    %v2084 = vadd.f32 %v1795, %v2083
    %v2085 = vpop.f32.mrf.mxu0
    %v2086 = vpop.f32.mrf.mxu0
    %v2087 = vadd.f32 %v1798, %v2086
    %v2088 = vpop.f32.mrf.mxu0
    %2089 = vmatprep.mubr.bf16.mxu0 %v1052
    %2090 = vmatmul.mubr.bf16.gmra.mxu0 %v1051
    %v2091 = vpop.f32.mrf.mxu0
    %v2092 = vadd.f32 %v1803, %v2091
    %v2093 = vpop.f32.mrf.mxu0
    %v2094 = vpop.f32.mrf.mxu0
    %v2095 = vadd.f32 %v1806, %v2094
    %v2096 = vpop.f32.mrf.mxu0
    %2097 = vmatprep.mubr.bf16.mxu0 %v1055
    %2098 = vmatmul.mubr.bf16.gmra.mxu0 %v1054
    %v2099 = vpop.f32.mrf.mxu0
    %v2100 = vadd.f32 %v1811, %v2099
    %v2101 = vpop.f32.mrf.mxu0
    %v2102 = vpop.f32.mrf.mxu0
    %v2103 = vadd.f32 %v1814, %v2102
    %v2104 = vpop.f32.mrf.mxu0
    %2105 = vmatprep.mubr.bf16.mxu0 %v1058
    %2106 = vmatmul.mubr.bf16.gmra.mxu0 %v1057
    %v2107 = vpop.f32.mrf.mxu0
    %v2108 = vadd.f32 %v1819, %v2107
    %v2109 = vpop.f32.mrf.mxu0
    %v2110 = vpop.f32.mrf.mxu0
    %v2111 = vadd.f32 %v1822, %v2110
    %v2112 = vpop.f32.mrf.mxu0
    %2113 = vmatprep.mubr.bf16.mxu0 %v1061
    %2114 = vmatmul.mubr.bf16.gmra.mxu0 %v1060
    %v2115 = vpop.f32.mrf.mxu0
    %v2116 = vadd.f32 %v1827, %v2115
    %v2117 = vpop.f32.mrf.mxu0
    %v2118 = vpop.f32.mrf.mxu0
    %v2119 = vadd.f32 %v1830, %v2118
    %v2120 = vpop.f32.mrf.mxu0
    %2121 = vmatprep.mubr.bf16.mxu0 %v1064
    %2122 = vmatmul.mubr.bf16.gmra.mxu0 %v1063
    %v2123 = vpop.f32.mrf.mxu0
    %v2124 = vadd.f32 %v1835, %v2123
    %v2125 = vpop.f32.mrf.mxu0
    %v2126 = vpop.f32.mrf.mxu0
    %v2127 = vadd.f32 %v1838, %v2126
    %v2128 = vpop.f32.mrf.mxu0
    %2129 = vmatprep.mubr.bf16.mxu0 %v1067
    %2130 = vmatmul.mubr.bf16.gmra.mxu0 %v1066
    %v2131 = vpop.f32.mrf.mxu0
    %v2132 = vadd.f32 %v1843, %v2131
    %v2133 = vpop.f32.mrf.mxu0
    %v2134 = vpop.f32.mrf.mxu0
    %v2135 = vadd.f32 %v1846, %v2134
    %v2136 = vpop.f32.mrf.mxu0
    %2137 = vmatprep.mubr.bf16.mxu0 %v1070
    %2138 = vmatmul.mubr.bf16.gmra.mxu0 %v1069
    %v2139 = vpop.f32.mrf.mxu0
    %v2140 = vadd.f32 %v1851, %v2139
    %v2141 = vpop.f32.mrf.mxu0
    %v2142 = vpop.f32.mrf.mxu0
    %v2143 = vadd.f32 %v1854, %v2142
    %v2144 = vpop.f32.mrf.mxu0
    %2145 = vmatprep.mubr.bf16.mxu0 %v1073
    %2146 = vmatmul.mubr.bf16.gmra.mxu0 %v1072
    %v2147 = vpop.f32.mrf.mxu0
    %v2148 = vadd.f32 %v1859, %v2147
    %v2149 = vpop.f32.mrf.mxu0
    %v2150 = vpop.f32.mrf.mxu0
    %v2151 = vadd.f32 %v1862, %v2150
    %v2152 = vpop.f32.mrf.mxu0
    %2153 = vmatprep.mubr.bf16.mxu0 %v1076
    %2154 = vmatmul.mubr.bf16.gmra.mxu0 %v1075
    %v2155 = vpop.f32.mrf.mxu0
    %v2156 = vadd.f32 %v1867, %v2155
    %v2157 = vpop.f32.mrf.mxu0
    %v2158 = vpop.f32.mrf.mxu0
    %v2159 = vadd.f32 %v1870, %v2158
    %v2160 = vpop.f32.mrf.mxu0
    %2161 = vmatprep.mubr.bf16.mxu0 %v1085
    %2162 = vmatmul.mubr.bf16.gmra.mxu0 %v1084
    %v2163 = vpop.f32.mrf.mxu0
    %v2164 = vadd.f32 %v1875, %v2163
    %v2165 = vpop.f32.mrf.mxu0
    %v2166 = vpop.f32.mrf.mxu0
    %v2167 = vadd.f32 %v1878, %v2166
    %v2168 = vpop.f32.mrf.mxu0
    %2169 = vmatprep.mubr.bf16.mxu0 %v1088
    %2170 = vmatmul.mubr.bf16.gmra.mxu0 %v1087
    %v2171 = vpop.f32.mrf.mxu0
    %v2172 = vadd.f32 %v1883, %v2171
    %v2173 = vpop.f32.mrf.mxu0
    %v2174 = vpop.f32.mrf.mxu0
    %v2175 = vadd.f32 %v1886, %v2174
    %v2176 = vpop.f32.mrf.mxu0
    %2177 = vmatprep.mubr.bf16.mxu0 %v1091
    %2178 = vmatmul.mubr.bf16.gmra.mxu0 %v1090
    %v2179 = vpop.f32.mrf.mxu0
    %v2180 = vadd.f32 %v1891, %v2179
    %v2181 = vpop.f32.mrf.mxu0
    %v2182 = vpop.f32.mrf.mxu0
    %v2183 = vadd.f32 %v1894, %v2182
    %v2184 = vpop.f32.mrf.mxu0
    %2185 = vmatprep.mubr.bf16.mxu0 %v1094
    %2186 = vmatmul.mubr.bf16.gmra.mxu0 %v1093
    %v2187 = vpop.f32.mrf.mxu0
    %v2188 = vadd.f32 %v1899, %v2187
    %v2189 = vpop.f32.mrf.mxu0
    %v2190 = vpop.f32.mrf.mxu0
    %v2191 = vadd.f32 %v1902, %v2190
    %v2192 = vpop.f32.mrf.mxu0
    %2193 = vmatprep.mubr.bf16.mxu0 %v1097
    %2194 = vmatmul.mubr.bf16.gmra.mxu0 %v1096
    %v2195 = vpop.f32.mrf.mxu0
    %v2196 = vadd.f32 %v1907, %v2195
    %v2197 = vpop.f32.mrf.mxu0
    %v2198 = vpop.f32.mrf.mxu0
    %v2199 = vadd.f32 %v1910, %v2198
    %v2200 = vpop.f32.mrf.mxu0
    %2201 = vmatprep.mubr.bf16.mxu0 %v1100
    %2202 = vmatmul.mubr.bf16.gmra.mxu0 %v1099
    %v2203 = vpop.f32.mrf.mxu0
    %v2204 = vadd.f32 %v1915, %v2203
    %v2205 = vpop.f32.mrf.mxu0
    %v2206 = vpop.f32.mrf.mxu0
    %v2207 = vadd.f32 %v1918, %v2206
    %v2208 = vpop.f32.mrf.mxu0
    %2209 = vmatprep.mubr.bf16.mxu0 %v1103
    %2210 = vmatmul.mubr.bf16.gmra.mxu0 %v1102
    %v2211 = vpop.f32.mrf.mxu0
    %v2212 = vadd.f32 %v1923, %v2211
    %v2213 = vpop.f32.mrf.mxu0
    %v2214 = vpop.f32.mrf.mxu0
    %v2215 = vadd.f32 %v1926, %v2214
    %v2216 = vpop.f32.mrf.mxu0
    %2217 = vmatprep.mubr.bf16.mxu0 %v1106
    %2218 = vmatmul.mubr.bf16.gmra.mxu0 %v1105
    %v2219 = vpop.f32.mrf.mxu0
    %v2220 = vadd.f32 %v1931, %v2219
    %v2221 = vpop.f32.mrf.mxu0
    %v2222 = vpop.f32.mrf.mxu0
    %v2223 = vadd.f32 %v1934, %v2222
    %v2224 = vpop.f32.mrf.mxu0
    %2225 = vmatprep.mubr.bf16.mxu0 %v1109
    %2226 = vmatmul.mubr.bf16.gmra.mxu0 %v1108
    %v2227 = vpop.f32.mrf.mxu0
    %v2228 = vadd.f32 %v1939, %v2227
    %v2229 = vpop.f32.mrf.mxu0
    %v2230 = vpop.f32.mrf.mxu0
    %v2231 = vadd.f32 %v1942, %v2230
    %v2232 = vpop.f32.mrf.mxu0
    %2233 = vmatprep.mubr.bf16.mxu0 %v1112
    %2234 = vmatmul.mubr.bf16.gmra.mxu0 %v1111
    %v2235 = vpop.f32.mrf.mxu0
    %v2236 = vadd.f32 %v1947, %v2235
    %v2237 = vpop.f32.mrf.mxu0
    %v2238 = vpop.f32.mrf.mxu0
    %v2239 = vadd.f32 %v1950, %v2238
    %v2240 = vpop.f32.mrf.mxu0
    %2241 = vmatprep.mubr.bf16.mxu0 %v1115
    %2242 = vmatmul.mubr.bf16.gmra.mxu0 %v1114
    %v2243 = vpop.f32.mrf.mxu0
    %v2244 = vadd.f32 %v1955, %v2243
    %v2245 = vpop.f32.mrf.mxu0
    %v2246 = vpop.f32.mrf.mxu0
    %v2247 = vadd.f32 %v1958, %v2246
    %v2248 = vpop.f32.mrf.mxu0
    %2249 = vmatprep.mubr.bf16.mxu0 %v1118
    %2250 = vmatmul.mubr.bf16.gmra.mxu0 %v1117
    %v2251 = vpop.f32.mrf.mxu0
    %v2252 = vadd.f32 %v1963, %v2251
    %v2253 = vpop.f32.mrf.mxu0
    %v2254 = vpop.f32.mrf.mxu0
    %v2255 = vadd.f32 %v1966, %v2254
    %v2256 = vpop.f32.mrf.mxu0
    %2257 = vmatprep.mubr.bf16.mxu0 %v1121
    %2258 = vmatmul.mubr.bf16.gmra.mxu0 %v1120
    %v2259 = vpop.f32.mrf.mxu0
    %v2260 = vadd.f32 %v1971, %v2259
    %v2261 = vpop.f32.mrf.mxu0
    %v2262 = vpop.f32.mrf.mxu0
    %v2263 = vadd.f32 %v1974, %v2262
    %v2264 = vpop.f32.mrf.mxu0
    %2265 = vmatprep.mubr.bf16.mxu0 %v1124
    %2266 = vmatmul.mubr.bf16.gmra.mxu0 %v1123
    %v2267 = vpop.f32.mrf.mxu0
    %v2268 = vadd.f32 %v1979, %v2267
    %v2269 = vpop.f32.mrf.mxu0
    %v2270 = vpop.f32.mrf.mxu0
    %v2271 = vadd.f32 %v1982, %v2270
    %v2272 = vpop.f32.mrf.mxu0
    %2273 = vmatprep.mubr.bf16.mxu0 %v1127
    %2274 = vmatmul.mubr.bf16.gmra.mxu0 %v1126
    %v2275 = vpop.f32.mrf.mxu0
    %v2276 = vadd.f32 %v1987, %v2275
    %v2277 = vpop.f32.mrf.mxu0
    %v2278 = vpop.f32.mrf.mxu0
    %v2279 = vadd.f32 %v1990, %v2278
    %v2280 = vpop.f32.mrf.mxu0
    %2281 = vmatprep.mubr.bf16.mxu0 %v1130
    %2282 = vmatmul.mubr.bf16.gmra.mxu0 %v1129
    %v2283 = vpop.f32.mrf.mxu0
    %v2284 = vadd.f32 %v1995, %v2283
    %v2285 = vpop.f32.mrf.mxu0
    %v2286 = vpop.f32.mrf.mxu0
    %v2287 = vadd.f32 %v1998, %v2286
    %v2288 = vpop.f32.mrf.mxu0
    %2289 = vdwg.mxu0
    %2290 = vmatprep.subr.bf16.mxu0 0
    %2291 = vmatpush1.bf16.msra.mxu0 %v1607
    %2292 = vmatprep.subr.bf16.mxu0 0
    %2293 = vmatpush1.bf16.msra.mxu0 %v1606
    %2294 = vmatprep.subr.bf16.mxu0 0
    %2295 = vmatpush1.bf16.msra.mxu0 %v1605
    %2296 = vmatprep.subr.bf16.mxu0 0
    %2297 = vmatpush1.bf16.msra.mxu0 %v1604
    %2298 = vmatprep.subr.bf16.mxu0 0
    %2299 = vmatpush1.bf16.msra.mxu0 %v1603
    %2300 = vmatprep.subr.bf16.mxu0 0
    %2301 = vmatpush1.bf16.msra.mxu0 %v1602
    %2302 = vmatprep.subr.bf16.mxu0 0
    %2303 = vmatpush1.bf16.msra.mxu0 %v1601
    %2304 = vmatprep.subr.bf16.mxu0 0
    %2305 = vmatpush1.bf16.msra.mxu0 %v1600
    %2306 = vmatprep.subr.bf16.mxu0 0
    %2307 = vmatpush2.bf16.msra.mxu0 %v1615
    %2308 = vmatprep.subr.bf16.mxu0 0
    %2309 = vmatpush2.bf16.msra.mxu0 %v1614
    %2310 = vmatprep.subr.bf16.mxu0 0
    %2311 = vmatpush2.bf16.msra.mxu0 %v1613
    %2312 = vmatprep.subr.bf16.mxu0 0
    %2313 = vmatpush2.bf16.msra.mxu0 %v1612
    %2314 = vmatprep.subr.bf16.mxu0 0
    %2315 = vmatpush2.bf16.msra.mxu0 %v1611
    %2316 = vmatprep.subr.bf16.mxu0 0
    %2317 = vmatpush2.bf16.msra.mxu0 %v1610
    %2318 = vmatprep.subr.bf16.mxu0 0
    %2319 = vmatpush2.bf16.msra.mxu0 %v1609
    %2320 = vmatprep.subr.bf16.mxu0 0
    %2321 = vmatpush2.bf16.msra.mxu0 %v1608
    %2322 = vmatprep.mubr.bf16.mxu0 %v1033
    %2323 = vmatmul.mubr.bf16.gmra.mxu0 %v1032
    %v2324 = vpop.f32.mrf.mxu0
    %v2325 = vadd.f32 %v2036, %v2324
    %v2326 = vpop.f32.mrf.mxu0
    %v2327 = vpop.f32.mrf.mxu0
    %v2328 = vadd.f32 %v2039, %v2327
    %v2329 = vpop.f32.mrf.mxu0
    %2330 = vmatprep.mubr.bf16.mxu0 %v1036
    %2331 = vmatmul.mubr.bf16.gmra.mxu0 %v1035
    %v2332 = vpop.f32.mrf.mxu0
    %v2333 = vadd.f32 %v2044, %v2332
    %v2334 = vpop.f32.mrf.mxu0
    %v2335 = vpop.f32.mrf.mxu0
    %v2336 = vadd.f32 %v2047, %v2335
    %v2337 = vpop.f32.mrf.mxu0
    %2338 = vmatprep.mubr.bf16.mxu0 %v1039
    %2339 = vmatmul.mubr.bf16.gmra.mxu0 %v1038
    %v2340 = vpop.f32.mrf.mxu0
    %v2341 = vadd.f32 %v2052, %v2340
    %v2342 = vpop.f32.mrf.mxu0
    %v2343 = vpop.f32.mrf.mxu0
    %v2344 = vadd.f32 %v2055, %v2343
    %v2345 = vpop.f32.mrf.mxu0
    %2346 = vmatprep.mubr.bf16.mxu0 %v1042
    %2347 = vmatmul.mubr.bf16.gmra.mxu0 %v1041
    %v2348 = vpop.f32.mrf.mxu0
    %v2349 = vadd.f32 %v2060, %v2348
    %v2350 = vpop.f32.mrf.mxu0
    %v2351 = vpop.f32.mrf.mxu0
    %v2352 = vadd.f32 %v2063, %v2351
    %v2353 = vpop.f32.mrf.mxu0
    %2354 = vmatprep.mubr.bf16.mxu0 %v1045
    %2355 = vmatmul.mubr.bf16.gmra.mxu0 %v1044
    %v2356 = vpop.f32.mrf.mxu0
    %v2357 = vadd.f32 %v2068, %v2356
    %v2358 = vpop.f32.mrf.mxu0
    %v2359 = vpop.f32.mrf.mxu0
    %v2360 = vadd.f32 %v2071, %v2359
    %v2361 = vpop.f32.mrf.mxu0
    %2362 = vmatprep.mubr.bf16.mxu0 %v1048
    %2363 = vmatmul.mubr.bf16.gmra.mxu0 %v1047
    %v2364 = vpop.f32.mrf.mxu0
    %v2365 = vadd.f32 %v2076, %v2364
    %v2366 = vpop.f32.mrf.mxu0
    %v2367 = vpop.f32.mrf.mxu0
    %v2368 = vadd.f32 %v2079, %v2367
    %v2369 = vpop.f32.mrf.mxu0
    %2370 = vmatprep.mubr.bf16.mxu0 %v1051
    %2371 = vmatmul.mubr.bf16.gmra.mxu0 %v1050
    %v2372 = vpop.f32.mrf.mxu0
    %v2373 = vadd.f32 %v2084, %v2372
    %v2374 = vpop.f32.mrf.mxu0
    %v2375 = vpop.f32.mrf.mxu0
    %v2376 = vadd.f32 %v2087, %v2375
    %v2377 = vpop.f32.mrf.mxu0
    %2378 = vmatprep.mubr.bf16.mxu0 %v1054
    %2379 = vmatmul.mubr.bf16.gmra.mxu0 %v1053
    %v2380 = vpop.f32.mrf.mxu0
    %v2381 = vadd.f32 %v2092, %v2380
    %v2382 = vpop.f32.mrf.mxu0
    %v2383 = vpop.f32.mrf.mxu0
    %v2384 = vadd.f32 %v2095, %v2383
    %v2385 = vpop.f32.mrf.mxu0
    %2386 = vmatprep.mubr.bf16.mxu0 %v1057
    %2387 = vmatmul.mubr.bf16.gmra.mxu0 %v1056
    %v2388 = vpop.f32.mrf.mxu0
    %v2389 = vadd.f32 %v2100, %v2388
    %v2390 = vpop.f32.mrf.mxu0
    %v2391 = vpop.f32.mrf.mxu0
    %v2392 = vadd.f32 %v2103, %v2391
    %v2393 = vpop.f32.mrf.mxu0
    %2394 = vmatprep.mubr.bf16.mxu0 %v1060
    %2395 = vmatmul.mubr.bf16.gmra.mxu0 %v1059
    %v2396 = vpop.f32.mrf.mxu0
    %v2397 = vadd.f32 %v2108, %v2396
    %v2398 = vpop.f32.mrf.mxu0
    %v2399 = vpop.f32.mrf.mxu0
    %v2400 = vadd.f32 %v2111, %v2399
    %v2401 = vpop.f32.mrf.mxu0
    %2402 = vmatprep.mubr.bf16.mxu0 %v1063
    %2403 = vmatmul.mubr.bf16.gmra.mxu0 %v1062
    %v2404 = vpop.f32.mrf.mxu0
    %v2405 = vadd.f32 %v2116, %v2404
    %v2406 = vpop.f32.mrf.mxu0
    %v2407 = vpop.f32.mrf.mxu0
    %v2408 = vadd.f32 %v2119, %v2407
    %v2409 = vpop.f32.mrf.mxu0
    %2410 = vmatprep.mubr.bf16.mxu0 %v1066
    %2411 = vmatmul.mubr.bf16.gmra.mxu0 %v1065
    %v2412 = vpop.f32.mrf.mxu0
    %v2413 = vadd.f32 %v2124, %v2412
    %v2414 = vpop.f32.mrf.mxu0
    %v2415 = vpop.f32.mrf.mxu0
    %v2416 = vadd.f32 %v2127, %v2415
    %v2417 = vpop.f32.mrf.mxu0
    %2418 = vmatprep.mubr.bf16.mxu0 %v1069
    %2419 = vmatmul.mubr.bf16.gmra.mxu0 %v1068
    %v2420 = vpop.f32.mrf.mxu0
    %v2421 = vadd.f32 %v2132, %v2420
    %v2422 = vpop.f32.mrf.mxu0
    %v2423 = vpop.f32.mrf.mxu0
    %v2424 = vadd.f32 %v2135, %v2423
    %v2425 = vpop.f32.mrf.mxu0
    %2426 = vmatprep.mubr.bf16.mxu0 %v1072
    %2427 = vmatmul.mubr.bf16.gmra.mxu0 %v1071
    %v2428 = vpop.f32.mrf.mxu0
    %v2429 = vadd.f32 %v2140, %v2428
    %v2430 = vpop.f32.mrf.mxu0
    %v2431 = vpop.f32.mrf.mxu0
    %v2432 = vadd.f32 %v2143, %v2431
    %v2433 = vpop.f32.mrf.mxu0
    %2434 = vmatprep.mubr.bf16.mxu0 %v1075
    %2435 = vmatmul.mubr.bf16.gmra.mxu0 %v1074
    %v2436 = vpop.f32.mrf.mxu0
    %v2437 = vadd.f32 %v2148, %v2436
    %v2438 = vpop.f32.mrf.mxu0
    %v2439 = vpop.f32.mrf.mxu0
    %v2440 = vadd.f32 %v2151, %v2439
    %v2441 = vpop.f32.mrf.mxu0
    %2442 = vmatprep.mubr.bf16.mxu0 %v1078
    %2443 = vmatmul.mubr.bf16.gmra.mxu0 %v1077
    %v2444 = vpop.f32.mrf.mxu0
    %v2445 = vadd.f32 %v2156, %v2444
    %v2446 = vpop.f32.mrf.mxu0
    %v2447 = vpop.f32.mrf.mxu0
    %v2448 = vadd.f32 %v2159, %v2447
    %v2449 = vpop.f32.mrf.mxu0
    %2450 = vmatprep.mubr.bf16.mxu0 %v1087
    %2451 = vmatmul.mubr.bf16.gmra.mxu0 %v1086
    %v2452 = vpop.f32.mrf.mxu0
    %v2453 = vadd.f32 %v2164, %v2452
    %v2454 = vpop.f32.mrf.mxu0
    %v2455 = vpop.f32.mrf.mxu0
    %v2456 = vadd.f32 %v2167, %v2455
    %v2457 = vpop.f32.mrf.mxu0
    %2458 = vmatprep.mubr.bf16.mxu0 %v1090
    %2459 = vmatmul.mubr.bf16.gmra.mxu0 %v1089
    %v2460 = vpop.f32.mrf.mxu0
    %v2461 = vadd.f32 %v2172, %v2460
    %v2462 = vpop.f32.mrf.mxu0
    %v2463 = vpop.f32.mrf.mxu0
    %v2464 = vadd.f32 %v2175, %v2463
    %v2465 = vpop.f32.mrf.mxu0
    %2466 = vmatprep.mubr.bf16.mxu0 %v1093
    %2467 = vmatmul.mubr.bf16.gmra.mxu0 %v1092
    %v2468 = vpop.f32.mrf.mxu0
    %v2469 = vadd.f32 %v2180, %v2468
    %v2470 = vpop.f32.mrf.mxu0
    %v2471 = vpop.f32.mrf.mxu0
    %v2472 = vadd.f32 %v2183, %v2471
    %v2473 = vpop.f32.mrf.mxu0
    %2474 = vmatprep.mubr.bf16.mxu0 %v1096
    %2475 = vmatmul.mubr.bf16.gmra.mxu0 %v1095
    %v2476 = vpop.f32.mrf.mxu0
    %v2477 = vadd.f32 %v2188, %v2476
    %v2478 = vpop.f32.mrf.mxu0
    %v2479 = vpop.f32.mrf.mxu0
    %v2480 = vadd.f32 %v2191, %v2479
    %v2481 = vpop.f32.mrf.mxu0
    %2482 = vmatprep.mubr.bf16.mxu0 %v1099
    %2483 = vmatmul.mubr.bf16.gmra.mxu0 %v1098
    %v2484 = vpop.f32.mrf.mxu0
    %v2485 = vadd.f32 %v2196, %v2484
    %v2486 = vpop.f32.mrf.mxu0
    %v2487 = vpop.f32.mrf.mxu0
    %v2488 = vadd.f32 %v2199, %v2487
    %v2489 = vpop.f32.mrf.mxu0
    %2490 = vmatprep.mubr.bf16.mxu0 %v1102
    %2491 = vmatmul.mubr.bf16.gmra.mxu0 %v1101
    %v2492 = vpop.f32.mrf.mxu0
    %v2493 = vadd.f32 %v2204, %v2492
    %v2494 = vpop.f32.mrf.mxu0
    %v2495 = vpop.f32.mrf.mxu0
    %v2496 = vadd.f32 %v2207, %v2495
    %v2497 = vpop.f32.mrf.mxu0
    %2498 = vmatprep.mubr.bf16.mxu0 %v1105
    %2499 = vmatmul.mubr.bf16.gmra.mxu0 %v1104
    %v2500 = vpop.f32.mrf.mxu0
    %v2501 = vadd.f32 %v2212, %v2500
    %v2502 = vpop.f32.mrf.mxu0
    %v2503 = vpop.f32.mrf.mxu0
    %v2504 = vadd.f32 %v2215, %v2503
    %v2505 = vpop.f32.mrf.mxu0
    %2506 = vmatprep.mubr.bf16.mxu0 %v1108
    %2507 = vmatmul.mubr.bf16.gmra.mxu0 %v1107
    %v2508 = vpop.f32.mrf.mxu0
    %v2509 = vadd.f32 %v2220, %v2508
    %v2510 = vpop.f32.mrf.mxu0
    %v2511 = vpop.f32.mrf.mxu0
    %v2512 = vadd.f32 %v2223, %v2511
    %v2513 = vpop.f32.mrf.mxu0
    %2514 = vmatprep.mubr.bf16.mxu0 %v1111
    %2515 = vmatmul.mubr.bf16.gmra.mxu0 %v1110
    %v2516 = vpop.f32.mrf.mxu0
    %v2517 = vadd.f32 %v2228, %v2516
    %v2518 = vpop.f32.mrf.mxu0
    %v2519 = vpop.f32.mrf.mxu0
    %v2520 = vadd.f32 %v2231, %v2519
    %v2521 = vpop.f32.mrf.mxu0
    %2522 = vmatprep.mubr.bf16.mxu0 %v1114
    %2523 = vmatmul.mubr.bf16.gmra.mxu0 %v1113
    %v2524 = vpop.f32.mrf.mxu0
    %v2525 = vadd.f32 %v2236, %v2524
    %v2526 = vpop.f32.mrf.mxu0
    %v2527 = vpop.f32.mrf.mxu0
    %v2528 = vadd.f32 %v2239, %v2527
    %v2529 = vpop.f32.mrf.mxu0
    %2530 = vmatprep.mubr.bf16.mxu0 %v1117
    %2531 = vmatmul.mubr.bf16.gmra.mxu0 %v1116
    %v2532 = vpop.f32.mrf.mxu0
    %v2533 = vadd.f32 %v2244, %v2532
    %v2534 = vpop.f32.mrf.mxu0
    %v2535 = vpop.f32.mrf.mxu0
    %v2536 = vadd.f32 %v2247, %v2535
    %v2537 = vpop.f32.mrf.mxu0
    %2538 = vmatprep.mubr.bf16.mxu0 %v1120
    %2539 = vmatmul.mubr.bf16.gmra.mxu0 %v1119
    %v2540 = vpop.f32.mrf.mxu0
    %v2541 = vadd.f32 %v2252, %v2540
    %v2542 = vpop.f32.mrf.mxu0
    %v2543 = vpop.f32.mrf.mxu0
    %v2544 = vadd.f32 %v2255, %v2543
    %v2545 = vpop.f32.mrf.mxu0
    %2546 = vmatprep.mubr.bf16.mxu0 %v1123
    %2547 = vmatmul.mubr.bf16.gmra.mxu0 %v1122
    %v2548 = vpop.f32.mrf.mxu0
    %v2549 = vadd.f32 %v2260, %v2548
    %v2550 = vpop.f32.mrf.mxu0
    %v2551 = vpop.f32.mrf.mxu0
    %v2552 = vadd.f32 %v2263, %v2551
    %v2553 = vpop.f32.mrf.mxu0
    %2554 = vmatprep.mubr.bf16.mxu0 %v1126
    %2555 = vmatmul.mubr.bf16.gmra.mxu0 %v1125
    %v2556 = vpop.f32.mrf.mxu0
    %v2557 = vadd.f32 %v2268, %v2556
    %v2558 = vpop.f32.mrf.mxu0
    %v2559 = vpop.f32.mrf.mxu0
    %v2560 = vadd.f32 %v2271, %v2559
    %v2561 = vpop.f32.mrf.mxu0
    %2562 = vmatprep.mubr.bf16.mxu0 %v1129
    %2563 = vmatmul.mubr.bf16.gmra.mxu0 %v1128
    %v2564 = vpop.f32.mrf.mxu0
    %v2565 = vadd.f32 %v2276, %v2564
    %v2566 = vpop.f32.mrf.mxu0
    %v2567 = vpop.f32.mrf.mxu0
    %v2568 = vadd.f32 %v2279, %v2567
    %v2569 = vpop.f32.mrf.mxu0
    %2570 = vmatprep.mubr.bf16.mxu0 %v1132
    %2571 = vmatmul.mubr.bf16.gmra.mxu0 %v1131
    %v2572 = vpop.f32.mrf.mxu0
    %v2573 = vadd.f32 %v2284, %v2572
    %v2574 = vpop.f32.mrf.mxu0
    %v2575 = vpop.f32.mrf.mxu0
    %v2576 = vadd.f32 %v2287, %v2575
    %v2577 = vpop.f32.mrf.mxu0
    %2578 = vdwg.mxu0
    %2579 = vmatprep.subr.bf16.mxu0 0
    %2580 = vmatpush1.bf16.msra.mxu0 %v1623
    %2581 = vmatprep.subr.bf16.mxu0 0
    %2582 = vmatpush1.bf16.msra.mxu0 %v1622
    %2583 = vmatprep.subr.bf16.mxu0 0
    %2584 = vmatpush1.bf16.msra.mxu0 %v1621
    %2585 = vmatprep.subr.bf16.mxu0 0
    %2586 = vmatpush1.bf16.msra.mxu0 %v1620
    %2587 = vmatprep.subr.bf16.mxu0 0
    %2588 = vmatpush1.bf16.msra.mxu0 %v1619
    %2589 = vmatprep.subr.bf16.mxu0 0
    %2590 = vmatpush1.bf16.msra.mxu0 %v1618
    %2591 = vmatprep.subr.bf16.mxu0 0
    %2592 = vmatpush1.bf16.msra.mxu0 %v1617
    %2593 = vmatprep.subr.bf16.mxu0 0
    %2594 = vmatpush1.bf16.msra.mxu0 %v1616
    %2595 = vmatprep.subr.bf16.mxu0 0
    %2596 = vmatpush2.bf16.msra.mxu0 %v1631
    %2597 = vmatprep.subr.bf16.mxu0 0
    %2598 = vmatpush2.bf16.msra.mxu0 %v1630
    %2599 = vmatprep.subr.bf16.mxu0 0
    %2600 = vmatpush2.bf16.msra.mxu0 %v1629
    %2601 = vmatprep.subr.bf16.mxu0 0
    %2602 = vmatpush2.bf16.msra.mxu0 %v1628
    %2603 = vmatprep.subr.bf16.mxu0 0
    %2604 = vmatpush2.bf16.msra.mxu0 %v1627
    %2605 = vmatprep.subr.bf16.mxu0 0
    %2606 = vmatpush2.bf16.msra.mxu0 %v1626
    %2607 = vmatprep.subr.bf16.mxu0 0
    %2608 = vmatpush2.bf16.msra.mxu0 %v1625
    %2609 = vmatprep.subr.bf16.mxu0 0
    %2610 = vmatpush2.bf16.msra.mxu0 %v1624
    %2611 = vmatprep.mubr.bf16.mxu0 %v1035
    %2612 = vmatmul.mubr.bf16.gmra.mxu0 %v1034
    %v2613 = vpop.f32.mrf.mxu0
    %v2614 = vadd.f32 %v2325, %v2613
    %v2615 = vpop.f32.mrf.mxu0
    %v2616 = vpop.f32.mrf.mxu0
    %v2617 = vadd.f32 %v2328, %v2616
    %v2618 = vpop.f32.mrf.mxu0
    %2619 = vmatprep.mubr.bf16.mxu0 %v1038
    %2620 = vmatmul.mubr.bf16.gmra.mxu0 %v1037
    %v2621 = vpop.f32.mrf.mxu0
    %v2622 = vadd.f32 %v2333, %v2621
    %v2623 = vpop.f32.mrf.mxu0
    %v2624 = vpop.f32.mrf.mxu0
    %v2625 = vadd.f32 %v2336, %v2624
    %v2626 = vpop.f32.mrf.mxu0
    %2627 = vmatprep.mubr.bf16.mxu0 %v1041
    %2628 = vmatmul.mubr.bf16.gmra.mxu0 %v1040
    %v2629 = vpop.f32.mrf.mxu0
    %v2630 = vadd.f32 %v2341, %v2629
    %v2631 = vpop.f32.mrf.mxu0
    %v2632 = vpop.f32.mrf.mxu0
    %v2633 = vadd.f32 %v2344, %v2632
    %v2634 = vpop.f32.mrf.mxu0
    %2635 = vmatprep.mubr.bf16.mxu0 %v1044
    %2636 = vmatmul.mubr.bf16.gmra.mxu0 %v1043
    %v2637 = vpop.f32.mrf.mxu0
    %v2638 = vadd.f32 %v2349, %v2637
    %v2639 = vpop.f32.mrf.mxu0
    %v2640 = vpop.f32.mrf.mxu0
    %v2641 = vadd.f32 %v2352, %v2640
    %v2642 = vpop.f32.mrf.mxu0
    %2643 = vmatprep.mubr.bf16.mxu0 %v1047
    %2644 = vmatmul.mubr.bf16.gmra.mxu0 %v1046
    %v2645 = vpop.f32.mrf.mxu0
    %v2646 = vadd.f32 %v2357, %v2645
    %v2647 = vpop.f32.mrf.mxu0
    %v2648 = vpop.f32.mrf.mxu0
    %v2649 = vadd.f32 %v2360, %v2648
    %v2650 = vpop.f32.mrf.mxu0
    %2651 = vmatprep.mubr.bf16.mxu0 %v1050
    %2652 = vmatmul.mubr.bf16.gmra.mxu0 %v1049
    %v2653 = vpop.f32.mrf.mxu0
    %v2654 = vadd.f32 %v2365, %v2653
    %v2655 = vpop.f32.mrf.mxu0
    %v2656 = vpop.f32.mrf.mxu0
    %v2657 = vadd.f32 %v2368, %v2656
    %v2658 = vpop.f32.mrf.mxu0
    %2659 = vmatprep.mubr.bf16.mxu0 %v1053
    %2660 = vmatmul.mubr.bf16.gmra.mxu0 %v1052
    %v2661 = vpop.f32.mrf.mxu0
    %v2662 = vadd.f32 %v2373, %v2661
    %v2663 = vpop.f32.mrf.mxu0
    %v2664 = vpop.f32.mrf.mxu0
    %v2665 = vadd.f32 %v2376, %v2664
    %v2666 = vpop.f32.mrf.mxu0
    %2667 = vmatprep.mubr.bf16.mxu0 %v1056
    %2668 = vmatmul.mubr.bf16.gmra.mxu0 %v1055
    %v2669 = vpop.f32.mrf.mxu0
    %v2670 = vadd.f32 %v2381, %v2669
    %v2671 = vpop.f32.mrf.mxu0
    %v2672 = vpop.f32.mrf.mxu0
    %v2673 = vadd.f32 %v2384, %v2672
    %v2674 = vpop.f32.mrf.mxu0
    %2675 = vmatprep.mubr.bf16.mxu0 %v1059
    %2676 = vmatmul.mubr.bf16.gmra.mxu0 %v1058
    %v2677 = vpop.f32.mrf.mxu0
    %v2678 = vadd.f32 %v2389, %v2677
    %v2679 = vpop.f32.mrf.mxu0
    %v2680 = vpop.f32.mrf.mxu0
    %v2681 = vadd.f32 %v2392, %v2680
    %v2682 = vpop.f32.mrf.mxu0
    %2683 = vmatprep.mubr.bf16.mxu0 %v1062
    %2684 = vmatmul.mubr.bf16.gmra.mxu0 %v1061
    %v2685 = vpop.f32.mrf.mxu0
    %v2686 = vadd.f32 %v2397, %v2685
    %v2687 = vpop.f32.mrf.mxu0
    %v2688 = vpop.f32.mrf.mxu0
    %v2689 = vadd.f32 %v2400, %v2688
    %v2690 = vpop.f32.mrf.mxu0
    %2691 = vmatprep.mubr.bf16.mxu0 %v1065
    %2692 = vmatmul.mubr.bf16.gmra.mxu0 %v1064
    %v2693 = vpop.f32.mrf.mxu0
    %v2694 = vadd.f32 %v2405, %v2693
    %v2695 = vpop.f32.mrf.mxu0
    %v2696 = vpop.f32.mrf.mxu0
    %v2697 = vadd.f32 %v2408, %v2696
    %v2698 = vpop.f32.mrf.mxu0
    %2699 = vmatprep.mubr.bf16.mxu0 %v1068
    %2700 = vmatmul.mubr.bf16.gmra.mxu0 %v1067
    %v2701 = vpop.f32.mrf.mxu0
    %v2702 = vadd.f32 %v2413, %v2701
    %v2703 = vpop.f32.mrf.mxu0
    %v2704 = vpop.f32.mrf.mxu0
    %v2705 = vadd.f32 %v2416, %v2704
    %v2706 = vpop.f32.mrf.mxu0
    %2707 = vmatprep.mubr.bf16.mxu0 %v1071
    %2708 = vmatmul.mubr.bf16.gmra.mxu0 %v1070
    %v2709 = vpop.f32.mrf.mxu0
    %v2710 = vadd.f32 %v2421, %v2709
    %v2711 = vpop.f32.mrf.mxu0
    %v2712 = vpop.f32.mrf.mxu0
    %v2713 = vadd.f32 %v2424, %v2712
    %v2714 = vpop.f32.mrf.mxu0
    %2715 = vmatprep.mubr.bf16.mxu0 %v1074
    %2716 = vmatmul.mubr.bf16.gmra.mxu0 %v1073
    %v2717 = vpop.f32.mrf.mxu0
    %v2718 = vadd.f32 %v2429, %v2717
    %v2719 = vpop.f32.mrf.mxu0
    %v2720 = vpop.f32.mrf.mxu0
    %v2721 = vadd.f32 %v2432, %v2720
    %v2722 = vpop.f32.mrf.mxu0
    %2723 = vmatprep.mubr.bf16.mxu0 %v1077
    %2724 = vmatmul.mubr.bf16.gmra.mxu0 %v1076
    %v2725 = vpop.f32.mrf.mxu0
    %v2726 = vadd.f32 %v2437, %v2725
    %v2727 = vpop.f32.mrf.mxu0
    %v2728 = vpop.f32.mrf.mxu0
    %v2729 = vadd.f32 %v2440, %v2728
    %v2730 = vpop.f32.mrf.mxu0
    %2731 = vmatprep.mubr.bf16.mxu0 %v1080
    %2732 = vmatmul.mubr.bf16.gmra.mxu0 %v1079
    %v2733 = vpop.f32.mrf.mxu0
    %v2734 = vadd.f32 %v2445, %v2733
    %v2735 = vpop.f32.mrf.mxu0
    %v2736 = vpop.f32.mrf.mxu0
    %v2737 = vadd.f32 %v2448, %v2736
    %v2738 = vpop.f32.mrf.mxu0
    %2739 = vmatprep.mubr.bf16.mxu0 %v1089
    %2740 = vmatmul.mubr.bf16.gmra.mxu0 %v1088
    %v2741 = vpop.f32.mrf.mxu0
    %v2742 = vadd.f32 %v2453, %v2741
    %v2743 = vpop.f32.mrf.mxu0
    %v2744 = vpop.f32.mrf.mxu0
    %v2745 = vadd.f32 %v2456, %v2744
    %v2746 = vpop.f32.mrf.mxu0
    %2747 = vmatprep.mubr.bf16.mxu0 %v1092
    %2748 = vmatmul.mubr.bf16.gmra.mxu0 %v1091
    %v2749 = vpop.f32.mrf.mxu0
    %v2750 = vadd.f32 %v2461, %v2749
    %v2751 = vpop.f32.mrf.mxu0
    %v2752 = vpop.f32.mrf.mxu0
    %v2753 = vadd.f32 %v2464, %v2752
    %v2754 = vpop.f32.mrf.mxu0
    %2755 = vmatprep.mubr.bf16.mxu0 %v1095
    %2756 = vmatmul.mubr.bf16.gmra.mxu0 %v1094
    %v2757 = vpop.f32.mrf.mxu0
    %v2758 = vadd.f32 %v2469, %v2757
    %v2759 = vpop.f32.mrf.mxu0
    %v2760 = vpop.f32.mrf.mxu0
    %v2761 = vadd.f32 %v2472, %v2760
    %v2762 = vpop.f32.mrf.mxu0
    %2763 = vmatprep.mubr.bf16.mxu0 %v1098
    %2764 = vmatmul.mubr.bf16.gmra.mxu0 %v1097
    %v2765 = vpop.f32.mrf.mxu0
    %v2766 = vadd.f32 %v2477, %v2765
    %v2767 = vpop.f32.mrf.mxu0
    %v2768 = vpop.f32.mrf.mxu0
    %v2769 = vadd.f32 %v2480, %v2768
    %v2770 = vpop.f32.mrf.mxu0
    %2771 = vmatprep.mubr.bf16.mxu0 %v1101
    %2772 = vmatmul.mubr.bf16.gmra.mxu0 %v1100
    %v2773 = vpop.f32.mrf.mxu0
    %v2774 = vadd.f32 %v2485, %v2773
    %v2775 = vpop.f32.mrf.mxu0
    %v2776 = vpop.f32.mrf.mxu0
    %v2777 = vadd.f32 %v2488, %v2776
    %v2778 = vpop.f32.mrf.mxu0
    %2779 = vmatprep.mubr.bf16.mxu0 %v1104
    %2780 = vmatmul.mubr.bf16.gmra.mxu0 %v1103
    %v2781 = vpop.f32.mrf.mxu0
    %v2782 = vadd.f32 %v2493, %v2781
    %v2783 = vpop.f32.mrf.mxu0
    %v2784 = vpop.f32.mrf.mxu0
    %v2785 = vadd.f32 %v2496, %v2784
    %v2786 = vpop.f32.mrf.mxu0
    %2787 = vmatprep.mubr.bf16.mxu0 %v1107
    %2788 = vmatmul.mubr.bf16.gmra.mxu0 %v1106
    %v2789 = vpop.f32.mrf.mxu0
    %v2790 = vadd.f32 %v2501, %v2789
    %v2791 = vpop.f32.mrf.mxu0
    %v2792 = vpop.f32.mrf.mxu0
    %v2793 = vadd.f32 %v2504, %v2792
    %v2794 = vpop.f32.mrf.mxu0
    %2795 = vmatprep.mubr.bf16.mxu0 %v1110
    %2796 = vmatmul.mubr.bf16.gmra.mxu0 %v1109
    %v2797 = vpop.f32.mrf.mxu0
    %v2798 = vadd.f32 %v2509, %v2797
    %v2799 = vpop.f32.mrf.mxu0
    %v2800 = vpop.f32.mrf.mxu0
    %v2801 = vadd.f32 %v2512, %v2800
    %v2802 = vpop.f32.mrf.mxu0
    %2803 = vmatprep.mubr.bf16.mxu0 %v1113
    %2804 = vmatmul.mubr.bf16.gmra.mxu0 %v1112
    %v2805 = vpop.f32.mrf.mxu0
    %v2806 = vadd.f32 %v2517, %v2805
    %v2807 = vpop.f32.mrf.mxu0
    %v2808 = vpop.f32.mrf.mxu0
    %v2809 = vadd.f32 %v2520, %v2808
    %v2810 = vpop.f32.mrf.mxu0
    %2811 = vmatprep.mubr.bf16.mxu0 %v1116
    %2812 = vmatmul.mubr.bf16.gmra.mxu0 %v1115
    %v2813 = vpop.f32.mrf.mxu0
    %v2814 = vadd.f32 %v2525, %v2813
    %v2815 = vpop.f32.mrf.mxu0
    %v2816 = vpop.f32.mrf.mxu0
    %v2817 = vadd.f32 %v2528, %v2816
    %v2818 = vpop.f32.mrf.mxu0
    %2819 = vmatprep.mubr.bf16.mxu0 %v1119
    %2820 = vmatmul.mubr.bf16.gmra.mxu0 %v1118
    %v2821 = vpop.f32.mrf.mxu0
    %v2822 = vadd.f32 %v2533, %v2821
    %v2823 = vpop.f32.mrf.mxu0
    %v2824 = vpop.f32.mrf.mxu0
    %v2825 = vadd.f32 %v2536, %v2824
    %v2826 = vpop.f32.mrf.mxu0
    %2827 = vmatprep.mubr.bf16.mxu0 %v1122
    %2828 = vmatmul.mubr.bf16.gmra.mxu0 %v1121
    %v2829 = vpop.f32.mrf.mxu0
    %v2830 = vadd.f32 %v2541, %v2829
    %v2831 = vpop.f32.mrf.mxu0
    %v2832 = vpop.f32.mrf.mxu0
    %v2833 = vadd.f32 %v2544, %v2832
    %v2834 = vpop.f32.mrf.mxu0
    %2835 = vmatprep.mubr.bf16.mxu0 %v1125
    %2836 = vmatmul.mubr.bf16.gmra.mxu0 %v1124
    %v2837 = vpop.f32.mrf.mxu0
    %v2838 = vadd.f32 %v2549, %v2837
    %v2839 = vpop.f32.mrf.mxu0
    %v2840 = vpop.f32.mrf.mxu0
    %v2841 = vadd.f32 %v2552, %v2840
    %v2842 = vpop.f32.mrf.mxu0
    %2843 = vmatprep.mubr.bf16.mxu0 %v1128
    %2844 = vmatmul.mubr.bf16.gmra.mxu0 %v1127
    %v2845 = vpop.f32.mrf.mxu0
    %v2846 = vadd.f32 %v2557, %v2845
    %v2847 = vpop.f32.mrf.mxu0
    %v2848 = vpop.f32.mrf.mxu0
    %v2849 = vadd.f32 %v2560, %v2848
    %v2850 = vpop.f32.mrf.mxu0
    %2851 = vmatprep.mubr.bf16.mxu0 %v1131
    %2852 = vmatmul.mubr.bf16.gmra.mxu0 %v1130
    %v2853 = vpop.f32.mrf.mxu0
    %v2854 = vadd.f32 %v2565, %v2853
    %v2855 = vpop.f32.mrf.mxu0
    %v2856 = vpop.f32.mrf.mxu0
    %v2857 = vadd.f32 %v2568, %v2856
    %v2858 = vpop.f32.mrf.mxu0
    %2859 = vmatprep.mubr.bf16.mxu0 %v1134
    %2860 = vmatmul.mubr.bf16.gmra.mxu0 %v1133
    %v2861 = vpop.f32.mrf.mxu0
    %v2862 = vadd.f32 %v2573, %v2861
    %v2863 = vpop.f32.mrf.mxu0
    %v2864 = vpop.f32.mrf.mxu0
    %v2865 = vadd.f32 %v2576, %v2864
    %v2866 = vpop.f32.mrf.mxu0
    %2867 = vdwg.mxu0
    %2868 = vmatprep.subr.bf16.mxu0 0
    %2869 = vmatpush1.bf16.msra.mxu0 %v1639
    %2870 = vmatprep.subr.bf16.mxu0 0
    %2871 = vmatpush1.bf16.msra.mxu0 %v1638
    %2872 = vmatprep.subr.bf16.mxu0 0
    %2873 = vmatpush1.bf16.msra.mxu0 %v1637
    %2874 = vmatprep.subr.bf16.mxu0 0
    %2875 = vmatpush1.bf16.msra.mxu0 %v1636
    %2876 = vmatprep.subr.bf16.mxu0 0
    %2877 = vmatpush1.bf16.msra.mxu0 %v1635
    %2878 = vmatprep.subr.bf16.mxu0 0
    %2879 = vmatpush1.bf16.msra.mxu0 %v1634
    %2880 = vmatprep.subr.bf16.mxu0 0
    %2881 = vmatpush1.bf16.msra.mxu0 %v1633
    %2882 = vmatprep.subr.bf16.mxu0 0
    %2883 = vmatpush1.bf16.msra.mxu0 %v1632
    %2884 = vmatprep.subr.bf16.mxu0 0
    %2885 = vmatpush2.bf16.msra.mxu0 0
    %2886 = vmatprep.subr.bf16.mxu0 0
    %2887 = vmatpush2.bf16.msra.mxu0 0
    %2888 = vmatprep.subr.bf16.mxu0 0
    %2889 = vmatpush2.bf16.msra.mxu0 0
    %2890 = vmatprep.subr.bf16.mxu0 0
    %2891 = vmatpush2.bf16.msra.mxu0 0
    %2892 = vmatprep.subr.bf16.mxu0 0
    %2893 = vmatpush2.bf16.msra.mxu0 0
    %2894 = vmatprep.subr.bf16.mxu0 0
    %2895 = vmatpush2.bf16.msra.mxu0 0
    %2896 = vmatprep.subr.bf16.mxu0 0
    %2897 = vmatpush2.bf16.msra.mxu0 0
    %2898 = vmatprep.subr.bf16.mxu0 0
    %2899 = vmatpush2.bf16.msra.mxu0 0
    %2900 = vmatprep.mubr.bf16.mxu0 0
    %2901 = vmatmul.mubr.bf16.gmra.mxu0 %v1036
    %v2902 = vpop.f32.mrf.mxu0
    %v2903 = vadd.f32 %v2614, %v2902
    %v2904 = vpop.f32.mrf.mxu0
    %v2905 = vpop.f32.mrf.mxu0
    %v2906 = vadd.f32 %v2617, %v2905
    %v2907 = vpop.f32.mrf.mxu0
    %2908 = vmatprep.mubr.bf16.mxu0 0
    %2909 = vmatmul.mubr.bf16.gmra.mxu0 %v1039
    %v2910 = vpop.f32.mrf.mxu0
    %v2911 = vadd.f32 %v2622, %v2910
    %v2912 = vpop.f32.mrf.mxu0
    %v2913 = vpop.f32.mrf.mxu0
    %v2914 = vadd.f32 %v2625, %v2913
    %v2915 = vpop.f32.mrf.mxu0
    %2916 = vmatprep.mubr.bf16.mxu0 0
    %2917 = vmatmul.mubr.bf16.gmra.mxu0 %v1042
    %v2918 = vpop.f32.mrf.mxu0
    %v2919 = vadd.f32 %v2630, %v2918
    %v2920 = vpop.f32.mrf.mxu0
    %v2921 = vpop.f32.mrf.mxu0
    %v2922 = vadd.f32 %v2633, %v2921
    %v2923 = vpop.f32.mrf.mxu0
    %2924 = vmatprep.mubr.bf16.mxu0 0
    %2925 = vmatmul.mubr.bf16.gmra.mxu0 %v1045
    %v2926 = vpop.f32.mrf.mxu0
    %v2927 = vadd.f32 %v2638, %v2926
    %v2928 = vpop.f32.mrf.mxu0
    %v2929 = vpop.f32.mrf.mxu0
    %v2930 = vadd.f32 %v2641, %v2929
    %v2931 = vpop.f32.mrf.mxu0
    %2932 = vmatprep.mubr.bf16.mxu0 0
    %2933 = vmatmul.mubr.bf16.gmra.mxu0 %v1048
    %v2934 = vpop.f32.mrf.mxu0
    %v2935 = vadd.f32 %v2646, %v2934
    %v2936 = vpop.f32.mrf.mxu0
    %v2937 = vpop.f32.mrf.mxu0
    %v2938 = vadd.f32 %v2649, %v2937
    %v2939 = vpop.f32.mrf.mxu0
    %2940 = vmatprep.mubr.bf16.mxu0 0
    %2941 = vmatmul.mubr.bf16.gmra.mxu0 %v1051
    %v2942 = vpop.f32.mrf.mxu0
    %v2943 = vadd.f32 %v2654, %v2942
    %v2944 = vpop.f32.mrf.mxu0
    %v2945 = vpop.f32.mrf.mxu0
    %v2946 = vadd.f32 %v2657, %v2945
    %v2947 = vpop.f32.mrf.mxu0
    %2948 = vmatprep.mubr.bf16.mxu0 0
    %2949 = vmatmul.mubr.bf16.gmra.mxu0 %v1054
    %v2950 = vpop.f32.mrf.mxu0
    %v2951 = vadd.f32 %v2662, %v2950
    %v2952 = vpop.f32.mrf.mxu0
    %v2953 = vpop.f32.mrf.mxu0
    %v2954 = vadd.f32 %v2665, %v2953
    %v2955 = vpop.f32.mrf.mxu0
    %2956 = vmatprep.mubr.bf16.mxu0 0
    %2957 = vmatmul.mubr.bf16.gmra.mxu0 %v1057
    %v2958 = vpop.f32.mrf.mxu0
    %v2959 = vadd.f32 %v2670, %v2958
    %v2960 = vpop.f32.mrf.mxu0
    %v2961 = vpop.f32.mrf.mxu0
    %v2962 = vadd.f32 %v2673, %v2961
    %v2963 = vpop.f32.mrf.mxu0
    %2964 = vmatprep.mubr.bf16.mxu0 0
    %2965 = vmatmul.mubr.bf16.gmra.mxu0 %v1060
    %v2966 = vpop.f32.mrf.mxu0
    %v2967 = vadd.f32 %v2678, %v2966
    %v2968 = vpop.f32.mrf.mxu0
    %v2969 = vpop.f32.mrf.mxu0
    %v2970 = vadd.f32 %v2681, %v2969
    %v2971 = vpop.f32.mrf.mxu0
    %2972 = vmatprep.mubr.bf16.mxu0 0
    %2973 = vmatmul.mubr.bf16.gmra.mxu0 %v1063
    %v2974 = vpop.f32.mrf.mxu0
    %v2975 = vadd.f32 %v2686, %v2974
    %v2976 = vpop.f32.mrf.mxu0
    %v2977 = vpop.f32.mrf.mxu0
    %v2978 = vadd.f32 %v2689, %v2977
    %v2979 = vpop.f32.mrf.mxu0
    %2980 = vmatprep.mubr.bf16.mxu0 0
    %2981 = vmatmul.mubr.bf16.gmra.mxu0 %v1066
    %v2982 = vpop.f32.mrf.mxu0
    %v2983 = vadd.f32 %v2694, %v2982
    %v2984 = vpop.f32.mrf.mxu0
    %v2985 = vpop.f32.mrf.mxu0
    %v2986 = vadd.f32 %v2697, %v2985
    %v2987 = vpop.f32.mrf.mxu0
    %2988 = vmatprep.mubr.bf16.mxu0 0
    %2989 = vmatmul.mubr.bf16.gmra.mxu0 %v1069
    %v2990 = vpop.f32.mrf.mxu0
    %v2991 = vadd.f32 %v2702, %v2990
    %v2992 = vpop.f32.mrf.mxu0
    %v2993 = vpop.f32.mrf.mxu0
    %v2994 = vadd.f32 %v2705, %v2993
    %v2995 = vpop.f32.mrf.mxu0
    %2996 = vmatprep.mubr.bf16.mxu0 0
    %2997 = vmatmul.mubr.bf16.gmra.mxu0 %v1072
    %v2998 = vpop.f32.mrf.mxu0
    %v2999 = vadd.f32 %v2710, %v2998
    %v3000 = vpop.f32.mrf.mxu0
    %v3001 = vpop.f32.mrf.mxu0
    %v3002 = vadd.f32 %v2713, %v3001
    %v3003 = vpop.f32.mrf.mxu0
    %3004 = vmatprep.mubr.bf16.mxu0 0
    %3005 = vmatmul.mubr.bf16.gmra.mxu0 %v1075
    %v3006 = vpop.f32.mrf.mxu0
    %v3007 = vadd.f32 %v2718, %v3006
    %v3008 = vpop.f32.mrf.mxu0
    %v3009 = vpop.f32.mrf.mxu0
    %v3010 = vadd.f32 %v2721, %v3009
    %v3011 = vpop.f32.mrf.mxu0
    %3012 = vmatprep.mubr.bf16.mxu0 0
    %3013 = vmatmul.mubr.bf16.gmra.mxu0 %v1078
    %v3014 = vpop.f32.mrf.mxu0
    %v3015 = vadd.f32 %v2726, %v3014
    %v3016 = vpop.f32.mrf.mxu0
    %v3017 = vpop.f32.mrf.mxu0
    %v3018 = vadd.f32 %v2729, %v3017
    %v3019 = vpop.f32.mrf.mxu0
    %3020 = vmatprep.mubr.bf16.mxu0 0
    %3021 = vmatmul.mubr.bf16.gmra.mxu0 %v1081
    %v3022 = vpop.f32.mrf.mxu0
    %v3023 = vadd.f32 %v2734, %v3022
    %v3024 = vpop.f32.mrf.mxu0
    %v3025 = vpop.f32.mrf.mxu0
    %v3026 = vadd.f32 %v2737, %v3025
    %v3027 = vpop.f32.mrf.mxu0
    %3028 = vmatprep.mubr.bf16.mxu0 0
    %3029 = vmatmul.mubr.bf16.gmra.mxu0 %v1090
    %v3030 = vpop.f32.mrf.mxu0
    %v3031 = vadd.f32 %v2742, %v3030
    %v3032 = vpop.f32.mrf.mxu0
    %v3033 = vpop.f32.mrf.mxu0
    %v3034 = vadd.f32 %v2745, %v3033
    %v3035 = vpop.f32.mrf.mxu0
    %3036 = vmatprep.mubr.bf16.mxu0 0
    %3037 = vmatmul.mubr.bf16.gmra.mxu0 %v1093
    %v3038 = vpop.f32.mrf.mxu0
    %v3039 = vadd.f32 %v2750, %v3038
    %v3040 = vpop.f32.mrf.mxu0
    %v3041 = vpop.f32.mrf.mxu0
    %v3042 = vadd.f32 %v2753, %v3041
    %v3043 = vpop.f32.mrf.mxu0
    %3044 = vmatprep.mubr.bf16.mxu0 0
    %3045 = vmatmul.mubr.bf16.gmra.mxu0 %v1096
    %v3046 = vpop.f32.mrf.mxu0
    %v3047 = vadd.f32 %v2758, %v3046
    %v3048 = vpop.f32.mrf.mxu0
    %v3049 = vpop.f32.mrf.mxu0
    %v3050 = vadd.f32 %v2761, %v3049
    %v3051 = vpop.f32.mrf.mxu0
    %3052 = vmatprep.mubr.bf16.mxu0 0
    %3053 = vmatmul.mubr.bf16.gmra.mxu0 %v1099
    %v3054 = vpop.f32.mrf.mxu0
    %v3055 = vadd.f32 %v2766, %v3054
    %v3056 = vpop.f32.mrf.mxu0
    %v3057 = vpop.f32.mrf.mxu0
    %v3058 = vadd.f32 %v2769, %v3057
    %v3059 = vpop.f32.mrf.mxu0
    %3060 = vmatprep.mubr.bf16.mxu0 0
    %3061 = vmatmul.mubr.bf16.gmra.mxu0 %v1102
    %v3062 = vpop.f32.mrf.mxu0
    %v3063 = vadd.f32 %v2774, %v3062
    %v3064 = vpop.f32.mrf.mxu0
    %v3065 = vpop.f32.mrf.mxu0
    %v3066 = vadd.f32 %v2777, %v3065
    %v3067 = vpop.f32.mrf.mxu0
    %3068 = vmatprep.mubr.bf16.mxu0 0
    %3069 = vmatmul.mubr.bf16.gmra.mxu0 %v1105
    %v3070 = vpop.f32.mrf.mxu0
    %v3071 = vadd.f32 %v2782, %v3070
    %v3072 = vpop.f32.mrf.mxu0
    %v3073 = vpop.f32.mrf.mxu0
    %v3074 = vadd.f32 %v2785, %v3073
    %v3075 = vpop.f32.mrf.mxu0
    %3076 = vmatprep.mubr.bf16.mxu0 0
    %3077 = vmatmul.mubr.bf16.gmra.mxu0 %v1108
    %v3078 = vpop.f32.mrf.mxu0
    %v3079 = vadd.f32 %v2790, %v3078
    %v3080 = vpop.f32.mrf.mxu0
    %v3081 = vpop.f32.mrf.mxu0
    %v3082 = vadd.f32 %v2793, %v3081
    %v3083 = vpop.f32.mrf.mxu0
    %3084 = vmatprep.mubr.bf16.mxu0 0
    %3085 = vmatmul.mubr.bf16.gmra.mxu0 %v1111
    %v3086 = vpop.f32.mrf.mxu0
    %v3087 = vadd.f32 %v2798, %v3086
    %v3088 = vpop.f32.mrf.mxu0
    %v3089 = vpop.f32.mrf.mxu0
    %v3090 = vadd.f32 %v2801, %v3089
    %v3091 = vpop.f32.mrf.mxu0
    %3092 = vmatprep.mubr.bf16.mxu0 0
    %3093 = vmatmul.mubr.bf16.gmra.mxu0 %v1114
    %v3094 = vpop.f32.mrf.mxu0
    %v3095 = vadd.f32 %v2806, %v3094
    %v3096 = vpop.f32.mrf.mxu0
    %v3097 = vpop.f32.mrf.mxu0
    %v3098 = vadd.f32 %v2809, %v3097
    %v3099 = vpop.f32.mrf.mxu0
    %3100 = vmatprep.mubr.bf16.mxu0 0
    %3101 = vmatmul.mubr.bf16.gmra.mxu0 %v1117
    %v3102 = vpop.f32.mrf.mxu0
    %v3103 = vadd.f32 %v2814, %v3102
    %v3104 = vpop.f32.mrf.mxu0
    %v3105 = vpop.f32.mrf.mxu0
    %v3106 = vadd.f32 %v2817, %v3105
    %v3107 = vpop.f32.mrf.mxu0
    %3108 = vmatprep.mubr.bf16.mxu0 0
    %3109 = vmatmul.mubr.bf16.gmra.mxu0 %v1120
    %v3110 = vpop.f32.mrf.mxu0
    %v3111 = vadd.f32 %v2822, %v3110
    %v3112 = vpop.f32.mrf.mxu0
    %v3113 = vpop.f32.mrf.mxu0
    %v3114 = vadd.f32 %v2825, %v3113
    %v3115 = vpop.f32.mrf.mxu0
    %3116 = vmatprep.mubr.bf16.mxu0 0
    %3117 = vmatmul.mubr.bf16.gmra.mxu0 %v1123
    %v3118 = vpop.f32.mrf.mxu0
    %v3119 = vadd.f32 %v2830, %v3118
    %v3120 = vpop.f32.mrf.mxu0
    %v3121 = vpop.f32.mrf.mxu0
    %v3122 = vadd.f32 %v2833, %v3121
    %v3123 = vpop.f32.mrf.mxu0
    %3124 = vmatprep.mubr.bf16.mxu0 0
    %3125 = vmatmul.mubr.bf16.gmra.mxu0 %v1126
    %v3126 = vpop.f32.mrf.mxu0
    %v3127 = vadd.f32 %v2838, %v3126
    %v3128 = vpop.f32.mrf.mxu0
    %v3129 = vpop.f32.mrf.mxu0
    %v3130 = vadd.f32 %v2841, %v3129
    %v3131 = vpop.f32.mrf.mxu0
    %3132 = vmatprep.mubr.bf16.mxu0 0
    %3133 = vmatmul.mubr.bf16.gmra.mxu0 %v1129
    %v3134 = vpop.f32.mrf.mxu0
    %v3135 = vadd.f32 %v2846, %v3134
    %v3136 = vpop.f32.mrf.mxu0
    %v3137 = vpop.f32.mrf.mxu0
    %v3138 = vadd.f32 %v2849, %v3137
    %v3139 = vpop.f32.mrf.mxu0
    %3140 = vmatprep.mubr.bf16.mxu0 0
    %3141 = vmatmul.mubr.bf16.gmra.mxu0 %v1132
    %v3142 = vpop.f32.mrf.mxu0
    %v3143 = vadd.f32 %v2854, %v3142
    %v3144 = vpop.f32.mrf.mxu0
    %v3145 = vpop.f32.mrf.mxu0
    %v3146 = vadd.f32 %v2857, %v3145
    %v3147 = vpop.f32.mrf.mxu0
    %3148 = vmatprep.mubr.bf16.mxu0 0
    %3149 = vmatmul.mubr.bf16.gmra.mxu0 %v1135
    %v3150 = vpop.f32.mrf.mxu0
    %v3151 = vadd.f32 %v2862, %v3150
    %v3152 = vpop.f32.mrf.mxu0
    %v3153 = vpop.f32.mrf.mxu0
    %v3154 = vadd.f32 %v2865, %v3153
    %v3155 = vpop.f32.mrf.mxu0
    %3156 = vdwg.mxu0
    %v3157 = vadd.f32 %v2903, %v2906
    %v3158 = vadd.f32 %v3157, %v2911
    %v3159 = vadd.f32 %v3158, %v2914
    %v3160 = vadd.f32 %v3159, %v2919
    %v3161 = vadd.f32 %v3160, %v2922
    %v3162 = vadd.f32 %v3161, %v2927
    %v3163 = vadd.f32 %v3162, %v2930
    %v3164 = vadd.f32 %v3163, %v2935
    %v3165 = vadd.f32 %v3164, %v2938
    %v3166 = vadd.f32 %v3165, %v2943
    %v3167 = vadd.f32 %v3166, %v2946
    %v3168 = vadd.f32 %v3167, %v2951
    %v3169 = vadd.f32 %v3168, %v2954
    %v3170 = vadd.f32 %v3169, %v2959
    %v3171 = vadd.f32 %v3170, %v2962
    %v3172 = vadd.f32 %v3171, %v2967
    %v3173 = vadd.f32 %v3172, %v2970
    %v3174 = vadd.f32 %v3173, %v2975
    %v3175 = vadd.f32 %v3174, %v2978
    %v3176 = vadd.f32 %v3175, %v2983
    %v3177 = vadd.f32 %v3176, %v2986
    %v3178 = vadd.f32 %v3177, %v2991
    %v3179 = vadd.f32 %v3178, %v2994
    %v3180 = vadd.f32 %v3179, %v2999
    %v3181 = vadd.f32 %v3180, %v3002
    %v3182 = vadd.f32 %v3181, %v3007
    %v3183 = vadd.f32 %v3182, %v3010
    %v3184 = vadd.f32 %v3183, %v3015
    %v3185 = vadd.f32 %v3184, %v3018
    %v3186 = vadd.f32 %v3185, %v3023
    %v3187 = vadd.f32 %v3186, %v3026
    %v3188 = vadd.f32 %v3187, %v3031
    %v3189 = vadd.f32 %v3188, %v3034
    %v3190 = vadd.f32 %v3189, %v3039
    %v3191 = vadd.f32 %v3190, %v3042
    %v3192 = vadd.f32 %v3191, %v3047
    %v3193 = vadd.f32 %v3192, %v3050
    %v3194 = vadd.f32 %v3193, %v3055
    %v3195 = vadd.f32 %v3194, %v3058
    %v3196 = vadd.f32 %v3195, %v3063
    %v3197 = vadd.f32 %v3196, %v3066
    %v3198 = vadd.f32 %v3197, %v3071
    %v3199 = vadd.f32 %v3198, %v3074
    %v3200 = vadd.f32 %v3199, %v3079
    %v3201 = vadd.f32 %v3200, %v3082
    %v3202 = vadd.f32 %v3201, %v3087
    %v3203 = vadd.f32 %v3202, %v3090
    %v3204 = vadd.f32 %v3203, %v3095
    %v3205 = vadd.f32 %v3204, %v3098
    %v3206 = vadd.f32 %v3205, %v3103
    %v3207 = vadd.f32 %v3206, %v3106
    %v3208 = vadd.f32 %v3207, %v3111
    %v3209 = vadd.f32 %v3208, %v3114
    %v3210 = vadd.f32 %v3209, %v3119
    %v3211 = vadd.f32 %v3210, %v3122
    %v3212 = vadd.f32 %v3211, %v3127
    %v3213 = vadd.f32 %v3212, %v3130
    %v3214 = vadd.f32 %v3213, %v3135
    %v3215 = vadd.f32 %v3214, %v3138
    %v3216 = vadd.f32 %v3215, %v3143
    %v3217 = vadd.f32 %v3216, %v3146
    %v3218 = vadd.f32 %v3217, %v3151
    %v3219 = vadd.f32 %v3218, %v3154
    %v3220 = vrot.slane %v3219, 4
    %v3221 = vadd.f32 %v3219, %v3220
    %v3222 = vrot.slane %v3221, 2
    %v3223 = vadd.f32 %v3221, %v3222
    %v3224 = vrot.slane %v3223, 1
    %v3225 = vadd.f32 %v3223, %v3224
    %v3226 = vmul.f32 %v3225, 0.001953125
    %v3227 = vsub.f32 %v2903, %v3226
    %v3228 = vsub.f32 %v2906, %v3226
    %v3229 = vsub.f32 %v2911, %v3226
    %v3230 = vsub.f32 %v2914, %v3226
    %v3231 = vsub.f32 %v2919, %v3226
    %v3232 = vsub.f32 %v2922, %v3226
    %v3233 = vsub.f32 %v2927, %v3226
    %v3234 = vsub.f32 %v2930, %v3226
    %v3235 = vsub.f32 %v2935, %v3226
    %v3236 = vsub.f32 %v2938, %v3226
    %v3237 = vsub.f32 %v2943, %v3226
    %v3238 = vsub.f32 %v2946, %v3226
    %v3239 = vsub.f32 %v2951, %v3226
    %v3240 = vsub.f32 %v2954, %v3226
    %v3241 = vsub.f32 %v2959, %v3226
    %v3242 = vsub.f32 %v2962, %v3226
    %v3243 = vsub.f32 %v2967, %v3226
    %v3244 = vsub.f32 %v2970, %v3226
    %v3245 = vsub.f32 %v2975, %v3226
    %v3246 = vsub.f32 %v2978, %v3226
    %v3247 = vsub.f32 %v2983, %v3226
    %v3248 = vsub.f32 %v2986, %v3226
    %v3249 = vsub.f32 %v2991, %v3226
    %v3250 = vsub.f32 %v2994, %v3226
    %v3251 = vsub.f32 %v2999, %v3226
    %v3252 = vsub.f32 %v3002, %v3226
    %v3253 = vsub.f32 %v3007, %v3226
    %v3254 = vsub.f32 %v3010, %v3226
    %v3255 = vsub.f32 %v3015, %v3226
    %v3256 = vsub.f32 %v3018, %v3226
    %v3257 = vsub.f32 %v3023, %v3226
    %v3258 = vsub.f32 %v3026, %v3226
    %v3259 = vsub.f32 %v3031, %v3226
    %v3260 = vsub.f32 %v3034, %v3226
    %v3261 = vsub.f32 %v3039, %v3226
    %v3262 = vsub.f32 %v3042, %v3226
    %v3263 = vsub.f32 %v3047, %v3226
    %v3264 = vsub.f32 %v3050, %v3226
    %v3265 = vsub.f32 %v3055, %v3226
    %v3266 = vsub.f32 %v3058, %v3226
    %v3267 = vsub.f32 %v3063, %v3226
    %v3268 = vsub.f32 %v3066, %v3226
    %v3269 = vsub.f32 %v3071, %v3226
    %v3270 = vsub.f32 %v3074, %v3226
    %v3271 = vsub.f32 %v3079, %v3226
    %v3272 = vsub.f32 %v3082, %v3226
    %v3273 = vsub.f32 %v3087, %v3226
    %v3274 = vsub.f32 %v3090, %v3226
    %v3275 = vsub.f32 %v3095, %v3226
    %v3276 = vsub.f32 %v3098, %v3226
    %v3277 = vsub.f32 %v3103, %v3226
    %v3278 = vsub.f32 %v3106, %v3226
    %v3279 = vsub.f32 %v3111, %v3226
    %v3280 = vsub.f32 %v3114, %v3226
    %v3281 = vsub.f32 %v3119, %v3226
    %v3282 = vsub.f32 %v3122, %v3226
    %v3283 = vsub.f32 %v3127, %v3226
    %v3284 = vsub.f32 %v3130, %v3226
    %v3285 = vsub.f32 %v3135, %v3226
    %v3286 = vsub.f32 %v3138, %v3226
    %v3287 = vsub.f32 %v3143, %v3226
    %v3288 = vsub.f32 %v3146, %v3226
    %v3289 = vsub.f32 %v3151, %v3226
    %v3290 = vsub.f32 %v3154, %v3226
    %v3291 = vmul.f32 %v3227, %v3227
    %v3292 = vmul.f32 %v3228, %v3228
    %v3293 = vmul.f32 %v3229, %v3229
    %v3294 = vmul.f32 %v3230, %v3230
    %v3295 = vmul.f32 %v3231, %v3231
    %v3296 = vmul.f32 %v3232, %v3232
    %v3297 = vmul.f32 %v3233, %v3233
    %v3298 = vmul.f32 %v3234, %v3234
    %v3299 = vmul.f32 %v3235, %v3235
    %v3300 = vmul.f32 %v3236, %v3236
    %v3301 = vmul.f32 %v3237, %v3237
    %v3302 = vmul.f32 %v3238, %v3238
    %v3303 = vmul.f32 %v3239, %v3239
    %v3304 = vmul.f32 %v3240, %v3240
    %v3305 = vmul.f32 %v3241, %v3241
    %v3306 = vmul.f32 %v3242, %v3242
    %v3307 = vmul.f32 %v3243, %v3243
    %v3308 = vmul.f32 %v3244, %v3244
    %v3309 = vmul.f32 %v3245, %v3245
    %v3310 = vmul.f32 %v3246, %v3246
    %v3311 = vmul.f32 %v3247, %v3247
    %v3312 = vmul.f32 %v3248, %v3248
    %v3313 = vmul.f32 %v3249, %v3249
    %v3314 = vmul.f32 %v3250, %v3250
    %v3315 = vmul.f32 %v3251, %v3251
    %v3316 = vmul.f32 %v3252, %v3252
    %v3317 = vmul.f32 %v3253, %v3253
    %v3318 = vmul.f32 %v3254, %v3254
    %v3319 = vmul.f32 %v3255, %v3255
    %v3320 = vmul.f32 %v3256, %v3256
    %v3321 = vmul.f32 %v3257, %v3257
    %v3322 = vmul.f32 %v3258, %v3258
    %v3323 = vmul.f32 %v3259, %v3259
    %v3324 = vmul.f32 %v3260, %v3260
    %v3325 = vmul.f32 %v3261, %v3261
    %v3326 = vmul.f32 %v3262, %v3262
    %v3327 = vmul.f32 %v3263, %v3263
    %v3328 = vmul.f32 %v3264, %v3264
    %v3329 = vmul.f32 %v3265, %v3265
    %v3330 = vmul.f32 %v3266, %v3266
    %v3331 = vmul.f32 %v3267, %v3267
    %v3332 = vmul.f32 %v3268, %v3268
    %v3333 = vmul.f32 %v3269, %v3269
    %v3334 = vmul.f32 %v3270, %v3270
    %v3335 = vmul.f32 %v3271, %v3271
    %v3336 = vmul.f32 %v3272, %v3272
    %v3337 = vmul.f32 %v3273, %v3273
    %v3338 = vmul.f32 %v3274, %v3274
    %v3339 = vmul.f32 %v3275, %v3275
    %v3340 = vmul.f32 %v3276, %v3276
    %v3341 = vmul.f32 %v3277, %v3277
    %v3342 = vmul.f32 %v3278, %v3278
    %v3343 = vmul.f32 %v3279, %v3279
    %v3344 = vmul.f32 %v3280, %v3280
    %v3345 = vmul.f32 %v3281, %v3281
    %v3346 = vmul.f32 %v3282, %v3282
    %v3347 = vmul.f32 %v3283, %v3283
    %v3348 = vmul.f32 %v3284, %v3284
    %v3349 = vmul.f32 %v3285, %v3285
    %v3350 = vmul.f32 %v3286, %v3286
    %v3351 = vmul.f32 %v3287, %v3287
    %v3352 = vmul.f32 %v3288, %v3288
    %v3353 = vmul.f32 %v3289, %v3289
    %v3354 = vmul.f32 %v3290, %v3290
    %v3355 = vadd.f32 %v3291, %v3292
    %v3356 = vadd.f32 %v3355, %v3293
    %v3357 = vadd.f32 %v3356, %v3294
    %v3358 = vadd.f32 %v3357, %v3295
    %v3359 = vadd.f32 %v3358, %v3296
    %v3360 = vadd.f32 %v3359, %v3297
    %v3361 = vadd.f32 %v3360, %v3298
    %v3362 = vadd.f32 %v3361, %v3299
    %v3363 = vadd.f32 %v3362, %v3300
    %v3364 = vadd.f32 %v3363, %v3301
    %v3365 = vadd.f32 %v3364, %v3302
    %v3366 = vadd.f32 %v3365, %v3303
    %v3367 = vadd.f32 %v3366, %v3304
    %v3368 = vadd.f32 %v3367, %v3305
    %v3369 = vadd.f32 %v3368, %v3306
    %v3370 = vadd.f32 %v3369, %v3307
    %v3371 = vadd.f32 %v3370, %v3308
    %v3372 = vadd.f32 %v3371, %v3309
    %v3373 = vadd.f32 %v3372, %v3310
    %v3374 = vadd.f32 %v3373, %v3311
    %v3375 = vadd.f32 %v3374, %v3312
    %v3376 = vadd.f32 %v3375, %v3313
    %v3377 = vadd.f32 %v3376, %v3314
    %v3378 = vadd.f32 %v3377, %v3315
    %v3379 = vadd.f32 %v3378, %v3316
    %v3380 = vadd.f32 %v3379, %v3317
    %v3381 = vadd.f32 %v3380, %v3318
    %v3382 = vadd.f32 %v3381, %v3319
    %v3383 = vadd.f32 %v3382, %v3320
    %v3384 = vadd.f32 %v3383, %v3321
    %v3385 = vadd.f32 %v3384, %v3322
    %v3386 = vadd.f32 %v3385, %v3323
    %v3387 = vadd.f32 %v3386, %v3324
    %v3388 = vadd.f32 %v3387, %v3325
    %v3389 = vadd.f32 %v3388, %v3326
    %v3390 = vadd.f32 %v3389, %v3327
    %v3391 = vadd.f32 %v3390, %v3328
    %v3392 = vadd.f32 %v3391, %v3329
    %v3393 = vadd.f32 %v3392, %v3330
    %v3394 = vadd.f32 %v3393, %v3331
    %v3395 = vadd.f32 %v3394, %v3332
    %v3396 = vadd.f32 %v3395, %v3333
    %v3397 = vadd.f32 %v3396, %v3334
    %v3398 = vadd.f32 %v3397, %v3335
    %v3399 = vadd.f32 %v3398, %v3336
    %v3400 = vadd.f32 %v3399, %v3337
    %v3401 = vadd.f32 %v3400, %v3338
    %v3402 = vadd.f32 %v3401, %v3339
    %v3403 = vadd.f32 %v3402, %v3340
    %v3404 = vadd.f32 %v3403, %v3341
    %v3405 = vadd.f32 %v3404, %v3342
    %v3406 = vadd.f32 %v3405, %v3343
    %v3407 = vadd.f32 %v3406, %v3344
    %v3408 = vadd.f32 %v3407, %v3345
    %v3409 = vadd.f32 %v3408, %v3346
    %v3410 = vadd.f32 %v3409, %v3347
    %v3411 = vadd.f32 %v3410, %v3348
    %v3412 = vadd.f32 %v3411, %v3349
    %v3413 = vadd.f32 %v3412, %v3350
    %v3414 = vadd.f32 %v3413, %v3351
    %v3415 = vadd.f32 %v3414, %v3352
    %v3416 = vadd.f32 %v3415, %v3353
    %v3417 = vadd.f32 %v3416, %v3354
    %v3418 = vrot.slane %v3417, 4
    %v3419 = vadd.f32 %v3417, %v3418
    %v3420 = vrot.slane %v3419, 2
    %v3421 = vadd.f32 %v3419, %v3420
    %v3422 = vrot.slane %v3421, 1
    %v3423 = vadd.f32 %v3421, %v3422
    %v3424 = vmul.f32 %v3423, 0.001953125
    %v3425 = vadd.f32 %v3424, 1e-05
    %v3426 = vrsqrt.pop %v3425
    %v3427 = vmul.f32 %v3227, %v3426
    %v3428 = vmul.f32 %v3228, %v3426
    %v3429 = vmul.f32 %v3229, %v3426
    %v3430 = vmul.f32 %v3230, %v3426
    %v3431 = vmul.f32 %v3231, %v3426
    %v3432 = vmul.f32 %v3232, %v3426
    %v3433 = vmul.f32 %v3233, %v3426
    %v3434 = vmul.f32 %v3234, %v3426
    %v3435 = vmul.f32 %v3235, %v3426
    %v3436 = vmul.f32 %v3236, %v3426
    %v3437 = vmul.f32 %v3237, %v3426
    %v3438 = vmul.f32 %v3238, %v3426
    %v3439 = vmul.f32 %v3239, %v3426
    %v3440 = vmul.f32 %v3240, %v3426
    %v3441 = vmul.f32 %v3241, %v3426
    %v3442 = vmul.f32 %v3242, %v3426
    %v3443 = vmul.f32 %v3243, %v3426
    %v3444 = vmul.f32 %v3244, %v3426
    %v3445 = vmul.f32 %v3245, %v3426
    %v3446 = vmul.f32 %v3246, %v3426
    %v3447 = vmul.f32 %v3247, %v3426
    %v3448 = vmul.f32 %v3248, %v3426
    %v3449 = vmul.f32 %v3249, %v3426
    %v3450 = vmul.f32 %v3250, %v3426
    %v3451 = vmul.f32 %v3251, %v3426
    %v3452 = vmul.f32 %v3252, %v3426
    %v3453 = vmul.f32 %v3253, %v3426
    %v3454 = vmul.f32 %v3254, %v3426
    %v3455 = vmul.f32 %v3255, %v3426
    %v3456 = vmul.f32 %v3256, %v3426
    %v3457 = vmul.f32 %v3257, %v3426
    %v3458 = vmul.f32 %v3258, %v3426
    %v3459 = vmul.f32 %v3259, %v3426
    %v3460 = vmul.f32 %v3260, %v3426
    %v3461 = vmul.f32 %v3261, %v3426
    %v3462 = vmul.f32 %v3262, %v3426
    %v3463 = vmul.f32 %v3263, %v3426
    %v3464 = vmul.f32 %v3264, %v3426
    %v3465 = vmul.f32 %v3265, %v3426
    %v3466 = vmul.f32 %v3266, %v3426
    %v3467 = vmul.f32 %v3267, %v3426
    %v3468 = vmul.f32 %v3268, %v3426
    %v3469 = vmul.f32 %v3269, %v3426
    %v3470 = vmul.f32 %v3270, %v3426
    %v3471 = vmul.f32 %v3271, %v3426
    %v3472 = vmul.f32 %v3272, %v3426
    %v3473 = vmul.f32 %v3273, %v3426
    %v3474 = vmul.f32 %v3274, %v3426
    %v3475 = vmul.f32 %v3275, %v3426
    %v3476 = vmul.f32 %v3276, %v3426
    %v3477 = vmul.f32 %v3277, %v3426
    %v3478 = vmul.f32 %v3278, %v3426
    %v3479 = vmul.f32 %v3279, %v3426
    %v3480 = vmul.f32 %v3280, %v3426
    %v3481 = vmul.f32 %v3281, %v3426
    %v3482 = vmul.f32 %v3282, %v3426
    %v3483 = vmul.f32 %v3283, %v3426
    %v3484 = vmul.f32 %v3284, %v3426
    %v3485 = vmul.f32 %v3285, %v3426
    %v3486 = vmul.f32 %v3286, %v3426
    %v3487 = vmul.f32 %v3287, %v3426
    %v3488 = vmul.f32 %v3288, %v3426
    %v3489 = vmul.f32 %v3289, %v3426
    %v3490 = vmul.f32 %v3290, %v3426
    %v3491 = vld [vmem:[%s3] sm:$0x1]
    %v3493 = vlaneseq
    %v3494 = vshrl.u32 %v3493, 7
    %v3495 = vsub.s32 0, %v3494
    %v3496 = vrot.slane %v3491, %v3495
    %v3498 = vmul.f32 %v3427, %v3496
    %v3499 = vmul.f32 %v3428, %v3496
    %v3500 = vmul.f32 %v3429, %v3496
    %v3501 = vmul.f32 %v3430, %v3496
    %v3502 = vmul.f32 %v3431, %v3496
    %v3503 = vmul.f32 %v3432, %v3496
    %v3504 = vmul.f32 %v3433, %v3496
    %v3505 = vmul.f32 %v3434, %v3496
    %v3506 = vmul.f32 %v3435, %v3496
    %v3507 = vmul.f32 %v3436, %v3496
    %v3508 = vmul.f32 %v3437, %v3496
    %v3509 = vmul.f32 %v3438, %v3496
    %v3510 = vmul.f32 %v3439, %v3496
    %v3511 = vmul.f32 %v3440, %v3496
    %v3512 = vmul.f32 %v3441, %v3496
    %v3513 = vmul.f32 %v3442, %v3496
    %v3514 = vmul.f32 %v3443, %v3496
    %v3515 = vmul.f32 %v3444, %v3496
    %v3516 = vmul.f32 %v3445, %v3496
    %v3517 = vmul.f32 %v3446, %v3496
    %v3518 = vmul.f32 %v3447, %v3496
    %v3519 = vmul.f32 %v3448, %v3496
    %v3520 = vmul.f32 %v3449, %v3496
    %v3521 = vmul.f32 %v3450, %v3496
    %v3522 = vmul.f32 %v3451, %v3496
    %v3523 = vmul.f32 %v3452, %v3496
    %v3524 = vmul.f32 %v3453, %v3496
    %v3525 = vmul.f32 %v3454, %v3496
    %v3526 = vmul.f32 %v3455, %v3496
    %v3527 = vmul.f32 %v3456, %v3496
    %v3528 = vmul.f32 %v3457, %v3496
    %v3529 = vmul.f32 %v3458, %v3496
    %v3530 = vmul.f32 %v3459, %v3496
    %v3531 = vmul.f32 %v3460, %v3496
    %v3532 = vmul.f32 %v3461, %v3496
    %v3533 = vmul.f32 %v3462, %v3496
    %v3534 = vmul.f32 %v3463, %v3496
    %v3535 = vmul.f32 %v3464, %v3496
    %v3536 = vmul.f32 %v3465, %v3496
    %v3537 = vmul.f32 %v3466, %v3496
    %v3538 = vmul.f32 %v3467, %v3496
    %v3539 = vmul.f32 %v3468, %v3496
    %v3540 = vmul.f32 %v3469, %v3496
    %v3541 = vmul.f32 %v3470, %v3496
    %v3542 = vmul.f32 %v3471, %v3496
    %v3543 = vmul.f32 %v3472, %v3496
    %v3544 = vmul.f32 %v3473, %v3496
    %v3545 = vmul.f32 %v3474, %v3496
    %v3546 = vmul.f32 %v3475, %v3496
    %v3547 = vmul.f32 %v3476, %v3496
    %v3548 = vmul.f32 %v3477, %v3496
    %v3549 = vmul.f32 %v3478, %v3496
    %v3550 = vmul.f32 %v3479, %v3496
    %v3551 = vmul.f32 %v3480, %v3496
    %v3552 = vmul.f32 %v3481, %v3496
    %v3553 = vmul.f32 %v3482, %v3496
    %v3554 = vmul.f32 %v3483, %v3496
    %v3555 = vmul.f32 %v3484, %v3496
    %v3556 = vmul.f32 %v3485, %v3496
    %v3557 = vmul.f32 %v3486, %v3496
    %v3558 = vmul.f32 %v3487, %v3496
    %v3559 = vmul.f32 %v3488, %v3496
    %v3560 = vmul.f32 %v3489, %v3496
    %v3561 = vmul.f32 %v3490, %v3496
    %v3562 = vld [vmem:[%s4] sm:$0x1]
    %v3564 = vlaneseq
    %v3565 = vshrl.u32 %v3564, 7
    %v3566 = vsub.s32 0, %v3565
    %v3567 = vrot.slane %v3562, %v3566
    %v3569 = vadd.f32 %v3498, %v3567
    %v3570 = vadd.f32 %v3499, %v3567
    %v3571 = vadd.f32 %v3500, %v3567
    %v3572 = vadd.f32 %v3501, %v3567
    %v3573 = vadd.f32 %v3502, %v3567
    %v3574 = vadd.f32 %v3503, %v3567
    %v3575 = vadd.f32 %v3504, %v3567
    %v3576 = vadd.f32 %v3505, %v3567
    %v3577 = vadd.f32 %v3506, %v3567
    %v3578 = vadd.f32 %v3507, %v3567
    %v3579 = vadd.f32 %v3508, %v3567
    %v3580 = vadd.f32 %v3509, %v3567
    %v3581 = vadd.f32 %v3510, %v3567
    %v3582 = vadd.f32 %v3511, %v3567
    %v3583 = vadd.f32 %v3512, %v3567
    %v3584 = vadd.f32 %v3513, %v3567
    %v3585 = vadd.f32 %v3514, %v3567
    %v3586 = vadd.f32 %v3515, %v3567
    %v3587 = vadd.f32 %v3516, %v3567
    %v3588 = vadd.f32 %v3517, %v3567
    %v3589 = vadd.f32 %v3518, %v3567
    %v3590 = vadd.f32 %v3519, %v3567
    %v3591 = vadd.f32 %v3520, %v3567
    %v3592 = vadd.f32 %v3521, %v3567
    %v3593 = vadd.f32 %v3522, %v3567
    %v3594 = vadd.f32 %v3523, %v3567
    %v3595 = vadd.f32 %v3524, %v3567
    %v3596 = vadd.f32 %v3525, %v3567
    %v3597 = vadd.f32 %v3526, %v3567
    %v3598 = vadd.f32 %v3527, %v3567
    %v3599 = vadd.f32 %v3528, %v3567
    %v3600 = vadd.f32 %v3529, %v3567
    %v3601 = vadd.f32 %v3530, %v3567
    %v3602 = vadd.f32 %v3531, %v3567
    %v3603 = vadd.f32 %v3532, %v3567
    %v3604 = vadd.f32 %v3533, %v3567
    %v3605 = vadd.f32 %v3534, %v3567
    %v3606 = vadd.f32 %v3535, %v3567
    %v3607 = vadd.f32 %v3536, %v3567
    %v3608 = vadd.f32 %v3537, %v3567
    %v3609 = vadd.f32 %v3538, %v3567
    %v3610 = vadd.f32 %v3539, %v3567
    %v3611 = vadd.f32 %v3540, %v3567
    %v3612 = vadd.f32 %v3541, %v3567
    %v3613 = vadd.f32 %v3542, %v3567
    %v3614 = vadd.f32 %v3543, %v3567
    %v3615 = vadd.f32 %v3544, %v3567
    %v3616 = vadd.f32 %v3545, %v3567
    %v3617 = vadd.f32 %v3546, %v3567
    %v3618 = vadd.f32 %v3547, %v3567
    %v3619 = vadd.f32 %v3548, %v3567
    %v3620 = vadd.f32 %v3549, %v3567
    %v3621 = vadd.f32 %v3550, %v3567
    %v3622 = vadd.f32 %v3551, %v3567
    %v3623 = vadd.f32 %v3552, %v3567
    %v3624 = vadd.f32 %v3553, %v3567
    %v3625 = vadd.f32 %v3554, %v3567
    %v3626 = vadd.f32 %v3555, %v3567
    %v3627 = vadd.f32 %v3556, %v3567
    %v3628 = vadd.f32 %v3557, %v3567
    %v3629 = vadd.f32 %v3558, %v3567
    %v3630 = vadd.f32 %v3559, %v3567
    %v3631 = vadd.f32 %v3560, %v3567
    %v3632 = vadd.f32 %v3561, %v3567
    %v3633 = vmax.f32 %v3569, 0.0
    %v3634 = vmax.f32 %v3570, 0.0
    %v3635 = vmax.f32 %v3571, 0.0
    %v3636 = vmax.f32 %v3572, 0.0
    %v3637 = vmax.f32 %v3573, 0.0
    %v3638 = vmax.f32 %v3574, 0.0
    %v3639 = vmax.f32 %v3575, 0.0
    %v3640 = vmax.f32 %v3576, 0.0
    %v3641 = vmax.f32 %v3577, 0.0
    %v3642 = vmax.f32 %v3578, 0.0
    %v3643 = vmax.f32 %v3579, 0.0
    %v3644 = vmax.f32 %v3580, 0.0
    %v3645 = vmax.f32 %v3581, 0.0
    %v3646 = vmax.f32 %v3582, 0.0
    %v3647 = vmax.f32 %v3583, 0.0
    %v3648 = vmax.f32 %v3584, 0.0
    %v3649 = vmax.f32 %v3585, 0.0
    %v3650 = vmax.f32 %v3586, 0.0
    %v3651 = vmax.f32 %v3587, 0.0
    %v3652 = vmax.f32 %v3588, 0.0
    %v3653 = vmax.f32 %v3589, 0.0
    %v3654 = vmax.f32 %v3590, 0.0
    %v3655 = vmax.f32 %v3591, 0.0
    %v3656 = vmax.f32 %v3592, 0.0
    %v3657 = vmax.f32 %v3593, 0.0
    %v3658 = vmax.f32 %v3594, 0.0
    %v3659 = vmax.f32 %v3595, 0.0
    %v3660 = vmax.f32 %v3596, 0.0
    %v3661 = vmax.f32 %v3597, 0.0
    %v3662 = vmax.f32 %v3598, 0.0
    %v3663 = vmax.f32 %v3599, 0.0
    %v3664 = vmax.f32 %v3600, 0.0
    %v3665 = vmax.f32 %v3601, 0.0
    %v3666 = vmax.f32 %v3602, 0.0
    %v3667 = vmax.f32 %v3603, 0.0
    %v3668 = vmax.f32 %v3604, 0.0
    %v3669 = vmax.f32 %v3605, 0.0
    %v3670 = vmax.f32 %v3606, 0.0
    %v3671 = vmax.f32 %v3607, 0.0
    %v3672 = vmax.f32 %v3608, 0.0
    %v3673 = vmax.f32 %v3609, 0.0
    %v3674 = vmax.f32 %v3610, 0.0
    %v3675 = vmax.f32 %v3611, 0.0
    %v3676 = vmax.f32 %v3612, 0.0
    %v3677 = vmax.f32 %v3613, 0.0
    %v3678 = vmax.f32 %v3614, 0.0
    %v3679 = vmax.f32 %v3615, 0.0
    %v3680 = vmax.f32 %v3616, 0.0
    %v3681 = vmax.f32 %v3617, 0.0
    %v3682 = vmax.f32 %v3618, 0.0
    %v3683 = vmax.f32 %v3619, 0.0
    %v3684 = vmax.f32 %v3620, 0.0
    %v3685 = vmax.f32 %v3621, 0.0
    %v3686 = vmax.f32 %v3622, 0.0
    %v3687 = vmax.f32 %v3623, 0.0
    %v3688 = vmax.f32 %v3624, 0.0
    %v3689 = vmax.f32 %v3625, 0.0
    %v3690 = vmax.f32 %v3626, 0.0
    %v3691 = vmax.f32 %v3627, 0.0
    %v3692 = vmax.f32 %v3628, 0.0
    %v3693 = vmax.f32 %v3629, 0.0
    %v3694 = vmax.f32 %v3630, 0.0
    %v3695 = vmax.f32 %v3631, 0.0
    %v3696 = vmax.f32 %v3632, 0.0
    %3697 = vst [vmem:[%s241 + $0x1] sm:$0xff] %v3633
    %3698 = vst [vmem:[%s241 + $0x9] sm:$0xff] %v3634
    %3699 = vst [vmem:[%s241 + $0x19] sm:$0xff] %v3635
    %3700 = vst [vmem:[%s241 + $0x21] sm:$0xff] %v3636
    %3701 = vst [vmem:[%s241 + $0x31] sm:$0xff] %v3637
    %3702 = vst [vmem:[%s241 + $0x39] sm:$0xff] %v3638
    %3703 = vst [vmem:[%s241 + $0x49] sm:$0xff] %v3639
    %3704 = vst [vmem:[%s241 + $0x51] sm:$0xff] %v3640
    %3705 = vst [vmem:[%s241 + $0x61] sm:$0xff] %v3641
    %3706 = vst [vmem:[%s241 + $0x69] sm:$0xff] %v3642
    %3707 = vst [vmem:[%s241 + $0x79] sm:$0xff] %v3643
    %3708 = vst [vmem:[%s241 + $0x81] sm:$0xff] %v3644
    %3709 = vst [vmem:[%s241 + $0x91] sm:$0xff] %v3645
    %3710 = vst [vmem:[%s241 + $0x99] sm:$0xff] %v3646
    %3711 = vst [vmem:[%s241 + $0xa9] sm:$0xff] %v3647
    %3712 = vst [vmem:[%s241 + $0xb1] sm:$0xff] %v3648
    %3713 = vst [vmem:[%s241 + $0xc1] sm:$0xff] %v3649
    %3714 = vst [vmem:[%s241 + $0xc9] sm:$0xff] %v3650
    %3715 = vst [vmem:[%s241 + $0xd9] sm:$0xff] %v3651
    %3716 = vst [vmem:[%s241 + $0xe1] sm:$0xff] %v3652
    %3717 = vst [vmem:[%s241 + $0xf1] sm:$0xff] %v3653
    %3718 = vst [vmem:[%s241 + $0xf9] sm:$0xff] %v3654
    %3719 = vst [vmem:[%s241 + $0x109] sm:$0xff] %v3655
    %3720 = vst [vmem:[%s241 + $0x111] sm:$0xff] %v3656
    %3721 = vst [vmem:[%s241 + $0x121] sm:$0xff] %v3657
    %3722 = vst [vmem:[%s241 + $0x129] sm:$0xff] %v3658
    %3723 = vst [vmem:[%s241 + $0x139] sm:$0xff] %v3659
    %3724 = vst [vmem:[%s241 + $0x141] sm:$0xff] %v3660
    %3725 = vst [vmem:[%s241 + $0x151] sm:$0xff] %v3661
    %3726 = vst [vmem:[%s241 + $0x159] sm:$0xff] %v3662
    %3727 = vst [vmem:[%s241 + $0x169] sm:$0xff] %v3663
    %3728 = vst [vmem:[%s241 + $0x171] sm:$0xff] %v3664
    %3729 = vst [vmem:[%s241 + $0x1b1] sm:$0xff] %v3665
    %3730 = vst [vmem:[%s241 + $0x1b9] sm:$0xff] %v3666
    %3731 = vst [vmem:[%s241 + $0x1c9] sm:$0xff] %v3667
    %3732 = vst [vmem:[%s241 + $0x1d1] sm:$0xff] %v3668
    %3733 = vst [vmem:[%s241 + $0x1e1] sm:$0xff] %v3669
    %3734 = vst [vmem:[%s241 + $0x1e9] sm:$0xff] %v3670
    %3735 = vst [vmem:[%s241 + $0x1f9] sm:$0xff] %v3671
    %3736 = vst [vmem:[%s241 + $0x201] sm:$0xff] %v3672
    %3737 = vst [vmem:[%s241 + $0x211] sm:$0xff] %v3673
    %3738 = vst [vmem:[%s241 + $0x219] sm:$0xff] %v3674
    %3739 = vst [vmem:[%s241 + $0x229] sm:$0xff] %v3675
    %3740 = vst [vmem:[%s241 + $0x231] sm:$0xff] %v3676
    %3741 = vst [vmem:[%s241 + $0x241] sm:$0xff] %v3677
    %3742 = vst [vmem:[%s241 + $0x249] sm:$0xff] %v3678
    %3743 = vst [vmem:[%s241 + $0x259] sm:$0xff] %v3679
    %3744 = vst [vmem:[%s241 + $0x261] sm:$0xff] %v3680
    %3745 = vst [vmem:[%s241 + $0x271] sm:$0xff] %v3681
    %3746 = vst [vmem:[%s241 + $0x279] sm:$0xff] %v3682
    %3747 = vst [vmem:[%s241 + $0x289] sm:$0xff] %v3683
    %3748 = vst [vmem:[%s241 + $0x291] sm:$0xff] %v3684
    %3749 = vst [vmem:[%s241 + $0x2a1] sm:$0xff] %v3685
    %3750 = vst [vmem:[%s241 + $0x2a9] sm:$0xff] %v3686
    %3751 = vst [vmem:[%s241 + $0x2b9] sm:$0xff] %v3687
    %3752 = vst [vmem:[%s241 + $0x2c1] sm:$0xff] %v3688
    %3753 = vst [vmem:[%s241 + $0x2d1] sm:$0xff] %v3689
    %3754 = vst [vmem:[%s241 + $0x2d9] sm:$0xff] %v3690
    %3755 = vst [vmem:[%s241 + $0x2e9] sm:$0xff] %v3691
    %3756 = vst [vmem:[%s241 + $0x2f1] sm:$0xff] %v3692
    %3757 = vst [vmem:[%s241 + $0x301] sm:$0xff] %v3693
    %3758 = vst [vmem:[%s241 + $0x309] sm:$0xff] %v3694
    %3759 = vst [vmem:[%s241 + $0x319] sm:$0xff] %v3695
    %3760 = vst [vmem:[%s241 + $0x321] sm:$0xff] %v3696
    %v3761 = vld [vmem:[#allocation2] sm:$0xff]
    %v3762 = vld [vmem:[#allocation2 + $0x8] sm:$0xff]
    %v3763 = vld [vmem:[#allocation2 + $0x10] sm:$0x3]
    %v3764 = vld [vmem:[#allocation2 + $0x18] sm:$0xff]
    %v3765 = vld [vmem:[#allocation2 + $0x20] sm:$0xff]
    %v3766 = vld [vmem:[#allocation2 + $0x28] sm:$0x3]
    %v3767 = vld [vmem:[#allocation2 + $0x30] sm:$0xff]
    %v3768 = vld [vmem:[#allocation2 + $0x38] sm:$0xff]
    %v3769 = vld [vmem:[#allocation2 + $0x40] sm:$0x3]
    %v3770 = vld [vmem:[#allocation2 + $0x48] sm:$0xff]
    %v3771 = vld [vmem:[#allocation2 + $0x50] sm:$0xff]
    %v3772 = vld [vmem:[#allocation2 + $0x58] sm:$0x3]
    %v3773 = vld [vmem:[#allocation2 + $0x60] sm:$0xff]
    %v3774 = vld [vmem:[#allocation2 + $0x68] sm:$0xff]
    %v3775 = vld [vmem:[#allocation2 + $0x70] sm:$0x3]
    %v3776 = vld [vmem:[#allocation2 + $0x78] sm:$0xff]
    %v3777 = vld [vmem:[#allocation2 + $0x80] sm:$0xff]
    %v3778 = vld [vmem:[#allocation2 + $0x88] sm:$0x3]
    %v3779 = vld [vmem:[#allocation2 + $0x90] sm:$0xff]
    %v3780 = vld [vmem:[#allocation2 + $0x98] sm:$0xff]
    %v3781 = vld [vmem:[#allocation2 + $0xa0] sm:$0x3]
    %v3782 = vld [vmem:[#allocation2 + $0xa8] sm:$0xff]
    %v3783 = vld [vmem:[#allocation2 + $0xb0] sm:$0xff]
    %v3784 = vld [vmem:[#allocation2 + $0xb8] sm:$0x3]
    %v3785 = vld [vmem:[#allocation2 + $0xc0] sm:$0xff]
    %v3786 = vld [vmem:[#allocation2 + $0xc8] sm:$0xff]
    %v3787 = vld [vmem:[#allocation2 + $0xd0] sm:$0x3]
    %v3788 = vld [vmem:[#allocation2 + $0xd8] sm:$0xff]
    %v3789 = vld [vmem:[#allocation2 + $0xe0] sm:$0xff]
    %v3790 = vld [vmem:[#allocation2 + $0xe8] sm:$0x3]
    %v3791 = vld [vmem:[#allocation2 + $0xf0] sm:$0xff]
    %v3792 = vld [vmem:[#allocation2 + $0xf8] sm:$0xff]
    %v3793 = vld [vmem:[#allocation2 + $0x100] sm:$0x3]
    %v3794 = vld [vmem:[#allocation2 + $0x108] sm:$0xff]
    %v3795 = vld [vmem:[#allocation2 + $0x110] sm:$0xff]
    %v3796 = vld [vmem:[#allocation2 + $0x118] sm:$0x3]
    %v3797 = vld [vmem:[#allocation2 + $0x120] sm:$0xff]
    %v3798 = vld [vmem:[#allocation2 + $0x128] sm:$0xff]
    %v3799 = vld [vmem:[#allocation2 + $0x130] sm:$0x3]
    %v3800 = vld [vmem:[#allocation2 + $0x138] sm:$0xff]
    %v3801 = vld [vmem:[#allocation2 + $0x140] sm:$0xff]
    %v3802 = vld [vmem:[#allocation2 + $0x148] sm:$0x3]
    %v3803 = vld [vmem:[#allocation2 + $0x150] sm:$0xff]
    %v3804 = vld [vmem:[#allocation2 + $0x158] sm:$0xff]
    %v3805 = vld [vmem:[#allocation2 + $0x160] sm:$0x3]
    %v3806 = vld [vmem:[#allocation2 + $0x168] sm:$0xff]
    %v3807 = vld [vmem:[#allocation2 + $0x170] sm:$0xff]
    %v3808 = vld [vmem:[#allocation2 + $0x178] sm:$0x3]
    %v3809 = vld [vmem:[#allocation2 + $0x180] sm:$0xff]
    %v3810 = vld [vmem:[#allocation2 + $0x188] sm:$0xff]
    %v3811 = vld [vmem:[#allocation2 + $0x190] sm:$0x3]
    %v3812 = vld [vmem:[#allocation2 + $0x198] sm:$0xff]
    %v3813 = vld [vmem:[#allocation2 + $0x1a0] sm:$0xff]
    %v3814 = vld [vmem:[#allocation2 + $0x1a8] sm:$0x3]
    %v3815 = vld [vmem:[#allocation2 + $0x1b0] sm:$0xff]
    %v3816 = vld [vmem:[#allocation2 + $0x1b8] sm:$0xff]
    %v3817 = vld [vmem:[#allocation2 + $0x1c0] sm:$0x3]
    %v3818 = vld [vmem:[#allocation2 + $0x1c8] sm:$0xff]
    %v3819 = vld [vmem:[#allocation2 + $0x1d0] sm:$0xff]
    %v3820 = vld [vmem:[#allocation2 + $0x1d8] sm:$0x3]
    %v3821 = vld [vmem:[#allocation2 + $0x1e0] sm:$0xff]
    %v3822 = vld [vmem:[#allocation2 + $0x1e8] sm:$0xff]
    %v3823 = vld [vmem:[#allocation2 + $0x1f0] sm:$0x3]
    %v3824 = vld [vmem:[#allocation2 + $0x1f8] sm:$0xff]
    %v3825 = vld [vmem:[#allocation2 + $0x200] sm:$0xff]
    %v3826 = vld [vmem:[#allocation2 + $0x208] sm:$0x3]
    %v3827 = vld [vmem:[#allocation2 + $0x210] sm:$0xff]
    %v3828 = vld [vmem:[#allocation2 + $0x218] sm:$0xff]
    %v3829 = vld [vmem:[#allocation2 + $0x220] sm:$0x3]
    %v3830 = vld [vmem:[#allocation2 + $0x228] sm:$0xff]
    %v3831 = vld [vmem:[#allocation2 + $0x230] sm:$0xff]
    %v3832 = vld [vmem:[#allocation2 + $0x238] sm:$0x3]
    %v3833 = vld [vmem:[#allocation2 + $0x240] sm:$0xff]
    %v3834 = vld [vmem:[#allocation2 + $0x248] sm:$0xff]
    %v3835 = vld [vmem:[#allocation2 + $0x250] sm:$0x3]
    %v3836 = vld [vmem:[#allocation2 + $0x258] sm:$0xff]
    %v3837 = vld [vmem:[#allocation2 + $0x260] sm:$0xff]
    %v3838 = vld [vmem:[#allocation2 + $0x268] sm:$0x3]
    %v3839 = vld [vmem:[#allocation2 + $0x270] sm:$0xff]
    %v3840 = vld [vmem:[#allocation2 + $0x278] sm:$0xff]
    %v3841 = vld [vmem:[#allocation2 + $0x280] sm:$0x3]
    %v3842 = vld [vmem:[#allocation2 + $0x288] sm:$0xff]
    %v3843 = vld [vmem:[#allocation2 + $0x290] sm:$0xff]
    %v3844 = vld [vmem:[#allocation2 + $0x298] sm:$0x3]
    %v3845 = vld [vmem:[#allocation2 + $0x2a0] sm:$0xff]
    %v3846 = vld [vmem:[#allocation2 + $0x2a8] sm:$0xff]
    %v3847 = vld [vmem:[#allocation2 + $0x2b0] sm:$0x3]
    %v3848 = vld [vmem:[#allocation2 + $0x2b8] sm:$0xff]
    %v3849 = vld [vmem:[#allocation2 + $0x2c0] sm:$0xff]
    %v3850 = vld [vmem:[#allocation2 + $0x2c8] sm:$0x3]
    %v3851 = vld [vmem:[#allocation2 + $0x2d0] sm:$0xff]
    %v3852 = vld [vmem:[#allocation2 + $0x2d8] sm:$0xff]
    %v3853 = vld [vmem:[#allocation2 + $0x2e0] sm:$0x3]
    %v3854 = vld [vmem:[#allocation2 + $0x2e8] sm:$0xff]
    %v3855 = vld [vmem:[#allocation2 + $0x2f0] sm:$0xff]
    %v3856 = vld [vmem:[#allocation2 + $0x2f8] sm:$0x3]
    %v3857 = vld [vmem:[#allocation2 + $0x300] sm:$0xff]
    %v3858 = vld [vmem:[#allocation2 + $0x308] sm:$0xff]
    %v3859 = vld [vmem:[#allocation2 + $0x310] sm:$0x3]
    %v3860 = vld [vmem:[#allocation2 + $0x318] sm:$0xff]
    %v3861 = vld [vmem:[#allocation2 + $0x320] sm:$0xff]
    %v3862 = vld [vmem:[#allocation2 + $0x328] sm:$0x3]
    %v3863 = vld [vmem:[#allocation2 + $0x330] sm:$0xff]
    %v3864 = vld [vmem:[#allocation2 + $0x338] sm:$0xff]
    %v3865 = vld [vmem:[#allocation2 + $0x340] sm:$0x3]
    %v3866 = vld [vmem:[#allocation2 + $0x348] sm:$0xff]
    %v3867 = vld [vmem:[#allocation2 + $0x350] sm:$0xff]
    %v3868 = vld [vmem:[#allocation2 + $0x358] sm:$0x3]
    %v3965 = vrot.slane %v3761, 1
    %v3966 = vrot.slane %v3762, 1
    %v3967 = vsel %vm510, %v3965, %v3966
    %v3968 = vrot.slane %v3763, 1
    %v3969 = vsel %vm510, %v3966, %v3968
    %v3970 = vrot.slane %v3764, 1
    %v3971 = vrot.slane %v3765, 1
    %v3972 = vsel %vm510, %v3970, %v3971
    %v3973 = vrot.slane %v3766, 1
    %v3974 = vsel %vm510, %v3971, %v3973
    %v3975 = vrot.slane %v3767, 1
    %v3976 = vrot.slane %v3768, 1
    %v3977 = vsel %vm510, %v3975, %v3976
    %v3978 = vrot.slane %v3769, 1
    %v3979 = vsel %vm510, %v3976, %v3978
    %v3980 = vrot.slane %v3770, 1
    %v3981 = vrot.slane %v3771, 1
    %v3982 = vsel %vm510, %v3980, %v3981
    %v3983 = vrot.slane %v3772, 1
    %v3984 = vsel %vm510, %v3981, %v3983
    %v3985 = vrot.slane %v3773, 1
    %v3986 = vrot.slane %v3774, 1
    %v3987 = vsel %vm510, %v3985, %v3986
    %v3988 = vrot.slane %v3775, 1
    %v3989 = vsel %vm510, %v3986, %v3988
    %v3990 = vrot.slane %v3776, 1
    %v3991 = vrot.slane %v3777, 1
    %v3992 = vsel %vm510, %v3990, %v3991
    %v3993 = vrot.slane %v3778, 1
    %v3994 = vsel %vm510, %v3991, %v3993
    %v3995 = vrot.slane %v3779, 1
    %v3996 = vrot.slane %v3780, 1
    %v3997 = vsel %vm510, %v3995, %v3996
    %v3998 = vrot.slane %v3781, 1
    %v3999 = vsel %vm510, %v3996, %v3998
    %v4000 = vrot.slane %v3782, 1
    %v4001 = vrot.slane %v3783, 1
    %v4002 = vsel %vm510, %v4000, %v4001
    %v4003 = vrot.slane %v3784, 1
    %v4004 = vsel %vm510, %v4001, %v4003
    %v4005 = vrot.slane %v3785, 1
    %v4006 = vrot.slane %v3786, 1
    %v4007 = vsel %vm510, %v4005, %v4006
    %v4008 = vrot.slane %v3787, 1
    %v4009 = vsel %vm510, %v4006, %v4008
    %v4010 = vrot.slane %v3788, 1
    %v4011 = vrot.slane %v3789, 1
    %v4012 = vsel %vm510, %v4010, %v4011
    %v4013 = vrot.slane %v3790, 1
    %v4014 = vsel %vm510, %v4011, %v4013
    %v4015 = vrot.slane %v3791, 1
    %v4016 = vrot.slane %v3792, 1
    %v4017 = vsel %vm510, %v4015, %v4016
    %v4018 = vrot.slane %v3793, 1
    %v4019 = vsel %vm510, %v4016, %v4018
    %v4020 = vrot.slane %v3794, 1
    %v4021 = vrot.slane %v3795, 1
    %v4022 = vsel %vm510, %v4020, %v4021
    %v4023 = vrot.slane %v3796, 1
    %v4024 = vsel %vm510, %v4021, %v4023
    %v4025 = vrot.slane %v3797, 1
    %v4026 = vrot.slane %v3798, 1
    %v4027 = vsel %vm510, %v4025, %v4026
    %v4028 = vrot.slane %v3799, 1
    %v4029 = vsel %vm510, %v4026, %v4028
    %v4030 = vrot.slane %v3800, 1
    %v4031 = vrot.slane %v3801, 1
    %v4032 = vsel %vm510, %v4030, %v4031
    %v4033 = vrot.slane %v3802, 1
    %v4034 = vsel %vm510, %v4031, %v4033
    %v4035 = vrot.slane %v3803, 1
    %v4036 = vrot.slane %v3804, 1
    %v4037 = vsel %vm510, %v4035, %v4036
    %v4038 = vrot.slane %v3805, 1
    %v4039 = vsel %vm510, %v4036, %v4038
    %v4040 = vrot.slane %v3806, 1
    %v4041 = vrot.slane %v3807, 1
    %v4042 = vsel %vm510, %v4040, %v4041
    %v4043 = vrot.slane %v3808, 1
    %v4044 = vsel %vm510, %v4041, %v4043
    %v4045 = vrot.slane %v3815, 1
    %v4046 = vrot.slane %v3816, 1
    %v4047 = vsel %vm510, %v4045, %v4046
    %v4048 = vrot.slane %v3817, 1
    %v4049 = vsel %vm510, %v4046, %v4048
    %v4050 = vrot.slane %v3818, 1
    %v4051 = vrot.slane %v3819, 1
    %v4052 = vsel %vm510, %v4050, %v4051
    %v4053 = vrot.slane %v3820, 1
    %v4054 = vsel %vm510, %v4051, %v4053
    %v4055 = vrot.slane %v3821, 1
    %v4056 = vrot.slane %v3822, 1
    %v4057 = vsel %vm510, %v4055, %v4056
    %v4058 = vrot.slane %v3823, 1
    %v4059 = vsel %vm510, %v4056, %v4058
    %v4060 = vrot.slane %v3824, 1
    %v4061 = vrot.slane %v3825, 1
    %v4062 = vsel %vm510, %v4060, %v4061
    %v4063 = vrot.slane %v3826, 1
    %v4064 = vsel %vm510, %v4061, %v4063
    %v4065 = vrot.slane %v3827, 1
    %v4066 = vrot.slane %v3828, 1
    %v4067 = vsel %vm510, %v4065, %v4066
    %v4068 = vrot.slane %v3829, 1
    %v4069 = vsel %vm510, %v4066, %v4068
    %v4070 = vrot.slane %v3830, 1
    %v4071 = vrot.slane %v3831, 1
    %v4072 = vsel %vm510, %v4070, %v4071
    %v4073 = vrot.slane %v3832, 1
    %v4074 = vsel %vm510, %v4071, %v4073
    %v4075 = vrot.slane %v3833, 1
    %v4076 = vrot.slane %v3834, 1
    %v4077 = vsel %vm510, %v4075, %v4076
    %v4078 = vrot.slane %v3835, 1
    %v4079 = vsel %vm510, %v4076, %v4078
    %v4080 = vrot.slane %v3836, 1
    %v4081 = vrot.slane %v3837, 1
    %v4082 = vsel %vm510, %v4080, %v4081
    %v4083 = vrot.slane %v3838, 1
    %v4084 = vsel %vm510, %v4081, %v4083
    %v4085 = vrot.slane %v3839, 1
    %v4086 = vrot.slane %v3840, 1
    %v4087 = vsel %vm510, %v4085, %v4086
    %v4088 = vrot.slane %v3841, 1
    %v4089 = vsel %vm510, %v4086, %v4088
    %v4090 = vrot.slane %v3842, 1
    %v4091 = vrot.slane %v3843, 1
    %v4092 = vsel %vm510, %v4090, %v4091
    %v4093 = vrot.slane %v3844, 1
    %v4094 = vsel %vm510, %v4091, %v4093
    %v4095 = vrot.slane %v3845, 1
    %v4096 = vrot.slane %v3846, 1
    %v4097 = vsel %vm510, %v4095, %v4096
    %v4098 = vrot.slane %v3847, 1
    %v4099 = vsel %vm510, %v4096, %v4098
    %v4100 = vrot.slane %v3848, 1
    %v4101 = vrot.slane %v3849, 1
    %v4102 = vsel %vm510, %v4100, %v4101
    %v4103 = vrot.slane %v3850, 1
    %v4104 = vsel %vm510, %v4101, %v4103
    %v4105 = vrot.slane %v3851, 1
    %v4106 = vrot.slane %v3852, 1
    %v4107 = vsel %vm510, %v4105, %v4106
    %v4108 = vrot.slane %v3853, 1
    %v4109 = vsel %vm510, %v4106, %v4108
    %v4110 = vrot.slane %v3854, 1
    %v4111 = vrot.slane %v3855, 1
    %v4112 = vsel %vm510, %v4110, %v4111
    %v4113 = vrot.slane %v3856, 1
    %v4114 = vsel %vm510, %v4111, %v4113
    %v4115 = vrot.slane %v3857, 1
    %v4116 = vrot.slane %v3858, 1
    %v4117 = vsel %vm510, %v4115, %v4116
    %v4118 = vrot.slane %v3859, 1
    %v4119 = vsel %vm510, %v4116, %v4118
    %v4120 = vrot.slane %v3860, 1
    %v4121 = vrot.slane %v3861, 1
    %v4122 = vsel %vm510, %v4120, %v4121
    %v4123 = vrot.slane %v3862, 1
    %v4124 = vsel %vm510, %v4121, %v4123
    %v4189 = vrot.slane %v3761, 2
    %v4190 = vrot.slane %v3762, 2
    %v4191 = vsel %vm735, %v4189, %v4190
    %v4192 = vrot.slane %v3763, 2
    %v4193 = vsel %vm735, %v4190, %v4192
    %v4194 = vrot.slane %v3764, 2
    %v4195 = vrot.slane %v3765, 2
    %v4196 = vsel %vm735, %v4194, %v4195
    %v4197 = vrot.slane %v3766, 2
    %v4198 = vsel %vm735, %v4195, %v4197
    %v4199 = vrot.slane %v3767, 2
    %v4200 = vrot.slane %v3768, 2
    %v4201 = vsel %vm735, %v4199, %v4200
    %v4202 = vrot.slane %v3769, 2
    %v4203 = vsel %vm735, %v4200, %v4202
    %v4204 = vrot.slane %v3770, 2
    %v4205 = vrot.slane %v3771, 2
    %v4206 = vsel %vm735, %v4204, %v4205
    %v4207 = vrot.slane %v3772, 2
    %v4208 = vsel %vm735, %v4205, %v4207
    %v4209 = vrot.slane %v3773, 2
    %v4210 = vrot.slane %v3774, 2
    %v4211 = vsel %vm735, %v4209, %v4210
    %v4212 = vrot.slane %v3775, 2
    %v4213 = vsel %vm735, %v4210, %v4212
    %v4214 = vrot.slane %v3776, 2
    %v4215 = vrot.slane %v3777, 2
    %v4216 = vsel %vm735, %v4214, %v4215
    %v4217 = vrot.slane %v3778, 2
    %v4218 = vsel %vm735, %v4215, %v4217
    %v4219 = vrot.slane %v3779, 2
    %v4220 = vrot.slane %v3780, 2
    %v4221 = vsel %vm735, %v4219, %v4220
    %v4222 = vrot.slane %v3781, 2
    %v4223 = vsel %vm735, %v4220, %v4222
    %v4224 = vrot.slane %v3782, 2
    %v4225 = vrot.slane %v3783, 2
    %v4226 = vsel %vm735, %v4224, %v4225
    %v4227 = vrot.slane %v3784, 2
    %v4228 = vsel %vm735, %v4225, %v4227
    %v4229 = vrot.slane %v3785, 2
    %v4230 = vrot.slane %v3786, 2
    %v4231 = vsel %vm735, %v4229, %v4230
    %v4232 = vrot.slane %v3787, 2
    %v4233 = vsel %vm735, %v4230, %v4232
    %v4234 = vrot.slane %v3788, 2
    %v4235 = vrot.slane %v3789, 2
    %v4236 = vsel %vm735, %v4234, %v4235
    %v4237 = vrot.slane %v3790, 2
    %v4238 = vsel %vm735, %v4235, %v4237
    %v4239 = vrot.slane %v3791, 2
    %v4240 = vrot.slane %v3792, 2
    %v4241 = vsel %vm735, %v4239, %v4240
    %v4242 = vrot.slane %v3793, 2
    %v4243 = vsel %vm735, %v4240, %v4242
    %v4244 = vrot.slane %v3794, 2
    %v4245 = vrot.slane %v3795, 2
    %v4246 = vsel %vm735, %v4244, %v4245
    %v4247 = vrot.slane %v3796, 2
    %v4248 = vsel %vm735, %v4245, %v4247
    %v4249 = vrot.slane %v3797, 2
    %v4250 = vrot.slane %v3798, 2
    %v4251 = vsel %vm735, %v4249, %v4250
    %v4252 = vrot.slane %v3799, 2
    %v4253 = vsel %vm735, %v4250, %v4252
    %v4254 = vrot.slane %v3800, 2
    %v4255 = vrot.slane %v3801, 2
    %v4256 = vsel %vm735, %v4254, %v4255
    %v4257 = vrot.slane %v3802, 2
    %v4258 = vsel %vm735, %v4255, %v4257
    %v4259 = vrot.slane %v3803, 2
    %v4260 = vrot.slane %v3804, 2
    %v4261 = vsel %vm735, %v4259, %v4260
    %v4262 = vrot.slane %v3805, 2
    %v4263 = vsel %vm735, %v4260, %v4262
    %v4264 = vrot.slane %v3806, 2
    %v4265 = vrot.slane %v3807, 2
    %v4266 = vsel %vm735, %v4264, %v4265
    %v4267 = vrot.slane %v3808, 2
    %v4268 = vsel %vm735, %v4265, %v4267
    %v4269 = vrot.slane %v3815, 2
    %v4270 = vrot.slane %v3816, 2
    %v4271 = vsel %vm735, %v4269, %v4270
    %v4272 = vrot.slane %v3817, 2
    %v4273 = vsel %vm735, %v4270, %v4272
    %v4274 = vrot.slane %v3818, 2
    %v4275 = vrot.slane %v3819, 2
    %v4276 = vsel %vm735, %v4274, %v4275
    %v4277 = vrot.slane %v3820, 2
    %v4278 = vsel %vm735, %v4275, %v4277
    %v4279 = vrot.slane %v3821, 2
    %v4280 = vrot.slane %v3822, 2
    %v4281 = vsel %vm735, %v4279, %v4280
    %v4282 = vrot.slane %v3823, 2
    %v4283 = vsel %vm735, %v4280, %v4282
    %v4284 = vrot.slane %v3824, 2
    %v4285 = vrot.slane %v3825, 2
    %v4286 = vsel %vm735, %v4284, %v4285
    %v4287 = vrot.slane %v3826, 2
    %v4288 = vsel %vm735, %v4285, %v4287
    %v4289 = vrot.slane %v3827, 2
    %v4290 = vrot.slane %v3828, 2
    %v4291 = vsel %vm735, %v4289, %v4290
    %v4292 = vrot.slane %v3829, 2
    %v4293 = vsel %vm735, %v4290, %v4292
    %v4294 = vrot.slane %v3830, 2
    %v4295 = vrot.slane %v3831, 2
    %v4296 = vsel %vm735, %v4294, %v4295
    %v4297 = vrot.slane %v3832, 2
    %v4298 = vsel %vm735, %v4295, %v4297
    %v4299 = vrot.slane %v3833, 2
    %v4300 = vrot.slane %v3834, 2
    %v4301 = vsel %vm735, %v4299, %v4300
    %v4302 = vrot.slane %v3835, 2
    %v4303 = vsel %vm735, %v4300, %v4302
    %v4304 = vrot.slane %v3836, 2
    %v4305 = vrot.slane %v3837, 2
    %v4306 = vsel %vm735, %v4304, %v4305
    %v4307 = vrot.slane %v3838, 2
    %v4308 = vsel %vm735, %v4305, %v4307
    %v4309 = vrot.slane %v3839, 2
    %v4310 = vrot.slane %v3840, 2
    %v4311 = vsel %vm735, %v4309, %v4310
    %v4312 = vrot.slane %v3841, 2
    %v4313 = vsel %vm735, %v4310, %v4312
    %v4314 = vrot.slane %v3842, 2
    %v4315 = vrot.slane %v3843, 2
    %v4316 = vsel %vm735, %v4314, %v4315
    %v4317 = vrot.slane %v3844, 2
    %v4318 = vsel %vm735, %v4315, %v4317
    %v4319 = vrot.slane %v3845, 2
    %v4320 = vrot.slane %v3846, 2
    %v4321 = vsel %vm735, %v4319, %v4320
    %v4322 = vrot.slane %v3847, 2
    %v4323 = vsel %vm735, %v4320, %v4322
    %v4324 = vrot.slane %v3848, 2
    %v4325 = vrot.slane %v3849, 2
    %v4326 = vsel %vm735, %v4324, %v4325
    %v4327 = vrot.slane %v3850, 2
    %v4328 = vsel %vm735, %v4325, %v4327
    %v4329 = vrot.slane %v3851, 2
    %v4330 = vrot.slane %v3852, 2
    %v4331 = vsel %vm735, %v4329, %v4330
    %v4332 = vrot.slane %v3853, 2
    %v4333 = vsel %vm735, %v4330, %v4332
    %v4334 = vrot.slane %v3854, 2
    %v4335 = vrot.slane %v3855, 2
    %v4336 = vsel %vm735, %v4334, %v4335
    %v4337 = vrot.slane %v3856, 2
    %v4338 = vsel %vm735, %v4335, %v4337
    %v4339 = vrot.slane %v3857, 2
    %v4340 = vrot.slane %v3858, 2
    %v4341 = vsel %vm735, %v4339, %v4340
    %v4342 = vrot.slane %v3859, 2
    %v4343 = vsel %vm735, %v4340, %v4342
    %v4344 = vrot.slane %v3860, 2
    %v4345 = vrot.slane %v3861, 2
    %v4346 = vsel %vm735, %v4344, %v4345
    %v4347 = vrot.slane %v3862, 2
    %v4348 = vsel %vm735, %v4345, %v4347
    %v4419 = vrot.slane %v3809, 1
    %v4420 = vrot.slane %v3810, 1
    %v4421 = vsel %vm510, %v4419, %v4420
    %v4422 = vrot.slane %v3811, 1
    %v4423 = vsel %vm510, %v4420, %v4422
    %v4424 = vrot.slane %v3863, 1
    %v4425 = vrot.slane %v3864, 1
    %v4426 = vsel %vm510, %v4424, %v4425
    %v4427 = vrot.slane %v3865, 1
    %v4428 = vsel %vm510, %v4425, %v4427
    %v4433 = vrot.slane %v3809, 2
    %v4434 = vrot.slane %v3810, 2
    %v4435 = vsel %vm735, %v4433, %v4434
    %v4436 = vrot.slane %v3811, 2
    %v4437 = vsel %vm735, %v4434, %v4436
    %v4438 = vrot.slane %v3863, 2
    %v4439 = vrot.slane %v3864, 2
    %v4440 = vsel %vm735, %v4438, %v4439
    %v4441 = vrot.slane %v3865, 2
    %v4442 = vsel %vm735, %v4439, %v4441
    %v4453 = vrot.slane %v3812, 1
    %v4454 = vrot.slane %v3813, 1
    %v4455 = vsel %vm510, %v4453, %v4454
    %v4456 = vrot.slane %v3814, 1
    %v4457 = vsel %vm510, %v4454, %v4456
    %v4458 = vrot.slane %v3866, 1
    %v4459 = vrot.slane %v3867, 1
    %v4460 = vsel %vm510, %v4458, %v4459
    %v4461 = vrot.slane %v3868, 1
    %v4462 = vsel %vm510, %v4459, %v4461
    %v4467 = vrot.slane %v3812, 2
    %v4468 = vrot.slane %v3813, 2
    %v4469 = vsel %vm735, %v4467, %v4468
    %v4470 = vrot.slane %v3814, 2
    %v4471 = vsel %vm735, %v4468, %v4470
    %v4472 = vrot.slane %v3866, 2
    %v4473 = vrot.slane %v3867, 2
    %v4474 = vsel %vm735, %v4472, %v4473
    %v4475 = vrot.slane %v3868, 2
    %v4476 = vsel %vm735, %v4473, %v4475
    %v4481 = vpack.c.bf16 %v3762, %v3761
    %v4482 = vpack.c.bf16 %v3969, %v3967
    %v4483 = vpack.c.bf16 %v4193, %v4191
    %v4484 = vpack.c.bf16 %v3765, %v3764
    %v4485 = vpack.c.bf16 %v3974, %v3972
    %v4486 = vpack.c.bf16 %v4198, %v4196
    %v4487 = vpack.c.bf16 %v3768, %v3767
    %v4488 = vpack.c.bf16 %v3979, %v3977
    %v4489 = vpack.c.bf16 %v4203, %v4201
    %v4490 = vpack.c.bf16 %v3771, %v3770
    %v4491 = vpack.c.bf16 %v3984, %v3982
    %v4492 = vpack.c.bf16 %v4208, %v4206
    %v4493 = vpack.c.bf16 %v3774, %v3773
    %v4494 = vpack.c.bf16 %v3989, %v3987
    %v4495 = vpack.c.bf16 %v4213, %v4211
    %v4496 = vpack.c.bf16 %v3777, %v3776
    %v4497 = vpack.c.bf16 %v3994, %v3992
    %v4498 = vpack.c.bf16 %v4218, %v4216
    %v4499 = vpack.c.bf16 %v3780, %v3779
    %v4500 = vpack.c.bf16 %v3999, %v3997
    %v4501 = vpack.c.bf16 %v4223, %v4221
    %v4502 = vpack.c.bf16 %v3783, %v3782
    %v4503 = vpack.c.bf16 %v4004, %v4002
    %v4504 = vpack.c.bf16 %v4228, %v4226
    %v4505 = vpack.c.bf16 %v3786, %v3785
    %v4506 = vpack.c.bf16 %v4009, %v4007
    %v4507 = vpack.c.bf16 %v4233, %v4231
    %v4508 = vpack.c.bf16 %v3789, %v3788
    %v4509 = vpack.c.bf16 %v4014, %v4012
    %v4510 = vpack.c.bf16 %v4238, %v4236
    %v4511 = vpack.c.bf16 %v3792, %v3791
    %v4512 = vpack.c.bf16 %v4019, %v4017
    %v4513 = vpack.c.bf16 %v4243, %v4241
    %v4514 = vpack.c.bf16 %v3795, %v3794
    %v4515 = vpack.c.bf16 %v4024, %v4022
    %v4516 = vpack.c.bf16 %v4248, %v4246
    %v4517 = vpack.c.bf16 %v3798, %v3797
    %v4518 = vpack.c.bf16 %v4029, %v4027
    %v4519 = vpack.c.bf16 %v4253, %v4251
    %v4520 = vpack.c.bf16 %v3801, %v3800
    %v4521 = vpack.c.bf16 %v4034, %v4032
    %v4522 = vpack.c.bf16 %v4258, %v4256
    %v4523 = vpack.c.bf16 %v3804, %v3803
    %v4524 = vpack.c.bf16 %v4039, %v4037
    %v4525 = vpack.c.bf16 %v4263, %v4261
    %v4526 = vpack.c.bf16 %v3807, %v3806
    %v4527 = vpack.c.bf16 %v4044, %v4042
    %v4528 = vpack.c.bf16 %v4268, %v4266
    %v4529 = vpack.c.bf16 %v3810, %v3809
    %v4530 = vpack.c.bf16 %v4423, %v4421
    %v4531 = vpack.c.bf16 %v4437, %v4435
    %v4532 = vpack.c.bf16 %v3813, %v3812
    %v4533 = vpack.c.bf16 %v4457, %v4455
    %v4534 = vpack.c.bf16 %v4471, %v4469
    %v4535 = vpack.c.bf16 %v3816, %v3815
    %v4536 = vpack.c.bf16 %v4049, %v4047
    %v4537 = vpack.c.bf16 %v4273, %v4271
    %v4538 = vpack.c.bf16 %v3819, %v3818
    %v4539 = vpack.c.bf16 %v4054, %v4052
    %v4540 = vpack.c.bf16 %v4278, %v4276
    %v4541 = vpack.c.bf16 %v3822, %v3821
    %v4542 = vpack.c.bf16 %v4059, %v4057
    %v4543 = vpack.c.bf16 %v4283, %v4281
    %v4544 = vpack.c.bf16 %v3825, %v3824
    %v4545 = vpack.c.bf16 %v4064, %v4062
    %v4546 = vpack.c.bf16 %v4288, %v4286
    %v4547 = vpack.c.bf16 %v3828, %v3827
    %v4548 = vpack.c.bf16 %v4069, %v4067
    %v4549 = vpack.c.bf16 %v4293, %v4291
    %v4550 = vpack.c.bf16 %v3831, %v3830
    %v4551 = vpack.c.bf16 %v4074, %v4072
    %v4552 = vpack.c.bf16 %v4298, %v4296
    %v4553 = vpack.c.bf16 %v3834, %v3833
    %v4554 = vpack.c.bf16 %v4079, %v4077
    %v4555 = vpack.c.bf16 %v4303, %v4301
    %v4556 = vpack.c.bf16 %v3837, %v3836
    %v4557 = vpack.c.bf16 %v4084, %v4082
    %v4558 = vpack.c.bf16 %v4308, %v4306
    %v4559 = vpack.c.bf16 %v3840, %v3839
    %v4560 = vpack.c.bf16 %v4089, %v4087
    %v4561 = vpack.c.bf16 %v4313, %v4311
    %v4562 = vpack.c.bf16 %v3843, %v3842
    %v4563 = vpack.c.bf16 %v4094, %v4092
    %v4564 = vpack.c.bf16 %v4318, %v4316
    %v4565 = vpack.c.bf16 %v3846, %v3845
    %v4566 = vpack.c.bf16 %v4099, %v4097
    %v4567 = vpack.c.bf16 %v4323, %v4321
    %v4568 = vpack.c.bf16 %v3849, %v3848
    %v4569 = vpack.c.bf16 %v4104, %v4102
    %v4570 = vpack.c.bf16 %v4328, %v4326
    %v4571 = vpack.c.bf16 %v3852, %v3851
    %v4572 = vpack.c.bf16 %v4109, %v4107
    %v4573 = vpack.c.bf16 %v4333, %v4331
    %v4574 = vpack.c.bf16 %v3855, %v3854
    %v4575 = vpack.c.bf16 %v4114, %v4112
    %v4576 = vpack.c.bf16 %v4338, %v4336
    %v4577 = vpack.c.bf16 %v3858, %v3857
    %v4578 = vpack.c.bf16 %v4119, %v4117
    %v4579 = vpack.c.bf16 %v4343, %v4341
    %v4580 = vpack.c.bf16 %v3861, %v3860
    %v4581 = vpack.c.bf16 %v4124, %v4122
    %v4582 = vpack.c.bf16 %v4348, %v4346
    %v4583 = vpack.c.bf16 %v3864, %v3863
    %v4584 = vpack.c.bf16 %v4428, %v4426
    %v4585 = vpack.c.bf16 %v4442, %v4440
    %v4586 = vpack.c.bf16 %v3867, %v3866
    %v4587 = vpack.c.bf16 %v4462, %v4460
    %v4588 = vpack.c.bf16 %v4476, %v4474
    %v4589 = vld [vmem:[#allocation8] sm:$0xf]
    %v4590 = vld [vmem:[#allocation8 + $0x4] sm:$0xf]
    %v4591 = vld [vmem:[#allocation8 + $0x8] sm:$0xf]
    %v4592 = vld [vmem:[#allocation8 + $0xc] sm:$0xf]
    %v4593 = vld [vmem:[#allocation8 + $0x10] sm:$0xf]
    %v4594 = vld [vmem:[#allocation8 + $0x14] sm:$0xf]
    %v4595 = vld [vmem:[#allocation8 + $0x18] sm:$0xf]
    %v4596 = vld [vmem:[#allocation8 + $0x1c] sm:$0xf]
    %v4597 = vld [vmem:[#allocation8 + $0x20] sm:$0xf]
    %v4598 = vld [vmem:[#allocation8 + $0x24] sm:$0xf]
    %v4599 = vld [vmem:[#allocation8 + $0x28] sm:$0xf]
    %v4600 = vld [vmem:[#allocation8 + $0x2c] sm:$0xf]
    %v4601 = vld [vmem:[#allocation8 + $0x30] sm:$0xf]
    %v4602 = vld [vmem:[#allocation8 + $0x34] sm:$0xf]
    %v4603 = vld [vmem:[#allocation8 + $0x38] sm:$0xf]
    %v4604 = vld [vmem:[#allocation8 + $0x3c] sm:$0xf]
    %v4605 = vld [vmem:[#allocation8 + $0x40] sm:$0xf]
    %v4606 = vld [vmem:[#allocation8 + $0x44] sm:$0xf]
    %v4607 = vld [vmem:[#allocation8 + $0x48] sm:$0xf]
    %v4608 = vld [vmem:[#allocation8 + $0x4c] sm:$0xf]
    %v4609 = vld [vmem:[#allocation8 + $0x50] sm:$0xf]
    %v4610 = vld [vmem:[#allocation8 + $0x54] sm:$0xf]
    %v4611 = vld [vmem:[#allocation8 + $0x58] sm:$0xf]
    %v4612 = vld [vmem:[#allocation8 + $0x5c] sm:$0xf]
    %v4613 = vld [vmem:[#allocation8 + $0x60] sm:$0xf]
    %v4614 = vld [vmem:[#allocation8 + $0x64] sm:$0xf]
    %v4615 = vld [vmem:[#allocation8 + $0x68] sm:$0xf]
    %v4616 = vld [vmem:[#allocation8 + $0x6c] sm:$0xf]
    %v4617 = vld [vmem:[#allocation8 + $0x70] sm:$0xf]
    %v4618 = vld [vmem:[#allocation8 + $0x74] sm:$0xf]
    %v4619 = vld [vmem:[#allocation8 + $0x78] sm:$0xf]
    %v4620 = vld [vmem:[#allocation8 + $0x7c] sm:$0xf]
    %v4621 = vld [vmem:[#allocation8 + $0x80] sm:$0xf]
    %v4622 = vld [vmem:[#allocation8 + $0x84] sm:$0xf]
    %v4623 = vld [vmem:[#allocation8 + $0x88] sm:$0xf]
    %v4624 = vld [vmem:[#allocation8 + $0x8c] sm:$0xf]
    %v4625 = vld [vmem:[#allocation8 + $0x90] sm:$0xf]
    %v4626 = vld [vmem:[#allocation8 + $0x94] sm:$0xf]
    %v4627 = vld [vmem:[#allocation8 + $0x98] sm:$0xf]
    %v4628 = vld [vmem:[#allocation8 + $0x9c] sm:$0xf]
    %v4629 = vld [vmem:[#allocation8 + $0xa0] sm:$0xf]
    %v4630 = vld [vmem:[#allocation8 + $0xa4] sm:$0xf]
    %v4631 = vld [vmem:[#allocation8 + $0xa8] sm:$0xf]
    %v4632 = vld [vmem:[#allocation8 + $0xac] sm:$0xf]
    %v4633 = vld [vmem:[#allocation8 + $0xb0] sm:$0xf]
    %v4634 = vld [vmem:[#allocation8 + $0xb4] sm:$0xf]
    %v4635 = vld [vmem:[#allocation8 + $0xb8] sm:$0xf]
    %v4636 = vld [vmem:[#allocation8 + $0xbc] sm:$0xf]
    %v4637 = vld [vmem:[#allocation8 + $0xc0] sm:$0xf]
    %v4638 = vld [vmem:[#allocation8 + $0xc4] sm:$0xf]
    %v4639 = vld [vmem:[#allocation8 + $0xc8] sm:$0xf]
    %v4640 = vld [vmem:[#allocation8 + $0xcc] sm:$0xf]
    %v4641 = vld [vmem:[#allocation8 + $0xd0] sm:$0xf]
    %v4642 = vld [vmem:[#allocation8 + $0xd4] sm:$0xf]
    %v4643 = vld [vmem:[#allocation8 + $0xd8] sm:$0xf]
    %v4644 = vld [vmem:[#allocation8 + $0xdc] sm:$0xf]
    %v4645 = vld [vmem:[#allocation8 + $0xe0] sm:$0xf]
    %v4646 = vld [vmem:[#allocation8 + $0xe4] sm:$0xf]
    %v4647 = vld [vmem:[#allocation8 + $0xe8] sm:$0xf]
    %v4648 = vld [vmem:[#allocation8 + $0xec] sm:$0xf]
    %v4649 = vld [vmem:[#allocation8 + $0xf0] sm:$0xf]
    %v4650 = vld [vmem:[#allocation8 + $0xf4] sm:$0xf]
    %v4651 = vld [vmem:[#allocation8 + $0xf8] sm:$0xf]
    %v4652 = vld [vmem:[#allocation8 + $0xfc] sm:$0xf]
    %v4653 = vld [vmem:[#allocation8 + $0x100] sm:$0xf]
    %v4654 = vld [vmem:[#allocation8 + $0x104] sm:$0xf]
    %v4655 = vld [vmem:[#allocation8 + $0x108] sm:$0xf]
    %v4656 = vld [vmem:[#allocation8 + $0x10c] sm:$0xf]
    %v4657 = vld [vmem:[#allocation8 + $0x110] sm:$0xf]
    %v4658 = vld [vmem:[#allocation8 + $0x114] sm:$0xf]
    %v4659 = vld [vmem:[#allocation8 + $0x118] sm:$0xf]
    %v4660 = vld [vmem:[#allocation8 + $0x11c] sm:$0xf]
    %v4661 = vld [vmem:[#allocation8 + $0x120] sm:$0xf]
    %v4662 = vld [vmem:[#allocation8 + $0x124] sm:$0xf]
    %v4663 = vld [vmem:[#allocation8 + $0x128] sm:$0xf]
    %v4664 = vld [vmem:[#allocation8 + $0x12c] sm:$0xf]
    %v4665 = vld [vmem:[#allocation8 + $0x130] sm:$0xf]
    %v4666 = vld [vmem:[#allocation8 + $0x134] sm:$0xf]
    %v4667 = vld [vmem:[#allocation8 + $0x138] sm:$0xf]
    %v4668 = vld [vmem:[#allocation8 + $0x13c] sm:$0xf]
    %v4669 = vld [vmem:[#allocation8 + $0x140] sm:$0xf]
    %v4670 = vld [vmem:[#allocation8 + $0x144] sm:$0xf]
    %v4671 = vld [vmem:[#allocation8 + $0x148] sm:$0xf]
    %v4672 = vld [vmem:[#allocation8 + $0x14c] sm:$0xf]
    %v4673 = vld [vmem:[#allocation8 + $0x150] sm:$0xf]
    %v4674 = vld [vmem:[#allocation8 + $0x154] sm:$0xf]
    %v4675 = vld [vmem:[#allocation8 + $0x158] sm:$0xf]
    %v4676 = vld [vmem:[#allocation8 + $0x15c] sm:$0xf]
    %v4677 = vld [vmem:[#allocation8 + $0x160] sm:$0xf]
    %v4678 = vld [vmem:[#allocation8 + $0x164] sm:$0xf]
    %v4679 = vld [vmem:[#allocation8 + $0x168] sm:$0xf]
    %v4680 = vld [vmem:[#allocation8 + $0x16c] sm:$0xf]
    %v4681 = vld [vmem:[#allocation8 + $0x170] sm:$0xf]
    %v4682 = vld [vmem:[#allocation8 + $0x174] sm:$0xf]
    %v4683 = vld [vmem:[#allocation8 + $0x178] sm:$0xf]
    %v4684 = vld [vmem:[#allocation8 + $0x17c] sm:$0xf]
    %v4685 = vld [vmem:[#allocation8 + $0x180] sm:$0xf]
    %v4686 = vld [vmem:[#allocation8 + $0x184] sm:$0xf]
    %v4687 = vld [vmem:[#allocation8 + $0x188] sm:$0xf]
    %v4688 = vld [vmem:[#allocation8 + $0x18c] sm:$0xf]
    %v4689 = vld [vmem:[#allocation8 + $0x190] sm:$0xf]
    %v4690 = vld [vmem:[#allocation8 + $0x194] sm:$0xf]
    %v4691 = vld [vmem:[#allocation8 + $0x198] sm:$0xf]
    %v4692 = vld [vmem:[#allocation8 + $0x19c] sm:$0xf]
    %v4693 = vld [vmem:[#allocation8 + $0x1a0] sm:$0xf]
    %v4694 = vld [vmem:[#allocation8 + $0x1a4] sm:$0xf]
    %v4695 = vld [vmem:[#allocation8 + $0x1a8] sm:$0xf]
    %v4696 = vld [vmem:[#allocation8 + $0x1ac] sm:$0xf]
    %v4697 = vld [vmem:[#allocation8 + $0x1b0] sm:$0xf]
    %v4698 = vld [vmem:[#allocation8 + $0x1b4] sm:$0xf]
    %v4699 = vld [vmem:[#allocation8 + $0x1b8] sm:$0xf]
    %v4700 = vld [vmem:[#allocation8 + $0x1bc] sm:$0xf]
    %v4701 = vld [vmem:[#allocation8 + $0x1c0] sm:$0xf]
    %v4702 = vld [vmem:[#allocation8 + $0x1c4] sm:$0xf]
    %v4703 = vld [vmem:[#allocation8 + $0x1c8] sm:$0xf]
    %v4704 = vld [vmem:[#allocation8 + $0x1cc] sm:$0xf]
    %v4705 = vld [vmem:[#allocation8 + $0x1d0] sm:$0xf]
    %v4706 = vld [vmem:[#allocation8 + $0x1d4] sm:$0xf]
    %v4707 = vld [vmem:[#allocation8 + $0x1d8] sm:$0xf]
    %v4708 = vld [vmem:[#allocation8 + $0x1dc] sm:$0xf]
    %v4709 = vld [vmem:[#allocation8 + $0x1e0] sm:$0xf]
    %v4710 = vld [vmem:[#allocation8 + $0x1e4] sm:$0xf]
    %v4711 = vld [vmem:[#allocation8 + $0x1e8] sm:$0xf]
    %v4712 = vld [vmem:[#allocation8 + $0x1ec] sm:$0xf]
    %v4713 = vld [vmem:[#allocation8 + $0x1f0] sm:$0xf]
    %v4714 = vld [vmem:[#allocation8 + $0x1f4] sm:$0xf]
    %v4715 = vld [vmem:[#allocation8 + $0x1f8] sm:$0xf]
    %v4716 = vld [vmem:[#allocation8 + $0x1fc] sm:$0xf]
    %v4717 = vld [vmem:[#allocation8 + $0x200] sm:$0xf]
    %v4718 = vld [vmem:[#allocation8 + $0x204] sm:$0xf]
    %v4719 = vld [vmem:[#allocation8 + $0x208] sm:$0xf]
    %v4720 = vld [vmem:[#allocation8 + $0x20c] sm:$0xf]
    %v4721 = vld [vmem:[#allocation8 + $0x210] sm:$0xf]
    %v4722 = vld [vmem:[#allocation8 + $0x214] sm:$0xf]
    %v4723 = vld [vmem:[#allocation8 + $0x218] sm:$0xf]
    %v4724 = vld [vmem:[#allocation8 + $0x21c] sm:$0xf]
    %v4725 = vld [vmem:[#allocation8 + $0x220] sm:$0xf]
    %v4726 = vld [vmem:[#allocation8 + $0x224] sm:$0xf]
    %v4727 = vld [vmem:[#allocation8 + $0x228] sm:$0xf]
    %v4728 = vld [vmem:[#allocation8 + $0x22c] sm:$0xf]
    %v4729 = vld [vmem:[#allocation8 + $0x230] sm:$0xf]
    %v4730 = vld [vmem:[#allocation8 + $0x234] sm:$0xf]
    %v4731 = vld [vmem:[#allocation8 + $0x238] sm:$0xf]
    %v4732 = vld [vmem:[#allocation8 + $0x23c] sm:$0xf]
    %v4877 = vunpack.c.l.b16 %v4589
    %v4878 = vunpack.c.l.b16 %v4590
    %v4879 = vunpack.c.l.b16 %v4591
    %v4880 = vunpack.c.l.b16 %v4592
    %v4881 = vunpack.c.l.b16 %v4593
    %v4882 = vunpack.c.l.b16 %v4594
    %v4883 = vunpack.c.l.b16 %v4595
    %v4884 = vunpack.c.l.b16 %v4596
    %v4885 = vunpack.c.l.b16 %v4597
    %v4886 = vunpack.c.l.b16 %v4598
    %v4887 = vunpack.c.l.b16 %v4599
    %v4888 = vunpack.c.l.b16 %v4600
    %v4889 = vunpack.c.l.b16 %v4601
    %v4890 = vunpack.c.l.b16 %v4602
    %v4891 = vunpack.c.l.b16 %v4603
    %v4892 = vunpack.c.l.b16 %v4604
    %v4893 = vunpack.c.l.b16 %v4605
    %v4894 = vunpack.c.l.b16 %v4606
    %v4895 = vunpack.c.l.b16 %v4607
    %v4896 = vunpack.c.l.b16 %v4608
    %v4897 = vunpack.c.l.b16 %v4609
    %v4898 = vunpack.c.l.b16 %v4610
    %v4899 = vunpack.c.l.b16 %v4611
    %v4900 = vunpack.c.l.b16 %v4612
    %v4901 = vunpack.c.l.b16 %v4613
    %v4902 = vunpack.c.l.b16 %v4614
    %v4903 = vunpack.c.l.b16 %v4615
    %v4904 = vunpack.c.l.b16 %v4616
    %v4905 = vunpack.c.l.b16 %v4617
    %v4906 = vunpack.c.l.b16 %v4618
    %v4907 = vunpack.c.l.b16 %v4619
    %v4908 = vunpack.c.l.b16 %v4620
    %v4909 = vunpack.c.l.b16 %v4621
    %v4910 = vunpack.c.l.b16 %v4622
    %v4911 = vunpack.c.l.b16 %v4623
    %v4912 = vunpack.c.l.b16 %v4624
    %v4913 = vunpack.c.l.b16 %v4625
    %v4914 = vunpack.c.l.b16 %v4626
    %v4915 = vunpack.c.l.b16 %v4627
    %v4916 = vunpack.c.l.b16 %v4628
    %v4917 = vunpack.c.l.b16 %v4629
    %v4918 = vunpack.c.l.b16 %v4630
    %v4919 = vunpack.c.l.b16 %v4631
    %v4920 = vunpack.c.l.b16 %v4632
    %v4921 = vunpack.c.l.b16 %v4633
    %v4922 = vunpack.c.l.b16 %v4634
    %v4923 = vunpack.c.l.b16 %v4635
    %v4924 = vunpack.c.l.b16 %v4636
    %v4925 = vunpack.c.l.b16 %v4637
    %v4926 = vunpack.c.l.b16 %v4638
    %v4927 = vunpack.c.l.b16 %v4639
    %v4928 = vunpack.c.l.b16 %v4640
    %v4929 = vunpack.c.l.b16 %v4641
    %v4930 = vunpack.c.l.b16 %v4642
    %v4931 = vunpack.c.l.b16 %v4643
    %v4932 = vunpack.c.l.b16 %v4644
    %v4933 = vunpack.c.l.b16 %v4645
    %v4934 = vunpack.c.l.b16 %v4646
    %v4935 = vunpack.c.l.b16 %v4647
    %v4936 = vunpack.c.l.b16 %v4648
    %v4937 = vunpack.c.l.b16 %v4649
    %v4938 = vunpack.c.l.b16 %v4650
    %v4939 = vunpack.c.l.b16 %v4651
    %v4940 = vunpack.c.l.b16 %v4652
    %v4941 = vunpack.c.l.b16 %v4653
    %v4942 = vunpack.c.l.b16 %v4654
    %v4943 = vunpack.c.l.b16 %v4655
    %v4944 = vunpack.c.l.b16 %v4656
    %v4945 = vunpack.c.l.b16 %v4657
    %v4946 = vunpack.c.l.b16 %v4658
    %v4947 = vunpack.c.l.b16 %v4659
    %v4948 = vunpack.c.l.b16 %v4660
    %v4949 = vunpack.c.l.b16 %v4661
    %v4950 = vunpack.c.l.b16 %v4662
    %v4951 = vunpack.c.l.b16 %v4663
    %v4952 = vunpack.c.l.b16 %v4664
    %v4953 = vunpack.c.l.b16 %v4665
    %v4954 = vunpack.c.l.b16 %v4666
    %v4955 = vunpack.c.l.b16 %v4667
    %v4956 = vunpack.c.l.b16 %v4668
    %v4957 = vunpack.c.l.b16 %v4669
    %v4958 = vunpack.c.l.b16 %v4670
    %v4959 = vunpack.c.l.b16 %v4671
    %v4960 = vunpack.c.l.b16 %v4672
    %v4961 = vunpack.c.l.b16 %v4673
    %v4962 = vunpack.c.l.b16 %v4674
    %v4963 = vunpack.c.l.b16 %v4675
    %v4964 = vunpack.c.l.b16 %v4676
    %v4965 = vunpack.c.l.b16 %v4677
    %v4966 = vunpack.c.l.b16 %v4678
    %v4967 = vunpack.c.l.b16 %v4679
    %v4968 = vunpack.c.l.b16 %v4680
    %v4969 = vunpack.c.l.b16 %v4681
    %v4970 = vunpack.c.l.b16 %v4682
    %v4971 = vunpack.c.l.b16 %v4683
    %v4972 = vunpack.c.l.b16 %v4684
    %v4973 = vunpack.c.l.b16 %v4685
    %v4974 = vunpack.c.l.b16 %v4686
    %v4975 = vunpack.c.l.b16 %v4687
    %v4976 = vunpack.c.l.b16 %v4688
    %v4977 = vunpack.c.l.b16 %v4689
    %v4978 = vunpack.c.l.b16 %v4690
    %v4979 = vunpack.c.l.b16 %v4691
    %v4980 = vunpack.c.l.b16 %v4692
    %v4981 = vunpack.c.l.b16 %v4693
    %v4982 = vunpack.c.l.b16 %v4694
    %v4983 = vunpack.c.l.b16 %v4695
    %v4984 = vunpack.c.l.b16 %v4696
    %v4985 = vunpack.c.l.b16 %v4697
    %v4986 = vunpack.c.l.b16 %v4698
    %v4987 = vunpack.c.l.b16 %v4699
    %v4988 = vunpack.c.l.b16 %v4700
    %v4989 = vunpack.c.l.b16 %v4701
    %v4990 = vunpack.c.l.b16 %v4702
    %v4991 = vunpack.c.l.b16 %v4703
    %v4992 = vunpack.c.l.b16 %v4704
    %v4993 = vunpack.c.l.b16 %v4705
    %v4994 = vunpack.c.l.b16 %v4706
    %v4995 = vunpack.c.l.b16 %v4707
    %v4996 = vunpack.c.l.b16 %v4708
    %v4997 = vunpack.c.l.b16 %v4709
    %v4998 = vunpack.c.l.b16 %v4710
    %v4999 = vunpack.c.l.b16 %v4711
    %v5000 = vunpack.c.l.b16 %v4712
    %v5001 = vunpack.c.l.b16 %v4713
    %v5002 = vunpack.c.l.b16 %v4714
    %v5003 = vunpack.c.l.b16 %v4715
    %v5004 = vunpack.c.l.b16 %v4716
    %v5005 = vunpack.c.l.b16 %v4717
    %v5006 = vunpack.c.l.b16 %v4718
    %v5007 = vunpack.c.l.b16 %v4719
    %v5008 = vunpack.c.l.b16 %v4720
    %v5009 = vunpack.c.l.b16 %v4721
    %v5010 = vunpack.c.l.b16 %v4722
    %v5011 = vunpack.c.l.b16 %v4723
    %v5012 = vunpack.c.l.b16 %v4724
    %v5013 = vunpack.c.l.b16 %v4725
    %v5014 = vunpack.c.l.b16 %v4726
    %v5015 = vunpack.c.l.b16 %v4727
    %v5016 = vunpack.c.l.b16 %v4728
    %v5017 = vunpack.c.l.b16 %v4729
    %v5018 = vunpack.c.l.b16 %v4730
    %v5019 = vunpack.c.l.b16 %v4731
    %v5020 = vunpack.c.l.b16 %v4732
    %v5021 = vpack.c.b16 %v4878, %v4877
    %v5022 = vpack.c.b16 %v4880, %v4879
    %v5023 = vpack.c.b16 %v4882, %v4881
    %v5024 = vpack.c.b16 %v4884, %v4883
    %v5025 = vpack.c.b16 %v4886, %v4885
    %v5026 = vpack.c.b16 %v4888, %v4887
    %v5027 = vpack.c.b16 %v4890, %v4889
    %v5028 = vpack.c.b16 %v4892, %v4891
    %v5029 = vpack.c.b16 %v4894, %v4893
    %v5030 = vpack.c.b16 %v4896, %v4895
    %v5031 = vpack.c.b16 %v4898, %v4897
    %v5032 = vpack.c.b16 %v4900, %v4899
    %v5033 = vpack.c.b16 %v4902, %v4901
    %v5034 = vpack.c.b16 %v4904, %v4903
    %v5035 = vpack.c.b16 %v4906, %v4905
    %v5036 = vpack.c.b16 %v4908, %v4907
    %v5037 = vpack.c.b16 %v4910, %v4909
    %v5038 = vpack.c.b16 %v4912, %v4911
    %v5039 = vpack.c.b16 %v4914, %v4913
    %v5040 = vpack.c.b16 %v4916, %v4915
    %v5041 = vpack.c.b16 %v4918, %v4917
    %v5042 = vpack.c.b16 %v4920, %v4919
    %v5043 = vpack.c.b16 %v4922, %v4921
    %v5044 = vpack.c.b16 %v4924, %v4923
    %v5045 = vpack.c.b16 %v4926, %v4925
    %v5046 = vpack.c.b16 %v4928, %v4927
    %v5047 = vpack.c.b16 %v4930, %v4929
    %v5048 = vpack.c.b16 %v4932, %v4931
    %v5049 = vpack.c.b16 %v4934, %v4933
    %v5050 = vpack.c.b16 %v4936, %v4935
    %v5051 = vpack.c.b16 %v4938, %v4937
    %v5052 = vpack.c.b16 %v4940, %v4939
    %v5053 = vpack.c.b16 %v4942, %v4941
    %v5054 = vpack.c.b16 %v4944, %v4943
    %v5055 = vpack.c.b16 %v4946, %v4945
    %v5056 = vpack.c.b16 %v4948, %v4947
    %v5057 = vpack.c.b16 %v4950, %v4949
    %v5058 = vpack.c.b16 %v4952, %v4951
    %v5059 = vpack.c.b16 %v4954, %v4953
    %v5060 = vpack.c.b16 %v4956, %v4955
    %v5061 = vpack.c.b16 %v4958, %v4957
    %v5062 = vpack.c.b16 %v4960, %v4959
    %v5063 = vpack.c.b16 %v4962, %v4961
    %v5064 = vpack.c.b16 %v4964, %v4963
    %v5065 = vpack.c.b16 %v4966, %v4965
    %v5066 = vpack.c.b16 %v4968, %v4967
    %v5067 = vpack.c.b16 %v4970, %v4969
    %v5068 = vpack.c.b16 %v4972, %v4971
    %v5069 = vpack.c.b16 %v4974, %v4973
    %v5070 = vpack.c.b16 %v4976, %v4975
    %v5071 = vpack.c.b16 %v4978, %v4977
    %v5072 = vpack.c.b16 %v4980, %v4979
    %v5073 = vpack.c.b16 %v4982, %v4981
    %v5074 = vpack.c.b16 %v4984, %v4983
    %v5075 = vpack.c.b16 %v4986, %v4985
    %v5076 = vpack.c.b16 %v4988, %v4987
    %v5077 = vpack.c.b16 %v4990, %v4989
    %v5078 = vpack.c.b16 %v4992, %v4991
    %v5079 = vpack.c.b16 %v4994, %v4993
    %v5080 = vpack.c.b16 %v4996, %v4995
    %v5081 = vpack.c.b16 %v4998, %v4997
    %v5082 = vpack.c.b16 %v5000, %v4999
    %v5083 = vpack.c.b16 %v5002, %v5001
    %v5084 = vpack.c.b16 %v5004, %v5003
    %v5085 = vpack.c.b16 %v5006, %v5005
    %v5086 = vpack.c.b16 %v5008, %v5007
    %v5087 = vpack.c.b16 %v5010, %v5009
    %v5088 = vpack.c.b16 %v5012, %v5011
    %v5089 = vpack.c.b16 %v5014, %v5013
    %v5090 = vpack.c.b16 %v5016, %v5015
    %v5091 = vpack.c.b16 %v5018, %v5017
    %v5092 = vpack.c.b16 %v5020, %v5019
    %5165 = vmatprep.subr.bf16.mxu0 0
    %5166 = vmatpush1.bf16.msra.mxu0 %v5028
    %5167 = vmatprep.subr.bf16.mxu0 0
    %5168 = vmatpush1.bf16.msra.mxu0 %v5027
    %5169 = vmatprep.subr.bf16.mxu0 0
    %5170 = vmatpush1.bf16.msra.mxu0 %v5026
    %5171 = vmatprep.subr.bf16.mxu0 0
    %5172 = vmatpush1.bf16.msra.mxu0 %v5025
    %5173 = vmatprep.subr.bf16.mxu0 0
    %5174 = vmatpush1.bf16.msra.mxu0 %v5024
    %5175 = vmatprep.subr.bf16.mxu0 0
    %5176 = vmatpush1.bf16.msra.mxu0 %v5023
    %5177 = vmatprep.subr.bf16.mxu0 0
    %5178 = vmatpush1.bf16.msra.mxu0 %v5022
    %5179 = vmatprep.subr.bf16.mxu0 0
    %5180 = vmatpush1.bf16.msra.mxu0 %v5021
    %5181 = vmatprep.subr.bf16.mxu0 0
    %5182 = vmatpush2.bf16.msra.mxu0 %v5036
    %5183 = vmatprep.subr.bf16.mxu0 0
    %5184 = vmatpush2.bf16.msra.mxu0 %v5035
    %5185 = vmatprep.subr.bf16.mxu0 0
    %5186 = vmatpush2.bf16.msra.mxu0 %v5034
    %5187 = vmatprep.subr.bf16.mxu0 0
    %5188 = vmatpush2.bf16.msra.mxu0 %v5033
    %5189 = vmatprep.subr.bf16.mxu0 0
    %5190 = vmatpush2.bf16.msra.mxu0 %v5032
    %5191 = vmatprep.subr.bf16.mxu0 0
    %5192 = vmatpush2.bf16.msra.mxu0 %v5031
    %5193 = vmatprep.subr.bf16.mxu0 0
    %5194 = vmatpush2.bf16.msra.mxu0 %v5030
    %5195 = vmatprep.subr.bf16.mxu0 0
    %5196 = vmatpush2.bf16.msra.mxu0 %v5029
    %5197 = vmatprep.mubr.bf16.mxu0 %v4482
    %5198 = vmatmul.mubr.bf16.gmra.mxu0 %v4481
    %v5199 = vpop.f32.mrf.mxu0
    %v5200 = vadd.f32 0.0, %v5199
    %v5201 = vpop.f32.mrf.mxu0
    %v5202 = vpop.f32.mrf.mxu0
    %v5203 = vadd.f32 0.0, %v5202
    %v5204 = vpop.f32.mrf.mxu0
    %5205 = vmatprep.mubr.bf16.mxu0 %v4485
    %5206 = vmatmul.mubr.bf16.gmra.mxu0 %v4484
    %v5207 = vpop.f32.mrf.mxu0
    %v5208 = vadd.f32 0.0, %v5207
    %v5209 = vpop.f32.mrf.mxu0
    %v5210 = vpop.f32.mrf.mxu0
    %v5211 = vadd.f32 0.0, %v5210
    %v5212 = vpop.f32.mrf.mxu0
    %5213 = vmatprep.mubr.bf16.mxu0 %v4488
    %5214 = vmatmul.mubr.bf16.gmra.mxu0 %v4487
    %v5215 = vpop.f32.mrf.mxu0
    %v5216 = vadd.f32 0.0, %v5215
    %v5217 = vpop.f32.mrf.mxu0
    %v5218 = vpop.f32.mrf.mxu0
    %v5219 = vadd.f32 0.0, %v5218
    %v5220 = vpop.f32.mrf.mxu0
    %5221 = vmatprep.mubr.bf16.mxu0 %v4491
    %5222 = vmatmul.mubr.bf16.gmra.mxu0 %v4490
    %v5223 = vpop.f32.mrf.mxu0
    %v5224 = vadd.f32 0.0, %v5223
    %v5225 = vpop.f32.mrf.mxu0
    %v5226 = vpop.f32.mrf.mxu0
    %v5227 = vadd.f32 0.0, %v5226
    %v5228 = vpop.f32.mrf.mxu0
    %5229 = vmatprep.mubr.bf16.mxu0 %v4494
    %5230 = vmatmul.mubr.bf16.gmra.mxu0 %v4493
    %v5231 = vpop.f32.mrf.mxu0
    %v5232 = vadd.f32 0.0, %v5231
    %v5233 = vpop.f32.mrf.mxu0
    %v5234 = vpop.f32.mrf.mxu0
    %v5235 = vadd.f32 0.0, %v5234
    %v5236 = vpop.f32.mrf.mxu0
    %5237 = vmatprep.mubr.bf16.mxu0 %v4497
    %5238 = vmatmul.mubr.bf16.gmra.mxu0 %v4496
    %v5239 = vpop.f32.mrf.mxu0
    %v5240 = vadd.f32 0.0, %v5239
    %v5241 = vpop.f32.mrf.mxu0
    %v5242 = vpop.f32.mrf.mxu0
    %v5243 = vadd.f32 0.0, %v5242
    %v5244 = vpop.f32.mrf.mxu0
    %5245 = vmatprep.mubr.bf16.mxu0 %v4500
    %5246 = vmatmul.mubr.bf16.gmra.mxu0 %v4499
    %v5247 = vpop.f32.mrf.mxu0
    %v5248 = vadd.f32 0.0, %v5247
    %v5249 = vpop.f32.mrf.mxu0
    %v5250 = vpop.f32.mrf.mxu0
    %v5251 = vadd.f32 0.0, %v5250
    %v5252 = vpop.f32.mrf.mxu0
    %5253 = vmatprep.mubr.bf16.mxu0 %v4503
    %5254 = vmatmul.mubr.bf16.gmra.mxu0 %v4502
    %v5255 = vpop.f32.mrf.mxu0
    %v5256 = vadd.f32 0.0, %v5255
    %v5257 = vpop.f32.mrf.mxu0
    %v5258 = vpop.f32.mrf.mxu0
    %v5259 = vadd.f32 0.0, %v5258
    %v5260 = vpop.f32.mrf.mxu0
    %5261 = vmatprep.mubr.bf16.mxu0 %v4506
    %5262 = vmatmul.mubr.bf16.gmra.mxu0 %v4505
    %v5263 = vpop.f32.mrf.mxu0
    %v5264 = vadd.f32 0.0, %v5263
    %v5265 = vpop.f32.mrf.mxu0
    %v5266 = vpop.f32.mrf.mxu0
    %v5267 = vadd.f32 0.0, %v5266
    %v5268 = vpop.f32.mrf.mxu0
    %5269 = vmatprep.mubr.bf16.mxu0 %v4509
    %5270 = vmatmul.mubr.bf16.gmra.mxu0 %v4508
    %v5271 = vpop.f32.mrf.mxu0
    %v5272 = vadd.f32 0.0, %v5271
    %v5273 = vpop.f32.mrf.mxu0
    %v5274 = vpop.f32.mrf.mxu0
    %v5275 = vadd.f32 0.0, %v5274
    %v5276 = vpop.f32.mrf.mxu0
    %5277 = vmatprep.mubr.bf16.mxu0 %v4512
    %5278 = vmatmul.mubr.bf16.gmra.mxu0 %v4511
    %v5279 = vpop.f32.mrf.mxu0
    %v5280 = vadd.f32 0.0, %v5279
    %v5281 = vpop.f32.mrf.mxu0
    %v5282 = vpop.f32.mrf.mxu0
    %v5283 = vadd.f32 0.0, %v5282
    %v5284 = vpop.f32.mrf.mxu0
    %5285 = vmatprep.mubr.bf16.mxu0 %v4515
    %5286 = vmatmul.mubr.bf16.gmra.mxu0 %v4514
    %v5287 = vpop.f32.mrf.mxu0
    %v5288 = vadd.f32 0.0, %v5287
    %v5289 = vpop.f32.mrf.mxu0
    %v5290 = vpop.f32.mrf.mxu0
    %v5291 = vadd.f32 0.0, %v5290
    %v5292 = vpop.f32.mrf.mxu0
    %5293 = vmatprep.mubr.bf16.mxu0 %v4518
    %5294 = vmatmul.mubr.bf16.gmra.mxu0 %v4517
    %v5295 = vpop.f32.mrf.mxu0
    %v5296 = vadd.f32 0.0, %v5295
    %v5297 = vpop.f32.mrf.mxu0
    %v5298 = vpop.f32.mrf.mxu0
    %v5299 = vadd.f32 0.0, %v5298
    %v5300 = vpop.f32.mrf.mxu0
    %5301 = vmatprep.mubr.bf16.mxu0 %v4521
    %5302 = vmatmul.mubr.bf16.gmra.mxu0 %v4520
    %v5303 = vpop.f32.mrf.mxu0
    %v5304 = vadd.f32 0.0, %v5303
    %v5305 = vpop.f32.mrf.mxu0
    %v5306 = vpop.f32.mrf.mxu0
    %v5307 = vadd.f32 0.0, %v5306
    %v5308 = vpop.f32.mrf.mxu0
    %5309 = vmatprep.mubr.bf16.mxu0 %v4524
    %5310 = vmatmul.mubr.bf16.gmra.mxu0 %v4523
    %v5311 = vpop.f32.mrf.mxu0
    %v5312 = vadd.f32 0.0, %v5311
    %v5313 = vpop.f32.mrf.mxu0
    %v5314 = vpop.f32.mrf.mxu0
    %v5315 = vadd.f32 0.0, %v5314
    %v5316 = vpop.f32.mrf.mxu0
    %5317 = vmatprep.mubr.bf16.mxu0 %v4527
    %5318 = vmatmul.mubr.bf16.gmra.mxu0 %v4526
    %v5319 = vpop.f32.mrf.mxu0
    %v5320 = vadd.f32 0.0, %v5319
    %v5321 = vpop.f32.mrf.mxu0
    %v5322 = vpop.f32.mrf.mxu0
    %v5323 = vadd.f32 0.0, %v5322
    %v5324 = vpop.f32.mrf.mxu0
    %5325 = vmatprep.mubr.bf16.mxu0 %v4536
    %5326 = vmatmul.mubr.bf16.gmra.mxu0 %v4535
    %v5327 = vpop.f32.mrf.mxu0
    %v5328 = vadd.f32 0.0, %v5327
    %v5329 = vpop.f32.mrf.mxu0
    %v5330 = vpop.f32.mrf.mxu0
    %v5331 = vadd.f32 0.0, %v5330
    %v5332 = vpop.f32.mrf.mxu0
    %5333 = vmatprep.mubr.bf16.mxu0 %v4539
    %5334 = vmatmul.mubr.bf16.gmra.mxu0 %v4538
    %v5335 = vpop.f32.mrf.mxu0
    %v5336 = vadd.f32 0.0, %v5335
    %v5337 = vpop.f32.mrf.mxu0
    %v5338 = vpop.f32.mrf.mxu0
    %v5339 = vadd.f32 0.0, %v5338
    %v5340 = vpop.f32.mrf.mxu0
    %5341 = vmatprep.mubr.bf16.mxu0 %v4542
    %5342 = vmatmul.mubr.bf16.gmra.mxu0 %v4541
    %v5343 = vpop.f32.mrf.mxu0
    %v5344 = vadd.f32 0.0, %v5343
    %v5345 = vpop.f32.mrf.mxu0
    %v5346 = vpop.f32.mrf.mxu0
    %v5347 = vadd.f32 0.0, %v5346
    %v5348 = vpop.f32.mrf.mxu0
    %5349 = vmatprep.mubr.bf16.mxu0 %v4545
    %5350 = vmatmul.mubr.bf16.gmra.mxu0 %v4544
    %v5351 = vpop.f32.mrf.mxu0
    %v5352 = vadd.f32 0.0, %v5351
    %v5353 = vpop.f32.mrf.mxu0
    %v5354 = vpop.f32.mrf.mxu0
    %v5355 = vadd.f32 0.0, %v5354
    %v5356 = vpop.f32.mrf.mxu0
    %5357 = vmatprep.mubr.bf16.mxu0 %v4548
    %5358 = vmatmul.mubr.bf16.gmra.mxu0 %v4547
    %v5359 = vpop.f32.mrf.mxu0
    %v5360 = vadd.f32 0.0, %v5359
    %v5361 = vpop.f32.mrf.mxu0
    %v5362 = vpop.f32.mrf.mxu0
    %v5363 = vadd.f32 0.0, %v5362
    %v5364 = vpop.f32.mrf.mxu0
    %5365 = vmatprep.mubr.bf16.mxu0 %v4551
    %5366 = vmatmul.mubr.bf16.gmra.mxu0 %v4550
    %v5367 = vpop.f32.mrf.mxu0
    %v5368 = vadd.f32 0.0, %v5367
    %v5369 = vpop.f32.mrf.mxu0
    %v5370 = vpop.f32.mrf.mxu0
    %v5371 = vadd.f32 0.0, %v5370
    %v5372 = vpop.f32.mrf.mxu0
    %5373 = vmatprep.mubr.bf16.mxu0 %v4554
    %5374 = vmatmul.mubr.bf16.gmra.mxu0 %v4553
    %v5375 = vpop.f32.mrf.mxu0
    %v5376 = vadd.f32 0.0, %v5375
    %v5377 = vpop.f32.mrf.mxu0
    %v5378 = vpop.f32.mrf.mxu0
    %v5379 = vadd.f32 0.0, %v5378
    %v5380 = vpop.f32.mrf.mxu0
    %5381 = vmatprep.mubr.bf16.mxu0 %v4557
    %5382 = vmatmul.mubr.bf16.gmra.mxu0 %v4556
    %v5383 = vpop.f32.mrf.mxu0
    %v5384 = vadd.f32 0.0, %v5383
    %v5385 = vpop.f32.mrf.mxu0
    %v5386 = vpop.f32.mrf.mxu0
    %v5387 = vadd.f32 0.0, %v5386
    %v5388 = vpop.f32.mrf.mxu0
    %5389 = vmatprep.mubr.bf16.mxu0 %v4560
    %5390 = vmatmul.mubr.bf16.gmra.mxu0 %v4559
    %v5391 = vpop.f32.mrf.mxu0
    %v5392 = vadd.f32 0.0, %v5391
    %v5393 = vpop.f32.mrf.mxu0
    %v5394 = vpop.f32.mrf.mxu0
    %v5395 = vadd.f32 0.0, %v5394
    %v5396 = vpop.f32.mrf.mxu0
    %5397 = vmatprep.mubr.bf16.mxu0 %v4563
    %5398 = vmatmul.mubr.bf16.gmra.mxu0 %v4562
    %v5399 = vpop.f32.mrf.mxu0
    %v5400 = vadd.f32 0.0, %v5399
    %v5401 = vpop.f32.mrf.mxu0
    %v5402 = vpop.f32.mrf.mxu0
    %v5403 = vadd.f32 0.0, %v5402
    %v5404 = vpop.f32.mrf.mxu0
    %5405 = vmatprep.mubr.bf16.mxu0 %v4566
    %5406 = vmatmul.mubr.bf16.gmra.mxu0 %v4565
    %v5407 = vpop.f32.mrf.mxu0
    %v5408 = vadd.f32 0.0, %v5407
    %v5409 = vpop.f32.mrf.mxu0
    %v5410 = vpop.f32.mrf.mxu0
    %v5411 = vadd.f32 0.0, %v5410
    %v5412 = vpop.f32.mrf.mxu0
    %5413 = vmatprep.mubr.bf16.mxu0 %v4569
    %5414 = vmatmul.mubr.bf16.gmra.mxu0 %v4568
    %v5415 = vpop.f32.mrf.mxu0
    %v5416 = vadd.f32 0.0, %v5415
    %v5417 = vpop.f32.mrf.mxu0
    %v5418 = vpop.f32.mrf.mxu0
    %v5419 = vadd.f32 0.0, %v5418
    %v5420 = vpop.f32.mrf.mxu0
    %5421 = vmatprep.mubr.bf16.mxu0 %v4572
    %5422 = vmatmul.mubr.bf16.gmra.mxu0 %v4571
    %v5423 = vpop.f32.mrf.mxu0
    %v5424 = vadd.f32 0.0, %v5423
    %v5425 = vpop.f32.mrf.mxu0
    %v5426 = vpop.f32.mrf.mxu0
    %v5427 = vadd.f32 0.0, %v5426
    %v5428 = vpop.f32.mrf.mxu0
    %5429 = vmatprep.mubr.bf16.mxu0 %v4575
    %5430 = vmatmul.mubr.bf16.gmra.mxu0 %v4574
    %v5431 = vpop.f32.mrf.mxu0
    %v5432 = vadd.f32 0.0, %v5431
    %v5433 = vpop.f32.mrf.mxu0
    %v5434 = vpop.f32.mrf.mxu0
    %v5435 = vadd.f32 0.0, %v5434
    %v5436 = vpop.f32.mrf.mxu0
    %5437 = vmatprep.mubr.bf16.mxu0 %v4578
    %5438 = vmatmul.mubr.bf16.gmra.mxu0 %v4577
    %v5439 = vpop.f32.mrf.mxu0
    %v5440 = vadd.f32 0.0, %v5439
    %v5441 = vpop.f32.mrf.mxu0
    %v5442 = vpop.f32.mrf.mxu0
    %v5443 = vadd.f32 0.0, %v5442
    %v5444 = vpop.f32.mrf.mxu0
    %5445 = vmatprep.mubr.bf16.mxu0 %v4581
    %5446 = vmatmul.mubr.bf16.gmra.mxu0 %v4580
    %v5447 = vpop.f32.mrf.mxu0
    %v5448 = vadd.f32 0.0, %v5447
    %v5449 = vpop.f32.mrf.mxu0
    %v5450 = vpop.f32.mrf.mxu0
    %v5451 = vadd.f32 0.0, %v5450
    %v5452 = vpop.f32.mrf.mxu0
    %5453 = vdwg.mxu0
    %5454 = vmatprep.subr.bf16.mxu0 0
    %5455 = vmatpush1.bf16.msra.mxu0 %v5044
    %5456 = vmatprep.subr.bf16.mxu0 0
    %5457 = vmatpush1.bf16.msra.mxu0 %v5043
    %5458 = vmatprep.subr.bf16.mxu0 0
    %5459 = vmatpush1.bf16.msra.mxu0 %v5042
    %5460 = vmatprep.subr.bf16.mxu0 0
    %5461 = vmatpush1.bf16.msra.mxu0 %v5041
    %5462 = vmatprep.subr.bf16.mxu0 0
    %5463 = vmatpush1.bf16.msra.mxu0 %v5040
    %5464 = vmatprep.subr.bf16.mxu0 0
    %5465 = vmatpush1.bf16.msra.mxu0 %v5039
    %5466 = vmatprep.subr.bf16.mxu0 0
    %5467 = vmatpush1.bf16.msra.mxu0 %v5038
    %5468 = vmatprep.subr.bf16.mxu0 0
    %5469 = vmatpush1.bf16.msra.mxu0 %v5037
    %5470 = vmatprep.subr.bf16.mxu0 0
    %5471 = vmatpush2.bf16.msra.mxu0 %v5052
    %5472 = vmatprep.subr.bf16.mxu0 0
    %5473 = vmatpush2.bf16.msra.mxu0 %v5051
    %5474 = vmatprep.subr.bf16.mxu0 0
    %5475 = vmatpush2.bf16.msra.mxu0 %v5050
    %5476 = vmatprep.subr.bf16.mxu0 0
    %5477 = vmatpush2.bf16.msra.mxu0 %v5049
    %5478 = vmatprep.subr.bf16.mxu0 0
    %5479 = vmatpush2.bf16.msra.mxu0 %v5048
    %5480 = vmatprep.subr.bf16.mxu0 0
    %5481 = vmatpush2.bf16.msra.mxu0 %v5047
    %5482 = vmatprep.subr.bf16.mxu0 0
    %5483 = vmatpush2.bf16.msra.mxu0 %v5046
    %5484 = vmatprep.subr.bf16.mxu0 0
    %5485 = vmatpush2.bf16.msra.mxu0 %v5045
    %5486 = vmatprep.mubr.bf16.mxu0 %v4484
    %5487 = vmatmul.mubr.bf16.gmra.mxu0 %v4483
    %v5488 = vpop.f32.mrf.mxu0
    %v5489 = vadd.f32 %v5200, %v5488
    %v5490 = vpop.f32.mrf.mxu0
    %v5491 = vpop.f32.mrf.mxu0
    %v5492 = vadd.f32 %v5203, %v5491
    %v5493 = vpop.f32.mrf.mxu0
    %5494 = vmatprep.mubr.bf16.mxu0 %v4487
    %5495 = vmatmul.mubr.bf16.gmra.mxu0 %v4486
    %v5496 = vpop.f32.mrf.mxu0
    %v5497 = vadd.f32 %v5208, %v5496
    %v5498 = vpop.f32.mrf.mxu0
    %v5499 = vpop.f32.mrf.mxu0
    %v5500 = vadd.f32 %v5211, %v5499
    %v5501 = vpop.f32.mrf.mxu0
    %5502 = vmatprep.mubr.bf16.mxu0 %v4490
    %5503 = vmatmul.mubr.bf16.gmra.mxu0 %v4489
    %v5504 = vpop.f32.mrf.mxu0
    %v5505 = vadd.f32 %v5216, %v5504
    %v5506 = vpop.f32.mrf.mxu0
    %v5507 = vpop.f32.mrf.mxu0
    %v5508 = vadd.f32 %v5219, %v5507
    %v5509 = vpop.f32.mrf.mxu0
    %5510 = vmatprep.mubr.bf16.mxu0 %v4493
    %5511 = vmatmul.mubr.bf16.gmra.mxu0 %v4492
    %v5512 = vpop.f32.mrf.mxu0
    %v5513 = vadd.f32 %v5224, %v5512
    %v5514 = vpop.f32.mrf.mxu0
    %v5515 = vpop.f32.mrf.mxu0
    %v5516 = vadd.f32 %v5227, %v5515
    %v5517 = vpop.f32.mrf.mxu0
    %5518 = vmatprep.mubr.bf16.mxu0 %v4496
    %5519 = vmatmul.mubr.bf16.gmra.mxu0 %v4495
    %v5520 = vpop.f32.mrf.mxu0
    %v5521 = vadd.f32 %v5232, %v5520
    %v5522 = vpop.f32.mrf.mxu0
    %v5523 = vpop.f32.mrf.mxu0
    %v5524 = vadd.f32 %v5235, %v5523
    %v5525 = vpop.f32.mrf.mxu0
    %5526 = vmatprep.mubr.bf16.mxu0 %v4499
    %5527 = vmatmul.mubr.bf16.gmra.mxu0 %v4498
    %v5528 = vpop.f32.mrf.mxu0
    %v5529 = vadd.f32 %v5240, %v5528
    %v5530 = vpop.f32.mrf.mxu0
    %v5531 = vpop.f32.mrf.mxu0
    %v5532 = vadd.f32 %v5243, %v5531
    %v5533 = vpop.f32.mrf.mxu0
    %5534 = vmatprep.mubr.bf16.mxu0 %v4502
    %5535 = vmatmul.mubr.bf16.gmra.mxu0 %v4501
    %v5536 = vpop.f32.mrf.mxu0
    %v5537 = vadd.f32 %v5248, %v5536
    %v5538 = vpop.f32.mrf.mxu0
    %v5539 = vpop.f32.mrf.mxu0
    %v5540 = vadd.f32 %v5251, %v5539
    %v5541 = vpop.f32.mrf.mxu0
    %5542 = vmatprep.mubr.bf16.mxu0 %v4505
    %5543 = vmatmul.mubr.bf16.gmra.mxu0 %v4504
    %v5544 = vpop.f32.mrf.mxu0
    %v5545 = vadd.f32 %v5256, %v5544
    %v5546 = vpop.f32.mrf.mxu0
    %v5547 = vpop.f32.mrf.mxu0
    %v5548 = vadd.f32 %v5259, %v5547
    %v5549 = vpop.f32.mrf.mxu0
    %5550 = vmatprep.mubr.bf16.mxu0 %v4508
    %5551 = vmatmul.mubr.bf16.gmra.mxu0 %v4507
    %v5552 = vpop.f32.mrf.mxu0
    %v5553 = vadd.f32 %v5264, %v5552
    %v5554 = vpop.f32.mrf.mxu0
    %v5555 = vpop.f32.mrf.mxu0
    %v5556 = vadd.f32 %v5267, %v5555
    %v5557 = vpop.f32.mrf.mxu0
    %5558 = vmatprep.mubr.bf16.mxu0 %v4511
    %5559 = vmatmul.mubr.bf16.gmra.mxu0 %v4510
    %v5560 = vpop.f32.mrf.mxu0
    %v5561 = vadd.f32 %v5272, %v5560
    %v5562 = vpop.f32.mrf.mxu0
    %v5563 = vpop.f32.mrf.mxu0
    %v5564 = vadd.f32 %v5275, %v5563
    %v5565 = vpop.f32.mrf.mxu0
    %5566 = vmatprep.mubr.bf16.mxu0 %v4514
    %5567 = vmatmul.mubr.bf16.gmra.mxu0 %v4513
    %v5568 = vpop.f32.mrf.mxu0
    %v5569 = vadd.f32 %v5280, %v5568
    %v5570 = vpop.f32.mrf.mxu0
    %v5571 = vpop.f32.mrf.mxu0
    %v5572 = vadd.f32 %v5283, %v5571
    %v5573 = vpop.f32.mrf.mxu0
    %5574 = vmatprep.mubr.bf16.mxu0 %v4517
    %5575 = vmatmul.mubr.bf16.gmra.mxu0 %v4516
    %v5576 = vpop.f32.mrf.mxu0
    %v5577 = vadd.f32 %v5288, %v5576
    %v5578 = vpop.f32.mrf.mxu0
    %v5579 = vpop.f32.mrf.mxu0
    %v5580 = vadd.f32 %v5291, %v5579
    %v5581 = vpop.f32.mrf.mxu0
    %5582 = vmatprep.mubr.bf16.mxu0 %v4520
    %5583 = vmatmul.mubr.bf16.gmra.mxu0 %v4519
    %v5584 = vpop.f32.mrf.mxu0
    %v5585 = vadd.f32 %v5296, %v5584
    %v5586 = vpop.f32.mrf.mxu0
    %v5587 = vpop.f32.mrf.mxu0
    %v5588 = vadd.f32 %v5299, %v5587
    %v5589 = vpop.f32.mrf.mxu0
    %5590 = vmatprep.mubr.bf16.mxu0 %v4523
    %5591 = vmatmul.mubr.bf16.gmra.mxu0 %v4522
    %v5592 = vpop.f32.mrf.mxu0
    %v5593 = vadd.f32 %v5304, %v5592
    %v5594 = vpop.f32.mrf.mxu0
    %v5595 = vpop.f32.mrf.mxu0
    %v5596 = vadd.f32 %v5307, %v5595
    %v5597 = vpop.f32.mrf.mxu0
    %5598 = vmatprep.mubr.bf16.mxu0 %v4526
    %5599 = vmatmul.mubr.bf16.gmra.mxu0 %v4525
    %v5600 = vpop.f32.mrf.mxu0
    %v5601 = vadd.f32 %v5312, %v5600
    %v5602 = vpop.f32.mrf.mxu0
    %v5603 = vpop.f32.mrf.mxu0
    %v5604 = vadd.f32 %v5315, %v5603
    %v5605 = vpop.f32.mrf.mxu0
    %5606 = vmatprep.mubr.bf16.mxu0 %v4529
    %5607 = vmatmul.mubr.bf16.gmra.mxu0 %v4528
    %v5608 = vpop.f32.mrf.mxu0
    %v5609 = vadd.f32 %v5320, %v5608
    %v5610 = vpop.f32.mrf.mxu0
    %v5611 = vpop.f32.mrf.mxu0
    %v5612 = vadd.f32 %v5323, %v5611
    %v5613 = vpop.f32.mrf.mxu0
    %5614 = vmatprep.mubr.bf16.mxu0 %v4538
    %5615 = vmatmul.mubr.bf16.gmra.mxu0 %v4537
    %v5616 = vpop.f32.mrf.mxu0
    %v5617 = vadd.f32 %v5328, %v5616
    %v5618 = vpop.f32.mrf.mxu0
    %v5619 = vpop.f32.mrf.mxu0
    %v5620 = vadd.f32 %v5331, %v5619
    %v5621 = vpop.f32.mrf.mxu0
    %5622 = vmatprep.mubr.bf16.mxu0 %v4541
    %5623 = vmatmul.mubr.bf16.gmra.mxu0 %v4540
    %v5624 = vpop.f32.mrf.mxu0
    %v5625 = vadd.f32 %v5336, %v5624
    %v5626 = vpop.f32.mrf.mxu0
    %v5627 = vpop.f32.mrf.mxu0
    %v5628 = vadd.f32 %v5339, %v5627
    %v5629 = vpop.f32.mrf.mxu0
    %5630 = vmatprep.mubr.bf16.mxu0 %v4544
    %5631 = vmatmul.mubr.bf16.gmra.mxu0 %v4543
    %v5632 = vpop.f32.mrf.mxu0
    %v5633 = vadd.f32 %v5344, %v5632
    %v5634 = vpop.f32.mrf.mxu0
    %v5635 = vpop.f32.mrf.mxu0
    %v5636 = vadd.f32 %v5347, %v5635
    %v5637 = vpop.f32.mrf.mxu0
    %5638 = vmatprep.mubr.bf16.mxu0 %v4547
    %5639 = vmatmul.mubr.bf16.gmra.mxu0 %v4546
    %v5640 = vpop.f32.mrf.mxu0
    %v5641 = vadd.f32 %v5352, %v5640
    %v5642 = vpop.f32.mrf.mxu0
    %v5643 = vpop.f32.mrf.mxu0
    %v5644 = vadd.f32 %v5355, %v5643
    %v5645 = vpop.f32.mrf.mxu0
    %5646 = vmatprep.mubr.bf16.mxu0 %v4550
    %5647 = vmatmul.mubr.bf16.gmra.mxu0 %v4549
    %v5648 = vpop.f32.mrf.mxu0
    %v5649 = vadd.f32 %v5360, %v5648
    %v5650 = vpop.f32.mrf.mxu0
    %v5651 = vpop.f32.mrf.mxu0
    %v5652 = vadd.f32 %v5363, %v5651
    %v5653 = vpop.f32.mrf.mxu0
    %5654 = vmatprep.mubr.bf16.mxu0 %v4553
    %5655 = vmatmul.mubr.bf16.gmra.mxu0 %v4552
    %v5656 = vpop.f32.mrf.mxu0
    %v5657 = vadd.f32 %v5368, %v5656
    %v5658 = vpop.f32.mrf.mxu0
    %v5659 = vpop.f32.mrf.mxu0
    %v5660 = vadd.f32 %v5371, %v5659
    %v5661 = vpop.f32.mrf.mxu0
    %5662 = vmatprep.mubr.bf16.mxu0 %v4556
    %5663 = vmatmul.mubr.bf16.gmra.mxu0 %v4555
    %v5664 = vpop.f32.mrf.mxu0
    %v5665 = vadd.f32 %v5376, %v5664
    %v5666 = vpop.f32.mrf.mxu0
    %v5667 = vpop.f32.mrf.mxu0
    %v5668 = vadd.f32 %v5379, %v5667
    %v5669 = vpop.f32.mrf.mxu0
    %5670 = vmatprep.mubr.bf16.mxu0 %v4559
    %5671 = vmatmul.mubr.bf16.gmra.mxu0 %v4558
    %v5672 = vpop.f32.mrf.mxu0
    %v5673 = vadd.f32 %v5384, %v5672
    %v5674 = vpop.f32.mrf.mxu0
    %v5675 = vpop.f32.mrf.mxu0
    %v5676 = vadd.f32 %v5387, %v5675
    %v5677 = vpop.f32.mrf.mxu0
    %5678 = vmatprep.mubr.bf16.mxu0 %v4562
    %5679 = vmatmul.mubr.bf16.gmra.mxu0 %v4561
    %v5680 = vpop.f32.mrf.mxu0
    %v5681 = vadd.f32 %v5392, %v5680
    %v5682 = vpop.f32.mrf.mxu0
    %v5683 = vpop.f32.mrf.mxu0
    %v5684 = vadd.f32 %v5395, %v5683
    %v5685 = vpop.f32.mrf.mxu0
    %5686 = vmatprep.mubr.bf16.mxu0 %v4565
    %5687 = vmatmul.mubr.bf16.gmra.mxu0 %v4564
    %v5688 = vpop.f32.mrf.mxu0
    %v5689 = vadd.f32 %v5400, %v5688
    %v5690 = vpop.f32.mrf.mxu0
    %v5691 = vpop.f32.mrf.mxu0
    %v5692 = vadd.f32 %v5403, %v5691
    %v5693 = vpop.f32.mrf.mxu0
    %5694 = vmatprep.mubr.bf16.mxu0 %v4568
    %5695 = vmatmul.mubr.bf16.gmra.mxu0 %v4567
    %v5696 = vpop.f32.mrf.mxu0
    %v5697 = vadd.f32 %v5408, %v5696
    %v5698 = vpop.f32.mrf.mxu0
    %v5699 = vpop.f32.mrf.mxu0
    %v5700 = vadd.f32 %v5411, %v5699
    %v5701 = vpop.f32.mrf.mxu0
    %5702 = vmatprep.mubr.bf16.mxu0 %v4571
    %5703 = vmatmul.mubr.bf16.gmra.mxu0 %v4570
    %v5704 = vpop.f32.mrf.mxu0
    %v5705 = vadd.f32 %v5416, %v5704
    %v5706 = vpop.f32.mrf.mxu0
    %v5707 = vpop.f32.mrf.mxu0
    %v5708 = vadd.f32 %v5419, %v5707
    %v5709 = vpop.f32.mrf.mxu0
    %5710 = vmatprep.mubr.bf16.mxu0 %v4574
    %5711 = vmatmul.mubr.bf16.gmra.mxu0 %v4573
    %v5712 = vpop.f32.mrf.mxu0
    %v5713 = vadd.f32 %v5424, %v5712
    %v5714 = vpop.f32.mrf.mxu0
    %v5715 = vpop.f32.mrf.mxu0
    %v5716 = vadd.f32 %v5427, %v5715
    %v5717 = vpop.f32.mrf.mxu0
    %5718 = vmatprep.mubr.bf16.mxu0 %v4577
    %5719 = vmatmul.mubr.bf16.gmra.mxu0 %v4576
    %v5720 = vpop.f32.mrf.mxu0
    %v5721 = vadd.f32 %v5432, %v5720
    %v5722 = vpop.f32.mrf.mxu0
    %v5723 = vpop.f32.mrf.mxu0
    %v5724 = vadd.f32 %v5435, %v5723
    %v5725 = vpop.f32.mrf.mxu0
    %5726 = vmatprep.mubr.bf16.mxu0 %v4580
    %5727 = vmatmul.mubr.bf16.gmra.mxu0 %v4579
    %v5728 = vpop.f32.mrf.mxu0
    %v5729 = vadd.f32 %v5440, %v5728
    %v5730 = vpop.f32.mrf.mxu0
    %v5731 = vpop.f32.mrf.mxu0
    %v5732 = vadd.f32 %v5443, %v5731
    %v5733 = vpop.f32.mrf.mxu0
    %5734 = vmatprep.mubr.bf16.mxu0 %v4583
    %5735 = vmatmul.mubr.bf16.gmra.mxu0 %v4582
    %v5736 = vpop.f32.mrf.mxu0
    %v5737 = vadd.f32 %v5448, %v5736
    %v5738 = vpop.f32.mrf.mxu0
    %v5739 = vpop.f32.mrf.mxu0
    %v5740 = vadd.f32 %v5451, %v5739
    %v5741 = vpop.f32.mrf.mxu0
    %5742 = vdwg.mxu0
    %5743 = vmatprep.subr.bf16.mxu0 0
    %5744 = vmatpush1.bf16.msra.mxu0 %v5060
    %5745 = vmatprep.subr.bf16.mxu0 0
    %5746 = vmatpush1.bf16.msra.mxu0 %v5059
    %5747 = vmatprep.subr.bf16.mxu0 0
    %5748 = vmatpush1.bf16.msra.mxu0 %v5058
    %5749 = vmatprep.subr.bf16.mxu0 0
    %5750 = vmatpush1.bf16.msra.mxu0 %v5057
    %5751 = vmatprep.subr.bf16.mxu0 0
    %5752 = vmatpush1.bf16.msra.mxu0 %v5056
    %5753 = vmatprep.subr.bf16.mxu0 0
    %5754 = vmatpush1.bf16.msra.mxu0 %v5055
    %5755 = vmatprep.subr.bf16.mxu0 0
    %5756 = vmatpush1.bf16.msra.mxu0 %v5054
    %5757 = vmatprep.subr.bf16.mxu0 0
    %5758 = vmatpush1.bf16.msra.mxu0 %v5053
    %5759 = vmatprep.subr.bf16.mxu0 0
    %5760 = vmatpush2.bf16.msra.mxu0 %v5068
    %5761 = vmatprep.subr.bf16.mxu0 0
    %5762 = vmatpush2.bf16.msra.mxu0 %v5067
    %5763 = vmatprep.subr.bf16.mxu0 0
    %5764 = vmatpush2.bf16.msra.mxu0 %v5066
    %5765 = vmatprep.subr.bf16.mxu0 0
    %5766 = vmatpush2.bf16.msra.mxu0 %v5065
    %5767 = vmatprep.subr.bf16.mxu0 0
    %5768 = vmatpush2.bf16.msra.mxu0 %v5064
    %5769 = vmatprep.subr.bf16.mxu0 0
    %5770 = vmatpush2.bf16.msra.mxu0 %v5063
    %5771 = vmatprep.subr.bf16.mxu0 0
    %5772 = vmatpush2.bf16.msra.mxu0 %v5062
    %5773 = vmatprep.subr.bf16.mxu0 0
    %5774 = vmatpush2.bf16.msra.mxu0 %v5061
    %5775 = vmatprep.mubr.bf16.mxu0 %v4486
    %5776 = vmatmul.mubr.bf16.gmra.mxu0 %v4485
    %v5777 = vpop.f32.mrf.mxu0
    %v5778 = vadd.f32 %v5489, %v5777
    %v5779 = vpop.f32.mrf.mxu0
    %v5780 = vpop.f32.mrf.mxu0
    %v5781 = vadd.f32 %v5492, %v5780
    %v5782 = vpop.f32.mrf.mxu0
    %5783 = vmatprep.mubr.bf16.mxu0 %v4489
    %5784 = vmatmul.mubr.bf16.gmra.mxu0 %v4488
    %v5785 = vpop.f32.mrf.mxu0
    %v5786 = vadd.f32 %v5497, %v5785
    %v5787 = vpop.f32.mrf.mxu0
    %v5788 = vpop.f32.mrf.mxu0
    %v5789 = vadd.f32 %v5500, %v5788
    %v5790 = vpop.f32.mrf.mxu0
    %5791 = vmatprep.mubr.bf16.mxu0 %v4492
    %5792 = vmatmul.mubr.bf16.gmra.mxu0 %v4491
    %v5793 = vpop.f32.mrf.mxu0
    %v5794 = vadd.f32 %v5505, %v5793
    %v5795 = vpop.f32.mrf.mxu0
    %v5796 = vpop.f32.mrf.mxu0
    %v5797 = vadd.f32 %v5508, %v5796
    %v5798 = vpop.f32.mrf.mxu0
    %5799 = vmatprep.mubr.bf16.mxu0 %v4495
    %5800 = vmatmul.mubr.bf16.gmra.mxu0 %v4494
    %v5801 = vpop.f32.mrf.mxu0
    %v5802 = vadd.f32 %v5513, %v5801
    %v5803 = vpop.f32.mrf.mxu0
    %v5804 = vpop.f32.mrf.mxu0
    %v5805 = vadd.f32 %v5516, %v5804
    %v5806 = vpop.f32.mrf.mxu0
    %5807 = vmatprep.mubr.bf16.mxu0 %v4498
    %5808 = vmatmul.mubr.bf16.gmra.mxu0 %v4497
    %v5809 = vpop.f32.mrf.mxu0
    %v5810 = vadd.f32 %v5521, %v5809
    %v5811 = vpop.f32.mrf.mxu0
    %v5812 = vpop.f32.mrf.mxu0
    %v5813 = vadd.f32 %v5524, %v5812
    %v5814 = vpop.f32.mrf.mxu0
    %5815 = vmatprep.mubr.bf16.mxu0 %v4501
    %5816 = vmatmul.mubr.bf16.gmra.mxu0 %v4500
    %v5817 = vpop.f32.mrf.mxu0
    %v5818 = vadd.f32 %v5529, %v5817
    %v5819 = vpop.f32.mrf.mxu0
    %v5820 = vpop.f32.mrf.mxu0
    %v5821 = vadd.f32 %v5532, %v5820
    %v5822 = vpop.f32.mrf.mxu0
    %5823 = vmatprep.mubr.bf16.mxu0 %v4504
    %5824 = vmatmul.mubr.bf16.gmra.mxu0 %v4503
    %v5825 = vpop.f32.mrf.mxu0
    %v5826 = vadd.f32 %v5537, %v5825
    %v5827 = vpop.f32.mrf.mxu0
    %v5828 = vpop.f32.mrf.mxu0
    %v5829 = vadd.f32 %v5540, %v5828
    %v5830 = vpop.f32.mrf.mxu0
    %5831 = vmatprep.mubr.bf16.mxu0 %v4507
    %5832 = vmatmul.mubr.bf16.gmra.mxu0 %v4506
    %v5833 = vpop.f32.mrf.mxu0
    %v5834 = vadd.f32 %v5545, %v5833
    %v5835 = vpop.f32.mrf.mxu0
    %v5836 = vpop.f32.mrf.mxu0
    %v5837 = vadd.f32 %v5548, %v5836
    %v5838 = vpop.f32.mrf.mxu0
    %5839 = vmatprep.mubr.bf16.mxu0 %v4510
    %5840 = vmatmul.mubr.bf16.gmra.mxu0 %v4509
    %v5841 = vpop.f32.mrf.mxu0
    %v5842 = vadd.f32 %v5553, %v5841
    %v5843 = vpop.f32.mrf.mxu0
    %v5844 = vpop.f32.mrf.mxu0
    %v5845 = vadd.f32 %v5556, %v5844
    %v5846 = vpop.f32.mrf.mxu0
    %5847 = vmatprep.mubr.bf16.mxu0 %v4513
    %5848 = vmatmul.mubr.bf16.gmra.mxu0 %v4512
    %v5849 = vpop.f32.mrf.mxu0
    %v5850 = vadd.f32 %v5561, %v5849
    %v5851 = vpop.f32.mrf.mxu0
    %v5852 = vpop.f32.mrf.mxu0
    %v5853 = vadd.f32 %v5564, %v5852
    %v5854 = vpop.f32.mrf.mxu0
    %5855 = vmatprep.mubr.bf16.mxu0 %v4516
    %5856 = vmatmul.mubr.bf16.gmra.mxu0 %v4515
    %v5857 = vpop.f32.mrf.mxu0
    %v5858 = vadd.f32 %v5569, %v5857
    %v5859 = vpop.f32.mrf.mxu0
    %v5860 = vpop.f32.mrf.mxu0
    %v5861 = vadd.f32 %v5572, %v5860
    %v5862 = vpop.f32.mrf.mxu0
    %5863 = vmatprep.mubr.bf16.mxu0 %v4519
    %5864 = vmatmul.mubr.bf16.gmra.mxu0 %v4518
    %v5865 = vpop.f32.mrf.mxu0
    %v5866 = vadd.f32 %v5577, %v5865
    %v5867 = vpop.f32.mrf.mxu0
    %v5868 = vpop.f32.mrf.mxu0
    %v5869 = vadd.f32 %v5580, %v5868
    %v5870 = vpop.f32.mrf.mxu0
    %5871 = vmatprep.mubr.bf16.mxu0 %v4522
    %5872 = vmatmul.mubr.bf16.gmra.mxu0 %v4521
    %v5873 = vpop.f32.mrf.mxu0
    %v5874 = vadd.f32 %v5585, %v5873
    %v5875 = vpop.f32.mrf.mxu0
    %v5876 = vpop.f32.mrf.mxu0
    %v5877 = vadd.f32 %v5588, %v5876
    %v5878 = vpop.f32.mrf.mxu0
    %5879 = vmatprep.mubr.bf16.mxu0 %v4525
    %5880 = vmatmul.mubr.bf16.gmra.mxu0 %v4524
    %v5881 = vpop.f32.mrf.mxu0
    %v5882 = vadd.f32 %v5593, %v5881
    %v5883 = vpop.f32.mrf.mxu0
    %v5884 = vpop.f32.mrf.mxu0
    %v5885 = vadd.f32 %v5596, %v5884
    %v5886 = vpop.f32.mrf.mxu0
    %5887 = vmatprep.mubr.bf16.mxu0 %v4528
    %5888 = vmatmul.mubr.bf16.gmra.mxu0 %v4527
    %v5889 = vpop.f32.mrf.mxu0
    %v5890 = vadd.f32 %v5601, %v5889
    %v5891 = vpop.f32.mrf.mxu0
    %v5892 = vpop.f32.mrf.mxu0
    %v5893 = vadd.f32 %v5604, %v5892
    %v5894 = vpop.f32.mrf.mxu0
    %5895 = vmatprep.mubr.bf16.mxu0 %v4531
    %5896 = vmatmul.mubr.bf16.gmra.mxu0 %v4530
    %v5897 = vpop.f32.mrf.mxu0
    %v5898 = vadd.f32 %v5609, %v5897
    %v5899 = vpop.f32.mrf.mxu0
    %v5900 = vpop.f32.mrf.mxu0
    %v5901 = vadd.f32 %v5612, %v5900
    %v5902 = vpop.f32.mrf.mxu0
    %5903 = vmatprep.mubr.bf16.mxu0 %v4540
    %5904 = vmatmul.mubr.bf16.gmra.mxu0 %v4539
    %v5905 = vpop.f32.mrf.mxu0
    %v5906 = vadd.f32 %v5617, %v5905
    %v5907 = vpop.f32.mrf.mxu0
    %v5908 = vpop.f32.mrf.mxu0
    %v5909 = vadd.f32 %v5620, %v5908
    %v5910 = vpop.f32.mrf.mxu0
    %5911 = vmatprep.mubr.bf16.mxu0 %v4543
    %5912 = vmatmul.mubr.bf16.gmra.mxu0 %v4542
    %v5913 = vpop.f32.mrf.mxu0
    %v5914 = vadd.f32 %v5625, %v5913
    %v5915 = vpop.f32.mrf.mxu0
    %v5916 = vpop.f32.mrf.mxu0
    %v5917 = vadd.f32 %v5628, %v5916
    %v5918 = vpop.f32.mrf.mxu0
    %5919 = vmatprep.mubr.bf16.mxu0 %v4546
    %5920 = vmatmul.mubr.bf16.gmra.mxu0 %v4545
    %v5921 = vpop.f32.mrf.mxu0
    %v5922 = vadd.f32 %v5633, %v5921
    %v5923 = vpop.f32.mrf.mxu0
    %v5924 = vpop.f32.mrf.mxu0
    %v5925 = vadd.f32 %v5636, %v5924
    %v5926 = vpop.f32.mrf.mxu0
    %5927 = vmatprep.mubr.bf16.mxu0 %v4549
    %5928 = vmatmul.mubr.bf16.gmra.mxu0 %v4548
    %v5929 = vpop.f32.mrf.mxu0
    %v5930 = vadd.f32 %v5641, %v5929
    %v5931 = vpop.f32.mrf.mxu0
    %v5932 = vpop.f32.mrf.mxu0
    %v5933 = vadd.f32 %v5644, %v5932
    %v5934 = vpop.f32.mrf.mxu0
    %5935 = vmatprep.mubr.bf16.mxu0 %v4552
    %5936 = vmatmul.mubr.bf16.gmra.mxu0 %v4551
    %v5937 = vpop.f32.mrf.mxu0
    %v5938 = vadd.f32 %v5649, %v5937
    %v5939 = vpop.f32.mrf.mxu0
    %v5940 = vpop.f32.mrf.mxu0
    %v5941 = vadd.f32 %v5652, %v5940
    %v5942 = vpop.f32.mrf.mxu0
    %5943 = vmatprep.mubr.bf16.mxu0 %v4555
    %5944 = vmatmul.mubr.bf16.gmra.mxu0 %v4554
    %v5945 = vpop.f32.mrf.mxu0
    %v5946 = vadd.f32 %v5657, %v5945
    %v5947 = vpop.f32.mrf.mxu0
    %v5948 = vpop.f32.mrf.mxu0
    %v5949 = vadd.f32 %v5660, %v5948
    %v5950 = vpop.f32.mrf.mxu0
    %5951 = vmatprep.mubr.bf16.mxu0 %v4558
    %5952 = vmatmul.mubr.bf16.gmra.mxu0 %v4557
    %v5953 = vpop.f32.mrf.mxu0
    %v5954 = vadd.f32 %v5665, %v5953
    %v5955 = vpop.f32.mrf.mxu0
    %v5956 = vpop.f32.mrf.mxu0
    %v5957 = vadd.f32 %v5668, %v5956
    %v5958 = vpop.f32.mrf.mxu0
    %5959 = vmatprep.mubr.bf16.mxu0 %v4561
    %5960 = vmatmul.mubr.bf16.gmra.mxu0 %v4560
    %v5961 = vpop.f32.mrf.mxu0
    %v5962 = vadd.f32 %v5673, %v5961
    %v5963 = vpop.f32.mrf.mxu0
    %v5964 = vpop.f32.mrf.mxu0
    %v5965 = vadd.f32 %v5676, %v5964
    %v5966 = vpop.f32.mrf.mxu0
    %5967 = vmatprep.mubr.bf16.mxu0 %v4564
    %5968 = vmatmul.mubr.bf16.gmra.mxu0 %v4563
    %v5969 = vpop.f32.mrf.mxu0
    %v5970 = vadd.f32 %v5681, %v5969
    %v5971 = vpop.f32.mrf.mxu0
    %v5972 = vpop.f32.mrf.mxu0
    %v5973 = vadd.f32 %v5684, %v5972
    %v5974 = vpop.f32.mrf.mxu0
    %5975 = vmatprep.mubr.bf16.mxu0 %v4567
    %5976 = vmatmul.mubr.bf16.gmra.mxu0 %v4566
    %v5977 = vpop.f32.mrf.mxu0
    %v5978 = vadd.f32 %v5689, %v5977
    %v5979 = vpop.f32.mrf.mxu0
    %v5980 = vpop.f32.mrf.mxu0
    %v5981 = vadd.f32 %v5692, %v5980
    %v5982 = vpop.f32.mrf.mxu0
    %5983 = vmatprep.mubr.bf16.mxu0 %v4570
    %5984 = vmatmul.mubr.bf16.gmra.mxu0 %v4569
    %v5985 = vpop.f32.mrf.mxu0
    %v5986 = vadd.f32 %v5697, %v5985
    %v5987 = vpop.f32.mrf.mxu0
    %v5988 = vpop.f32.mrf.mxu0
    %v5989 = vadd.f32 %v5700, %v5988
    %v5990 = vpop.f32.mrf.mxu0
    %5991 = vmatprep.mubr.bf16.mxu0 %v4573
    %5992 = vmatmul.mubr.bf16.gmra.mxu0 %v4572
    %v5993 = vpop.f32.mrf.mxu0
    %v5994 = vadd.f32 %v5705, %v5993
    %v5995 = vpop.f32.mrf.mxu0
    %v5996 = vpop.f32.mrf.mxu0
    %v5997 = vadd.f32 %v5708, %v5996
    %v5998 = vpop.f32.mrf.mxu0
    %5999 = vmatprep.mubr.bf16.mxu0 %v4576
    %6000 = vmatmul.mubr.bf16.gmra.mxu0 %v4575
    %v6001 = vpop.f32.mrf.mxu0
    %v6002 = vadd.f32 %v5713, %v6001
    %v6003 = vpop.f32.mrf.mxu0
    %v6004 = vpop.f32.mrf.mxu0
    %v6005 = vadd.f32 %v5716, %v6004
    %v6006 = vpop.f32.mrf.mxu0
    %6007 = vmatprep.mubr.bf16.mxu0 %v4579
    %6008 = vmatmul.mubr.bf16.gmra.mxu0 %v4578
    %v6009 = vpop.f32.mrf.mxu0
    %v6010 = vadd.f32 %v5721, %v6009
    %v6011 = vpop.f32.mrf.mxu0
    %v6012 = vpop.f32.mrf.mxu0
    %v6013 = vadd.f32 %v5724, %v6012
    %v6014 = vpop.f32.mrf.mxu0
    %6015 = vmatprep.mubr.bf16.mxu0 %v4582
    %6016 = vmatmul.mubr.bf16.gmra.mxu0 %v4581
    %v6017 = vpop.f32.mrf.mxu0
    %v6018 = vadd.f32 %v5729, %v6017
    %v6019 = vpop.f32.mrf.mxu0
    %v6020 = vpop.f32.mrf.mxu0
    %v6021 = vadd.f32 %v5732, %v6020
    %v6022 = vpop.f32.mrf.mxu0
    %6023 = vmatprep.mubr.bf16.mxu0 %v4585
    %6024 = vmatmul.mubr.bf16.gmra.mxu0 %v4584
    %v6025 = vpop.f32.mrf.mxu0
    %v6026 = vadd.f32 %v5737, %v6025
    %v6027 = vpop.f32.mrf.mxu0
    %v6028 = vpop.f32.mrf.mxu0
    %v6029 = vadd.f32 %v5740, %v6028
    %v6030 = vpop.f32.mrf.mxu0
    %6031 = vdwg.mxu0
    %6032 = vmatprep.subr.bf16.mxu0 0
    %6033 = vmatpush1.bf16.msra.mxu0 %v5076
    %6034 = vmatprep.subr.bf16.mxu0 0
    %6035 = vmatpush1.bf16.msra.mxu0 %v5075
    %6036 = vmatprep.subr.bf16.mxu0 0
    %6037 = vmatpush1.bf16.msra.mxu0 %v5074
    %6038 = vmatprep.subr.bf16.mxu0 0
    %6039 = vmatpush1.bf16.msra.mxu0 %v5073
    %6040 = vmatprep.subr.bf16.mxu0 0
    %6041 = vmatpush1.bf16.msra.mxu0 %v5072
    %6042 = vmatprep.subr.bf16.mxu0 0
    %6043 = vmatpush1.bf16.msra.mxu0 %v5071
    %6044 = vmatprep.subr.bf16.mxu0 0
    %6045 = vmatpush1.bf16.msra.mxu0 %v5070
    %6046 = vmatprep.subr.bf16.mxu0 0
    %6047 = vmatpush1.bf16.msra.mxu0 %v5069
    %6048 = vmatprep.subr.bf16.mxu0 0
    %6049 = vmatpush2.bf16.msra.mxu0 %v5084
    %6050 = vmatprep.subr.bf16.mxu0 0
    %6051 = vmatpush2.bf16.msra.mxu0 %v5083
    %6052 = vmatprep.subr.bf16.mxu0 0
    %6053 = vmatpush2.bf16.msra.mxu0 %v5082
    %6054 = vmatprep.subr.bf16.mxu0 0
    %6055 = vmatpush2.bf16.msra.mxu0 %v5081
    %6056 = vmatprep.subr.bf16.mxu0 0
    %6057 = vmatpush2.bf16.msra.mxu0 %v5080
    %6058 = vmatprep.subr.bf16.mxu0 0
    %6059 = vmatpush2.bf16.msra.mxu0 %v5079
    %6060 = vmatprep.subr.bf16.mxu0 0
    %6061 = vmatpush2.bf16.msra.mxu0 %v5078
    %6062 = vmatprep.subr.bf16.mxu0 0
    %6063 = vmatpush2.bf16.msra.mxu0 %v5077
    %6064 = vmatprep.mubr.bf16.mxu0 %v4488
    %6065 = vmatmul.mubr.bf16.gmra.mxu0 %v4487
    %v6066 = vpop.f32.mrf.mxu0
    %v6067 = vadd.f32 %v5778, %v6066
    %v6068 = vpop.f32.mrf.mxu0
    %v6069 = vpop.f32.mrf.mxu0
    %v6070 = vadd.f32 %v5781, %v6069
    %v6071 = vpop.f32.mrf.mxu0
    %6072 = vmatprep.mubr.bf16.mxu0 %v4491
    %6073 = vmatmul.mubr.bf16.gmra.mxu0 %v4490
    %v6074 = vpop.f32.mrf.mxu0
    %v6075 = vadd.f32 %v5786, %v6074
    %v6076 = vpop.f32.mrf.mxu0
    %v6077 = vpop.f32.mrf.mxu0
    %v6078 = vadd.f32 %v5789, %v6077
    %v6079 = vpop.f32.mrf.mxu0
    %6080 = vmatprep.mubr.bf16.mxu0 %v4494
    %6081 = vmatmul.mubr.bf16.gmra.mxu0 %v4493
    %v6082 = vpop.f32.mrf.mxu0
    %v6083 = vadd.f32 %v5794, %v6082
    %v6084 = vpop.f32.mrf.mxu0
    %v6085 = vpop.f32.mrf.mxu0
    %v6086 = vadd.f32 %v5797, %v6085
    %v6087 = vpop.f32.mrf.mxu0
    %6088 = vmatprep.mubr.bf16.mxu0 %v4497
    %6089 = vmatmul.mubr.bf16.gmra.mxu0 %v4496
    %v6090 = vpop.f32.mrf.mxu0
    %v6091 = vadd.f32 %v5802, %v6090
    %v6092 = vpop.f32.mrf.mxu0
    %v6093 = vpop.f32.mrf.mxu0
    %v6094 = vadd.f32 %v5805, %v6093
    %v6095 = vpop.f32.mrf.mxu0
    %6096 = vmatprep.mubr.bf16.mxu0 %v4500
    %6097 = vmatmul.mubr.bf16.gmra.mxu0 %v4499
    %v6098 = vpop.f32.mrf.mxu0
    %v6099 = vadd.f32 %v5810, %v6098
    %v6100 = vpop.f32.mrf.mxu0
    %v6101 = vpop.f32.mrf.mxu0
    %v6102 = vadd.f32 %v5813, %v6101
    %v6103 = vpop.f32.mrf.mxu0
    %6104 = vmatprep.mubr.bf16.mxu0 %v4503
    %6105 = vmatmul.mubr.bf16.gmra.mxu0 %v4502
    %v6106 = vpop.f32.mrf.mxu0
    %v6107 = vadd.f32 %v5818, %v6106
    %v6108 = vpop.f32.mrf.mxu0
    %v6109 = vpop.f32.mrf.mxu0
    %v6110 = vadd.f32 %v5821, %v6109
    %v6111 = vpop.f32.mrf.mxu0
    %6112 = vmatprep.mubr.bf16.mxu0 %v4506
    %6113 = vmatmul.mubr.bf16.gmra.mxu0 %v4505
    %v6114 = vpop.f32.mrf.mxu0
    %v6115 = vadd.f32 %v5826, %v6114
    %v6116 = vpop.f32.mrf.mxu0
    %v6117 = vpop.f32.mrf.mxu0
    %v6118 = vadd.f32 %v5829, %v6117
    %v6119 = vpop.f32.mrf.mxu0
    %6120 = vmatprep.mubr.bf16.mxu0 %v4509
    %6121 = vmatmul.mubr.bf16.gmra.mxu0 %v4508
    %v6122 = vpop.f32.mrf.mxu0
    %v6123 = vadd.f32 %v5834, %v6122
    %v6124 = vpop.f32.mrf.mxu0
    %v6125 = vpop.f32.mrf.mxu0
    %v6126 = vadd.f32 %v5837, %v6125
    %v6127 = vpop.f32.mrf.mxu0
    %6128 = vmatprep.mubr.bf16.mxu0 %v4512
    %6129 = vmatmul.mubr.bf16.gmra.mxu0 %v4511
    %v6130 = vpop.f32.mrf.mxu0
    %v6131 = vadd.f32 %v5842, %v6130
    %v6132 = vpop.f32.mrf.mxu0
    %v6133 = vpop.f32.mrf.mxu0
    %v6134 = vadd.f32 %v5845, %v6133
    %v6135 = vpop.f32.mrf.mxu0
    %6136 = vmatprep.mubr.bf16.mxu0 %v4515
    %6137 = vmatmul.mubr.bf16.gmra.mxu0 %v4514
    %v6138 = vpop.f32.mrf.mxu0
    %v6139 = vadd.f32 %v5850, %v6138
    %v6140 = vpop.f32.mrf.mxu0
    %v6141 = vpop.f32.mrf.mxu0
    %v6142 = vadd.f32 %v5853, %v6141
    %v6143 = vpop.f32.mrf.mxu0
    %6144 = vmatprep.mubr.bf16.mxu0 %v4518
    %6145 = vmatmul.mubr.bf16.gmra.mxu0 %v4517
    %v6146 = vpop.f32.mrf.mxu0
    %v6147 = vadd.f32 %v5858, %v6146
    %v6148 = vpop.f32.mrf.mxu0
    %v6149 = vpop.f32.mrf.mxu0
    %v6150 = vadd.f32 %v5861, %v6149
    %v6151 = vpop.f32.mrf.mxu0
    %6152 = vmatprep.mubr.bf16.mxu0 %v4521
    %6153 = vmatmul.mubr.bf16.gmra.mxu0 %v4520
    %v6154 = vpop.f32.mrf.mxu0
    %v6155 = vadd.f32 %v5866, %v6154
    %v6156 = vpop.f32.mrf.mxu0
    %v6157 = vpop.f32.mrf.mxu0
    %v6158 = vadd.f32 %v5869, %v6157
    %v6159 = vpop.f32.mrf.mxu0
    %6160 = vmatprep.mubr.bf16.mxu0 %v4524
    %6161 = vmatmul.mubr.bf16.gmra.mxu0 %v4523
    %v6162 = vpop.f32.mrf.mxu0
    %v6163 = vadd.f32 %v5874, %v6162
    %v6164 = vpop.f32.mrf.mxu0
    %v6165 = vpop.f32.mrf.mxu0
    %v6166 = vadd.f32 %v5877, %v6165
    %v6167 = vpop.f32.mrf.mxu0
    %6168 = vmatprep.mubr.bf16.mxu0 %v4527
    %6169 = vmatmul.mubr.bf16.gmra.mxu0 %v4526
    %v6170 = vpop.f32.mrf.mxu0
    %v6171 = vadd.f32 %v5882, %v6170
    %v6172 = vpop.f32.mrf.mxu0
    %v6173 = vpop.f32.mrf.mxu0
    %v6174 = vadd.f32 %v5885, %v6173
    %v6175 = vpop.f32.mrf.mxu0
    %6176 = vmatprep.mubr.bf16.mxu0 %v4530
    %6177 = vmatmul.mubr.bf16.gmra.mxu0 %v4529
    %v6178 = vpop.f32.mrf.mxu0
    %v6179 = vadd.f32 %v5890, %v6178
    %v6180 = vpop.f32.mrf.mxu0
    %v6181 = vpop.f32.mrf.mxu0
    %v6182 = vadd.f32 %v5893, %v6181
    %v6183 = vpop.f32.mrf.mxu0
    %6184 = vmatprep.mubr.bf16.mxu0 %v4533
    %6185 = vmatmul.mubr.bf16.gmra.mxu0 %v4532
    %v6186 = vpop.f32.mrf.mxu0
    %v6187 = vadd.f32 %v5898, %v6186
    %v6188 = vpop.f32.mrf.mxu0
    %v6189 = vpop.f32.mrf.mxu0
    %v6190 = vadd.f32 %v5901, %v6189
    %v6191 = vpop.f32.mrf.mxu0
    %6192 = vmatprep.mubr.bf16.mxu0 %v4542
    %6193 = vmatmul.mubr.bf16.gmra.mxu0 %v4541
    %v6194 = vpop.f32.mrf.mxu0
    %v6195 = vadd.f32 %v5906, %v6194
    %v6196 = vpop.f32.mrf.mxu0
    %v6197 = vpop.f32.mrf.mxu0
    %v6198 = vadd.f32 %v5909, %v6197
    %v6199 = vpop.f32.mrf.mxu0
    %6200 = vmatprep.mubr.bf16.mxu0 %v4545
    %6201 = vmatmul.mubr.bf16.gmra.mxu0 %v4544
    %v6202 = vpop.f32.mrf.mxu0
    %v6203 = vadd.f32 %v5914, %v6202
    %v6204 = vpop.f32.mrf.mxu0
    %v6205 = vpop.f32.mrf.mxu0
    %v6206 = vadd.f32 %v5917, %v6205
    %v6207 = vpop.f32.mrf.mxu0
    %6208 = vmatprep.mubr.bf16.mxu0 %v4548
    %6209 = vmatmul.mubr.bf16.gmra.mxu0 %v4547
    %v6210 = vpop.f32.mrf.mxu0
    %v6211 = vadd.f32 %v5922, %v6210
    %v6212 = vpop.f32.mrf.mxu0
    %v6213 = vpop.f32.mrf.mxu0
    %v6214 = vadd.f32 %v5925, %v6213
    %v6215 = vpop.f32.mrf.mxu0
    %6216 = vmatprep.mubr.bf16.mxu0 %v4551
    %6217 = vmatmul.mubr.bf16.gmra.mxu0 %v4550
    %v6218 = vpop.f32.mrf.mxu0
    %v6219 = vadd.f32 %v5930, %v6218
    %v6220 = vpop.f32.mrf.mxu0
    %v6221 = vpop.f32.mrf.mxu0
    %v6222 = vadd.f32 %v5933, %v6221
    %v6223 = vpop.f32.mrf.mxu0
    %6224 = vmatprep.mubr.bf16.mxu0 %v4554
    %6225 = vmatmul.mubr.bf16.gmra.mxu0 %v4553
    %v6226 = vpop.f32.mrf.mxu0
    %v6227 = vadd.f32 %v5938, %v6226
    %v6228 = vpop.f32.mrf.mxu0
    %v6229 = vpop.f32.mrf.mxu0
    %v6230 = vadd.f32 %v5941, %v6229
    %v6231 = vpop.f32.mrf.mxu0
    %6232 = vmatprep.mubr.bf16.mxu0 %v4557
    %6233 = vmatmul.mubr.bf16.gmra.mxu0 %v4556
    %v6234 = vpop.f32.mrf.mxu0
    %v6235 = vadd.f32 %v5946, %v6234
    %v6236 = vpop.f32.mrf.mxu0
    %v6237 = vpop.f32.mrf.mxu0
    %v6238 = vadd.f32 %v5949, %v6237
    %v6239 = vpop.f32.mrf.mxu0
    %6240 = vmatprep.mubr.bf16.mxu0 %v4560
    %6241 = vmatmul.mubr.bf16.gmra.mxu0 %v4559
    %v6242 = vpop.f32.mrf.mxu0
    %v6243 = vadd.f32 %v5954, %v6242
    %v6244 = vpop.f32.mrf.mxu0
    %v6245 = vpop.f32.mrf.mxu0
    %v6246 = vadd.f32 %v5957, %v6245
    %v6247 = vpop.f32.mrf.mxu0
    %6248 = vmatprep.mubr.bf16.mxu0 %v4563
    %6249 = vmatmul.mubr.bf16.gmra.mxu0 %v4562
    %v6250 = vpop.f32.mrf.mxu0
    %v6251 = vadd.f32 %v5962, %v6250
    %v6252 = vpop.f32.mrf.mxu0
    %v6253 = vpop.f32.mrf.mxu0
    %v6254 = vadd.f32 %v5965, %v6253
    %v6255 = vpop.f32.mrf.mxu0
    %6256 = vmatprep.mubr.bf16.mxu0 %v4566
    %6257 = vmatmul.mubr.bf16.gmra.mxu0 %v4565
    %v6258 = vpop.f32.mrf.mxu0
    %v6259 = vadd.f32 %v5970, %v6258
    %v6260 = vpop.f32.mrf.mxu0
    %v6261 = vpop.f32.mrf.mxu0
    %v6262 = vadd.f32 %v5973, %v6261
    %v6263 = vpop.f32.mrf.mxu0
    %6264 = vmatprep.mubr.bf16.mxu0 %v4569
    %6265 = vmatmul.mubr.bf16.gmra.mxu0 %v4568
    %v6266 = vpop.f32.mrf.mxu0
    %v6267 = vadd.f32 %v5978, %v6266
    %v6268 = vpop.f32.mrf.mxu0
    %v6269 = vpop.f32.mrf.mxu0
    %v6270 = vadd.f32 %v5981, %v6269
    %v6271 = vpop.f32.mrf.mxu0
    %6272 = vmatprep.mubr.bf16.mxu0 %v4572
    %6273 = vmatmul.mubr.bf16.gmra.mxu0 %v4571
    %v6274 = vpop.f32.mrf.mxu0
    %v6275 = vadd.f32 %v5986, %v6274
    %v6276 = vpop.f32.mrf.mxu0
    %v6277 = vpop.f32.mrf.mxu0
    %v6278 = vadd.f32 %v5989, %v6277
    %v6279 = vpop.f32.mrf.mxu0
    %6280 = vmatprep.mubr.bf16.mxu0 %v4575
    %6281 = vmatmul.mubr.bf16.gmra.mxu0 %v4574
    %v6282 = vpop.f32.mrf.mxu0
    %v6283 = vadd.f32 %v5994, %v6282
    %v6284 = vpop.f32.mrf.mxu0
    %v6285 = vpop.f32.mrf.mxu0
    %v6286 = vadd.f32 %v5997, %v6285
    %v6287 = vpop.f32.mrf.mxu0
    %6288 = vmatprep.mubr.bf16.mxu0 %v4578
    %6289 = vmatmul.mubr.bf16.gmra.mxu0 %v4577
    %v6290 = vpop.f32.mrf.mxu0
    %v6291 = vadd.f32 %v6002, %v6290
    %v6292 = vpop.f32.mrf.mxu0
    %v6293 = vpop.f32.mrf.mxu0
    %v6294 = vadd.f32 %v6005, %v6293
    %v6295 = vpop.f32.mrf.mxu0
    %6296 = vmatprep.mubr.bf16.mxu0 %v4581
    %6297 = vmatmul.mubr.bf16.gmra.mxu0 %v4580
    %v6298 = vpop.f32.mrf.mxu0
    %v6299 = vadd.f32 %v6010, %v6298
    %v6300 = vpop.f32.mrf.mxu0
    %v6301 = vpop.f32.mrf.mxu0
    %v6302 = vadd.f32 %v6013, %v6301
    %v6303 = vpop.f32.mrf.mxu0
    %6304 = vmatprep.mubr.bf16.mxu0 %v4584
    %6305 = vmatmul.mubr.bf16.gmra.mxu0 %v4583
    %v6306 = vpop.f32.mrf.mxu0
    %v6307 = vadd.f32 %v6018, %v6306
    %v6308 = vpop.f32.mrf.mxu0
    %v6309 = vpop.f32.mrf.mxu0
    %v6310 = vadd.f32 %v6021, %v6309
    %v6311 = vpop.f32.mrf.mxu0
    %6312 = vmatprep.mubr.bf16.mxu0 %v4587
    %6313 = vmatmul.mubr.bf16.gmra.mxu0 %v4586
    %v6314 = vpop.f32.mrf.mxu0
    %v6315 = vadd.f32 %v6026, %v6314
    %v6316 = vpop.f32.mrf.mxu0
    %v6317 = vpop.f32.mrf.mxu0
    %v6318 = vadd.f32 %v6029, %v6317
    %v6319 = vpop.f32.mrf.mxu0
    %6320 = vdwg.mxu0
    %6321 = vmatprep.subr.bf16.mxu0 0
    %6322 = vmatpush1.bf16.msra.mxu0 %v5092
    %6323 = vmatprep.subr.bf16.mxu0 0
    %6324 = vmatpush1.bf16.msra.mxu0 %v5091
    %6325 = vmatprep.subr.bf16.mxu0 0
    %6326 = vmatpush1.bf16.msra.mxu0 %v5090
    %6327 = vmatprep.subr.bf16.mxu0 0
    %6328 = vmatpush1.bf16.msra.mxu0 %v5089
    %6329 = vmatprep.subr.bf16.mxu0 0
    %6330 = vmatpush1.bf16.msra.mxu0 %v5088
    %6331 = vmatprep.subr.bf16.mxu0 0
    %6332 = vmatpush1.bf16.msra.mxu0 %v5087
    %6333 = vmatprep.subr.bf16.mxu0 0
    %6334 = vmatpush1.bf16.msra.mxu0 %v5086
    %6335 = vmatprep.subr.bf16.mxu0 0
    %6336 = vmatpush1.bf16.msra.mxu0 %v5085
    %6337 = vmatprep.subr.bf16.mxu0 0
    %6338 = vmatpush2.bf16.msra.mxu0 0
    %6339 = vmatprep.subr.bf16.mxu0 0
    %6340 = vmatpush2.bf16.msra.mxu0 0
    %6341 = vmatprep.subr.bf16.mxu0 0
    %6342 = vmatpush2.bf16.msra.mxu0 0
    %6343 = vmatprep.subr.bf16.mxu0 0
    %6344 = vmatpush2.bf16.msra.mxu0 0
    %6345 = vmatprep.subr.bf16.mxu0 0
    %6346 = vmatpush2.bf16.msra.mxu0 0
    %6347 = vmatprep.subr.bf16.mxu0 0
    %6348 = vmatpush2.bf16.msra.mxu0 0
    %6349 = vmatprep.subr.bf16.mxu0 0
    %6350 = vmatpush2.bf16.msra.mxu0 0
    %6351 = vmatprep.subr.bf16.mxu0 0
    %6352 = vmatpush2.bf16.msra.mxu0 0
    %6353 = vmatprep.mubr.bf16.mxu0 0
    %6354 = vmatmul.mubr.bf16.gmra.mxu0 %v4489
    %v6355 = vpop.f32.mrf.mxu0
    %v6356 = vadd.f32 %v6067, %v6355
    %v6357 = vpop.f32.mrf.mxu0
    %v6358 = vpop.f32.mrf.mxu0
    %v6359 = vadd.f32 %v6070, %v6358
    %v6360 = vpop.f32.mrf.mxu0
    %6361 = vmatprep.mubr.bf16.mxu0 0
    %6362 = vmatmul.mubr.bf16.gmra.mxu0 %v4492
    %v6363 = vpop.f32.mrf.mxu0
    %v6364 = vadd.f32 %v6075, %v6363
    %v6365 = vpop.f32.mrf.mxu0
    %v6366 = vpop.f32.mrf.mxu0
    %v6367 = vadd.f32 %v6078, %v6366
    %v6368 = vpop.f32.mrf.mxu0
    %6369 = vmatprep.mubr.bf16.mxu0 0
    %6370 = vmatmul.mubr.bf16.gmra.mxu0 %v4495
    %v6371 = vpop.f32.mrf.mxu0
    %v6372 = vadd.f32 %v6083, %v6371
    %v6373 = vpop.f32.mrf.mxu0
    %v6374 = vpop.f32.mrf.mxu0
    %v6375 = vadd.f32 %v6086, %v6374
    %v6376 = vpop.f32.mrf.mxu0
    %6377 = vmatprep.mubr.bf16.mxu0 0
    %6378 = vmatmul.mubr.bf16.gmra.mxu0 %v4498
    %v6379 = vpop.f32.mrf.mxu0
    %v6380 = vadd.f32 %v6091, %v6379
    %v6381 = vpop.f32.mrf.mxu0
    %v6382 = vpop.f32.mrf.mxu0
    %v6383 = vadd.f32 %v6094, %v6382
    %v6384 = vpop.f32.mrf.mxu0
    %6385 = vmatprep.mubr.bf16.mxu0 0
    %6386 = vmatmul.mubr.bf16.gmra.mxu0 %v4501
    %v6387 = vpop.f32.mrf.mxu0
    %v6388 = vadd.f32 %v6099, %v6387
    %v6389 = vpop.f32.mrf.mxu0
    %v6390 = vpop.f32.mrf.mxu0
    %v6391 = vadd.f32 %v6102, %v6390
    %v6392 = vpop.f32.mrf.mxu0
    %6393 = vmatprep.mubr.bf16.mxu0 0
    %6394 = vmatmul.mubr.bf16.gmra.mxu0 %v4504
    %v6395 = vpop.f32.mrf.mxu0
    %v6396 = vadd.f32 %v6107, %v6395
    %v6397 = vpop.f32.mrf.mxu0
    %v6398 = vpop.f32.mrf.mxu0
    %v6399 = vadd.f32 %v6110, %v6398
    %v6400 = vpop.f32.mrf.mxu0
    %6401 = vmatprep.mubr.bf16.mxu0 0
    %6402 = vmatmul.mubr.bf16.gmra.mxu0 %v4507
    %v6403 = vpop.f32.mrf.mxu0
    %v6404 = vadd.f32 %v6115, %v6403
    %v6405 = vpop.f32.mrf.mxu0
    %v6406 = vpop.f32.mrf.mxu0
    %v6407 = vadd.f32 %v6118, %v6406
    %v6408 = vpop.f32.mrf.mxu0
    %6409 = vmatprep.mubr.bf16.mxu0 0
    %6410 = vmatmul.mubr.bf16.gmra.mxu0 %v4510
    %v6411 = vpop.f32.mrf.mxu0
    %v6412 = vadd.f32 %v6123, %v6411
    %v6413 = vpop.f32.mrf.mxu0
    %v6414 = vpop.f32.mrf.mxu0
    %v6415 = vadd.f32 %v6126, %v6414
    %v6416 = vpop.f32.mrf.mxu0
    %6417 = vmatprep.mubr.bf16.mxu0 0
    %6418 = vmatmul.mubr.bf16.gmra.mxu0 %v4513
    %v6419 = vpop.f32.mrf.mxu0
    %v6420 = vadd.f32 %v6131, %v6419
    %v6421 = vpop.f32.mrf.mxu0
    %v6422 = vpop.f32.mrf.mxu0
    %v6423 = vadd.f32 %v6134, %v6422
    %v6424 = vpop.f32.mrf.mxu0
    %6425 = vmatprep.mubr.bf16.mxu0 0
    %6426 = vmatmul.mubr.bf16.gmra.mxu0 %v4516
    %v6427 = vpop.f32.mrf.mxu0
    %v6428 = vadd.f32 %v6139, %v6427
    %v6429 = vpop.f32.mrf.mxu0
    %v6430 = vpop.f32.mrf.mxu0
    %v6431 = vadd.f32 %v6142, %v6430
    %v6432 = vpop.f32.mrf.mxu0
    %6433 = vmatprep.mubr.bf16.mxu0 0
    %6434 = vmatmul.mubr.bf16.gmra.mxu0 %v4519
    %v6435 = vpop.f32.mrf.mxu0
    %v6436 = vadd.f32 %v6147, %v6435
    %v6437 = vpop.f32.mrf.mxu0
    %v6438 = vpop.f32.mrf.mxu0
    %v6439 = vadd.f32 %v6150, %v6438
    %v6440 = vpop.f32.mrf.mxu0
    %6441 = vmatprep.mubr.bf16.mxu0 0
    %6442 = vmatmul.mubr.bf16.gmra.mxu0 %v4522
    %v6443 = vpop.f32.mrf.mxu0
    %v6444 = vadd.f32 %v6155, %v6443
    %v6445 = vpop.f32.mrf.mxu0
    %v6446 = vpop.f32.mrf.mxu0
    %v6447 = vadd.f32 %v6158, %v6446
    %v6448 = vpop.f32.mrf.mxu0
    %6449 = vmatprep.mubr.bf16.mxu0 0
    %6450 = vmatmul.mubr.bf16.gmra.mxu0 %v4525
    %v6451 = vpop.f32.mrf.mxu0
    %v6452 = vadd.f32 %v6163, %v6451
    %v6453 = vpop.f32.mrf.mxu0
    %v6454 = vpop.f32.mrf.mxu0
    %v6455 = vadd.f32 %v6166, %v6454
    %v6456 = vpop.f32.mrf.mxu0
    %6457 = vmatprep.mubr.bf16.mxu0 0
    %6458 = vmatmul.mubr.bf16.gmra.mxu0 %v4528
    %v6459 = vpop.f32.mrf.mxu0
    %v6460 = vadd.f32 %v6171, %v6459
    %v6461 = vpop.f32.mrf.mxu0
    %v6462 = vpop.f32.mrf.mxu0
    %v6463 = vadd.f32 %v6174, %v6462
    %v6464 = vpop.f32.mrf.mxu0
    %6465 = vmatprep.mubr.bf16.mxu0 0
    %6466 = vmatmul.mubr.bf16.gmra.mxu0 %v4531
    %v6467 = vpop.f32.mrf.mxu0
    %v6468 = vadd.f32 %v6179, %v6467
    %v6469 = vpop.f32.mrf.mxu0
    %v6470 = vpop.f32.mrf.mxu0
    %v6471 = vadd.f32 %v6182, %v6470
    %v6472 = vpop.f32.mrf.mxu0
    %6473 = vmatprep.mubr.bf16.mxu0 0
    %6474 = vmatmul.mubr.bf16.gmra.mxu0 %v4534
    %v6475 = vpop.f32.mrf.mxu0
    %v6476 = vadd.f32 %v6187, %v6475
    %v6477 = vpop.f32.mrf.mxu0
    %v6478 = vpop.f32.mrf.mxu0
    %v6479 = vadd.f32 %v6190, %v6478
    %v6480 = vpop.f32.mrf.mxu0
    %6481 = vmatprep.mubr.bf16.mxu0 0
    %6482 = vmatmul.mubr.bf16.gmra.mxu0 %v4543
    %v6483 = vpop.f32.mrf.mxu0
    %v6484 = vadd.f32 %v6195, %v6483
    %v6485 = vpop.f32.mrf.mxu0
    %v6486 = vpop.f32.mrf.mxu0
    %v6487 = vadd.f32 %v6198, %v6486
    %v6488 = vpop.f32.mrf.mxu0
    %6489 = vmatprep.mubr.bf16.mxu0 0
    %6490 = vmatmul.mubr.bf16.gmra.mxu0 %v4546
    %v6491 = vpop.f32.mrf.mxu0
    %v6492 = vadd.f32 %v6203, %v6491
    %v6493 = vpop.f32.mrf.mxu0
    %v6494 = vpop.f32.mrf.mxu0
    %v6495 = vadd.f32 %v6206, %v6494
    %v6496 = vpop.f32.mrf.mxu0
    %6497 = vmatprep.mubr.bf16.mxu0 0
    %6498 = vmatmul.mubr.bf16.gmra.mxu0 %v4549
    %v6499 = vpop.f32.mrf.mxu0
    %v6500 = vadd.f32 %v6211, %v6499
    %v6501 = vpop.f32.mrf.mxu0
    %v6502 = vpop.f32.mrf.mxu0
    %v6503 = vadd.f32 %v6214, %v6502
    %v6504 = vpop.f32.mrf.mxu0
    %6505 = vmatprep.mubr.bf16.mxu0 0
    %6506 = vmatmul.mubr.bf16.gmra.mxu0 %v4552
    %v6507 = vpop.f32.mrf.mxu0
    %v6508 = vadd.f32 %v6219, %v6507
    %v6509 = vpop.f32.mrf.mxu0
    %v6510 = vpop.f32.mrf.mxu0
    %v6511 = vadd.f32 %v6222, %v6510
    %v6512 = vpop.f32.mrf.mxu0
    %6513 = vmatprep.mubr.bf16.mxu0 0
    %6514 = vmatmul.mubr.bf16.gmra.mxu0 %v4555
    %v6515 = vpop.f32.mrf.mxu0
    %v6516 = vadd.f32 %v6227, %v6515
    %v6517 = vpop.f32.mrf.mxu0
    %v6518 = vpop.f32.mrf.mxu0
    %v6519 = vadd.f32 %v6230, %v6518
    %v6520 = vpop.f32.mrf.mxu0
    %6521 = vmatprep.mubr.bf16.mxu0 0
    %6522 = vmatmul.mubr.bf16.gmra.mxu0 %v4558
    %v6523 = vpop.f32.mrf.mxu0
    %v6524 = vadd.f32 %v6235, %v6523
    %v6525 = vpop.f32.mrf.mxu0
    %v6526 = vpop.f32.mrf.mxu0
    %v6527 = vadd.f32 %v6238, %v6526
    %v6528 = vpop.f32.mrf.mxu0
    %6529 = vmatprep.mubr.bf16.mxu0 0
    %6530 = vmatmul.mubr.bf16.gmra.mxu0 %v4561
    %v6531 = vpop.f32.mrf.mxu0
    %v6532 = vadd.f32 %v6243, %v6531
    %v6533 = vpop.f32.mrf.mxu0
    %v6534 = vpop.f32.mrf.mxu0
    %v6535 = vadd.f32 %v6246, %v6534
    %v6536 = vpop.f32.mrf.mxu0
    %6537 = vmatprep.mubr.bf16.mxu0 0
    %6538 = vmatmul.mubr.bf16.gmra.mxu0 %v4564
    %v6539 = vpop.f32.mrf.mxu0
    %v6540 = vadd.f32 %v6251, %v6539
    %v6541 = vpop.f32.mrf.mxu0
    %v6542 = vpop.f32.mrf.mxu0
    %v6543 = vadd.f32 %v6254, %v6542
    %v6544 = vpop.f32.mrf.mxu0
    %6545 = vmatprep.mubr.bf16.mxu0 0
    %6546 = vmatmul.mubr.bf16.gmra.mxu0 %v4567
    %v6547 = vpop.f32.mrf.mxu0
    %v6548 = vadd.f32 %v6259, %v6547
    %v6549 = vpop.f32.mrf.mxu0
    %v6550 = vpop.f32.mrf.mxu0
    %v6551 = vadd.f32 %v6262, %v6550
    %v6552 = vpop.f32.mrf.mxu0
    %6553 = vmatprep.mubr.bf16.mxu0 0
    %6554 = vmatmul.mubr.bf16.gmra.mxu0 %v4570
    %v6555 = vpop.f32.mrf.mxu0
    %v6556 = vadd.f32 %v6267, %v6555
    %v6557 = vpop.f32.mrf.mxu0
    %v6558 = vpop.f32.mrf.mxu0
    %v6559 = vadd.f32 %v6270, %v6558
    %v6560 = vpop.f32.mrf.mxu0
    %6561 = vmatprep.mubr.bf16.mxu0 0
    %6562 = vmatmul.mubr.bf16.gmra.mxu0 %v4573
    %v6563 = vpop.f32.mrf.mxu0
    %v6564 = vadd.f32 %v6275, %v6563
    %v6565 = vpop.f32.mrf.mxu0
    %v6566 = vpop.f32.mrf.mxu0
    %v6567 = vadd.f32 %v6278, %v6566
    %v6568 = vpop.f32.mrf.mxu0
    %6569 = vmatprep.mubr.bf16.mxu0 0
    %6570 = vmatmul.mubr.bf16.gmra.mxu0 %v4576
    %v6571 = vpop.f32.mrf.mxu0
    %v6572 = vadd.f32 %v6283, %v6571
    %v6573 = vpop.f32.mrf.mxu0
    %v6574 = vpop.f32.mrf.mxu0
    %v6575 = vadd.f32 %v6286, %v6574
    %v6576 = vpop.f32.mrf.mxu0
    %6577 = vmatprep.mubr.bf16.mxu0 0
    %6578 = vmatmul.mubr.bf16.gmra.mxu0 %v4579
    %v6579 = vpop.f32.mrf.mxu0
    %v6580 = vadd.f32 %v6291, %v6579
    %v6581 = vpop.f32.mrf.mxu0
    %v6582 = vpop.f32.mrf.mxu0
    %v6583 = vadd.f32 %v6294, %v6582
    %v6584 = vpop.f32.mrf.mxu0
    %6585 = vmatprep.mubr.bf16.mxu0 0
    %6586 = vmatmul.mubr.bf16.gmra.mxu0 %v4582
    %v6587 = vpop.f32.mrf.mxu0
    %v6588 = vadd.f32 %v6299, %v6587
    %v6589 = vpop.f32.mrf.mxu0
    %v6590 = vpop.f32.mrf.mxu0
    %v6591 = vadd.f32 %v6302, %v6590
    %v6592 = vpop.f32.mrf.mxu0
    %6593 = vmatprep.mubr.bf16.mxu0 0
    %6594 = vmatmul.mubr.bf16.gmra.mxu0 %v4585
    %v6595 = vpop.f32.mrf.mxu0
    %v6596 = vadd.f32 %v6307, %v6595
    %v6597 = vpop.f32.mrf.mxu0
    %v6598 = vpop.f32.mrf.mxu0
    %v6599 = vadd.f32 %v6310, %v6598
    %v6600 = vpop.f32.mrf.mxu0
    %6601 = vmatprep.mubr.bf16.mxu0 0
    %6602 = vmatmul.mubr.bf16.gmra.mxu0 %v4588
    %v6603 = vpop.f32.mrf.mxu0
    %v6604 = vadd.f32 %v6315, %v6603
    %v6605 = vpop.f32.mrf.mxu0
    %v6606 = vpop.f32.mrf.mxu0
    %v6607 = vadd.f32 %v6318, %v6606
    %v6608 = vpop.f32.mrf.mxu0
    %6609 = vdwg.mxu0
    %v6610 = vadd.f32 %v6356, %v6359
    %v6611 = vadd.f32 %v6610, %v6364
    %v6612 = vadd.f32 %v6611, %v6367
    %v6613 = vadd.f32 %v6612, %v6372
    %v6614 = vadd.f32 %v6613, %v6375
    %v6615 = vadd.f32 %v6614, %v6380
    %v6616 = vadd.f32 %v6615, %v6383
    %v6617 = vadd.f32 %v6616, %v6388
    %v6618 = vadd.f32 %v6617, %v6391
    %v6619 = vadd.f32 %v6618, %v6396
    %v6620 = vadd.f32 %v6619, %v6399
    %v6621 = vadd.f32 %v6620, %v6404
    %v6622 = vadd.f32 %v6621, %v6407
    %v6623 = vadd.f32 %v6622, %v6412
    %v6624 = vadd.f32 %v6623, %v6415
    %v6625 = vadd.f32 %v6624, %v6420
    %v6626 = vadd.f32 %v6625, %v6423
    %v6627 = vadd.f32 %v6626, %v6428
    %v6628 = vadd.f32 %v6627, %v6431
    %v6629 = vadd.f32 %v6628, %v6436
    %v6630 = vadd.f32 %v6629, %v6439
    %v6631 = vadd.f32 %v6630, %v6444
    %v6632 = vadd.f32 %v6631, %v6447
    %v6633 = vadd.f32 %v6632, %v6452
    %v6634 = vadd.f32 %v6633, %v6455
    %v6635 = vadd.f32 %v6634, %v6460
    %v6636 = vadd.f32 %v6635, %v6463
    %v6637 = vadd.f32 %v6636, %v6468
    %v6638 = vadd.f32 %v6637, %v6471
    %v6639 = vadd.f32 %v6638, %v6476
    %v6640 = vadd.f32 %v6639, %v6479
    %v6641 = vadd.f32 %v6640, %v6484
    %v6642 = vadd.f32 %v6641, %v6487
    %v6643 = vadd.f32 %v6642, %v6492
    %v6644 = vadd.f32 %v6643, %v6495
    %v6645 = vadd.f32 %v6644, %v6500
    %v6646 = vadd.f32 %v6645, %v6503
    %v6647 = vadd.f32 %v6646, %v6508
    %v6648 = vadd.f32 %v6647, %v6511
    %v6649 = vadd.f32 %v6648, %v6516
    %v6650 = vadd.f32 %v6649, %v6519
    %v6651 = vadd.f32 %v6650, %v6524
    %v6652 = vadd.f32 %v6651, %v6527
    %v6653 = vadd.f32 %v6652, %v6532
    %v6654 = vadd.f32 %v6653, %v6535
    %v6655 = vadd.f32 %v6654, %v6540
    %v6656 = vadd.f32 %v6655, %v6543
    %v6657 = vadd.f32 %v6656, %v6548
    %v6658 = vadd.f32 %v6657, %v6551
    %v6659 = vadd.f32 %v6658, %v6556
    %v6660 = vadd.f32 %v6659, %v6559
    %v6661 = vadd.f32 %v6660, %v6564
    %v6662 = vadd.f32 %v6661, %v6567
    %v6663 = vadd.f32 %v6662, %v6572
    %v6664 = vadd.f32 %v6663, %v6575
    %v6665 = vadd.f32 %v6664, %v6580
    %v6666 = vadd.f32 %v6665, %v6583
    %v6667 = vadd.f32 %v6666, %v6588
    %v6668 = vadd.f32 %v6667, %v6591
    %v6669 = vadd.f32 %v6668, %v6596
    %v6670 = vadd.f32 %v6669, %v6599
    %v6671 = vadd.f32 %v6670, %v6604
    %v6672 = vadd.f32 %v6671, %v6607
    %v6673 = vrot.slane %v6672, 4
    %v6674 = vadd.f32 %v6672, %v6673
    %v6675 = vrot.slane %v6674, 2
    %v6676 = vadd.f32 %v6674, %v6675
    %v6677 = vrot.slane %v6676, 1
    %v6678 = vadd.f32 %v6676, %v6677
    %v6679 = vmul.f32 %v6678, 0.001953125
    %v6680 = vsub.f32 %v6356, %v6679
    %v6681 = vsub.f32 %v6359, %v6679
    %v6682 = vsub.f32 %v6364, %v6679
    %v6683 = vsub.f32 %v6367, %v6679
    %v6684 = vsub.f32 %v6372, %v6679
    %v6685 = vsub.f32 %v6375, %v6679
    %v6686 = vsub.f32 %v6380, %v6679
    %v6687 = vsub.f32 %v6383, %v6679
    %v6688 = vsub.f32 %v6388, %v6679
    %v6689 = vsub.f32 %v6391, %v6679
    %v6690 = vsub.f32 %v6396, %v6679
    %v6691 = vsub.f32 %v6399, %v6679
    %v6692 = vsub.f32 %v6404, %v6679
    %v6693 = vsub.f32 %v6407, %v6679
    %v6694 = vsub.f32 %v6412, %v6679
    %v6695 = vsub.f32 %v6415, %v6679
    %v6696 = vsub.f32 %v6420, %v6679
    %v6697 = vsub.f32 %v6423, %v6679
    %v6698 = vsub.f32 %v6428, %v6679
    %v6699 = vsub.f32 %v6431, %v6679
    %v6700 = vsub.f32 %v6436, %v6679
    %v6701 = vsub.f32 %v6439, %v6679
    %v6702 = vsub.f32 %v6444, %v6679
    %v6703 = vsub.f32 %v6447, %v6679
    %v6704 = vsub.f32 %v6452, %v6679
    %v6705 = vsub.f32 %v6455, %v6679
    %v6706 = vsub.f32 %v6460, %v6679
    %v6707 = vsub.f32 %v6463, %v6679
    %v6708 = vsub.f32 %v6468, %v6679
    %v6709 = vsub.f32 %v6471, %v6679
    %v6710 = vsub.f32 %v6476, %v6679
    %v6711 = vsub.f32 %v6479, %v6679
    %v6712 = vsub.f32 %v6484, %v6679
    %v6713 = vsub.f32 %v6487, %v6679
    %v6714 = vsub.f32 %v6492, %v6679
    %v6715 = vsub.f32 %v6495, %v6679
    %v6716 = vsub.f32 %v6500, %v6679
    %v6717 = vsub.f32 %v6503, %v6679
    %v6718 = vsub.f32 %v6508, %v6679
    %v6719 = vsub.f32 %v6511, %v6679
    %v6720 = vsub.f32 %v6516, %v6679
    %v6721 = vsub.f32 %v6519, %v6679
    %v6722 = vsub.f32 %v6524, %v6679
    %v6723 = vsub.f32 %v6527, %v6679
    %v6724 = vsub.f32 %v6532, %v6679
    %v6725 = vsub.f32 %v6535, %v6679
    %v6726 = vsub.f32 %v6540, %v6679
    %v6727 = vsub.f32 %v6543, %v6679
    %v6728 = vsub.f32 %v6548, %v6679
    %v6729 = vsub.f32 %v6551, %v6679
    %v6730 = vsub.f32 %v6556, %v6679
    %v6731 = vsub.f32 %v6559, %v6679
    %v6732 = vsub.f32 %v6564, %v6679
    %v6733 = vsub.f32 %v6567, %v6679
    %v6734 = vsub.f32 %v6572, %v6679
    %v6735 = vsub.f32 %v6575, %v6679
    %v6736 = vsub.f32 %v6580, %v6679
    %v6737 = vsub.f32 %v6583, %v6679
    %v6738 = vsub.f32 %v6588, %v6679
    %v6739 = vsub.f32 %v6591, %v6679
    %v6740 = vsub.f32 %v6596, %v6679
    %v6741 = vsub.f32 %v6599, %v6679
    %v6742 = vsub.f32 %v6604, %v6679
    %v6743 = vsub.f32 %v6607, %v6679
    %v6744 = vmul.f32 %v6680, %v6680
    %v6745 = vmul.f32 %v6681, %v6681
    %v6746 = vmul.f32 %v6682, %v6682
    %v6747 = vmul.f32 %v6683, %v6683
    %v6748 = vmul.f32 %v6684, %v6684
    %v6749 = vmul.f32 %v6685, %v6685
    %v6750 = vmul.f32 %v6686, %v6686
    %v6751 = vmul.f32 %v6687, %v6687
    %v6752 = vmul.f32 %v6688, %v6688
    %v6753 = vmul.f32 %v6689, %v6689
    %v6754 = vmul.f32 %v6690, %v6690
    %v6755 = vmul.f32 %v6691, %v6691
    %v6756 = vmul.f32 %v6692, %v6692
    %v6757 = vmul.f32 %v6693, %v6693
    %v6758 = vmul.f32 %v6694, %v6694
    %v6759 = vmul.f32 %v6695, %v6695
    %v6760 = vmul.f32 %v6696, %v6696
    %v6761 = vmul.f32 %v6697, %v6697
    %v6762 = vmul.f32 %v6698, %v6698
    %v6763 = vmul.f32 %v6699, %v6699
    %v6764 = vmul.f32 %v6700, %v6700
    %v6765 = vmul.f32 %v6701, %v6701
    %v6766 = vmul.f32 %v6702, %v6702
    %v6767 = vmul.f32 %v6703, %v6703
    %v6768 = vmul.f32 %v6704, %v6704
    %v6769 = vmul.f32 %v6705, %v6705
    %v6770 = vmul.f32 %v6706, %v6706
    %v6771 = vmul.f32 %v6707, %v6707
    %v6772 = vmul.f32 %v6708, %v6708
    %v6773 = vmul.f32 %v6709, %v6709
    %v6774 = vmul.f32 %v6710, %v6710
    %v6775 = vmul.f32 %v6711, %v6711
    %v6776 = vmul.f32 %v6712, %v6712
    %v6777 = vmul.f32 %v6713, %v6713
    %v6778 = vmul.f32 %v6714, %v6714
    %v6779 = vmul.f32 %v6715, %v6715
    %v6780 = vmul.f32 %v6716, %v6716
    %v6781 = vmul.f32 %v6717, %v6717
    %v6782 = vmul.f32 %v6718, %v6718
    %v6783 = vmul.f32 %v6719, %v6719
    %v6784 = vmul.f32 %v6720, %v6720
    %v6785 = vmul.f32 %v6721, %v6721
    %v6786 = vmul.f32 %v6722, %v6722
    %v6787 = vmul.f32 %v6723, %v6723
    %v6788 = vmul.f32 %v6724, %v6724
    %v6789 = vmul.f32 %v6725, %v6725
    %v6790 = vmul.f32 %v6726, %v6726
    %v6791 = vmul.f32 %v6727, %v6727
    %v6792 = vmul.f32 %v6728, %v6728
    %v6793 = vmul.f32 %v6729, %v6729
    %v6794 = vmul.f32 %v6730, %v6730
    %v6795 = vmul.f32 %v6731, %v6731
    %v6796 = vmul.f32 %v6732, %v6732
    %v6797 = vmul.f32 %v6733, %v6733
    %v6798 = vmul.f32 %v6734, %v6734
    %v6799 = vmul.f32 %v6735, %v6735
    %v6800 = vmul.f32 %v6736, %v6736
    %v6801 = vmul.f32 %v6737, %v6737
    %v6802 = vmul.f32 %v6738, %v6738
    %v6803 = vmul.f32 %v6739, %v6739
    %v6804 = vmul.f32 %v6740, %v6740
    %v6805 = vmul.f32 %v6741, %v6741
    %v6806 = vmul.f32 %v6742, %v6742
    %v6807 = vmul.f32 %v6743, %v6743
    %v6808 = vadd.f32 %v6744, %v6745
    %v6809 = vadd.f32 %v6808, %v6746
    %v6810 = vadd.f32 %v6809, %v6747
    %v6811 = vadd.f32 %v6810, %v6748
    %v6812 = vadd.f32 %v6811, %v6749
    %v6813 = vadd.f32 %v6812, %v6750
    %v6814 = vadd.f32 %v6813, %v6751
    %v6815 = vadd.f32 %v6814, %v6752
    %v6816 = vadd.f32 %v6815, %v6753
    %v6817 = vadd.f32 %v6816, %v6754
    %v6818 = vadd.f32 %v6817, %v6755
    %v6819 = vadd.f32 %v6818, %v6756
    %v6820 = vadd.f32 %v6819, %v6757
    %v6821 = vadd.f32 %v6820, %v6758
    %v6822 = vadd.f32 %v6821, %v6759
    %v6823 = vadd.f32 %v6822, %v6760
    %v6824 = vadd.f32 %v6823, %v6761
    %v6825 = vadd.f32 %v6824, %v6762
    %v6826 = vadd.f32 %v6825, %v6763
    %v6827 = vadd.f32 %v6826, %v6764
    %v6828 = vadd.f32 %v6827, %v6765
    %v6829 = vadd.f32 %v6828, %v6766
    %v6830 = vadd.f32 %v6829, %v6767
    %v6831 = vadd.f32 %v6830, %v6768
    %v6832 = vadd.f32 %v6831, %v6769
    %v6833 = vadd.f32 %v6832, %v6770
    %v6834 = vadd.f32 %v6833, %v6771
    %v6835 = vadd.f32 %v6834, %v6772
    %v6836 = vadd.f32 %v6835, %v6773
    %v6837 = vadd.f32 %v6836, %v6774
    %v6838 = vadd.f32 %v6837, %v6775
    %v6839 = vadd.f32 %v6838, %v6776
    %v6840 = vadd.f32 %v6839, %v6777
    %v6841 = vadd.f32 %v6840, %v6778
    %v6842 = vadd.f32 %v6841, %v6779
    %v6843 = vadd.f32 %v6842, %v6780
    %v6844 = vadd.f32 %v6843, %v6781
    %v6845 = vadd.f32 %v6844, %v6782
    %v6846 = vadd.f32 %v6845, %v6783
    %v6847 = vadd.f32 %v6846, %v6784
    %v6848 = vadd.f32 %v6847, %v6785
    %v6849 = vadd.f32 %v6848, %v6786
    %v6850 = vadd.f32 %v6849, %v6787
    %v6851 = vadd.f32 %v6850, %v6788
    %v6852 = vadd.f32 %v6851, %v6789
    %v6853 = vadd.f32 %v6852, %v6790
    %v6854 = vadd.f32 %v6853, %v6791
    %v6855 = vadd.f32 %v6854, %v6792
    %v6856 = vadd.f32 %v6855, %v6793
    %v6857 = vadd.f32 %v6856, %v6794
    %v6858 = vadd.f32 %v6857, %v6795
    %v6859 = vadd.f32 %v6858, %v6796
    %v6860 = vadd.f32 %v6859, %v6797
    %v6861 = vadd.f32 %v6860, %v6798
    %v6862 = vadd.f32 %v6861, %v6799
    %v6863 = vadd.f32 %v6862, %v6800
    %v6864 = vadd.f32 %v6863, %v6801
    %v6865 = vadd.f32 %v6864, %v6802
    %v6866 = vadd.f32 %v6865, %v6803
    %v6867 = vadd.f32 %v6866, %v6804
    %v6868 = vadd.f32 %v6867, %v6805
    %v6869 = vadd.f32 %v6868, %v6806
    %v6870 = vadd.f32 %v6869, %v6807
    %v6871 = vrot.slane %v6870, 4
    %v6872 = vadd.f32 %v6870, %v6871
    %v6873 = vrot.slane %v6872, 2
    %v6874 = vadd.f32 %v6872, %v6873
    %v6875 = vrot.slane %v6874, 1
    %v6876 = vadd.f32 %v6874, %v6875
    %v6877 = vmul.f32 %v6876, 0.001953125
    %v6878 = vadd.f32 %v6877, 1e-05
    %v6879 = vrsqrt.pop %v6878
    %v6880 = vmul.f32 %v6680, %v6879
    %v6881 = vmul.f32 %v6681, %v6879
    %v6882 = vmul.f32 %v6682, %v6879
    %v6883 = vmul.f32 %v6683, %v6879
    %v6884 = vmul.f32 %v6684, %v6879
    %v6885 = vmul.f32 %v6685, %v6879
    %v6886 = vmul.f32 %v6686, %v6879
    %v6887 = vmul.f32 %v6687, %v6879
    %v6888 = vmul.f32 %v6688, %v6879
    %v6889 = vmul.f32 %v6689, %v6879
    %v6890 = vmul.f32 %v6690, %v6879
    %v6891 = vmul.f32 %v6691, %v6879
    %v6892 = vmul.f32 %v6692, %v6879
    %v6893 = vmul.f32 %v6693, %v6879
    %v6894 = vmul.f32 %v6694, %v6879
    %v6895 = vmul.f32 %v6695, %v6879
    %v6896 = vmul.f32 %v6696, %v6879
    %v6897 = vmul.f32 %v6697, %v6879
    %v6898 = vmul.f32 %v6698, %v6879
    %v6899 = vmul.f32 %v6699, %v6879
    %v6900 = vmul.f32 %v6700, %v6879
    %v6901 = vmul.f32 %v6701, %v6879
    %v6902 = vmul.f32 %v6702, %v6879
    %v6903 = vmul.f32 %v6703, %v6879
    %v6904 = vmul.f32 %v6704, %v6879
    %v6905 = vmul.f32 %v6705, %v6879
    %v6906 = vmul.f32 %v6706, %v6879
    %v6907 = vmul.f32 %v6707, %v6879
    %v6908 = vmul.f32 %v6708, %v6879
    %v6909 = vmul.f32 %v6709, %v6879
    %v6910 = vmul.f32 %v6710, %v6879
    %v6911 = vmul.f32 %v6711, %v6879
    %v6912 = vmul.f32 %v6712, %v6879
    %v6913 = vmul.f32 %v6713, %v6879
    %v6914 = vmul.f32 %v6714, %v6879
    %v6915 = vmul.f32 %v6715, %v6879
    %v6916 = vmul.f32 %v6716, %v6879
    %v6917 = vmul.f32 %v6717, %v6879
    %v6918 = vmul.f32 %v6718, %v6879
    %v6919 = vmul.f32 %v6719, %v6879
    %v6920 = vmul.f32 %v6720, %v6879
    %v6921 = vmul.f32 %v6721, %v6879
    %v6922 = vmul.f32 %v6722, %v6879
    %v6923 = vmul.f32 %v6723, %v6879
    %v6924 = vmul.f32 %v6724, %v6879
    %v6925 = vmul.f32 %v6725, %v6879
    %v6926 = vmul.f32 %v6726, %v6879
    %v6927 = vmul.f32 %v6727, %v6879
    %v6928 = vmul.f32 %v6728, %v6879
    %v6929 = vmul.f32 %v6729, %v6879
    %v6930 = vmul.f32 %v6730, %v6879
    %v6931 = vmul.f32 %v6731, %v6879
    %v6932 = vmul.f32 %v6732, %v6879
    %v6933 = vmul.f32 %v6733, %v6879
    %v6934 = vmul.f32 %v6734, %v6879
    %v6935 = vmul.f32 %v6735, %v6879
    %v6936 = vmul.f32 %v6736, %v6879
    %v6937 = vmul.f32 %v6737, %v6879
    %v6938 = vmul.f32 %v6738, %v6879
    %v6939 = vmul.f32 %v6739, %v6879
    %v6940 = vmul.f32 %v6740, %v6879
    %v6941 = vmul.f32 %v6741, %v6879
    %v6942 = vmul.f32 %v6742, %v6879
    %v6943 = vmul.f32 %v6743, %v6879
    %v6944 = vld [vmem:[%s5] sm:$0x1]
    %v6946 = vlaneseq
    %v6947 = vshrl.u32 %v6946, 7
    %v6948 = vsub.s32 0, %v6947
    %v6949 = vrot.slane %v6944, %v6948
    %v6951 = vmul.f32 %v6880, %v6949
    %v6952 = vmul.f32 %v6881, %v6949
    %v6953 = vmul.f32 %v6882, %v6949
    %v6954 = vmul.f32 %v6883, %v6949
    %v6955 = vmul.f32 %v6884, %v6949
    %v6956 = vmul.f32 %v6885, %v6949
    %v6957 = vmul.f32 %v6886, %v6949
    %v6958 = vmul.f32 %v6887, %v6949
    %v6959 = vmul.f32 %v6888, %v6949
    %v6960 = vmul.f32 %v6889, %v6949
    %v6961 = vmul.f32 %v6890, %v6949
    %v6962 = vmul.f32 %v6891, %v6949
    %v6963 = vmul.f32 %v6892, %v6949
    %v6964 = vmul.f32 %v6893, %v6949
    %v6965 = vmul.f32 %v6894, %v6949
    %v6966 = vmul.f32 %v6895, %v6949
    %v6967 = vmul.f32 %v6896, %v6949
    %v6968 = vmul.f32 %v6897, %v6949
    %v6969 = vmul.f32 %v6898, %v6949
    %v6970 = vmul.f32 %v6899, %v6949
    %v6971 = vmul.f32 %v6900, %v6949
    %v6972 = vmul.f32 %v6901, %v6949
    %v6973 = vmul.f32 %v6902, %v6949
    %v6974 = vmul.f32 %v6903, %v6949
    %v6975 = vmul.f32 %v6904, %v6949
    %v6976 = vmul.f32 %v6905, %v6949
    %v6977 = vmul.f32 %v6906, %v6949
    %v6978 = vmul.f32 %v6907, %v6949
    %v6979 = vmul.f32 %v6908, %v6949
    %v6980 = vmul.f32 %v6909, %v6949
    %v6981 = vmul.f32 %v6910, %v6949
    %v6982 = vmul.f32 %v6911, %v6949
    %v6983 = vmul.f32 %v6912, %v6949
    %v6984 = vmul.f32 %v6913, %v6949
    %v6985 = vmul.f32 %v6914, %v6949
    %v6986 = vmul.f32 %v6915, %v6949
    %v6987 = vmul.f32 %v6916, %v6949
    %v6988 = vmul.f32 %v6917, %v6949
    %v6989 = vmul.f32 %v6918, %v6949
    %v6990 = vmul.f32 %v6919, %v6949
    %v6991 = vmul.f32 %v6920, %v6949
    %v6992 = vmul.f32 %v6921, %v6949
    %v6993 = vmul.f32 %v6922, %v6949
    %v6994 = vmul.f32 %v6923, %v6949
    %v6995 = vmul.f32 %v6924, %v6949
    %v6996 = vmul.f32 %v6925, %v6949
    %v6997 = vmul.f32 %v6926, %v6949
    %v6998 = vmul.f32 %v6927, %v6949
    %v6999 = vmul.f32 %v6928, %v6949
    %v7000 = vmul.f32 %v6929, %v6949
    %v7001 = vmul.f32 %v6930, %v6949
    %v7002 = vmul.f32 %v6931, %v6949
    %v7003 = vmul.f32 %v6932, %v6949
    %v7004 = vmul.f32 %v6933, %v6949
    %v7005 = vmul.f32 %v6934, %v6949
    %v7006 = vmul.f32 %v6935, %v6949
    %v7007 = vmul.f32 %v6936, %v6949
    %v7008 = vmul.f32 %v6937, %v6949
    %v7009 = vmul.f32 %v6938, %v6949
    %v7010 = vmul.f32 %v6939, %v6949
    %v7011 = vmul.f32 %v6940, %v6949
    %v7012 = vmul.f32 %v6941, %v6949
    %v7013 = vmul.f32 %v6942, %v6949
    %v7014 = vmul.f32 %v6943, %v6949
    %v7015 = vld [vmem:[%s6] sm:$0x1]
    %v7017 = vlaneseq
    %v7018 = vshrl.u32 %v7017, 7
    %v7019 = vsub.s32 0, %v7018
    %v7020 = vrot.slane %v7015, %v7019
    %v7022 = vadd.f32 %v6951, %v7020
    %v7023 = vadd.f32 %v6952, %v7020
    %v7024 = vadd.f32 %v6953, %v7020
    %v7025 = vadd.f32 %v6954, %v7020
    %v7026 = vadd.f32 %v6955, %v7020
    %v7027 = vadd.f32 %v6956, %v7020
    %v7028 = vadd.f32 %v6957, %v7020
    %v7029 = vadd.f32 %v6958, %v7020
    %v7030 = vadd.f32 %v6959, %v7020
    %v7031 = vadd.f32 %v6960, %v7020
    %v7032 = vadd.f32 %v6961, %v7020
    %v7033 = vadd.f32 %v6962, %v7020
    %v7034 = vadd.f32 %v6963, %v7020
    %v7035 = vadd.f32 %v6964, %v7020
    %v7036 = vadd.f32 %v6965, %v7020
    %v7037 = vadd.f32 %v6966, %v7020
    %v7038 = vadd.f32 %v6967, %v7020
    %v7039 = vadd.f32 %v6968, %v7020
    %v7040 = vadd.f32 %v6969, %v7020
    %v7041 = vadd.f32 %v6970, %v7020
    %v7042 = vadd.f32 %v6971, %v7020
    %v7043 = vadd.f32 %v6972, %v7020
    %v7044 = vadd.f32 %v6973, %v7020
    %v7045 = vadd.f32 %v6974, %v7020
    %v7046 = vadd.f32 %v6975, %v7020
    %v7047 = vadd.f32 %v6976, %v7020
    %v7048 = vadd.f32 %v6977, %v7020
    %v7049 = vadd.f32 %v6978, %v7020
    %v7050 = vadd.f32 %v6979, %v7020
    %v7051 = vadd.f32 %v6980, %v7020
    %v7052 = vadd.f32 %v6981, %v7020
    %v7053 = vadd.f32 %v6982, %v7020
    %v7054 = vadd.f32 %v6983, %v7020
    %v7055 = vadd.f32 %v6984, %v7020
    %v7056 = vadd.f32 %v6985, %v7020
    %v7057 = vadd.f32 %v6986, %v7020
    %v7058 = vadd.f32 %v6987, %v7020
    %v7059 = vadd.f32 %v6988, %v7020
    %v7060 = vadd.f32 %v6989, %v7020
    %v7061 = vadd.f32 %v6990, %v7020
    %v7062 = vadd.f32 %v6991, %v7020
    %v7063 = vadd.f32 %v6992, %v7020
    %v7064 = vadd.f32 %v6993, %v7020
    %v7065 = vadd.f32 %v6994, %v7020
    %v7066 = vadd.f32 %v6995, %v7020
    %v7067 = vadd.f32 %v6996, %v7020
    %v7068 = vadd.f32 %v6997, %v7020
    %v7069 = vadd.f32 %v6998, %v7020
    %v7070 = vadd.f32 %v6999, %v7020
    %v7071 = vadd.f32 %v7000, %v7020
    %v7072 = vadd.f32 %v7001, %v7020
    %v7073 = vadd.f32 %v7002, %v7020
    %v7074 = vadd.f32 %v7003, %v7020
    %v7075 = vadd.f32 %v7004, %v7020
    %v7076 = vadd.f32 %v7005, %v7020
    %v7077 = vadd.f32 %v7006, %v7020
    %v7078 = vadd.f32 %v7007, %v7020
    %v7079 = vadd.f32 %v7008, %v7020
    %v7080 = vadd.f32 %v7009, %v7020
    %v7081 = vadd.f32 %v7010, %v7020
    %v7082 = vadd.f32 %v7011, %v7020
    %v7083 = vadd.f32 %v7012, %v7020
    %v7084 = vadd.f32 %v7013, %v7020
    %v7085 = vadd.f32 %v7014, %v7020
    %v7086 = vadd.f32 %v7022, %v177
    %v7087 = vadd.f32 %v7023, %v178
    %v7088 = vadd.f32 %v7024, %v179
    %v7089 = vadd.f32 %v7025, %v180
    %v7090 = vadd.f32 %v7026, %v181
    %v7091 = vadd.f32 %v7027, %v182
    %v7092 = vadd.f32 %v7028, %v183
    %v7093 = vadd.f32 %v7029, %v184
    %v7094 = vadd.f32 %v7030, %v185
    %v7095 = vadd.f32 %v7031, %v186
    %v7096 = vadd.f32 %v7032, %v187
    %v7097 = vadd.f32 %v7033, %v188
    %v7098 = vadd.f32 %v7034, %v189
    %v7099 = vadd.f32 %v7035, %v190
    %v7100 = vadd.f32 %v7036, %v191
    %v7101 = vadd.f32 %v7037, %v192
    %v7102 = vadd.f32 %v7038, %v193
    %v7103 = vadd.f32 %v7039, %v194
    %v7104 = vadd.f32 %v7040, %v195
    %v7105 = vadd.f32 %v7041, %v196
    %v7106 = vadd.f32 %v7042, %v197
    %v7107 = vadd.f32 %v7043, %v198
    %v7108 = vadd.f32 %v7044, %v199
    %v7109 = vadd.f32 %v7045, %v200
    %v7110 = vadd.f32 %v7046, %v201
    %v7111 = vadd.f32 %v7047, %v202
    %v7112 = vadd.f32 %v7048, %v203
    %v7113 = vadd.f32 %v7049, %v204
    %v7114 = vadd.f32 %v7050, %v205
    %v7115 = vadd.f32 %v7051, %v206
    %v7116 = vadd.f32 %v7052, %v207
    %v7117 = vadd.f32 %v7053, %v208
    %v7118 = vadd.f32 %v7054, %v209
    %v7119 = vadd.f32 %v7055, %v210
    %v7120 = vadd.f32 %v7056, %v211
    %v7121 = vadd.f32 %v7057, %v212
    %v7122 = vadd.f32 %v7058, %v213
    %v7123 = vadd.f32 %v7059, %v214
    %v7124 = vadd.f32 %v7060, %v215
    %v7125 = vadd.f32 %v7061, %v216
    %v7126 = vadd.f32 %v7062, %v217
    %v7127 = vadd.f32 %v7063, %v218
    %v7128 = vadd.f32 %v7064, %v219
    %v7129 = vadd.f32 %v7065, %v220
    %v7130 = vadd.f32 %v7066, %v221
    %v7131 = vadd.f32 %v7067, %v222
    %v7132 = vadd.f32 %v7068, %v223
    %v7133 = vadd.f32 %v7069, %v224
    %v7134 = vadd.f32 %v7070, %v225
    %v7135 = vadd.f32 %v7071, %v226
    %v7136 = vadd.f32 %v7072, %v227
    %v7137 = vadd.f32 %v7073, %v228
    %v7138 = vadd.f32 %v7074, %v229
    %v7139 = vadd.f32 %v7075, %v230
    %v7140 = vadd.f32 %v7076, %v231
    %v7141 = vadd.f32 %v7077, %v232
    %v7142 = vadd.f32 %v7078, %v233
    %v7143 = vadd.f32 %v7079, %v234
    %v7144 = vadd.f32 %v7080, %v235
    %v7145 = vadd.f32 %v7081, %v236
    %v7146 = vadd.f32 %v7082, %v237
    %v7147 = vadd.f32 %v7083, %v238
    %v7148 = vadd.f32 %v7084, %v239
    %v7149 = vadd.f32 %v7085, %v240
    %v7150 = vmax.f32 %v7086, 0.0
    %v7151 = vmax.f32 %v7087, 0.0
    %v7152 = vmax.f32 %v7088, 0.0
    %v7153 = vmax.f32 %v7089, 0.0
    %v7154 = vmax.f32 %v7090, 0.0
    %v7155 = vmax.f32 %v7091, 0.0
    %v7156 = vmax.f32 %v7092, 0.0
    %v7157 = vmax.f32 %v7093, 0.0
    %v7158 = vmax.f32 %v7094, 0.0
    %v7159 = vmax.f32 %v7095, 0.0
    %v7160 = vmax.f32 %v7096, 0.0
    %v7161 = vmax.f32 %v7097, 0.0
    %v7162 = vmax.f32 %v7098, 0.0
    %v7163 = vmax.f32 %v7099, 0.0
    %v7164 = vmax.f32 %v7100, 0.0
    %v7165 = vmax.f32 %v7101, 0.0
    %v7166 = vmax.f32 %v7102, 0.0
    %v7167 = vmax.f32 %v7103, 0.0
    %v7168 = vmax.f32 %v7104, 0.0
    %v7169 = vmax.f32 %v7105, 0.0
    %v7170 = vmax.f32 %v7106, 0.0
    %v7171 = vmax.f32 %v7107, 0.0
    %v7172 = vmax.f32 %v7108, 0.0
    %v7173 = vmax.f32 %v7109, 0.0
    %v7174 = vmax.f32 %v7110, 0.0
    %v7175 = vmax.f32 %v7111, 0.0
    %v7176 = vmax.f32 %v7112, 0.0
    %v7177 = vmax.f32 %v7113, 0.0
    %v7178 = vmax.f32 %v7114, 0.0
    %v7179 = vmax.f32 %v7115, 0.0
    %v7180 = vmax.f32 %v7116, 0.0
    %v7181 = vmax.f32 %v7117, 0.0
    %v7182 = vmax.f32 %v7118, 0.0
    %v7183 = vmax.f32 %v7119, 0.0
    %v7184 = vmax.f32 %v7120, 0.0
    %v7185 = vmax.f32 %v7121, 0.0
    %v7186 = vmax.f32 %v7122, 0.0
    %v7187 = vmax.f32 %v7123, 0.0
    %v7188 = vmax.f32 %v7124, 0.0
    %v7189 = vmax.f32 %v7125, 0.0
    %v7190 = vmax.f32 %v7126, 0.0
    %v7191 = vmax.f32 %v7127, 0.0
    %v7192 = vmax.f32 %v7128, 0.0
    %v7193 = vmax.f32 %v7129, 0.0
    %v7194 = vmax.f32 %v7130, 0.0
    %v7195 = vmax.f32 %v7131, 0.0
    %v7196 = vmax.f32 %v7132, 0.0
    %v7197 = vmax.f32 %v7133, 0.0
    %v7198 = vmax.f32 %v7134, 0.0
    %v7199 = vmax.f32 %v7135, 0.0
    %v7200 = vmax.f32 %v7136, 0.0
    %v7201 = vmax.f32 %v7137, 0.0
    %v7202 = vmax.f32 %v7138, 0.0
    %v7203 = vmax.f32 %v7139, 0.0
    %v7204 = vmax.f32 %v7140, 0.0
    %v7205 = vmax.f32 %v7141, 0.0
    %v7206 = vmax.f32 %v7142, 0.0
    %v7207 = vmax.f32 %v7143, 0.0
    %v7208 = vmax.f32 %v7144, 0.0
    %v7209 = vmax.f32 %v7145, 0.0
    %v7210 = vmax.f32 %v7146, 0.0
    %v7211 = vmax.f32 %v7147, 0.0
    %v7212 = vmax.f32 %v7148, 0.0
    %v7213 = vmax.f32 %v7149, 0.0
    %7214 = vst [vmem:[#allocation9] sm:$0xff] %v7150
    %7215 = vst [vmem:[#allocation9 + $0x8] sm:$0xff] %v7151
    %7216 = vst [vmem:[#allocation9 + $0x10] sm:$0xff] %v7152
    %7217 = vst [vmem:[#allocation9 + $0x18] sm:$0xff] %v7153
    %7218 = vst [vmem:[#allocation9 + $0x20] sm:$0xff] %v7154
    %7219 = vst [vmem:[#allocation9 + $0x28] sm:$0xff] %v7155
    %7220 = vst [vmem:[#allocation9 + $0x30] sm:$0xff] %v7156
    %7221 = vst [vmem:[#allocation9 + $0x38] sm:$0xff] %v7157
    %7222 = vst [vmem:[#allocation9 + $0x40] sm:$0xff] %v7158
    %7223 = vst [vmem:[#allocation9 + $0x48] sm:$0xff] %v7159
    %7224 = vst [vmem:[#allocation9 + $0x50] sm:$0xff] %v7160
    %7225 = vst [vmem:[#allocation9 + $0x58] sm:$0xff] %v7161
    %7226 = vst [vmem:[#allocation9 + $0x60] sm:$0xff] %v7162
    %7227 = vst [vmem:[#allocation9 + $0x68] sm:$0xff] %v7163
    %7228 = vst [vmem:[#allocation9 + $0x70] sm:$0xff] %v7164
    %7229 = vst [vmem:[#allocation9 + $0x78] sm:$0xff] %v7165
    %7230 = vst [vmem:[#allocation9 + $0x80] sm:$0xff] %v7166
    %7231 = vst [vmem:[#allocation9 + $0x88] sm:$0xff] %v7167
    %7232 = vst [vmem:[#allocation9 + $0x90] sm:$0xff] %v7168
    %7233 = vst [vmem:[#allocation9 + $0x98] sm:$0xff] %v7169
    %7234 = vst [vmem:[#allocation9 + $0xa0] sm:$0xff] %v7170
    %7235 = vst [vmem:[#allocation9 + $0xa8] sm:$0xff] %v7171
    %7236 = vst [vmem:[#allocation9 + $0xb0] sm:$0xff] %v7172
    %7237 = vst [vmem:[#allocation9 + $0xb8] sm:$0xff] %v7173
    %7238 = vst [vmem:[#allocation9 + $0xc0] sm:$0xff] %v7174
    %7239 = vst [vmem:[#allocation9 + $0xc8] sm:$0xff] %v7175
    %7240 = vst [vmem:[#allocation9 + $0xd0] sm:$0xff] %v7176
    %7241 = vst [vmem:[#allocation9 + $0xd8] sm:$0xff] %v7177
    %7242 = vst [vmem:[#allocation9 + $0xe0] sm:$0xff] %v7178
    %7243 = vst [vmem:[#allocation9 + $0xe8] sm:$0xff] %v7179
    %7244 = vst [vmem:[#allocation9 + $0xf0] sm:$0xff] %v7180
    %7245 = vst [vmem:[#allocation9 + $0xf8] sm:$0xff] %v7181
    %7246 = vst [vmem:[#allocation9 + $0x100] sm:$0xff] %v7182
    %7247 = vst [vmem:[#allocation9 + $0x108] sm:$0xff] %v7183
    %7248 = vst [vmem:[#allocation9 + $0x110] sm:$0xff] %v7184
    %7249 = vst [vmem:[#allocation9 + $0x118] sm:$0xff] %v7185
    %7250 = vst [vmem:[#allocation9 + $0x120] sm:$0xff] %v7186
    %7251 = vst [vmem:[#allocation9 + $0x128] sm:$0xff] %v7187
    %7252 = vst [vmem:[#allocation9 + $0x130] sm:$0xff] %v7188
    %7253 = vst [vmem:[#allocation9 + $0x138] sm:$0xff] %v7189
    %7254 = vst [vmem:[#allocation9 + $0x140] sm:$0xff] %v7190
    %7255 = vst [vmem:[#allocation9 + $0x148] sm:$0xff] %v7191
    %7256 = vst [vmem:[#allocation9 + $0x150] sm:$0xff] %v7192
    %7257 = vst [vmem:[#allocation9 + $0x158] sm:$0xff] %v7193
    %7258 = vst [vmem:[#allocation9 + $0x160] sm:$0xff] %v7194
    %7259 = vst [vmem:[#allocation9 + $0x168] sm:$0xff] %v7195
    %7260 = vst [vmem:[#allocation9 + $0x170] sm:$0xff] %v7196
    %7261 = vst [vmem:[#allocation9 + $0x178] sm:$0xff] %v7197
    %7262 = vst [vmem:[#allocation9 + $0x180] sm:$0xff] %v7198
    %7263 = vst [vmem:[#allocation9 + $0x188] sm:$0xff] %v7199
    %7264 = vst [vmem:[#allocation9 + $0x190] sm:$0xff] %v7200
    %7265 = vst [vmem:[#allocation9 + $0x198] sm:$0xff] %v7201
    %7266 = vst [vmem:[#allocation9 + $0x1a0] sm:$0xff] %v7202
    %7267 = vst [vmem:[#allocation9 + $0x1a8] sm:$0xff] %v7203
    %7268 = vst [vmem:[#allocation9 + $0x1b0] sm:$0xff] %v7204
    %7269 = vst [vmem:[#allocation9 + $0x1b8] sm:$0xff] %v7205
    %7270 = vst [vmem:[#allocation9 + $0x1c0] sm:$0xff] %v7206
    %7271 = vst [vmem:[#allocation9 + $0x1c8] sm:$0xff] %v7207
    %7272 = vst [vmem:[#allocation9 + $0x1d0] sm:$0xff] %v7208
    %7273 = vst [vmem:[#allocation9 + $0x1d8] sm:$0xff] %v7209
    %7274 = vst [vmem:[#allocation9 + $0x1e0] sm:$0xff] %v7210
    %7275 = vst [vmem:[#allocation9 + $0x1e8] sm:$0xff] %v7211
    %7276 = vst [vmem:[#allocation9 + $0x1f0] sm:$0xff] %v7212
    %7277 = vst [vmem:[#allocation9 + $0x1f8] sm:$0xff] %v7213
    // Predicated region
    $region42: #{tpu_custom_call.1} parent=1 // pred_check
      _
    $region43: #{tpu_custom_call.1} parent=1 // pred_check_branch
      %7279 = sbr.rel (0) target = $region45
    $region44: #{tpu_custom_call.1} parent=1 // pred_region
      %s7281 = ssub.s32 8192, 8192
      %7282 = vsyncadd [#allocation5], %s7281
      %s7283 = sshll.u32 [#allocation9], 4
      %s7284 = int_to_ptr.vmem [resolvable:$true] %s7283
      %7289 = dma.vmem_to_hbm [thread:$0]  %s7284, 8192, %s7, [#allocation5], 128, 128, 8
    $region45: #{tpu_custom_call.1} parent=1 // pred_fallthru
      _
    // Predicated region
    $region46: #{tpu_custom_call.1} parent=1 // pred_check
      _
    $region47: #{tpu_custom_call.1} parent=1 // pred_check_branch
      %7291 = sbr.rel (0) target = $region49
    $region48: #{tpu_custom_call.1} parent=1 // pred_region
      %7292 = dma.done [#allocation5], 8192
    $region49: #{tpu_custom_call.1} parent=1 // pred_fallthru
      _
    %7293 = vsyncpa [#allocation4], 1
    %7294 = vsyncpa [#allocation7], 1
    %7295 = vsyncpa [#allocation5], 1

</llo_original>
